<compile_context>
chip_gen: v5e
topology: v5e:2x2
jax: 0.10.0
libtpu: 0.0.40
codegen_flags: <defaults>
</compile_context>

<pallas_src>
import functools

import jax
import jax.numpy as jnp
from jax.experimental import pallas as pl
from jax.experimental.pallas import tpu as pltpu

DIM = 64
FC_N_PAD = 128           # lane-dense FC output (true N = 1)
VMEM_LIMIT = 48 << 20    # fits v7x's 64 MiB physical VMEM; fine on v5e/v6e


def _round_up(x, m):
    return (x + m - 1) // m * m


# ----------------------------- Pallas kernel ------------------------------ #
def _matmul_bias_kernel(a_ref, w_ref, b_ref, o_ref, *, relu: bool):
    # a: (TM, K) bf16, w: (K, N) bf16, b: (1, N) f32  ->  o: (TM, N)
    acc = jnp.dot(a_ref[...], w_ref[...], preferred_element_type=jnp.float32)
    acc = acc + b_ref[...]
    if relu:
        acc = jnp.maximum(acc, 0.0)
    o_ref[...] = acc.astype(o_ref.dtype)


def matmul_bias(a, w, b, *, relu: bool, out_dtype=jnp.float32):
    """y = a @ w + b (optional ReLU). bf16 inputs, f32 MXU accumulation.

    M is tiled along a 1-D "parallel" grid (pipelined double-buffering, and
    dual-TensorCore sharding on v7x); W and b stay resident in VMEM.
    """
    M, K = a.shape
    K2, N = w.shape
    assert K == K2, (K, K2)

    # Largest M tile that comfortably fits the default scoped VMEM budget on
    # every generation (A tile <= 512*4096*2B = 4 MiB, x2 buffers).
    TM = min(512, _round_up(max(M, 8), 8))
    Mp = _round_up(M, TM)
    if Mp != M:
        a = jnp.pad(a, ((0, Mp - M), (0, 0)))

    a = a.astype(jnp.bfloat16)
    w = w.astype(jnp.bfloat16)
    b2 = b.reshape(1, N).astype(jnp.float32)

    out = pl.pallas_call(
        functools.partial(_matmul_bias_kernel, relu=relu),
        out_shape=jax.ShapeDtypeStruct((Mp, N), out_dtype),
        grid=(Mp // TM,),
        in_specs=[
            pl.BlockSpec((TM, K), lambda i: (i, 0)),   # A: streamed over M
            pl.BlockSpec((K, N), lambda i: (0, 0)),    # W: resident across grid
            pl.BlockSpec((1, N), lambda i: (0, 0)),    # b: resident across grid
        ],
        out_specs=pl.BlockSpec((TM, N), lambda i: (i, 0)),
        compiler_params=pltpu.CompilerParams(
            dimension_semantics=("parallel",),
            vmem_limit_bytes=VMEM_LIMIT,
        ),
    )(a, w, b2)
    return out[:M] if Mp != M else out


# ------------------------------ im2col glue ------------------------------- #
def im2col(x, kh, kw, stride, pad):
    """x: (N, H, W, C) NHWC -> patches (N*OH*OW, kh*kw*C), plus (OH, OW)."""
    N, H, W, C = x.shape
    xp = jnp.pad(x, ((0, 0), (pad, pad), (pad, pad), (0, 0)))
    OH = (H + 2 * pad - kh) // stride + 1
    OW = (W + 2 * pad - kw) // stride + 1
    cols = []
    for i in range(kh):
        for j in range(kw):
            cols.append(xp[:, i:i + stride * OH:stride, j:j + stride * OW:stride, :])
    # (N, OH, OW, kh*kw, C): (i, j) major, channel minor -> matches weight layout.
    p = jnp.stack(cols, axis=3)
    return p.reshape(N * OH * OW, kh * kw * C), OH, OW


# ------------------------------- parameters -------------------------------- #
def init_params(key):
    """Synthetic weights matching the PyTorch module shapes, pre-packed for TPU."""
    ks = jax.random.split(key, 8)
    conv_shapes = [  # (Cout, Cin, KH, KW) as in PyTorch
        (DIM, 1, 5, 5),
        (2 * DIM, DIM, 5, 5),
        (4 * DIM, 2 * DIM, 5, 5),
    ]
    convs = []
    for idx, (cout, cin, kh, kw) in enumerate(conv_shapes):
        w = jax.random.normal(ks[2 * idx], (cout, cin, kh, kw), jnp.float32) * 0.05
        b = jax.random.normal(ks[2 * idx + 1], (cout,), jnp.float32) * 0.01
        # (Cout,Cin,KH,KW) -> (KH,KW,Cin,Cout) -> (KH*KW*Cin, Cout): im2col column order.
        w_mat = jnp.transpose(w, (2, 3, 1, 0)).reshape(kh * kw * cin, cout)
        k = kh * kw * cin
        k_pad = _round_up(k, 8)                      # conv1: 25 -> 32, free at init
        if k_pad != k:
            w_mat = jnp.pad(w_mat, ((0, k_pad - k), (0, 0)))
        convs.append((w_mat.astype(jnp.bfloat16), b))

    # Linear(4*4*4*DIM, 1): PyTorch weight (1, 4096) over NCHW-flattened features.
    fc_w = jax.random.normal(ks[6], (1, 4 * 4 * 4 * DIM), jnp.float32) * 0.02
    fc_b = jax.random.normal(ks[7], (1,), jnp.float32) * 0.01
    # Permute rows to NHWC flatten order so the forward pass skips the NCHW
    # transpose: (1, C*H*W) -> (1, C, 4, 4) -> (1, 4, 4, C) -> (4*4*C, 1).
    C = 4 * DIM
    fc_w_nhwc = jnp.transpose(fc_w.reshape(1, C, 4, 4), (0, 2, 3, 1)).reshape(1, 4 * 4 * C).T
    # Pad N from 1 -> 128 so the FC output tile is lane-dense (column 0 = result).
    fc_w_mat = jnp.pad(fc_w_nhwc, ((0, 0), (0, FC_N_PAD - 1))).astype(jnp.bfloat16)
    fc_b_pad = jnp.pad(fc_b, (0, FC_N_PAD - 1))
    return {"convs": convs, "fc_w": fc_w_mat, "fc_b": fc_b_pad}


# -------------------------------- forward ---------------------------------- #
def discriminator_forward(x, params):
    # x: (B, 1, 28, 28) NCHW (or anything reshapeable to it, like PyTorch .view)
    x = x.reshape(-1, 1, 28, 28)
    B = x.shape[0]
    h = jnp.transpose(x, (0, 2, 3, 1)).astype(jnp.bfloat16)    # NHWC, bf16
    for (w_mat, b) in params["convs"]:
        a, OH, OW = im2col(h, 5, 5, stride=2, pad=2)
        k_pad = w_mat.shape[0]
        if a.shape[1] != k_pad:                                # conv1: 25 -> 32
            a = jnp.pad(a, ((0, 0), (0, k_pad - a.shape[1])))
        cout = w_mat.shape[1]
        y = matmul_bias(a, w_mat, b, relu=True, out_dtype=jnp.bfloat16)
        h = y.reshape(B, OH, OW, cout)
    # Flatten directly in NHWC order; fc_w rows were permuted at init time so
    # this is numerically identical to PyTorch's NCHW flatten + Linear.
    feat = h.reshape(B, 4 * 4 * 4 * DIM)
    out = matmul_bias(feat, params["fc_w"], params["fc_b"], relu=False,
                      out_dtype=jnp.float32)                    # (B, 128)
    return out[:, 0]


# ---------------------------------- main ------------------------------------ #
if __name__ == "__main__":
    key = jax.random.PRNGKey(0)
    pkey, xkey = jax.random.split(key)
    params = init_params(pkey)
    x = jax.random.normal(xkey, (2, 1, 28, 28), jnp.float32)

    fwd = jax.jit(discriminator_forward)
    out = jax.block_until_ready(fwd(x, params))
    assert out.shape == (2,), out.shape
    print("KERNEL_OK")
</pallas_src>

<mosaic_0001>
module attributes {stable_mosaic.version = 11 : i64} {
  func.func @_matmul_bias_kernel(%arg0: i32, %arg1: memref<392x32xbf16, #tpu.memory_space<vmem>>, %arg2: memref<32x64xbf16, #tpu.memory_space<vmem>>, %arg3: memref<1x64xf32, #tpu.memory_space<vmem>>, %arg4: memref<392x64xbf16, #tpu.memory_space<vmem>>) attributes {dimension_semantics = [#tpu.dimension_semantics<parallel>], iteration_bounds = array<i64: 1>, scalar_prefetch = 0 : i64, scratch_operands = 0 : i64, tpu.core_type = #tpu.core_type<tc>, window_params = [{transform_indices = @transform_0, window_bounds = array<i64: 392, 32>}, {pipeline_mode = #tpu.pipeline_mode<synchronous>, transform_indices = @transform_1, window_bounds = array<i64: 32, 64>}, {pipeline_mode = #tpu.pipeline_mode<synchronous>, transform_indices = @transform_2, window_bounds = array<i64: 1, 64>}, {transform_indices = @transform_3, window_bounds = array<i64: 392, 64>}]} {
    %c0 = arith.constant 0 : index
    %c0_0 = arith.constant 0 : index
    %0 = vector.load %arg1[%c0, %c0_0] : memref<392x32xbf16, #tpu.memory_space<vmem>>, vector<392x32xbf16>
    %c0_1 = arith.constant 0 : index
    %c0_2 = arith.constant 0 : index
    %1 = vector.load %arg2[%c0_1, %c0_2] : memref<32x64xbf16, #tpu.memory_space<vmem>>, vector<32x64xbf16>
    %cst = arith.constant dense<0.000000e+00> : vector<392x64xf32>
    %2 = tpu.matmul %0, %1, %cst {dimension_numbers = #tpu.dot_dimension_numbers<[1], [0], [0], [1], [0, 0, 1, 1], [], []>} : vector<392x32xbf16>, vector<32x64xbf16>, vector<392x64xf32> -> vector<392x64xf32>
    %c0_3 = arith.constant 0 : index
    %c0_4 = arith.constant 0 : index
    %3 = vector.load %arg3[%c0_3, %c0_4] : memref<1x64xf32, #tpu.memory_space<vmem>>, vector<1x64xf32>
    %4 = vector.broadcast %3 : vector<1x64xf32> to vector<392x64xf32>
    %5 = arith.addf %2, %4 : vector<392x64xf32>
    %cst_5 = arith.constant 0.000000e+00 : f32
    %6 = vector.broadcast %cst_5 : f32 to vector<392x64xf32>
    %7 = arith.maximumf %5, %6 : vector<392x64xf32>
    %8 = arith.truncf %7 : vector<392x64xf32> to vector<392x64xbf16>
    %c0_6 = arith.constant 0 : index
    %c0_7 = arith.constant 0 : index
    %9 = vector.load %arg4[%c0_6, %c0_7] : memref<392x64xbf16, #tpu.memory_space<vmem>>, vector<392x64xbf16>
    tpu.vector_store %arg4[%c0_6, %c0_7], %8 {strides = array<i32>} : memref<392x64xbf16, #tpu.memory_space<vmem>>, vector<392x64xbf16>,
    return
  }
  func.func @transform_0(%arg0: i32) -> (i32, i32) {
    %c0_i32 = arith.constant 0 : i32
    %c0_i32_0 = arith.constant 0 : i32
    return %arg0, %c0_i32 : i32, i32
  }
  func.func @transform_1(%arg0: i32) -> (i32, i32) {
    %c0_i32 = arith.constant 0 : i32
    %c0_i32_0 = arith.constant 0 : i32
    %c0_i32_1 = arith.constant 0 : i32
    return %c0_i32, %c0_i32_0 : i32, i32
  }
  func.func @transform_2(%arg0: i32) -> (i32, i32) {
    %c0_i32 = arith.constant 0 : i32
    %c0_i32_0 = arith.constant 0 : i32
    %c0_i32_1 = arith.constant 0 : i32
    return %c0_i32, %c0_i32_0 : i32, i32
  }
  func.func @transform_3(%arg0: i32) -> (i32, i32) {
    %c0_i32 = arith.constant 0 : i32
    %c0_i32_0 = arith.constant 0 : i32
    return %arg0, %c0_i32 : i32, i32
  }
}

module attributes {stable_mosaic.version = 11 : i64} {
  func.func @_matmul_bias_kernel(%arg0: i32, %arg1: memref<104x1600xbf16, #tpu.memory_space<vmem>>, %arg2: memref<1600x128xbf16, #tpu.memory_space<vmem>>, %arg3: memref<1x128xf32, #tpu.memory_space<vmem>>, %arg4: memref<104x128xbf16, #tpu.memory_space<vmem>>) attributes {dimension_semantics = [#tpu.dimension_semantics<parallel>], iteration_bounds = array<i64: 1>, scalar_prefetch = 0 : i64, scratch_operands = 0 : i64, tpu.core_type = #tpu.core_type<tc>, window_params = [{transform_indices = @transform_0, window_bounds = array<i64: 104, 1600>}, {pipeline_mode = #tpu.pipeline_mode<synchronous>, transform_indices = @transform_1, window_bounds = array<i64: 1600, 128>}, {pipeline_mode = #tpu.pipeline_mode<synchronous>, transform_indices = @transform_2, window_bounds = array<i64: 1, 128>}, {transform_indices = @transform_3, window_bounds = array<i64: 104, 128>}]} {
    %c0 = arith.constant 0 : index
    %c0_0 = arith.constant 0 : index
    %0 = vector.load %arg1[%c0, %c0_0] : memref<104x1600xbf16, #tpu.memory_space<vmem>>, vector<104x1600xbf16>
    %c0_1 = arith.constant 0 : index
    %c0_2 = arith.constant 0 : index
    %1 = vector.load %arg2[%c0_1, %c0_2] : memref<1600x128xbf16, #tpu.memory_space<vmem>>, vector<1600x128xbf16>
    %cst = arith.constant dense<0.000000e+00> : vector<104x128xf32>
    %2 = tpu.matmul %0, %1, %cst {dimension_numbers = #tpu.dot_dimension_numbers<[1], [0], [0], [1], [0, 0, 1, 1], [], []>} : vector<104x1600xbf16>, vector<1600x128xbf16>, vector<104x128xf32> -> vector<104x128xf32>
    %c0_3 = arith.constant 0 : index
    %c0_4 = arith.constant 0 : index
    %3 = vector.load %arg3[%c0_3, %c0_4] : memref<1x128xf32, #tpu.memory_space<vmem>>, vector<1x128xf32>
    %4 = vector.broadcast %3 : vector<1x128xf32> to vector<104x128xf32>
    %5 = arith.addf %2, %4 : vector<104x128xf32>
    %cst_5 = arith.constant 0.000000e+00 : f32
    %6 = vector.broadcast %cst_5 : f32 to vector<104x128xf32>
    %7 = arith.maximumf %5, %6 : vector<104x128xf32>
    %8 = arith.truncf %7 : vector<104x128xf32> to vector<104x128xbf16>
    %c0_6 = arith.constant 0 : index
    %c0_7 = arith.constant 0 : index
    %9 = vector.load %arg4[%c0_6, %c0_7] : memref<104x128xbf16, #tpu.memory_space<vmem>>, vector<104x128xbf16>
    tpu.vector_store %arg4[%c0_6, %c0_7], %8 {strides = array<i32>} : memref<104x128xbf16, #tpu.memory_space<vmem>>, vector<104x128xbf16>,
    return
  }
  func.func @transform_0(%arg0: i32) -> (i32, i32) {
    %c0_i32 = arith.constant 0 : i32
    %c0_i32_0 = arith.constant 0 : i32
    return %arg0, %c0_i32 : i32, i32
  }
  func.func @transform_1(%arg0: i32) -> (i32, i32) {
    %c0_i32 = arith.constant 0 : i32
    %c0_i32_0 = arith.constant 0 : i32
    %c0_i32_1 = arith.constant 0 : i32
    return %c0_i32, %c0_i32_0 : i32, i32
  }
  func.func @transform_2(%arg0: i32) -> (i32, i32) {
    %c0_i32 = arith.constant 0 : i32
    %c0_i32_0 = arith.constant 0 : i32
    %c0_i32_1 = arith.constant 0 : i32
    return %c0_i32, %c0_i32_0 : i32, i32
  }
  func.func @transform_3(%arg0: i32) -> (i32, i32) {
    %c0_i32 = arith.constant 0 : i32
    %c0_i32_0 = arith.constant 0 : i32
    return %arg0, %c0_i32 : i32, i32
  }
}

module attributes {stable_mosaic.version = 11 : i64} {
  func.func @_matmul_bias_kernel(%arg0: i32, %arg1: memref<32x3200xbf16, #tpu.memory_space<vmem>>, %arg2: memref<3200x256xbf16, #tpu.memory_space<vmem>>, %arg3: memref<1x256xf32, #tpu.memory_space<vmem>>, %arg4: memref<32x256xbf16, #tpu.memory_space<vmem>>) attributes {dimension_semantics = [#tpu.dimension_semantics<parallel>], iteration_bounds = array<i64: 1>, scalar_prefetch = 0 : i64, scratch_operands = 0 : i64, tpu.core_type = #tpu.core_type<tc>, window_params = [{transform_indices = @transform_0, window_bounds = array<i64: 32, 3200>}, {pipeline_mode = #tpu.pipeline_mode<synchronous>, transform_indices = @transform_1, window_bounds = array<i64: 3200, 256>}, {pipeline_mode = #tpu.pipeline_mode<synchronous>, transform_indices = @transform_2, window_bounds = array<i64: 1, 256>}, {transform_indices = @transform_3, window_bounds = array<i64: 32, 256>}]} {
    %c0 = arith.constant 0 : index
    %c0_0 = arith.constant 0 : index
    %0 = vector.load %arg1[%c0, %c0_0] : memref<32x3200xbf16, #tpu.memory_space<vmem>>, vector<32x3200xbf16>
    %c0_1 = arith.constant 0 : index
    %c0_2 = arith.constant 0 : index
    %1 = vector.load %arg2[%c0_1, %c0_2] : memref<3200x256xbf16, #tpu.memory_space<vmem>>, vector<3200x256xbf16>
    %cst = arith.constant dense<0.000000e+00> : vector<32x256xf32>
    %2 = tpu.matmul %0, %1, %cst {dimension_numbers = #tpu.dot_dimension_numbers<[1], [0], [0], [1], [0, 0, 1, 1], [], []>} : vector<32x3200xbf16>, vector<3200x256xbf16>, vector<32x256xf32> -> vector<32x256xf32>
    %c0_3 = arith.constant 0 : index
    %c0_4 = arith.constant 0 : index
    %3 = vector.load %arg3[%c0_3, %c0_4] : memref<1x256xf32, #tpu.memory_space<vmem>>, vector<1x256xf32>
    %4 = vector.broadcast %3 : vector<1x256xf32> to vector<32x256xf32>
    %5 = arith.addf %2, %4 : vector<32x256xf32>
    %cst_5 = arith.constant 0.000000e+00 : f32
    %6 = vector.broadcast %cst_5 : f32 to vector<32x256xf32>
    %7 = arith.maximumf %5, %6 : vector<32x256xf32>
    %8 = arith.truncf %7 : vector<32x256xf32> to vector<32x256xbf16>
    %c0_6 = arith.constant 0 : index
    %c0_7 = arith.constant 0 : index
    %9 = vector.load %arg4[%c0_6, %c0_7] : memref<32x256xbf16, #tpu.memory_space<vmem>>, vector<32x256xbf16>
    tpu.vector_store %arg4[%c0_6, %c0_7], %8 {strides = array<i32>} : memref<32x256xbf16, #tpu.memory_space<vmem>>, vector<32x256xbf16>,
    return
  }
  func.func @transform_0(%arg0: i32) -> (i32, i32) {
    %c0_i32 = arith.constant 0 : i32
    %c0_i32_0 = arith.constant 0 : i32
    return %arg0, %c0_i32 : i32, i32
  }
  func.func @transform_1(%arg0: i32) -> (i32, i32) {
    %c0_i32 = arith.constant 0 : i32
    %c0_i32_0 = arith.constant 0 : i32
    %c0_i32_1 = arith.constant 0 : i32
    return %c0_i32, %c0_i32_0 : i32, i32
  }
  func.func @transform_2(%arg0: i32) -> (i32, i32) {
    %c0_i32 = arith.constant 0 : i32
    %c0_i32_0 = arith.constant 0 : i32
    %c0_i32_1 = arith.constant 0 : i32
    return %c0_i32, %c0_i32_0 : i32, i32
  }
  func.func @transform_3(%arg0: i32) -> (i32, i32) {
    %c0_i32 = arith.constant 0 : i32
    %c0_i32_0 = arith.constant 0 : i32
    return %arg0, %c0_i32 : i32, i32
  }
}

module attributes {stable_mosaic.version = 11 : i64} {
  func.func @_matmul_bias_kernel(%arg0: i32, %arg1: memref<8x4096xbf16, #tpu.memory_space<vmem>>, %arg2: memref<4096x128xbf16, #tpu.memory_space<vmem>>, %arg3: memref<1x128xf32, #tpu.memory_space<vmem>>, %arg4: memref<8x128xf32, #tpu.memory_space<vmem>>) attributes {dimension_semantics = [#tpu.dimension_semantics<parallel>], iteration_bounds = array<i64: 1>, scalar_prefetch = 0 : i64, scratch_operands = 0 : i64, tpu.core_type = #tpu.core_type<tc>, window_params = [{transform_indices = @transform_0, window_bounds = array<i64: 8, 4096>}, {pipeline_mode = #tpu.pipeline_mode<synchronous>, transform_indices = @transform_1, window_bounds = array<i64: 4096, 128>}, {pipeline_mode = #tpu.pipeline_mode<synchronous>, transform_indices = @transform_2, window_bounds = array<i64: 1, 128>}, {transform_indices = @transform_3, window_bounds = array<i64: 8, 128>}]} {
    %c0 = arith.constant 0 : index
    %c0_0 = arith.constant 0 : index
    %0 = vector.load %arg1[%c0, %c0_0] : memref<8x4096xbf16, #tpu.memory_space<vmem>>, vector<8x4096xbf16>
    %c0_1 = arith.constant 0 : index
    %c0_2 = arith.constant 0 : index
    %1 = vector.load %arg2[%c0_1, %c0_2] : memref<4096x128xbf16, #tpu.memory_space<vmem>>, vector<4096x128xbf16>
    %cst = arith.constant dense<0.000000e+00> : vector<8x128xf32>
    %2 = tpu.matmul %0, %1, %cst {dimension_numbers = #tpu.dot_dimension_numbers<[1], [0], [0], [1], [0, 0, 1, 1], [], []>} : vector<8x4096xbf16>, vector<4096x128xbf16>, vector<8x128xf32> -> vector<8x128xf32>
    %c0_3 = arith.constant 0 : index
    %c0_4 = arith.constant 0 : index
    %3 = vector.load %arg3[%c0_3, %c0_4] : memref<1x128xf32, #tpu.memory_space<vmem>>, vector<1x128xf32>
    %4 = vector.broadcast %3 : vector<1x128xf32> to vector<8x128xf32>
    %5 = arith.addf %2, %4 : vector<8x128xf32>
    %c0_5 = arith.constant 0 : index
    %c0_6 = arith.constant 0 : index
    %6 = vector.load %arg4[%c0_5, %c0_6] : memref<8x128xf32, #tpu.memory_space<vmem>>, vector<8x128xf32>
    tpu.vector_store %arg4[%c0_5, %c0_6], %5 {strides = array<i32>} : memref<8x128xf32, #tpu.memory_space<vmem>>, vector<8x128xf32>,
    return
  }
  func.func @transform_0(%arg0: i32) -> (i32, i32) {
    %c0_i32 = arith.constant 0 : i32
    %c0_i32_0 = arith.constant 0 : i32
    return %arg0, %c0_i32 : i32, i32
  }
  func.func @transform_1(%arg0: i32) -> (i32, i32) {
    %c0_i32 = arith.constant 0 : i32
    %c0_i32_0 = arith.constant 0 : i32
    %c0_i32_1 = arith.constant 0 : i32
    return %c0_i32, %c0_i32_0 : i32, i32
  }
  func.func @transform_2(%arg0: i32) -> (i32, i32) {
    %c0_i32 = arith.constant 0 : i32
    %c0_i32_0 = arith.constant 0 : i32
    %c0_i32_1 = arith.constant 0 : i32
    return %c0_i32, %c0_i32_0 : i32, i32
  }
  func.func @transform_3(%arg0: i32) -> (i32, i32) {
    %c0_i32 = arith.constant 0 : i32
    %c0_i32_0 = arith.constant 0 : i32
    return %arg0, %c0_i32 : i32, i32
  }
}

</mosaic_0001>

<llo_original>
// kernel: discriminator_forward.4
$region0: #{discriminator_forward.4}
  #allocation0 [shape = 'u32[]', space=smem, size = 0x4, offset = 0x4, fixed_abs, tag = 'smem constant byte address 0x4 - core index']
  #allocation1 [shape = 'u32[72,128]{1,0:T(1,128)}', space=vmem, size = 0x9000, scoped, tag = 'internal scratch']
  %s0 = inlined_call_operand.vmem [shape: bf16[392,32], index: 0, kind: input, shape index: {}]
  %s1 = inlined_call_operand.hbm [shape: bf16[32,64], index: 1, kind: input, shape index: {}]
  %s2 = inlined_call_operand.hbm [shape: f32[1,64], index: 2, kind: input, shape index: {}]
  %s3 = inlined_call_operand.vmem [shape: bf16[392,64], index: 3, kind: output, shape index: {}]
  %s4 = sld [smem:[#allocation0]]
  $region30: #{discriminator_forward.4} parent=0
    _
  %s6 = ssub.s32 1, %s4
  %s7 = scalar_select 0, %s6, %s4
  $region1: #{discriminator_forward.4} parent=0
    #allocation2 [shape = 'u8[8192]{0}', space=vmem, size = 0x2000, scoped, tag = 'input window, operand 1, single buffered']
    #allocation3 [shape = 's32[1]{0}', space=sflag, size = 0x4, scoped, tag = 'scoped memory for discriminator_forward.4']
    #allocation4 [shape = 'u8[512]{0}', space=vmem, size = 0x400, scoped, tag = 'input window, operand 2, single buffered']
    #allocation5 [shape = 's32[1]{0}', space=sflag, size = 0x4, scoped, tag = 'scoped memory for discriminator_forward.4']
    %8 = vsyncpa [#allocation3], 0
    %9 = vsyncpa [#allocation5], 0
    // Predicated region
    $region2: #{discriminator_forward.4} parent=1 // pred_check
      _
    $region3: #{discriminator_forward.4} parent=1 // pred_check_branch
      %11 = sbr.rel (0) target = $region5
    $region4: #{discriminator_forward.4} parent=1 // pred_region
      _
    $region5: #{discriminator_forward.4} parent=1 // pred_fallthru
      _
    // Predicated region
    $region6: #{discriminator_forward.4} parent=1 // pred_check
      _
    $region7: #{discriminator_forward.4} parent=1 // pred_check_branch
      %13 = sbr.rel (0) target = $region9
    $region8: #{discriminator_forward.4} parent=1 // pred_region
      %15 = vsyncadd [#allocation3], 0
      %s16 = sshll.u32 %s1, 4
      %s17 = int_to_ptr.hbm [resolvable:$true] %s16
      %s18 = sshll.u32 [#allocation2], 4
      %s19 = int_to_ptr.vmem [resolvable:$true] %s18
      %24 = dma.hbm_to_vmem [thread:$0]  %s17, 256, %s19, [#allocation3], 64, 64, 4
    $region9: #{discriminator_forward.4} parent=1 // pred_fallthru
      _
    // Predicated region
    $region10: #{discriminator_forward.4} parent=1 // pred_check
      _
    $region11: #{discriminator_forward.4} parent=1 // pred_check_branch
      %26 = sbr.rel (0) target = $region13
    $region12: #{discriminator_forward.4} parent=1 // pred_region
      %28 = vsyncadd [#allocation5], 0
      %s30 = sshll.u32 %s2, 4
      %s31 = int_to_ptr.hbm [resolvable:$true] %s30
      %s32 = sshll.u32 [#allocation4], 4
      %s33 = int_to_ptr.vmem [resolvable:$true] %s32
      %35 = dma.hbm_to_vmem [thread:$0]  %s31, 16, %s33, [#allocation5]
    $region13: #{discriminator_forward.4} parent=1 // pred_fallthru
      _
    // Predicated region
    $region14: #{discriminator_forward.4} parent=1 // pred_check
      _
    $region15: #{discriminator_forward.4} parent=1 // pred_check_branch
      %37 = sbr.rel (0) target = $region17
    $region16: #{discriminator_forward.4} parent=1 // pred_region
      %39 = dma.done [#allocation3], 256
    $region17: #{discriminator_forward.4} parent=1 // pred_fallthru
      _
    // Predicated region
    $region18: #{discriminator_forward.4} parent=1 // pred_check
      _
    $region19: #{discriminator_forward.4} parent=1 // pred_check_branch
      %41 = sbr.rel (0) target = $region21
    $region20: #{discriminator_forward.4} parent=1 // pred_region
      %43 = dma.done [#allocation5], 16
    $region21: #{discriminator_forward.4} parent=1 // pred_fallthru
      _
    %v45 = vld [vmem:[%s0] sm:$0xf]
    %v46 = vld [vmem:[%s0 + $0x4] sm:$0xf]
    %v47 = vld [vmem:[%s0 + $0x8] sm:$0xf]
    %v48 = vld [vmem:[%s0 + $0xc] sm:$0xf]
    %v49 = vld [vmem:[%s0 + $0x10] sm:$0xf]
    %v50 = vld [vmem:[%s0 + $0x14] sm:$0xf]
    %v51 = vld [vmem:[%s0 + $0x18] sm:$0xf]
    %v52 = vld [vmem:[%s0 + $0x1c] sm:$0xf]
    %v53 = vld [vmem:[%s0 + $0x20] sm:$0xf]
    %v54 = vld [vmem:[%s0 + $0x24] sm:$0xf]
    %v55 = vld [vmem:[%s0 + $0x28] sm:$0xf]
    %v56 = vld [vmem:[%s0 + $0x2c] sm:$0xf]
    %v57 = vld [vmem:[%s0 + $0x30] sm:$0xf]
    %v58 = vld [vmem:[%s0 + $0x34] sm:$0xf]
    %v59 = vld [vmem:[%s0 + $0x38] sm:$0xf]
    %v60 = vld [vmem:[%s0 + $0x3c] sm:$0xf]
    %v61 = vld [vmem:[%s0 + $0x40] sm:$0xf]
    %v62 = vld [vmem:[%s0 + $0x44] sm:$0xf]
    %v63 = vld [vmem:[%s0 + $0x48] sm:$0xf]
    %v64 = vld [vmem:[%s0 + $0x4c] sm:$0xf]
    %v65 = vld [vmem:[%s0 + $0x50] sm:$0xf]
    %v66 = vld [vmem:[%s0 + $0x54] sm:$0xf]
    %v67 = vld [vmem:[%s0 + $0x58] sm:$0xf]
    %v68 = vld [vmem:[%s0 + $0x5c] sm:$0xf]
    %v69 = vld [vmem:[%s0 + $0x60] sm:$0xf]
    %v70 = vld [vmem:[%s0 + $0x64] sm:$0xf]
    %v71 = vld [vmem:[%s0 + $0x68] sm:$0xf]
    %v72 = vld [vmem:[%s0 + $0x6c] sm:$0xf]
    %v73 = vld [vmem:[%s0 + $0x70] sm:$0xf]
    %v74 = vld [vmem:[%s0 + $0x74] sm:$0xf]
    %v75 = vld [vmem:[%s0 + $0x78] sm:$0xf]
    %v76 = vld [vmem:[%s0 + $0x7c] sm:$0xf]
    %v77 = vld [vmem:[%s0 + $0x80] sm:$0xf]
    %v78 = vld [vmem:[%s0 + $0x84] sm:$0xf]
    %v79 = vld [vmem:[%s0 + $0x88] sm:$0xf]
    %v80 = vld [vmem:[%s0 + $0x8c] sm:$0xf]
    %v81 = vld [vmem:[%s0 + $0x90] sm:$0xf]
    %v82 = vld [vmem:[%s0 + $0x94] sm:$0xf]
    %v83 = vld [vmem:[%s0 + $0x98] sm:$0xf]
    %v84 = vld [vmem:[%s0 + $0x9c] sm:$0xf]
    %v85 = vld [vmem:[%s0 + $0xa0] sm:$0xf]
    %v86 = vld [vmem:[%s0 + $0xa4] sm:$0xf]
    %v87 = vld [vmem:[%s0 + $0xa8] sm:$0xf]
    %v88 = vld [vmem:[%s0 + $0xac] sm:$0xf]
    %v89 = vld [vmem:[%s0 + $0xb0] sm:$0xf]
    %v90 = vld [vmem:[%s0 + $0xb4] sm:$0xf]
    %v91 = vld [vmem:[%s0 + $0xb8] sm:$0xf]
    %v92 = vld [vmem:[%s0 + $0xbc] sm:$0xf]
    %v93 = vld [vmem:[%s0 + $0xc0] sm:$0xf]
    %v94 = vld [vmem:[#allocation2] sm:$0xf]
    %v95 = vld [vmem:[#allocation2 + $0x4] sm:$0xf]
    %v96 = vld [vmem:[#allocation2 + $0x8] sm:$0xf]
    %v97 = vld [vmem:[#allocation2 + $0xc] sm:$0xf]
    %v98 = vld [vmem:[#allocation4] sm:$0x1]
    %v100 = vperm.slane %v98, 0
    %v151 = vunpack.c.l.b16 %v45
    %v152 = vunpack.c.l.b16 %v46
    %v153 = vunpack.c.l.b16 %v47
    %v154 = vunpack.c.l.b16 %v48
    %v155 = vunpack.c.l.b16 %v49
    %v156 = vunpack.c.l.b16 %v50
    %v157 = vunpack.c.l.b16 %v51
    %v158 = vunpack.c.l.b16 %v52
    %v159 = vunpack.c.l.b16 %v53
    %v160 = vunpack.c.l.b16 %v54
    %v161 = vunpack.c.l.b16 %v55
    %v162 = vunpack.c.l.b16 %v56
    %v163 = vunpack.c.l.b16 %v57
    %v164 = vunpack.c.l.b16 %v58
    %v165 = vunpack.c.l.b16 %v59
    %v166 = vunpack.c.l.b16 %v60
    %v167 = vunpack.c.l.b16 %v61
    %v168 = vunpack.c.l.b16 %v62
    %v169 = vunpack.c.l.b16 %v63
    %v170 = vunpack.c.l.b16 %v64
    %v171 = vunpack.c.l.b16 %v65
    %v172 = vunpack.c.l.b16 %v66
    %v173 = vunpack.c.l.b16 %v67
    %v174 = vunpack.c.l.b16 %v68
    %v175 = vunpack.c.l.b16 %v69
    %v176 = vunpack.c.l.b16 %v70
    %v177 = vunpack.c.l.b16 %v71
    %v178 = vunpack.c.l.b16 %v72
    %v179 = vunpack.c.l.b16 %v73
    %v180 = vunpack.c.l.b16 %v74
    %v181 = vunpack.c.l.b16 %v75
    %v182 = vunpack.c.l.b16 %v76
    %v183 = vunpack.c.l.b16 %v77
    %v184 = vunpack.c.l.b16 %v78
    %v185 = vunpack.c.l.b16 %v79
    %v186 = vunpack.c.l.b16 %v80
    %v187 = vunpack.c.l.b16 %v81
    %v188 = vunpack.c.l.b16 %v82
    %v189 = vunpack.c.l.b16 %v83
    %v190 = vunpack.c.l.b16 %v84
    %v191 = vunpack.c.l.b16 %v85
    %v192 = vunpack.c.l.b16 %v86
    %v193 = vunpack.c.l.b16 %v87
    %v194 = vunpack.c.l.b16 %v88
    %v195 = vunpack.c.l.b16 %v89
    %v196 = vunpack.c.l.b16 %v90
    %v197 = vunpack.c.l.b16 %v91
    %v198 = vunpack.c.l.b16 %v92
    %v199 = vunpack.c.l.b16 %v93
    %v200 = vpack.c.b16 %v152, %v151
    %v201 = vpack.c.b16 %v154, %v153
    %v202 = vpack.c.b16 %v156, %v155
    %v203 = vpack.c.b16 %v158, %v157
    %v204 = vpack.c.b16 %v160, %v159
    %v205 = vpack.c.b16 %v162, %v161
    %v206 = vpack.c.b16 %v164, %v163
    %v207 = vpack.c.b16 %v166, %v165
    %v208 = vpack.c.b16 %v168, %v167
    %v209 = vpack.c.b16 %v170, %v169
    %v210 = vpack.c.b16 %v172, %v171
    %v211 = vpack.c.b16 %v174, %v173
    %v212 = vpack.c.b16 %v176, %v175
    %v213 = vpack.c.b16 %v178, %v177
    %v214 = vpack.c.b16 %v180, %v179
    %v215 = vpack.c.b16 %v182, %v181
    %v216 = vpack.c.b16 %v184, %v183
    %v217 = vpack.c.b16 %v186, %v185
    %v218 = vpack.c.b16 %v188, %v187
    %v219 = vpack.c.b16 %v190, %v189
    %v220 = vpack.c.b16 %v192, %v191
    %v221 = vpack.c.b16 %v194, %v193
    %v222 = vpack.c.b16 %v196, %v195
    %v223 = vpack.c.b16 %v198, %v197
    %v224 = vpack.c.b16 %v199, %v199
    %v229 = vunpack.c.l.b16 %v94
    %v230 = vunpack.c.l.b16 %v95
    %v231 = vunpack.c.l.b16 %v96
    %v232 = vunpack.c.l.b16 %v97
    %v233 = vpack.c.b16 %v230, %v229
    %v234 = vpack.c.b16 %v232, %v231
    %vm237 = vcmask 261120
    %v239 = vsel %vm237, %v200, 0
    %v242 = vsel %vm237, %v201, 0
    %v245 = vsel %vm237, %v202, 0
    %v248 = vsel %vm237, %v203, 0
    %v251 = vsel %vm237, %v204, 0
    %v254 = vsel %vm237, %v205, 0
    %v257 = vsel %vm237, %v206, 0
    %v260 = vsel %vm237, %v207, 0
    %v263 = vsel %vm237, %v208, 0
    %v266 = vsel %vm237, %v209, 0
    %v269 = vsel %vm237, %v210, 0
    %v272 = vsel %vm237, %v211, 0
    %v275 = vsel %vm237, %v212, 0
    %v278 = vsel %vm237, %v213, 0
    %v281 = vsel %vm237, %v214, 0
    %v284 = vsel %vm237, %v215, 0
    %v287 = vsel %vm237, %v216, 0
    %v290 = vsel %vm237, %v217, 0
    %v293 = vsel %vm237, %v218, 0
    %v296 = vsel %vm237, %v219, 0
    %v299 = vsel %vm237, %v220, 0
    %v302 = vsel %vm237, %v221, 0
    %v305 = vsel %vm237, %v222, 0
    %v308 = vsel %vm237, %v223, 0
    %v311 = vsel %vm237, %v224, 0
    %313 = vmatpush.bf16.msra.mxu0 0
    %314 = vmatpush.bf16.msra.mxu0 0
    %315 = vmatpush.bf16.msra.mxu0 0
    %316 = vmatpush.bf16.msra.mxu0 0
    %317 = vmatpush.bf16.msra.mxu0 0
    %318 = vmatpush.bf16.msra.mxu0 0
    %319 = vmatpush.bf16.msra.mxu0 %v234
    %320 = vmatpush.bf16.msra.mxu0 %v233
    %321 = vmatmul.bf16.gmra.mxu0 %v239
    %v322 = vpop.f32.mrf.mxu0
    %v323 = vadd.f32 %v100, %v322
    %v324 = vpop.f32.mrf.mxu0
    %v325 = vadd.f32 %v100, %v324
    %326 = vmatmul.bf16.gmra.mxu0 %v242
    %v327 = vpop.f32.mrf.mxu0
    %v328 = vadd.f32 %v100, %v327
    %v329 = vpop.f32.mrf.mxu0
    %v330 = vadd.f32 %v100, %v329
    %331 = vmatmul.bf16.gmra.mxu0 %v245
    %v332 = vpop.f32.mrf.mxu0
    %v333 = vadd.f32 %v100, %v332
    %v334 = vpop.f32.mrf.mxu0
    %v335 = vadd.f32 %v100, %v334
    %336 = vmatmul.bf16.gmra.mxu0 %v248
    %v337 = vpop.f32.mrf.mxu0
    %v338 = vadd.f32 %v100, %v337
    %v339 = vpop.f32.mrf.mxu0
    %v340 = vadd.f32 %v100, %v339
    %341 = vmatmul.bf16.gmra.mxu0 %v251
    %v342 = vpop.f32.mrf.mxu0
    %v343 = vadd.f32 %v100, %v342
    %v344 = vpop.f32.mrf.mxu0
    %v345 = vadd.f32 %v100, %v344
    %346 = vmatmul.bf16.gmra.mxu0 %v254
    %v347 = vpop.f32.mrf.mxu0
    %v348 = vadd.f32 %v100, %v347
    %v349 = vpop.f32.mrf.mxu0
    %v350 = vadd.f32 %v100, %v349
    %351 = vmatmul.bf16.gmra.mxu0 %v257
    %v352 = vpop.f32.mrf.mxu0
    %v353 = vadd.f32 %v100, %v352
    %v354 = vpop.f32.mrf.mxu0
    %v355 = vadd.f32 %v100, %v354
    %356 = vmatmul.bf16.gmra.mxu0 %v260
    %v357 = vpop.f32.mrf.mxu0
    %v358 = vadd.f32 %v100, %v357
    %v359 = vpop.f32.mrf.mxu0
    %v360 = vadd.f32 %v100, %v359
    %361 = vmatmul.bf16.gmra.mxu0 %v263
    %v362 = vpop.f32.mrf.mxu0
    %v363 = vadd.f32 %v100, %v362
    %v364 = vpop.f32.mrf.mxu0
    %v365 = vadd.f32 %v100, %v364
    %366 = vmatmul.bf16.gmra.mxu0 %v266
    %v367 = vpop.f32.mrf.mxu0
    %v368 = vadd.f32 %v100, %v367
    %v369 = vpop.f32.mrf.mxu0
    %v370 = vadd.f32 %v100, %v369
    %371 = vmatmul.bf16.gmra.mxu0 %v269
    %v372 = vpop.f32.mrf.mxu0
    %v373 = vadd.f32 %v100, %v372
    %v374 = vpop.f32.mrf.mxu0
    %v375 = vadd.f32 %v100, %v374
    %376 = vmatmul.bf16.gmra.mxu0 %v272
    %v377 = vpop.f32.mrf.mxu0
    %v378 = vadd.f32 %v100, %v377
    %v379 = vpop.f32.mrf.mxu0
    %v380 = vadd.f32 %v100, %v379
    %381 = vmatmul.bf16.gmra.mxu0 %v275
    %v382 = vpop.f32.mrf.mxu0
    %v383 = vadd.f32 %v100, %v382
    %v384 = vpop.f32.mrf.mxu0
    %v385 = vadd.f32 %v100, %v384
    %386 = vmatmul.bf16.gmra.mxu0 %v278
    %v387 = vpop.f32.mrf.mxu0
    %v388 = vadd.f32 %v100, %v387
    %v389 = vpop.f32.mrf.mxu0
    %v390 = vadd.f32 %v100, %v389
    %391 = vmatmul.bf16.gmra.mxu0 %v281
    %v392 = vpop.f32.mrf.mxu0
    %v393 = vadd.f32 %v100, %v392
    %v394 = vpop.f32.mrf.mxu0
    %v395 = vadd.f32 %v100, %v394
    %396 = vmatmul.bf16.gmra.mxu0 %v284
    %v397 = vpop.f32.mrf.mxu0
    %v398 = vadd.f32 %v100, %v397
    %v399 = vpop.f32.mrf.mxu0
    %v400 = vadd.f32 %v100, %v399
    %401 = vmatmul.bf16.gmra.mxu0 %v287
    %v402 = vpop.f32.mrf.mxu0
    %v403 = vadd.f32 %v100, %v402
    %v404 = vpop.f32.mrf.mxu0
    %v405 = vadd.f32 %v100, %v404
    %406 = vmatmul.bf16.gmra.mxu0 %v290
    %v407 = vpop.f32.mrf.mxu0
    %v408 = vadd.f32 %v100, %v407
    %v409 = vpop.f32.mrf.mxu0
    %v410 = vadd.f32 %v100, %v409
    %411 = vmatmul.bf16.gmra.mxu0 %v293
    %v412 = vpop.f32.mrf.mxu0
    %v413 = vadd.f32 %v100, %v412
    %v414 = vpop.f32.mrf.mxu0
    %v415 = vadd.f32 %v100, %v414
    %416 = vmatmul.bf16.gmra.mxu0 %v296
    %v417 = vpop.f32.mrf.mxu0
    %v418 = vadd.f32 %v100, %v417
    %v419 = vpop.f32.mrf.mxu0
    %v420 = vadd.f32 %v100, %v419
    %421 = vmatmul.bf16.gmra.mxu0 %v299
    %v422 = vpop.f32.mrf.mxu0
    %v423 = vadd.f32 %v100, %v422
    %v424 = vpop.f32.mrf.mxu0
    %v425 = vadd.f32 %v100, %v424
    %426 = vmatmul.bf16.gmra.mxu0 %v302
    %v427 = vpop.f32.mrf.mxu0
    %v428 = vadd.f32 %v100, %v427
    %v429 = vpop.f32.mrf.mxu0
    %v430 = vadd.f32 %v100, %v429
    %431 = vmatmul.bf16.gmra.mxu0 %v305
    %v432 = vpop.f32.mrf.mxu0
    %v433 = vadd.f32 %v100, %v432
    %v434 = vpop.f32.mrf.mxu0
    %v435 = vadd.f32 %v100, %v434
    %436 = vmatmul.bf16.gmra.mxu0 %v308
    %v437 = vpop.f32.mrf.mxu0
    %v438 = vadd.f32 %v100, %v437
    %v439 = vpop.f32.mrf.mxu0
    %v440 = vadd.f32 %v100, %v439
    %441 = vmatmul.bf16.gmra.mxu0 %v311
    %v442 = vpop.f32.mrf.mxu0
    %v443 = vadd.f32 %v100, %v442
    %v444 = vpop.f32.mrf.mxu0
    %445 = vdwg.mxu0
    %v446 = vmax.f32 %v323, 0.0
    %v447 = vmax.f32 %v325, 0.0
    %v448 = vmax.f32 %v328, 0.0
    %v449 = vmax.f32 %v330, 0.0
    %v450 = vmax.f32 %v333, 0.0
    %v451 = vmax.f32 %v335, 0.0
    %v452 = vmax.f32 %v338, 0.0
    %v453 = vmax.f32 %v340, 0.0
    %v454 = vmax.f32 %v343, 0.0
    %v455 = vmax.f32 %v345, 0.0
    %v456 = vmax.f32 %v348, 0.0
    %v457 = vmax.f32 %v350, 0.0
    %v458 = vmax.f32 %v353, 0.0
    %v459 = vmax.f32 %v355, 0.0
    %v460 = vmax.f32 %v358, 0.0
    %v461 = vmax.f32 %v360, 0.0
    %v462 = vmax.f32 %v363, 0.0
    %v463 = vmax.f32 %v365, 0.0
    %v464 = vmax.f32 %v368, 0.0
    %v465 = vmax.f32 %v370, 0.0
    %v466 = vmax.f32 %v373, 0.0
    %v467 = vmax.f32 %v375, 0.0
    %v468 = vmax.f32 %v378, 0.0
    %v469 = vmax.f32 %v380, 0.0
    %v470 = vmax.f32 %v383, 0.0
    %v471 = vmax.f32 %v385, 0.0
    %v472 = vmax.f32 %v388, 0.0
    %v473 = vmax.f32 %v390, 0.0
    %v474 = vmax.f32 %v393, 0.0
    %v475 = vmax.f32 %v395, 0.0
    %v476 = vmax.f32 %v398, 0.0
    %v477 = vmax.f32 %v400, 0.0
    %v478 = vmax.f32 %v403, 0.0
    %v479 = vmax.f32 %v405, 0.0
    %v480 = vmax.f32 %v408, 0.0
    %v481 = vmax.f32 %v410, 0.0
    %v482 = vmax.f32 %v413, 0.0
    %v483 = vmax.f32 %v415, 0.0
    %v484 = vmax.f32 %v418, 0.0
    %v485 = vmax.f32 %v420, 0.0
    %v486 = vmax.f32 %v423, 0.0
    %v487 = vmax.f32 %v425, 0.0
    %v488 = vmax.f32 %v428, 0.0
    %v489 = vmax.f32 %v430, 0.0
    %v490 = vmax.f32 %v433, 0.0
    %v491 = vmax.f32 %v435, 0.0
    %v492 = vmax.f32 %v438, 0.0
    %v493 = vmax.f32 %v440, 0.0
    %v494 = vmax.f32 %v443, 0.0
    %v495 = vpack.c.bf16 %v446, %v446
    %v496 = vpack.c.bf16 %v447, %v447
    %v497 = vpack.c.bf16 %v448, %v448
    %v498 = vpack.c.bf16 %v449, %v449
    %v499 = vpack.c.bf16 %v450, %v450
    %v500 = vpack.c.bf16 %v451, %v451
    %v501 = vpack.c.bf16 %v452, %v452
    %v502 = vpack.c.bf16 %v453, %v453
    %v503 = vpack.c.bf16 %v454, %v454
    %v504 = vpack.c.bf16 %v455, %v455
    %v505 = vpack.c.bf16 %v456, %v456
    %v506 = vpack.c.bf16 %v457, %v457
    %v507 = vpack.c.bf16 %v458, %v458
    %v508 = vpack.c.bf16 %v459, %v459
    %v509 = vpack.c.bf16 %v460, %v460
    %v510 = vpack.c.bf16 %v461, %v461
    %v511 = vpack.c.bf16 %v462, %v462
    %v512 = vpack.c.bf16 %v463, %v463
    %v513 = vpack.c.bf16 %v464, %v464
    %v514 = vpack.c.bf16 %v465, %v465
    %v515 = vpack.c.bf16 %v466, %v466
    %v516 = vpack.c.bf16 %v467, %v467
    %v517 = vpack.c.bf16 %v468, %v468
    %v518 = vpack.c.bf16 %v469, %v469
    %v519 = vpack.c.bf16 %v470, %v470
    %v520 = vpack.c.bf16 %v471, %v471
    %v521 = vpack.c.bf16 %v472, %v472
    %v522 = vpack.c.bf16 %v473, %v473
    %v523 = vpack.c.bf16 %v474, %v474
    %v524 = vpack.c.bf16 %v475, %v475
    %v525 = vpack.c.bf16 %v476, %v476
    %v526 = vpack.c.bf16 %v477, %v477
    %v527 = vpack.c.bf16 %v478, %v478
    %v528 = vpack.c.bf16 %v479, %v479
    %v529 = vpack.c.bf16 %v480, %v480
    %v530 = vpack.c.bf16 %v481, %v481
    %v531 = vpack.c.bf16 %v482, %v482
    %v532 = vpack.c.bf16 %v483, %v483
    %v533 = vpack.c.bf16 %v484, %v484
    %v534 = vpack.c.bf16 %v485, %v485
    %v535 = vpack.c.bf16 %v486, %v486
    %v536 = vpack.c.bf16 %v487, %v487
    %v537 = vpack.c.bf16 %v488, %v488
    %v538 = vpack.c.bf16 %v489, %v489
    %v539 = vpack.c.bf16 %v490, %v490
    %v540 = vpack.c.bf16 %v491, %v491
    %v541 = vpack.c.bf16 %v492, %v492
    %v542 = vpack.c.bf16 %v493, %v493
    %v543 = vpack.c.bf16 %v494, %v494
    %vm544 = vcmask 519168
    %545 = vst.msk [vmem:[%s3] sm:$0xf] %vm544, %v495
    %546 = vst.msk [vmem:[%s3 + $0x4] sm:$0xf] %vm544, %v496
    %547 = vst.msk [vmem:[%s3 + $0x8] sm:$0xf] %vm544, %v497
    %548 = vst.msk [vmem:[%s3 + $0xc] sm:$0xf] %vm544, %v498
    %549 = vst.msk [vmem:[%s3 + $0x10] sm:$0xf] %vm544, %v499
    %550 = vst.msk [vmem:[%s3 + $0x14] sm:$0xf] %vm544, %v500
    %551 = vst.msk [vmem:[%s3 + $0x18] sm:$0xf] %vm544, %v501
    %552 = vst.msk [vmem:[%s3 + $0x1c] sm:$0xf] %vm544, %v502
    %553 = vst.msk [vmem:[%s3 + $0x20] sm:$0xf] %vm544, %v503
    %554 = vst.msk [vmem:[%s3 + $0x24] sm:$0xf] %vm544, %v504
    %555 = vst.msk [vmem:[%s3 + $0x28] sm:$0xf] %vm544, %v505
    %556 = vst.msk [vmem:[%s3 + $0x2c] sm:$0xf] %vm544, %v506
    %557 = vst.msk [vmem:[%s3 + $0x30] sm:$0xf] %vm544, %v507
    %558 = vst.msk [vmem:[%s3 + $0x34] sm:$0xf] %vm544, %v508
    %559 = vst.msk [vmem:[%s3 + $0x38] sm:$0xf] %vm544, %v509
    %560 = vst.msk [vmem:[%s3 + $0x3c] sm:$0xf] %vm544, %v510
    %561 = vst.msk [vmem:[%s3 + $0x40] sm:$0xf] %vm544, %v511
    %562 = vst.msk [vmem:[%s3 + $0x44] sm:$0xf] %vm544, %v512
    %563 = vst.msk [vmem:[%s3 + $0x48] sm:$0xf] %vm544, %v513
    %564 = vst.msk [vmem:[%s3 + $0x4c] sm:$0xf] %vm544, %v514
    %565 = vst.msk [vmem:[%s3 + $0x50] sm:$0xf] %vm544, %v515
    %566 = vst.msk [vmem:[%s3 + $0x54] sm:$0xf] %vm544, %v516
    %567 = vst.msk [vmem:[%s3 + $0x58] sm:$0xf] %vm544, %v517
    %568 = vst.msk [vmem:[%s3 + $0x5c] sm:$0xf] %vm544, %v518
    %569 = vst.msk [vmem:[%s3 + $0x60] sm:$0xf] %vm544, %v519
    %570 = vst.msk [vmem:[%s3 + $0x64] sm:$0xf] %vm544, %v520
    %571 = vst.msk [vmem:[%s3 + $0x68] sm:$0xf] %vm544, %v521
    %572 = vst.msk [vmem:[%s3 + $0x6c] sm:$0xf] %vm544, %v522
    %573 = vst.msk [vmem:[%s3 + $0x70] sm:$0xf] %vm544, %v523
    %574 = vst.msk [vmem:[%s3 + $0x74] sm:$0xf] %vm544, %v524
    %575 = vst.msk [vmem:[%s3 + $0x78] sm:$0xf] %vm544, %v525
    %576 = vst.msk [vmem:[%s3 + $0x7c] sm:$0xf] %vm544, %v526
    %577 = vst.msk [vmem:[%s3 + $0x80] sm:$0xf] %vm544, %v527
    %578 = vst.msk [vmem:[%s3 + $0x84] sm:$0xf] %vm544, %v528
    %579 = vst.msk [vmem:[%s3 + $0x88] sm:$0xf] %vm544, %v529
    %580 = vst.msk [vmem:[%s3 + $0x8c] sm:$0xf] %vm544, %v530
    %581 = vst.msk [vmem:[%s3 + $0x90] sm:$0xf] %vm544, %v531
    %582 = vst.msk [vmem:[%s3 + $0x94] sm:$0xf] %vm544, %v532
    %583 = vst.msk [vmem:[%s3 + $0x98] sm:$0xf] %vm544, %v533
    %584 = vst.msk [vmem:[%s3 + $0x9c] sm:$0xf] %vm544, %v534
    %585 = vst.msk [vmem:[%s3 + $0xa0] sm:$0xf] %vm544, %v535
    %586 = vst.msk [vmem:[%s3 + $0xa4] sm:$0xf] %vm544, %v536
    %587 = vst.msk [vmem:[%s3 + $0xa8] sm:$0xf] %vm544, %v537
    %588 = vst.msk [vmem:[%s3 + $0xac] sm:$0xf] %vm544, %v538
    %589 = vst.msk [vmem:[%s3 + $0xb0] sm:$0xf] %vm544, %v539
    %590 = vst.msk [vmem:[%s3 + $0xb4] sm:$0xf] %vm544, %v540
    %591 = vst.msk [vmem:[%s3 + $0xb8] sm:$0xf] %vm544, %v541
    %592 = vst.msk [vmem:[%s3 + $0xbc] sm:$0xf] %vm544, %v542
    %593 = vst.msk [vmem:[%s3 + $0xc0] sm:$0xf] %vm544, %v543
    // Predicated region
    $region22: #{discriminator_forward.4} parent=1 // pred_check
      _
    $region23: #{discriminator_forward.4} parent=1 // pred_check_branch
      %595 = sbr.rel (0) target = $region25
    $region24: #{discriminator_forward.4} parent=1 // pred_region
      _
    $region25: #{discriminator_forward.4} parent=1 // pred_fallthru
      _
    // Predicated region
    $region26: #{discriminator_forward.4} parent=1 // pred_check
      _
    $region27: #{discriminator_forward.4} parent=1 // pred_check_branch
      %597 = sbr.rel (0) target = $region29
    $region28: #{discriminator_forward.4} parent=1 // pred_region
      _
    $region29: #{discriminator_forward.4} parent=1 // pred_fallthru
      _
    %598 = vsyncpa [#allocation3], 1
    %599 = vsyncpa [#allocation5], 1

// kernel: discriminator_forward.5
$region0: #{discriminator_forward.5}
  #allocation0 [shape = 'u32[]', space=smem, size = 0x4, offset = 0x4, fixed_abs, tag = 'smem constant byte address 0x4 - core index']
  #allocation1 [shape = 'u32[72,128]{1,0:T(1,128)}', space=vmem, size = 0x9000, scoped, tag = 'internal scratch']
  %s0 = inlined_call_operand.vmem [shape: bf16[104,1600], index: 0, kind: input, shape index: {}]
  %s1 = inlined_call_operand.vmem [shape: bf16[1600,128], index: 1, kind: input, shape index: {}]
  %s2 = inlined_call_operand.vmem [shape: f32[1,128], index: 2, kind: input, shape index: {}]
  %s3 = inlined_call_operand.vmem [shape: bf16[104,128], index: 3, kind: output, shape index: {}]
  %s4 = sld [smem:[#allocation0]]
  $region22: #{discriminator_forward.5} parent=0
    _
  %s6 = ssub.s32 1, %s4
  %s7 = scalar_select 0, %s6, %s4
  // Predicated region
  $region2: #{discriminator_forward.5} parent=0 // pred_check
    _
  $region3: #{discriminator_forward.5} parent=0 // pred_check_branch
    %9 = sbr.rel (0) target = $region5
  $region4: #{discriminator_forward.5} parent=0 // pred_region
    _
  $region5: #{discriminator_forward.5} parent=0 // pred_fallthru
    _
  // Predicated region
  $region6: #{discriminator_forward.5} parent=0 // pred_check
    _
  $region7: #{discriminator_forward.5} parent=0 // pred_check_branch
    %11 = sbr.rel (0) target = $region9
  $region8: #{discriminator_forward.5} parent=0 // pred_region
    _
  $region9: #{discriminator_forward.5} parent=0 // pred_fallthru
    _
  // Predicated region
  $region10: #{discriminator_forward.5} parent=0 // pred_check
    _
  $region11: #{discriminator_forward.5} parent=0 // pred_check_branch
    %13 = sbr.rel (0) target = $region13
  $region12: #{discriminator_forward.5} parent=0 // pred_region
    _
  $region13: #{discriminator_forward.5} parent=0 // pred_fallthru
    _
  %v15 = vld [vmem:[%s0] sm:$0xff]
  %v16 = vld [vmem:[%s0 + $0x8] sm:$0xff]
  %v17 = vld [vmem:[%s0 + $0x10] sm:$0xff]
  %v18 = vld [vmem:[%s0 + $0x18] sm:$0xff]
  %v19 = vld [vmem:[%s0 + $0x20] sm:$0xff]
  %v20 = vld [vmem:[%s0 + $0x28] sm:$0xff]
  %v21 = vld [vmem:[%s0 + $0x30] sm:$0xf]
  %v22 = vld [vmem:[%s0 + $0x34] sm:$0xff]
  %v23 = vld [vmem:[%s0 + $0x3c] sm:$0xff]
  %v24 = vld [vmem:[%s0 + $0x44] sm:$0xff]
  %v25 = vld [vmem:[%s0 + $0x4c] sm:$0xff]
  %v26 = vld [vmem:[%s0 + $0x54] sm:$0xff]
  %v27 = vld [vmem:[%s0 + $0x5c] sm:$0xff]
  %v28 = vld [vmem:[%s0 + $0x64] sm:$0xf]
  %v29 = vld [vmem:[%s0 + $0x68] sm:$0xff]
  %v30 = vld [vmem:[%s0 + $0x70] sm:$0xff]
  %v31 = vld [vmem:[%s0 + $0x78] sm:$0xff]
  %v32 = vld [vmem:[%s0 + $0x80] sm:$0xff]
  %v33 = vld [vmem:[%s0 + $0x88] sm:$0xff]
  %v34 = vld [vmem:[%s0 + $0x90] sm:$0xff]
  %v35 = vld [vmem:[%s0 + $0x98] sm:$0xf]
  %v36 = vld [vmem:[%s0 + $0x9c] sm:$0xff]
  %v37 = vld [vmem:[%s0 + $0xa4] sm:$0xff]
  %v38 = vld [vmem:[%s0 + $0xac] sm:$0xff]
  %v39 = vld [vmem:[%s0 + $0xb4] sm:$0xff]
  %v40 = vld [vmem:[%s0 + $0xbc] sm:$0xff]
  %v41 = vld [vmem:[%s0 + $0xc4] sm:$0xff]
  %v42 = vld [vmem:[%s0 + $0xcc] sm:$0xf]
  %v43 = vld [vmem:[%s0 + $0xd0] sm:$0xff]
  %v44 = vld [vmem:[%s0 + $0xd8] sm:$0xff]
  %v45 = vld [vmem:[%s0 + $0xe0] sm:$0xff]
  %v46 = vld [vmem:[%s0 + $0xe8] sm:$0xff]
  %v47 = vld [vmem:[%s0 + $0xf0] sm:$0xff]
  %v48 = vld [vmem:[%s0 + $0xf8] sm:$0xff]
  %v49 = vld [vmem:[%s0 + $0x100] sm:$0xf]
  %v50 = vld [vmem:[%s0 + $0x104] sm:$0xff]
  %v51 = vld [vmem:[%s0 + $0x10c] sm:$0xff]
  %v52 = vld [vmem:[%s0 + $0x114] sm:$0xff]
  %v53 = vld [vmem:[%s0 + $0x11c] sm:$0xff]
  %v54 = vld [vmem:[%s0 + $0x124] sm:$0xff]
  %v55 = vld [vmem:[%s0 + $0x12c] sm:$0xff]
  %v56 = vld [vmem:[%s0 + $0x134] sm:$0xf]
  %v57 = vld [vmem:[%s0 + $0x138] sm:$0xff]
  %v58 = vld [vmem:[%s0 + $0x140] sm:$0xff]
  %v59 = vld [vmem:[%s0 + $0x148] sm:$0xff]
  %v60 = vld [vmem:[%s0 + $0x150] sm:$0xff]
  %v61 = vld [vmem:[%s0 + $0x158] sm:$0xff]
  %v62 = vld [vmem:[%s0 + $0x160] sm:$0xff]
  %v63 = vld [vmem:[%s0 + $0x168] sm:$0xf]
  %v64 = vld [vmem:[%s0 + $0x16c] sm:$0xff]
  %v65 = vld [vmem:[%s0 + $0x174] sm:$0xff]
  %v66 = vld [vmem:[%s0 + $0x17c] sm:$0xff]
  %v67 = vld [vmem:[%s0 + $0x184] sm:$0xff]
  %v68 = vld [vmem:[%s0 + $0x18c] sm:$0xff]
  %v69 = vld [vmem:[%s0 + $0x194] sm:$0xff]
  %v70 = vld [vmem:[%s0 + $0x19c] sm:$0xf]
  %v71 = vld [vmem:[%s0 + $0x1a0] sm:$0xff]
  %v72 = vld [vmem:[%s0 + $0x1a8] sm:$0xff]
  %v73 = vld [vmem:[%s0 + $0x1b0] sm:$0xff]
  %v74 = vld [vmem:[%s0 + $0x1b8] sm:$0xff]
  %v75 = vld [vmem:[%s0 + $0x1c0] sm:$0xff]
  %v76 = vld [vmem:[%s0 + $0x1c8] sm:$0xff]
  %v77 = vld [vmem:[%s0 + $0x1d0] sm:$0xf]
  %v78 = vld [vmem:[%s0 + $0x1d4] sm:$0xff]
  %v79 = vld [vmem:[%s0 + $0x1dc] sm:$0xff]
  %v80 = vld [vmem:[%s0 + $0x1e4] sm:$0xff]
  %v81 = vld [vmem:[%s0 + $0x1ec] sm:$0xff]
  %v82 = vld [vmem:[%s0 + $0x1f4] sm:$0xff]
  %v83 = vld [vmem:[%s0 + $0x1fc] sm:$0xff]
  %v84 = vld [vmem:[%s0 + $0x204] sm:$0xf]
  %v85 = vld [vmem:[%s0 + $0x208] sm:$0xff]
  %v86 = vld [vmem:[%s0 + $0x210] sm:$0xff]
  %v87 = vld [vmem:[%s0 + $0x218] sm:$0xff]
  %v88 = vld [vmem:[%s0 + $0x220] sm:$0xff]
  %v89 = vld [vmem:[%s0 + $0x228] sm:$0xff]
  %v90 = vld [vmem:[%s0 + $0x230] sm:$0xff]
  %v91 = vld [vmem:[%s0 + $0x238] sm:$0xf]
  %v92 = vld [vmem:[%s0 + $0x23c] sm:$0xff]
  %v93 = vld [vmem:[%s0 + $0x244] sm:$0xff]
  %v94 = vld [vmem:[%s0 + $0x24c] sm:$0xff]
  %v95 = vld [vmem:[%s0 + $0x254] sm:$0xff]
  %v96 = vld [vmem:[%s0 + $0x25c] sm:$0xff]
  %v97 = vld [vmem:[%s0 + $0x264] sm:$0xff]
  %v98 = vld [vmem:[%s0 + $0x26c] sm:$0xf]
  %v99 = vld [vmem:[%s0 + $0x270] sm:$0xff]
  %v100 = vld [vmem:[%s0 + $0x278] sm:$0xff]
  %v101 = vld [vmem:[%s0 + $0x280] sm:$0xff]
  %v102 = vld [vmem:[%s0 + $0x288] sm:$0xff]
  %v103 = vld [vmem:[%s0 + $0x290] sm:$0xff]
  %v104 = vld [vmem:[%s0 + $0x298] sm:$0xff]
  %v105 = vld [vmem:[%s0 + $0x2a0] sm:$0xf]
  %v106 = vld [vmem:[%s1] sm:$0xf]
  %v107 = vld [vmem:[%s1 + $0x4] sm:$0xf]
  %v108 = vld [vmem:[%s1 + $0x8] sm:$0xf]
  %v109 = vld [vmem:[%s1 + $0xc] sm:$0xf]
  %v110 = vld [vmem:[%s1 + $0x10] sm:$0xf]
  %v111 = vld [vmem:[%s1 + $0x14] sm:$0xf]
  %v112 = vld [vmem:[%s1 + $0x18] sm:$0xf]
  %v113 = vld [vmem:[%s1 + $0x1c] sm:$0xf]
  %v114 = vld [vmem:[%s1 + $0x20] sm:$0xf]
  %v115 = vld [vmem:[%s1 + $0x24] sm:$0xf]
  %v116 = vld [vmem:[%s1 + $0x28] sm:$0xf]
  %v117 = vld [vmem:[%s1 + $0x2c] sm:$0xf]
  %v118 = vld [vmem:[%s1 + $0x30] sm:$0xf]
  %v119 = vld [vmem:[%s1 + $0x34] sm:$0xf]
  %v120 = vld [vmem:[%s1 + $0x38] sm:$0xf]
  %v121 = vld [vmem:[%s1 + $0x3c] sm:$0xf]
  %v122 = vld [vmem:[%s1 + $0x40] sm:$0xf]
  %v123 = vld [vmem:[%s1 + $0x44] sm:$0xf]
  %v124 = vld [vmem:[%s1 + $0x48] sm:$0xf]
  %v125 = vld [vmem:[%s1 + $0x4c] sm:$0xf]
  %v126 = vld [vmem:[%s1 + $0x50] sm:$0xf]
  %v127 = vld [vmem:[%s1 + $0x54] sm:$0xf]
  %v128 = vld [vmem:[%s1 + $0x58] sm:$0xf]
  %v129 = vld [vmem:[%s1 + $0x5c] sm:$0xf]
  %v130 = vld [vmem:[%s1 + $0x60] sm:$0xf]
  %v131 = vld [vmem:[%s1 + $0x64] sm:$0xf]
  %v132 = vld [vmem:[%s1 + $0x68] sm:$0xf]
  %v133 = vld [vmem:[%s1 + $0x6c] sm:$0xf]
  %v134 = vld [vmem:[%s1 + $0x70] sm:$0xf]
  %v135 = vld [vmem:[%s1 + $0x74] sm:$0xf]
  %v136 = vld [vmem:[%s1 + $0x78] sm:$0xf]
  %v137 = vld [vmem:[%s1 + $0x7c] sm:$0xf]
  %v138 = vld [vmem:[%s1 + $0x80] sm:$0xf]
  %v139 = vld [vmem:[%s1 + $0x84] sm:$0xf]
  %v140 = vld [vmem:[%s1 + $0x88] sm:$0xf]
  %v141 = vld [vmem:[%s1 + $0x8c] sm:$0xf]
  %v142 = vld [vmem:[%s1 + $0x90] sm:$0xf]
  %v143 = vld [vmem:[%s1 + $0x94] sm:$0xf]
  %v144 = vld [vmem:[%s1 + $0x98] sm:$0xf]
  %v145 = vld [vmem:[%s1 + $0x9c] sm:$0xf]
  %v146 = vld [vmem:[%s1 + $0xa0] sm:$0xf]
  %v147 = vld [vmem:[%s1 + $0xa4] sm:$0xf]
  %v148 = vld [vmem:[%s1 + $0xa8] sm:$0xf]
  %v149 = vld [vmem:[%s1 + $0xac] sm:$0xf]
  %v150 = vld [vmem:[%s1 + $0xb0] sm:$0xf]
  %v151 = vld [vmem:[%s1 + $0xb4] sm:$0xf]
  %v152 = vld [vmem:[%s1 + $0xb8] sm:$0xf]
  %v153 = vld [vmem:[%s1 + $0xbc] sm:$0xf]
  %v154 = vld [vmem:[%s1 + $0xc0] sm:$0xf]
  %v155 = vld [vmem:[%s1 + $0xc4] sm:$0xf]
  %v156 = vld [vmem:[%s1 + $0xc8] sm:$0xf]
  %v157 = vld [vmem:[%s1 + $0xcc] sm:$0xf]
  %v158 = vld [vmem:[%s1 + $0xd0] sm:$0xf]
  %v159 = vld [vmem:[%s1 + $0xd4] sm:$0xf]
  %v160 = vld [vmem:[%s1 + $0xd8] sm:$0xf]
  %v161 = vld [vmem:[%s1 + $0xdc] sm:$0xf]
  %v162 = vld [vmem:[%s1 + $0xe0] sm:$0xf]
  %v163 = vld [vmem:[%s1 + $0xe4] sm:$0xf]
  %v164 = vld [vmem:[%s1 + $0xe8] sm:$0xf]
  %v165 = vld [vmem:[%s1 + $0xec] sm:$0xf]
  %v166 = vld [vmem:[%s1 + $0xf0] sm:$0xf]
  %v167 = vld [vmem:[%s1 + $0xf4] sm:$0xf]
  %v168 = vld [vmem:[%s1 + $0xf8] sm:$0xf]
  %v169 = vld [vmem:[%s1 + $0xfc] sm:$0xf]
  %v170 = vld [vmem:[%s1 + $0x100] sm:$0xf]
  %v171 = vld [vmem:[%s1 + $0x104] sm:$0xf]
  %v172 = vld [vmem:[%s1 + $0x108] sm:$0xf]
  %v173 = vld [vmem:[%s1 + $0x10c] sm:$0xf]
  %v174 = vld [vmem:[%s1 + $0x110] sm:$0xf]
  %v175 = vld [vmem:[%s1 + $0x114] sm:$0xf]
  %v176 = vld [vmem:[%s1 + $0x118] sm:$0xf]
  %v177 = vld [vmem:[%s1 + $0x11c] sm:$0xf]
  %v178 = vld [vmem:[%s1 + $0x120] sm:$0xf]
  %v179 = vld [vmem:[%s1 + $0x124] sm:$0xf]
  %v180 = vld [vmem:[%s1 + $0x128] sm:$0xf]
  %v181 = vld [vmem:[%s1 + $0x12c] sm:$0xf]
  %v182 = vld [vmem:[%s1 + $0x130] sm:$0xf]
  %v183 = vld [vmem:[%s1 + $0x134] sm:$0xf]
  %v184 = vld [vmem:[%s1 + $0x138] sm:$0xf]
  %v185 = vld [vmem:[%s1 + $0x13c] sm:$0xf]
  %v186 = vld [vmem:[%s1 + $0x140] sm:$0xf]
  %v187 = vld [vmem:[%s1 + $0x144] sm:$0xf]
  %v188 = vld [vmem:[%s1 + $0x148] sm:$0xf]
  %v189 = vld [vmem:[%s1 + $0x14c] sm:$0xf]
  %v190 = vld [vmem:[%s1 + $0x150] sm:$0xf]
  %v191 = vld [vmem:[%s1 + $0x154] sm:$0xf]
  %v192 = vld [vmem:[%s1 + $0x158] sm:$0xf]
  %v193 = vld [vmem:[%s1 + $0x15c] sm:$0xf]
  %v194 = vld [vmem:[%s1 + $0x160] sm:$0xf]
  %v195 = vld [vmem:[%s1 + $0x164] sm:$0xf]
  %v196 = vld [vmem:[%s1 + $0x168] sm:$0xf]
  %v197 = vld [vmem:[%s1 + $0x16c] sm:$0xf]
  %v198 = vld [vmem:[%s1 + $0x170] sm:$0xf]
  %v199 = vld [vmem:[%s1 + $0x174] sm:$0xf]
  %v200 = vld [vmem:[%s1 + $0x178] sm:$0xf]
  %v201 = vld [vmem:[%s1 + $0x17c] sm:$0xf]
  %v202 = vld [vmem:[%s1 + $0x180] sm:$0xf]
  %v203 = vld [vmem:[%s1 + $0x184] sm:$0xf]
  %v204 = vld [vmem:[%s1 + $0x188] sm:$0xf]
  %v205 = vld [vmem:[%s1 + $0x18c] sm:$0xf]
  %v206 = vld [vmem:[%s1 + $0x190] sm:$0xf]
  %v207 = vld [vmem:[%s1 + $0x194] sm:$0xf]
  %v208 = vld [vmem:[%s1 + $0x198] sm:$0xf]
  %v209 = vld [vmem:[%s1 + $0x19c] sm:$0xf]
  %v210 = vld [vmem:[%s1 + $0x1a0] sm:$0xf]
  %v211 = vld [vmem:[%s1 + $0x1a4] sm:$0xf]
  %v212 = vld [vmem:[%s1 + $0x1a8] sm:$0xf]
  %v213 = vld [vmem:[%s1 + $0x1ac] sm:$0xf]
  %v214 = vld [vmem:[%s1 + $0x1b0] sm:$0xf]
  %v215 = vld [vmem:[%s1 + $0x1b4] sm:$0xf]
  %v216 = vld [vmem:[%s1 + $0x1b8] sm:$0xf]
  %v217 = vld [vmem:[%s1 + $0x1bc] sm:$0xf]
  %v218 = vld [vmem:[%s1 + $0x1c0] sm:$0xf]
  %v219 = vld [vmem:[%s1 + $0x1c4] sm:$0xf]
  %v220 = vld [vmem:[%s1 + $0x1c8] sm:$0xf]
  %v221 = vld [vmem:[%s1 + $0x1cc] sm:$0xf]
  %v222 = vld [vmem:[%s1 + $0x1d0] sm:$0xf]
  %v223 = vld [vmem:[%s1 + $0x1d4] sm:$0xf]
  %v224 = vld [vmem:[%s1 + $0x1d8] sm:$0xf]
  %v225 = vld [vmem:[%s1 + $0x1dc] sm:$0xf]
  %v226 = vld [vmem:[%s1 + $0x1e0] sm:$0xf]
  %v227 = vld [vmem:[%s1 + $0x1e4] sm:$0xf]
  %v228 = vld [vmem:[%s1 + $0x1e8] sm:$0xf]
  %v229 = vld [vmem:[%s1 + $0x1ec] sm:$0xf]
  %v230 = vld [vmem:[%s1 + $0x1f0] sm:$0xf]
  %v231 = vld [vmem:[%s1 + $0x1f4] sm:$0xf]
  %v232 = vld [vmem:[%s1 + $0x1f8] sm:$0xf]
  %v233 = vld [vmem:[%s1 + $0x1fc] sm:$0xf]
  %v234 = vld [vmem:[%s1 + $0x200] sm:$0xf]
  %v235 = vld [vmem:[%s1 + $0x204] sm:$0xf]
  %v236 = vld [vmem:[%s1 + $0x208] sm:$0xf]
  %v237 = vld [vmem:[%s1 + $0x20c] sm:$0xf]
  %v238 = vld [vmem:[%s1 + $0x210] sm:$0xf]
  %v239 = vld [vmem:[%s1 + $0x214] sm:$0xf]
  %v240 = vld [vmem:[%s1 + $0x218] sm:$0xf]
  %v241 = vld [vmem:[%s1 + $0x21c] sm:$0xf]
  %v242 = vld [vmem:[%s1 + $0x220] sm:$0xf]
  %v243 = vld [vmem:[%s1 + $0x224] sm:$0xf]
  %v244 = vld [vmem:[%s1 + $0x228] sm:$0xf]
  %v245 = vld [vmem:[%s1 + $0x22c] sm:$0xf]
  %v246 = vld [vmem:[%s1 + $0x230] sm:$0xf]
  %v247 = vld [vmem:[%s1 + $0x234] sm:$0xf]
  %v248 = vld [vmem:[%s1 + $0x238] sm:$0xf]
  %v249 = vld [vmem:[%s1 + $0x23c] sm:$0xf]
  %v250 = vld [vmem:[%s1 + $0x240] sm:$0xf]
  %v251 = vld [vmem:[%s1 + $0x244] sm:$0xf]
  %v252 = vld [vmem:[%s1 + $0x248] sm:$0xf]
  %v253 = vld [vmem:[%s1 + $0x24c] sm:$0xf]
  %v254 = vld [vmem:[%s1 + $0x250] sm:$0xf]
  %v255 = vld [vmem:[%s1 + $0x254] sm:$0xf]
  %v256 = vld [vmem:[%s1 + $0x258] sm:$0xf]
  %v257 = vld [vmem:[%s1 + $0x25c] sm:$0xf]
  %v258 = vld [vmem:[%s1 + $0x260] sm:$0xf]
  %v259 = vld [vmem:[%s1 + $0x264] sm:$0xf]
  %v260 = vld [vmem:[%s1 + $0x268] sm:$0xf]
  %v261 = vld [vmem:[%s1 + $0x26c] sm:$0xf]
  %v262 = vld [vmem:[%s1 + $0x270] sm:$0xf]
  %v263 = vld [vmem:[%s1 + $0x274] sm:$0xf]
  %v264 = vld [vmem:[%s1 + $0x278] sm:$0xf]
  %v265 = vld [vmem:[%s1 + $0x27c] sm:$0xf]
  %v266 = vld [vmem:[%s1 + $0x280] sm:$0xf]
  %v267 = vld [vmem:[%s1 + $0x284] sm:$0xf]
  %v268 = vld [vmem:[%s1 + $0x288] sm:$0xf]
  %v269 = vld [vmem:[%s1 + $0x28c] sm:$0xf]
  %v270 = vld [vmem:[%s1 + $0x290] sm:$0xf]
  %v271 = vld [vmem:[%s1 + $0x294] sm:$0xf]
  %v272 = vld [vmem:[%s1 + $0x298] sm:$0xf]
  %v273 = vld [vmem:[%s1 + $0x29c] sm:$0xf]
  %v274 = vld [vmem:[%s1 + $0x2a0] sm:$0xf]
  %v275 = vld [vmem:[%s1 + $0x2a4] sm:$0xf]
  %v276 = vld [vmem:[%s1 + $0x2a8] sm:$0xf]
  %v277 = vld [vmem:[%s1 + $0x2ac] sm:$0xf]
  %v278 = vld [vmem:[%s1 + $0x2b0] sm:$0xf]
  %v279 = vld [vmem:[%s1 + $0x2b4] sm:$0xf]
  %v280 = vld [vmem:[%s1 + $0x2b8] sm:$0xf]
  %v281 = vld [vmem:[%s1 + $0x2bc] sm:$0xf]
  %v282 = vld [vmem:[%s1 + $0x2c0] sm:$0xf]
  %v283 = vld [vmem:[%s1 + $0x2c4] sm:$0xf]
  %v284 = vld [vmem:[%s1 + $0x2c8] sm:$0xf]
  %v285 = vld [vmem:[%s1 + $0x2cc] sm:$0xf]
  %v286 = vld [vmem:[%s1 + $0x2d0] sm:$0xf]
  %v287 = vld [vmem:[%s1 + $0x2d4] sm:$0xf]
  %v288 = vld [vmem:[%s1 + $0x2d8] sm:$0xf]
  %v289 = vld [vmem:[%s1 + $0x2dc] sm:$0xf]
  %v290 = vld [vmem:[%s1 + $0x2e0] sm:$0xf]
  %v291 = vld [vmem:[%s1 + $0x2e4] sm:$0xf]
  %v292 = vld [vmem:[%s1 + $0x2e8] sm:$0xf]
  %v293 = vld [vmem:[%s1 + $0x2ec] sm:$0xf]
  %v294 = vld [vmem:[%s1 + $0x2f0] sm:$0xf]
  %v295 = vld [vmem:[%s1 + $0x2f4] sm:$0xf]
  %v296 = vld [vmem:[%s1 + $0x2f8] sm:$0xf]
  %v297 = vld [vmem:[%s1 + $0x2fc] sm:$0xf]
  %v298 = vld [vmem:[%s1 + $0x300] sm:$0xf]
  %v299 = vld [vmem:[%s1 + $0x304] sm:$0xf]
  %v300 = vld [vmem:[%s1 + $0x308] sm:$0xf]
  %v301 = vld [vmem:[%s1 + $0x30c] sm:$0xf]
  %v302 = vld [vmem:[%s1 + $0x310] sm:$0xf]
  %v303 = vld [vmem:[%s1 + $0x314] sm:$0xf]
  %v304 = vld [vmem:[%s1 + $0x318] sm:$0xf]
  %v305 = vld [vmem:[%s1 + $0x31c] sm:$0xf]
  %v306 = vld [vmem:[%s2] sm:$0x1]
  %v308 = vperm.slane %v306, 0
  %v401 = vunpack.c.l.b16 %v15
  %v402 = vunpack.c.h.b16 %v15
  %v403 = vunpack.c.l.b16 %v16
  %v404 = vunpack.c.h.b16 %v16
  %v405 = vunpack.c.l.b16 %v17
  %v406 = vunpack.c.h.b16 %v17
  %v407 = vunpack.c.l.b16 %v18
  %v408 = vunpack.c.h.b16 %v18
  %v409 = vunpack.c.l.b16 %v19
  %v410 = vunpack.c.h.b16 %v19
  %v411 = vunpack.c.l.b16 %v20
  %v412 = vunpack.c.h.b16 %v20
  %v413 = vunpack.c.l.b16 %v21
  %v414 = vunpack.c.l.b16 %v22
  %v415 = vunpack.c.h.b16 %v22
  %v416 = vunpack.c.l.b16 %v23
  %v417 = vunpack.c.h.b16 %v23
  %v418 = vunpack.c.l.b16 %v24
  %v419 = vunpack.c.h.b16 %v24
  %v420 = vunpack.c.l.b16 %v25
  %v421 = vunpack.c.h.b16 %v25
  %v422 = vunpack.c.l.b16 %v26
  %v423 = vunpack.c.h.b16 %v26
  %v424 = vunpack.c.l.b16 %v27
  %v425 = vunpack.c.h.b16 %v27
  %v426 = vunpack.c.l.b16 %v28
  %v427 = vunpack.c.l.b16 %v29
  %v428 = vunpack.c.h.b16 %v29
  %v429 = vunpack.c.l.b16 %v30
  %v430 = vunpack.c.h.b16 %v30
  %v431 = vunpack.c.l.b16 %v31
  %v432 = vunpack.c.h.b16 %v31
  %v433 = vunpack.c.l.b16 %v32
  %v434 = vunpack.c.h.b16 %v32
  %v435 = vunpack.c.l.b16 %v33
  %v436 = vunpack.c.h.b16 %v33
  %v437 = vunpack.c.l.b16 %v34
  %v438 = vunpack.c.h.b16 %v34
  %v439 = vunpack.c.l.b16 %v35
  %v440 = vunpack.c.l.b16 %v36
  %v441 = vunpack.c.h.b16 %v36
  %v442 = vunpack.c.l.b16 %v37
  %v443 = vunpack.c.h.b16 %v37
  %v444 = vunpack.c.l.b16 %v38
  %v445 = vunpack.c.h.b16 %v38
  %v446 = vunpack.c.l.b16 %v39
  %v447 = vunpack.c.h.b16 %v39
  %v448 = vunpack.c.l.b16 %v40
  %v449 = vunpack.c.h.b16 %v40
  %v450 = vunpack.c.l.b16 %v41
  %v451 = vunpack.c.h.b16 %v41
  %v452 = vunpack.c.l.b16 %v42
  %v453 = vunpack.c.l.b16 %v43
  %v454 = vunpack.c.h.b16 %v43
  %v455 = vunpack.c.l.b16 %v44
  %v456 = vunpack.c.h.b16 %v44
  %v457 = vunpack.c.l.b16 %v45
  %v458 = vunpack.c.h.b16 %v45
  %v459 = vunpack.c.l.b16 %v46
  %v460 = vunpack.c.h.b16 %v46
  %v461 = vunpack.c.l.b16 %v47
  %v462 = vunpack.c.h.b16 %v47
  %v463 = vunpack.c.l.b16 %v48
  %v464 = vunpack.c.h.b16 %v48
  %v465 = vunpack.c.l.b16 %v49
  %v466 = vunpack.c.l.b16 %v50
  %v467 = vunpack.c.h.b16 %v50
  %v468 = vunpack.c.l.b16 %v51
  %v469 = vunpack.c.h.b16 %v51
  %v470 = vunpack.c.l.b16 %v52
  %v471 = vunpack.c.h.b16 %v52
  %v472 = vunpack.c.l.b16 %v53
  %v473 = vunpack.c.h.b16 %v53
  %v474 = vunpack.c.l.b16 %v54
  %v475 = vunpack.c.h.b16 %v54
  %v476 = vunpack.c.l.b16 %v55
  %v477 = vunpack.c.h.b16 %v55
  %v478 = vunpack.c.l.b16 %v56
  %v479 = vunpack.c.l.b16 %v57
  %v480 = vunpack.c.h.b16 %v57
  %v481 = vunpack.c.l.b16 %v58
  %v482 = vunpack.c.h.b16 %v58
  %v483 = vunpack.c.l.b16 %v59
  %v484 = vunpack.c.h.b16 %v59
  %v485 = vunpack.c.l.b16 %v60
  %v486 = vunpack.c.h.b16 %v60
  %v487 = vunpack.c.l.b16 %v61
  %v488 = vunpack.c.h.b16 %v61
  %v489 = vunpack.c.l.b16 %v62
  %v490 = vunpack.c.h.b16 %v62
  %v491 = vunpack.c.l.b16 %v63
  %v492 = vunpack.c.l.b16 %v64
  %v493 = vunpack.c.h.b16 %v64
  %v494 = vunpack.c.l.b16 %v65
  %v495 = vunpack.c.h.b16 %v65
  %v496 = vunpack.c.l.b16 %v66
  %v497 = vunpack.c.h.b16 %v66
  %v498 = vunpack.c.l.b16 %v67
  %v499 = vunpack.c.h.b16 %v67
  %v500 = vunpack.c.l.b16 %v68
  %v501 = vunpack.c.h.b16 %v68
  %v502 = vunpack.c.l.b16 %v69
  %v503 = vunpack.c.h.b16 %v69
  %v504 = vunpack.c.l.b16 %v70
  %v505 = vunpack.c.l.b16 %v71
  %v506 = vunpack.c.h.b16 %v71
  %v507 = vunpack.c.l.b16 %v72
  %v508 = vunpack.c.h.b16 %v72
  %v509 = vunpack.c.l.b16 %v73
  %v510 = vunpack.c.h.b16 %v73
  %v511 = vunpack.c.l.b16 %v74
  %v512 = vunpack.c.h.b16 %v74
  %v513 = vunpack.c.l.b16 %v75
  %v514 = vunpack.c.h.b16 %v75
  %v515 = vunpack.c.l.b16 %v76
  %v516 = vunpack.c.h.b16 %v76
  %v517 = vunpack.c.l.b16 %v77
  %v518 = vunpack.c.l.b16 %v78
  %v519 = vunpack.c.h.b16 %v78
  %v520 = vunpack.c.l.b16 %v79
  %v521 = vunpack.c.h.b16 %v79
  %v522 = vunpack.c.l.b16 %v80
  %v523 = vunpack.c.h.b16 %v80
  %v524 = vunpack.c.l.b16 %v81
  %v525 = vunpack.c.h.b16 %v81
  %v526 = vunpack.c.l.b16 %v82
  %v527 = vunpack.c.h.b16 %v82
  %v528 = vunpack.c.l.b16 %v83
  %v529 = vunpack.c.h.b16 %v83
  %v530 = vunpack.c.l.b16 %v84
  %v531 = vunpack.c.l.b16 %v85
  %v532 = vunpack.c.h.b16 %v85
  %v533 = vunpack.c.l.b16 %v86
  %v534 = vunpack.c.h.b16 %v86
  %v535 = vunpack.c.l.b16 %v87
  %v536 = vunpack.c.h.b16 %v87
  %v537 = vunpack.c.l.b16 %v88
  %v538 = vunpack.c.h.b16 %v88
  %v539 = vunpack.c.l.b16 %v89
  %v540 = vunpack.c.h.b16 %v89
  %v541 = vunpack.c.l.b16 %v90
  %v542 = vunpack.c.h.b16 %v90
  %v543 = vunpack.c.l.b16 %v91
  %v544 = vunpack.c.l.b16 %v92
  %v545 = vunpack.c.h.b16 %v92
  %v546 = vunpack.c.l.b16 %v93
  %v547 = vunpack.c.h.b16 %v93
  %v548 = vunpack.c.l.b16 %v94
  %v549 = vunpack.c.h.b16 %v94
  %v550 = vunpack.c.l.b16 %v95
  %v551 = vunpack.c.h.b16 %v95
  %v552 = vunpack.c.l.b16 %v96
  %v553 = vunpack.c.h.b16 %v96
  %v554 = vunpack.c.l.b16 %v97
  %v555 = vunpack.c.h.b16 %v97
  %v556 = vunpack.c.l.b16 %v98
  %v557 = vunpack.c.l.b16 %v99
  %v558 = vunpack.c.h.b16 %v99
  %v559 = vunpack.c.l.b16 %v100
  %v560 = vunpack.c.h.b16 %v100
  %v561 = vunpack.c.l.b16 %v101
  %v562 = vunpack.c.h.b16 %v101
  %v563 = vunpack.c.l.b16 %v102
  %v564 = vunpack.c.h.b16 %v102
  %v565 = vunpack.c.l.b16 %v103
  %v566 = vunpack.c.h.b16 %v103
  %v567 = vunpack.c.l.b16 %v104
  %v568 = vunpack.c.h.b16 %v104
  %v569 = vunpack.c.l.b16 %v105
  %v570 = vpack.c.b16 %v414, %v401
  %v571 = vpack.c.b16 %v415, %v402
  %v572 = vpack.c.b16 %v416, %v403
  %v573 = vpack.c.b16 %v417, %v404
  %v574 = vpack.c.b16 %v418, %v405
  %v575 = vpack.c.b16 %v419, %v406
  %v576 = vpack.c.b16 %v420, %v407
  %v577 = vpack.c.b16 %v421, %v408
  %v578 = vpack.c.b16 %v422, %v409
  %v579 = vpack.c.b16 %v423, %v410
  %v580 = vpack.c.b16 %v424, %v411
  %v581 = vpack.c.b16 %v425, %v412
  %v582 = vpack.c.b16 %v426, %v413
  %v583 = vpack.c.b16 %v440, %v427
  %v584 = vpack.c.b16 %v441, %v428
  %v585 = vpack.c.b16 %v442, %v429
  %v586 = vpack.c.b16 %v443, %v430
  %v587 = vpack.c.b16 %v444, %v431
  %v588 = vpack.c.b16 %v445, %v432
  %v589 = vpack.c.b16 %v446, %v433
  %v590 = vpack.c.b16 %v447, %v434
  %v591 = vpack.c.b16 %v448, %v435
  %v592 = vpack.c.b16 %v449, %v436
  %v593 = vpack.c.b16 %v450, %v437
  %v594 = vpack.c.b16 %v451, %v438
  %v595 = vpack.c.b16 %v452, %v439
  %v596 = vpack.c.b16 %v466, %v453
  %v597 = vpack.c.b16 %v467, %v454
  %v598 = vpack.c.b16 %v468, %v455
  %v599 = vpack.c.b16 %v469, %v456
  %v600 = vpack.c.b16 %v470, %v457
  %v601 = vpack.c.b16 %v471, %v458
  %v602 = vpack.c.b16 %v472, %v459
  %v603 = vpack.c.b16 %v473, %v460
  %v604 = vpack.c.b16 %v474, %v461
  %v605 = vpack.c.b16 %v475, %v462
  %v606 = vpack.c.b16 %v476, %v463
  %v607 = vpack.c.b16 %v477, %v464
  %v608 = vpack.c.b16 %v478, %v465
  %v609 = vpack.c.b16 %v492, %v479
  %v610 = vpack.c.b16 %v493, %v480
  %v611 = vpack.c.b16 %v494, %v481
  %v612 = vpack.c.b16 %v495, %v482
  %v613 = vpack.c.b16 %v496, %v483
  %v614 = vpack.c.b16 %v497, %v484
  %v615 = vpack.c.b16 %v498, %v485
  %v616 = vpack.c.b16 %v499, %v486
  %v617 = vpack.c.b16 %v500, %v487
  %v618 = vpack.c.b16 %v501, %v488
  %v619 = vpack.c.b16 %v502, %v489
  %v620 = vpack.c.b16 %v503, %v490
  %v621 = vpack.c.b16 %v504, %v491
  %v622 = vpack.c.b16 %v518, %v505
  %v623 = vpack.c.b16 %v519, %v506
  %v624 = vpack.c.b16 %v520, %v507
  %v625 = vpack.c.b16 %v521, %v508
  %v626 = vpack.c.b16 %v522, %v509
  %v627 = vpack.c.b16 %v523, %v510
  %v628 = vpack.c.b16 %v524, %v511
  %v629 = vpack.c.b16 %v525, %v512
  %v630 = vpack.c.b16 %v526, %v513
  %v631 = vpack.c.b16 %v527, %v514
  %v632 = vpack.c.b16 %v528, %v515
  %v633 = vpack.c.b16 %v529, %v516
  %v634 = vpack.c.b16 %v530, %v517
  %v635 = vpack.c.b16 %v544, %v531
  %v636 = vpack.c.b16 %v545, %v532
  %v637 = vpack.c.b16 %v546, %v533
  %v638 = vpack.c.b16 %v547, %v534
  %v639 = vpack.c.b16 %v548, %v535
  %v640 = vpack.c.b16 %v549, %v536
  %v641 = vpack.c.b16 %v550, %v537
  %v642 = vpack.c.b16 %v551, %v538
  %v643 = vpack.c.b16 %v552, %v539
  %v644 = vpack.c.b16 %v553, %v540
  %v645 = vpack.c.b16 %v554, %v541
  %v646 = vpack.c.b16 %v555, %v542
  %v647 = vpack.c.b16 %v556, %v543
  %v648 = vpack.c.b16 %v557, %v557
  %v649 = vpack.c.b16 %v558, %v558
  %v650 = vpack.c.b16 %v559, %v559
  %v651 = vpack.c.b16 %v560, %v560
  %v652 = vpack.c.b16 %v561, %v561
  %v653 = vpack.c.b16 %v562, %v562
  %v654 = vpack.c.b16 %v563, %v563
  %v655 = vpack.c.b16 %v564, %v564
  %v656 = vpack.c.b16 %v565, %v565
  %v657 = vpack.c.b16 %v566, %v566
  %v658 = vpack.c.b16 %v567, %v567
  %v659 = vpack.c.b16 %v568, %v568
  %v660 = vpack.c.b16 %v569, %v569
  %v945 = vunpack.c.l.b16 %v106
  %v946 = vunpack.c.l.b16 %v107
  %v947 = vunpack.c.l.b16 %v108
  %v948 = vunpack.c.l.b16 %v109
  %v949 = vunpack.c.l.b16 %v110
  %v950 = vunpack.c.l.b16 %v111
  %v951 = vunpack.c.l.b16 %v112
  %v952 = vunpack.c.l.b16 %v113
  %v953 = vunpack.c.l.b16 %v114
  %v954 = vunpack.c.l.b16 %v115
  %v955 = vunpack.c.l.b16 %v116
  %v956 = vunpack.c.l.b16 %v117
  %v957 = vunpack.c.l.b16 %v118
  %v958 = vunpack.c.l.b16 %v119
  %v959 = vunpack.c.l.b16 %v120
  %v960 = vunpack.c.l.b16 %v121
  %v961 = vunpack.c.l.b16 %v122
  %v962 = vunpack.c.l.b16 %v123
  %v963 = vunpack.c.l.b16 %v124
  %v964 = vunpack.c.l.b16 %v125
  %v965 = vunpack.c.l.b16 %v126
  %v966 = vunpack.c.l.b16 %v127
  %v967 = vunpack.c.l.b16 %v128
  %v968 = vunpack.c.l.b16 %v129
  %v969 = vunpack.c.l.b16 %v130
  %v970 = vunpack.c.l.b16 %v131
  %v971 = vunpack.c.l.b16 %v132
  %v972 = vunpack.c.l.b16 %v133
  %v973 = vunpack.c.l.b16 %v134
  %v974 = vunpack.c.l.b16 %v135
  %v975 = vunpack.c.l.b16 %v136
  %v976 = vunpack.c.l.b16 %v137
  %v977 = vunpack.c.l.b16 %v138
  %v978 = vunpack.c.l.b16 %v139
  %v979 = vunpack.c.l.b16 %v140
  %v980 = vunpack.c.l.b16 %v141
  %v981 = vunpack.c.l.b16 %v142
  %v982 = vunpack.c.l.b16 %v143
  %v983 = vunpack.c.l.b16 %v144
  %v984 = vunpack.c.l.b16 %v145
  %v985 = vunpack.c.l.b16 %v146
  %v986 = vunpack.c.l.b16 %v147
  %v987 = vunpack.c.l.b16 %v148
  %v988 = vunpack.c.l.b16 %v149
  %v989 = vunpack.c.l.b16 %v150
  %v990 = vunpack.c.l.b16 %v151
  %v991 = vunpack.c.l.b16 %v152
  %v992 = vunpack.c.l.b16 %v153
  %v993 = vunpack.c.l.b16 %v154
  %v994 = vunpack.c.l.b16 %v155
  %v995 = vunpack.c.l.b16 %v156
  %v996 = vunpack.c.l.b16 %v157
  %v997 = vunpack.c.l.b16 %v158
  %v998 = vunpack.c.l.b16 %v159
  %v999 = vunpack.c.l.b16 %v160
  %v1000 = vunpack.c.l.b16 %v161
  %v1001 = vunpack.c.l.b16 %v162
  %v1002 = vunpack.c.l.b16 %v163
  %v1003 = vunpack.c.l.b16 %v164
  %v1004 = vunpack.c.l.b16 %v165
  %v1005 = vunpack.c.l.b16 %v166
  %v1006 = vunpack.c.l.b16 %v167
  %v1007 = vunpack.c.l.b16 %v168
  %v1008 = vunpack.c.l.b16 %v169
  %v1009 = vunpack.c.l.b16 %v170
  %v1010 = vunpack.c.l.b16 %v171
  %v1011 = vunpack.c.l.b16 %v172
  %v1012 = vunpack.c.l.b16 %v173
  %v1013 = vunpack.c.l.b16 %v174
  %v1014 = vunpack.c.l.b16 %v175
  %v1015 = vunpack.c.l.b16 %v176
  %v1016 = vunpack.c.l.b16 %v177
  %v1017 = vunpack.c.l.b16 %v178
  %v1018 = vunpack.c.l.b16 %v179
  %v1019 = vunpack.c.l.b16 %v180
  %v1020 = vunpack.c.l.b16 %v181
  %v1021 = vunpack.c.l.b16 %v182
  %v1022 = vunpack.c.l.b16 %v183
  %v1023 = vunpack.c.l.b16 %v184
  %v1024 = vunpack.c.l.b16 %v185
  %v1025 = vunpack.c.l.b16 %v186
  %v1026 = vunpack.c.l.b16 %v187
  %v1027 = vunpack.c.l.b16 %v188
  %v1028 = vunpack.c.l.b16 %v189
  %v1029 = vunpack.c.l.b16 %v190
  %v1030 = vunpack.c.l.b16 %v191
  %v1031 = vunpack.c.l.b16 %v192
  %v1032 = vunpack.c.l.b16 %v193
  %v1033 = vunpack.c.l.b16 %v194
  %v1034 = vunpack.c.l.b16 %v195
  %v1035 = vunpack.c.l.b16 %v196
  %v1036 = vunpack.c.l.b16 %v197
  %v1037 = vunpack.c.l.b16 %v198
  %v1038 = vunpack.c.l.b16 %v199
  %v1039 = vunpack.c.l.b16 %v200
  %v1040 = vunpack.c.l.b16 %v201
  %v1041 = vunpack.c.l.b16 %v202
  %v1042 = vunpack.c.l.b16 %v203
  %v1043 = vunpack.c.l.b16 %v204
  %v1044 = vunpack.c.l.b16 %v205
  %v1045 = vunpack.c.l.b16 %v206
  %v1046 = vunpack.c.l.b16 %v207
  %v1047 = vunpack.c.l.b16 %v208
  %v1048 = vunpack.c.l.b16 %v209
  %v1049 = vunpack.c.l.b16 %v210
  %v1050 = vunpack.c.l.b16 %v211
  %v1051 = vunpack.c.l.b16 %v212
  %v1052 = vunpack.c.l.b16 %v213
  %v1053 = vunpack.c.l.b16 %v214
  %v1054 = vunpack.c.l.b16 %v215
  %v1055 = vunpack.c.l.b16 %v216
  %v1056 = vunpack.c.l.b16 %v217
  %v1057 = vunpack.c.l.b16 %v218
  %v1058 = vunpack.c.l.b16 %v219
  %v1059 = vunpack.c.l.b16 %v220
  %v1060 = vunpack.c.l.b16 %v221
  %v1061 = vunpack.c.l.b16 %v222
  %v1062 = vunpack.c.l.b16 %v223
  %v1063 = vunpack.c.l.b16 %v224
  %v1064 = vunpack.c.l.b16 %v225
  %v1065 = vunpack.c.l.b16 %v226
  %v1066 = vunpack.c.l.b16 %v227
  %v1067 = vunpack.c.l.b16 %v228
  %v1068 = vunpack.c.l.b16 %v229
  %v1069 = vunpack.c.l.b16 %v230
  %v1070 = vunpack.c.l.b16 %v231
  %v1071 = vunpack.c.l.b16 %v232
  %v1072 = vunpack.c.l.b16 %v233
  %v1073 = vunpack.c.l.b16 %v234
  %v1074 = vunpack.c.l.b16 %v235
  %v1075 = vunpack.c.l.b16 %v236
  %v1076 = vunpack.c.l.b16 %v237
  %v1077 = vunpack.c.l.b16 %v238
  %v1078 = vunpack.c.l.b16 %v239
  %v1079 = vunpack.c.l.b16 %v240
  %v1080 = vunpack.c.l.b16 %v241
  %v1081 = vunpack.c.l.b16 %v242
  %v1082 = vunpack.c.l.b16 %v243
  %v1083 = vunpack.c.l.b16 %v244
  %v1084 = vunpack.c.l.b16 %v245
  %v1085 = vunpack.c.l.b16 %v246
  %v1086 = vunpack.c.l.b16 %v247
  %v1087 = vunpack.c.l.b16 %v248
  %v1088 = vunpack.c.l.b16 %v249
  %v1089 = vunpack.c.l.b16 %v250
  %v1090 = vunpack.c.l.b16 %v251
  %v1091 = vunpack.c.l.b16 %v252
  %v1092 = vunpack.c.l.b16 %v253
  %v1093 = vunpack.c.l.b16 %v254
  %v1094 = vunpack.c.l.b16 %v255
  %v1095 = vunpack.c.l.b16 %v256
  %v1096 = vunpack.c.l.b16 %v257
  %v1097 = vunpack.c.l.b16 %v258
  %v1098 = vunpack.c.l.b16 %v259
  %v1099 = vunpack.c.l.b16 %v260
  %v1100 = vunpack.c.l.b16 %v261
  %v1101 = vunpack.c.l.b16 %v262
  %v1102 = vunpack.c.l.b16 %v263
  %v1103 = vunpack.c.l.b16 %v264
  %v1104 = vunpack.c.l.b16 %v265
  %v1105 = vunpack.c.l.b16 %v266
  %v1106 = vunpack.c.l.b16 %v267
  %v1107 = vunpack.c.l.b16 %v268
  %v1108 = vunpack.c.l.b16 %v269
  %v1109 = vunpack.c.l.b16 %v270
  %v1110 = vunpack.c.l.b16 %v271
  %v1111 = vunpack.c.l.b16 %v272
  %v1112 = vunpack.c.l.b16 %v273
  %v1113 = vunpack.c.l.b16 %v274
  %v1114 = vunpack.c.l.b16 %v275
  %v1115 = vunpack.c.l.b16 %v276
  %v1116 = vunpack.c.l.b16 %v277
  %v1117 = vunpack.c.l.b16 %v278
  %v1118 = vunpack.c.l.b16 %v279
  %v1119 = vunpack.c.l.b16 %v280
  %v1120 = vunpack.c.l.b16 %v281
  %v1121 = vunpack.c.l.b16 %v282
  %v1122 = vunpack.c.l.b16 %v283
  %v1123 = vunpack.c.l.b16 %v284
  %v1124 = vunpack.c.l.b16 %v285
  %v1125 = vunpack.c.l.b16 %v286
  %v1126 = vunpack.c.l.b16 %v287
  %v1127 = vunpack.c.l.b16 %v288
  %v1128 = vunpack.c.l.b16 %v289
  %v1129 = vunpack.c.l.b16 %v290
  %v1130 = vunpack.c.l.b16 %v291
  %v1131 = vunpack.c.l.b16 %v292
  %v1132 = vunpack.c.l.b16 %v293
  %v1133 = vunpack.c.l.b16 %v294
  %v1134 = vunpack.c.l.b16 %v295
  %v1135 = vunpack.c.l.b16 %v296
  %v1136 = vunpack.c.l.b16 %v297
  %v1137 = vunpack.c.l.b16 %v298
  %v1138 = vunpack.c.l.b16 %v299
  %v1139 = vunpack.c.l.b16 %v300
  %v1140 = vunpack.c.l.b16 %v301
  %v1141 = vunpack.c.l.b16 %v302
  %v1142 = vunpack.c.l.b16 %v303
  %v1143 = vunpack.c.l.b16 %v304
  %v1144 = vunpack.c.l.b16 %v305
  %v1145 = vpack.c.b16 %v946, %v945
  %v1146 = vpack.c.b16 %v948, %v947
  %v1147 = vpack.c.b16 %v950, %v949
  %v1148 = vpack.c.b16 %v952, %v951
  %v1149 = vpack.c.b16 %v954, %v953
  %v1150 = vpack.c.b16 %v956, %v955
  %v1151 = vpack.c.b16 %v958, %v957
  %v1152 = vpack.c.b16 %v960, %v959
  %v1153 = vpack.c.b16 %v962, %v961
  %v1154 = vpack.c.b16 %v964, %v963
  %v1155 = vpack.c.b16 %v966, %v965
  %v1156 = vpack.c.b16 %v968, %v967
  %v1157 = vpack.c.b16 %v970, %v969
  %v1158 = vpack.c.b16 %v972, %v971
  %v1159 = vpack.c.b16 %v974, %v973
  %v1160 = vpack.c.b16 %v976, %v975
  %v1161 = vpack.c.b16 %v978, %v977
  %v1162 = vpack.c.b16 %v980, %v979
  %v1163 = vpack.c.b16 %v982, %v981
  %v1164 = vpack.c.b16 %v984, %v983
  %v1165 = vpack.c.b16 %v986, %v985
  %v1166 = vpack.c.b16 %v988, %v987
  %v1167 = vpack.c.b16 %v990, %v989
  %v1168 = vpack.c.b16 %v992, %v991
  %v1169 = vpack.c.b16 %v994, %v993
  %v1170 = vpack.c.b16 %v996, %v995
  %v1171 = vpack.c.b16 %v998, %v997
  %v1172 = vpack.c.b16 %v1000, %v999
  %v1173 = vpack.c.b16 %v1002, %v1001
  %v1174 = vpack.c.b16 %v1004, %v1003
  %v1175 = vpack.c.b16 %v1006, %v1005
  %v1176 = vpack.c.b16 %v1008, %v1007
  %v1177 = vpack.c.b16 %v1010, %v1009
  %v1178 = vpack.c.b16 %v1012, %v1011
  %v1179 = vpack.c.b16 %v1014, %v1013
  %v1180 = vpack.c.b16 %v1016, %v1015
  %v1181 = vpack.c.b16 %v1018, %v1017
  %v1182 = vpack.c.b16 %v1020, %v1019
  %v1183 = vpack.c.b16 %v1022, %v1021
  %v1184 = vpack.c.b16 %v1024, %v1023
  %v1185 = vpack.c.b16 %v1026, %v1025
  %v1186 = vpack.c.b16 %v1028, %v1027
  %v1187 = vpack.c.b16 %v1030, %v1029
  %v1188 = vpack.c.b16 %v1032, %v1031
  %v1189 = vpack.c.b16 %v1034, %v1033
  %v1190 = vpack.c.b16 %v1036, %v1035
  %v1191 = vpack.c.b16 %v1038, %v1037
  %v1192 = vpack.c.b16 %v1040, %v1039
  %v1193 = vpack.c.b16 %v1042, %v1041
  %v1194 = vpack.c.b16 %v1044, %v1043
  %v1195 = vpack.c.b16 %v1046, %v1045
  %v1196 = vpack.c.b16 %v1048, %v1047
  %v1197 = vpack.c.b16 %v1050, %v1049
  %v1198 = vpack.c.b16 %v1052, %v1051
  %v1199 = vpack.c.b16 %v1054, %v1053
  %v1200 = vpack.c.b16 %v1056, %v1055
  %v1201 = vpack.c.b16 %v1058, %v1057
  %v1202 = vpack.c.b16 %v1060, %v1059
  %v1203 = vpack.c.b16 %v1062, %v1061
  %v1204 = vpack.c.b16 %v1064, %v1063
  %v1205 = vpack.c.b16 %v1066, %v1065
  %v1206 = vpack.c.b16 %v1068, %v1067
  %v1207 = vpack.c.b16 %v1070, %v1069
  %v1208 = vpack.c.b16 %v1072, %v1071
  %v1209 = vpack.c.b16 %v1074, %v1073
  %v1210 = vpack.c.b16 %v1076, %v1075
  %v1211 = vpack.c.b16 %v1078, %v1077
  %v1212 = vpack.c.b16 %v1080, %v1079
  %v1213 = vpack.c.b16 %v1082, %v1081
  %v1214 = vpack.c.b16 %v1084, %v1083
  %v1215 = vpack.c.b16 %v1086, %v1085
  %v1216 = vpack.c.b16 %v1088, %v1087
  %v1217 = vpack.c.b16 %v1090, %v1089
  %v1218 = vpack.c.b16 %v1092, %v1091
  %v1219 = vpack.c.b16 %v1094, %v1093
  %v1220 = vpack.c.b16 %v1096, %v1095
  %v1221 = vpack.c.b16 %v1098, %v1097
  %v1222 = vpack.c.b16 %v1100, %v1099
  %v1223 = vpack.c.b16 %v1102, %v1101
  %v1224 = vpack.c.b16 %v1104, %v1103
  %v1225 = vpack.c.b16 %v1106, %v1105
  %v1226 = vpack.c.b16 %v1108, %v1107
  %v1227 = vpack.c.b16 %v1110, %v1109
  %v1228 = vpack.c.b16 %v1112, %v1111
  %v1229 = vpack.c.b16 %v1114, %v1113
  %v1230 = vpack.c.b16 %v1116, %v1115
  %v1231 = vpack.c.b16 %v1118, %v1117
  %v1232 = vpack.c.b16 %v1120, %v1119
  %v1233 = vpack.c.b16 %v1122, %v1121
  %v1234 = vpack.c.b16 %v1124, %v1123
  %v1235 = vpack.c.b16 %v1126, %v1125
  %v1236 = vpack.c.b16 %v1128, %v1127
  %v1237 = vpack.c.b16 %v1130, %v1129
  %v1238 = vpack.c.b16 %v1132, %v1131
  %v1239 = vpack.c.b16 %v1134, %v1133
  %v1240 = vpack.c.b16 %v1136, %v1135
  %v1241 = vpack.c.b16 %v1138, %v1137
  %v1242 = vpack.c.b16 %v1140, %v1139
  %v1243 = vpack.c.b16 %v1142, %v1141
  %v1244 = vpack.c.b16 %v1144, %v1143
  %vm1345 = vcmask 523264
  %v1347 = vsel %vm1345, %v582, 0
  %v1350 = vsel %vm1345, %v595, 0
  %v1353 = vsel %vm1345, %v608, 0
  %v1356 = vsel %vm1345, %v621, 0
  %v1359 = vsel %vm1345, %v634, 0
  %v1362 = vsel %vm1345, %v647, 0
  %v1365 = vsel %vm1345, %v660, 0
  %1367 = vmatpush.bf16.msra.mxu0 %v1152
  %1368 = vmatpush.bf16.msra.mxu0 %v1151
  %1369 = vmatpush.bf16.msra.mxu0 %v1150
  %1370 = vmatpush.bf16.msra.mxu0 %v1149
  %1371 = vmatpush.bf16.msra.mxu0 %v1148
  %1372 = vmatpush.bf16.msra.mxu0 %v1147
  %1373 = vmatpush.bf16.msra.mxu0 %v1146
  %1374 = vmatpush.bf16.msra.mxu0 %v1145
  %1375 = vmatmul.bf16.gmra.mxu0 %v570
  %v1376 = vpop.f32.mrf.mxu0
  %v1377 = vadd.f32 %v308, %v1376
  %v1378 = vpop.f32.mrf.mxu0
  %v1379 = vadd.f32 %v308, %v1378
  %1380 = vmatmul.bf16.gmra.mxu0 %v583
  %v1381 = vpop.f32.mrf.mxu0
  %v1382 = vadd.f32 %v308, %v1381
  %v1383 = vpop.f32.mrf.mxu0
  %v1384 = vadd.f32 %v308, %v1383
  %1385 = vmatmul.bf16.gmra.mxu0 %v596
  %v1386 = vpop.f32.mrf.mxu0
  %v1387 = vadd.f32 %v308, %v1386
  %v1388 = vpop.f32.mrf.mxu0
  %v1389 = vadd.f32 %v308, %v1388
  %1390 = vmatmul.bf16.gmra.mxu0 %v609
  %v1391 = vpop.f32.mrf.mxu0
  %v1392 = vadd.f32 %v308, %v1391
  %v1393 = vpop.f32.mrf.mxu0
  %v1394 = vadd.f32 %v308, %v1393
  %1395 = vmatmul.bf16.gmra.mxu0 %v622
  %v1396 = vpop.f32.mrf.mxu0
  %v1397 = vadd.f32 %v308, %v1396
  %v1398 = vpop.f32.mrf.mxu0
  %v1399 = vadd.f32 %v308, %v1398
  %1400 = vmatmul.bf16.gmra.mxu0 %v635
  %v1401 = vpop.f32.mrf.mxu0
  %v1402 = vadd.f32 %v308, %v1401
  %v1403 = vpop.f32.mrf.mxu0
  %v1404 = vadd.f32 %v308, %v1403
  %1405 = vmatmul.bf16.gmra.mxu0 %v648
  %v1406 = vpop.f32.mrf.mxu0
  %v1407 = vadd.f32 %v308, %v1406
  %v1408 = vpop.f32.mrf.mxu0
  %1409 = vdwg.mxu0
  %1410 = vmatpush.bf16.msra.mxu0 %v1160
  %1411 = vmatpush.bf16.msra.mxu0 %v1159
  %1412 = vmatpush.bf16.msra.mxu0 %v1158
  %1413 = vmatpush.bf16.msra.mxu0 %v1157
  %1414 = vmatpush.bf16.msra.mxu0 %v1156
  %1415 = vmatpush.bf16.msra.mxu0 %v1155
  %1416 = vmatpush.bf16.msra.mxu0 %v1154
  %1417 = vmatpush.bf16.msra.mxu0 %v1153
  %1418 = vmatmul.bf16.gmra.mxu0 %v571
  %v1419 = vpop.f32.mrf.mxu0
  %v1420 = vadd.f32 %v1377, %v1419
  %v1421 = vpop.f32.mrf.mxu0
  %v1422 = vadd.f32 %v1379, %v1421
  %1423 = vmatmul.bf16.gmra.mxu0 %v584
  %v1424 = vpop.f32.mrf.mxu0
  %v1425 = vadd.f32 %v1382, %v1424
  %v1426 = vpop.f32.mrf.mxu0
  %v1427 = vadd.f32 %v1384, %v1426
  %1428 = vmatmul.bf16.gmra.mxu0 %v597
  %v1429 = vpop.f32.mrf.mxu0
  %v1430 = vadd.f32 %v1387, %v1429
  %v1431 = vpop.f32.mrf.mxu0
  %v1432 = vadd.f32 %v1389, %v1431
  %1433 = vmatmul.bf16.gmra.mxu0 %v610
  %v1434 = vpop.f32.mrf.mxu0
  %v1435 = vadd.f32 %v1392, %v1434
  %v1436 = vpop.f32.mrf.mxu0
  %v1437 = vadd.f32 %v1394, %v1436
  %1438 = vmatmul.bf16.gmra.mxu0 %v623
  %v1439 = vpop.f32.mrf.mxu0
  %v1440 = vadd.f32 %v1397, %v1439
  %v1441 = vpop.f32.mrf.mxu0
  %v1442 = vadd.f32 %v1399, %v1441
  %1443 = vmatmul.bf16.gmra.mxu0 %v636
  %v1444 = vpop.f32.mrf.mxu0
  %v1445 = vadd.f32 %v1402, %v1444
  %v1446 = vpop.f32.mrf.mxu0
  %v1447 = vadd.f32 %v1404, %v1446
  %1448 = vmatmul.bf16.gmra.mxu0 %v649
  %v1449 = vpop.f32.mrf.mxu0
  %v1450 = vadd.f32 %v1407, %v1449
  %v1451 = vpop.f32.mrf.mxu0
  %1452 = vdwg.mxu0
  %1453 = vmatpush.bf16.msra.mxu0 %v1168
  %1454 = vmatpush.bf16.msra.mxu0 %v1167
  %1455 = vmatpush.bf16.msra.mxu0 %v1166
  %1456 = vmatpush.bf16.msra.mxu0 %v1165
  %1457 = vmatpush.bf16.msra.mxu0 %v1164
  %1458 = vmatpush.bf16.msra.mxu0 %v1163
  %1459 = vmatpush.bf16.msra.mxu0 %v1162
  %1460 = vmatpush.bf16.msra.mxu0 %v1161
  %1461 = vmatmul.bf16.gmra.mxu0 %v572
  %v1462 = vpop.f32.mrf.mxu0
  %v1463 = vadd.f32 %v1420, %v1462
  %v1464 = vpop.f32.mrf.mxu0
  %v1465 = vadd.f32 %v1422, %v1464
  %1466 = vmatmul.bf16.gmra.mxu0 %v585
  %v1467 = vpop.f32.mrf.mxu0
  %v1468 = vadd.f32 %v1425, %v1467
  %v1469 = vpop.f32.mrf.mxu0
  %v1470 = vadd.f32 %v1427, %v1469
  %1471 = vmatmul.bf16.gmra.mxu0 %v598
  %v1472 = vpop.f32.mrf.mxu0
  %v1473 = vadd.f32 %v1430, %v1472
  %v1474 = vpop.f32.mrf.mxu0
  %v1475 = vadd.f32 %v1432, %v1474
  %1476 = vmatmul.bf16.gmra.mxu0 %v611
  %v1477 = vpop.f32.mrf.mxu0
  %v1478 = vadd.f32 %v1435, %v1477
  %v1479 = vpop.f32.mrf.mxu0
  %v1480 = vadd.f32 %v1437, %v1479
  %1481 = vmatmul.bf16.gmra.mxu0 %v624
  %v1482 = vpop.f32.mrf.mxu0
  %v1483 = vadd.f32 %v1440, %v1482
  %v1484 = vpop.f32.mrf.mxu0
  %v1485 = vadd.f32 %v1442, %v1484
  %1486 = vmatmul.bf16.gmra.mxu0 %v637
  %v1487 = vpop.f32.mrf.mxu0
  %v1488 = vadd.f32 %v1445, %v1487
  %v1489 = vpop.f32.mrf.mxu0
  %v1490 = vadd.f32 %v1447, %v1489
  %1491 = vmatmul.bf16.gmra.mxu0 %v650
  %v1492 = vpop.f32.mrf.mxu0
  %v1493 = vadd.f32 %v1450, %v1492
  %v1494 = vpop.f32.mrf.mxu0
  %1495 = vdwg.mxu0
  %1496 = vmatpush.bf16.msra.mxu0 %v1176
  %1497 = vmatpush.bf16.msra.mxu0 %v1175
  %1498 = vmatpush.bf16.msra.mxu0 %v1174
  %1499 = vmatpush.bf16.msra.mxu0 %v1173
  %1500 = vmatpush.bf16.msra.mxu0 %v1172
  %1501 = vmatpush.bf16.msra.mxu0 %v1171
  %1502 = vmatpush.bf16.msra.mxu0 %v1170
  %1503 = vmatpush.bf16.msra.mxu0 %v1169
  %1504 = vmatmul.bf16.gmra.mxu0 %v573
  %v1505 = vpop.f32.mrf.mxu0
  %v1506 = vadd.f32 %v1463, %v1505
  %v1507 = vpop.f32.mrf.mxu0
  %v1508 = vadd.f32 %v1465, %v1507
  %1509 = vmatmul.bf16.gmra.mxu0 %v586
  %v1510 = vpop.f32.mrf.mxu0
  %v1511 = vadd.f32 %v1468, %v1510
  %v1512 = vpop.f32.mrf.mxu0
  %v1513 = vadd.f32 %v1470, %v1512
  %1514 = vmatmul.bf16.gmra.mxu0 %v599
  %v1515 = vpop.f32.mrf.mxu0
  %v1516 = vadd.f32 %v1473, %v1515
  %v1517 = vpop.f32.mrf.mxu0
  %v1518 = vadd.f32 %v1475, %v1517
  %1519 = vmatmul.bf16.gmra.mxu0 %v612
  %v1520 = vpop.f32.mrf.mxu0
  %v1521 = vadd.f32 %v1478, %v1520
  %v1522 = vpop.f32.mrf.mxu0
  %v1523 = vadd.f32 %v1480, %v1522
  %1524 = vmatmul.bf16.gmra.mxu0 %v625
  %v1525 = vpop.f32.mrf.mxu0
  %v1526 = vadd.f32 %v1483, %v1525
  %v1527 = vpop.f32.mrf.mxu0
  %v1528 = vadd.f32 %v1485, %v1527
  %1529 = vmatmul.bf16.gmra.mxu0 %v638
  %v1530 = vpop.f32.mrf.mxu0
  %v1531 = vadd.f32 %v1488, %v1530
  %v1532 = vpop.f32.mrf.mxu0
  %v1533 = vadd.f32 %v1490, %v1532
  %1534 = vmatmul.bf16.gmra.mxu0 %v651
  %v1535 = vpop.f32.mrf.mxu0
  %v1536 = vadd.f32 %v1493, %v1535
  %v1537 = vpop.f32.mrf.mxu0
  %1538 = vdwg.mxu0
  %1539 = vmatpush.bf16.msra.mxu0 %v1184
  %1540 = vmatpush.bf16.msra.mxu0 %v1183
  %1541 = vmatpush.bf16.msra.mxu0 %v1182
  %1542 = vmatpush.bf16.msra.mxu0 %v1181
  %1543 = vmatpush.bf16.msra.mxu0 %v1180
  %1544 = vmatpush.bf16.msra.mxu0 %v1179
  %1545 = vmatpush.bf16.msra.mxu0 %v1178
  %1546 = vmatpush.bf16.msra.mxu0 %v1177
  %1547 = vmatmul.bf16.gmra.mxu0 %v574
  %v1548 = vpop.f32.mrf.mxu0
  %v1549 = vadd.f32 %v1506, %v1548
  %v1550 = vpop.f32.mrf.mxu0
  %v1551 = vadd.f32 %v1508, %v1550
  %1552 = vmatmul.bf16.gmra.mxu0 %v587
  %v1553 = vpop.f32.mrf.mxu0
  %v1554 = vadd.f32 %v1511, %v1553
  %v1555 = vpop.f32.mrf.mxu0
  %v1556 = vadd.f32 %v1513, %v1555
  %1557 = vmatmul.bf16.gmra.mxu0 %v600
  %v1558 = vpop.f32.mrf.mxu0
  %v1559 = vadd.f32 %v1516, %v1558
  %v1560 = vpop.f32.mrf.mxu0
  %v1561 = vadd.f32 %v1518, %v1560
  %1562 = vmatmul.bf16.gmra.mxu0 %v613
  %v1563 = vpop.f32.mrf.mxu0
  %v1564 = vadd.f32 %v1521, %v1563
  %v1565 = vpop.f32.mrf.mxu0
  %v1566 = vadd.f32 %v1523, %v1565
  %1567 = vmatmul.bf16.gmra.mxu0 %v626
  %v1568 = vpop.f32.mrf.mxu0
  %v1569 = vadd.f32 %v1526, %v1568
  %v1570 = vpop.f32.mrf.mxu0
  %v1571 = vadd.f32 %v1528, %v1570
  %1572 = vmatmul.bf16.gmra.mxu0 %v639
  %v1573 = vpop.f32.mrf.mxu0
  %v1574 = vadd.f32 %v1531, %v1573
  %v1575 = vpop.f32.mrf.mxu0
  %v1576 = vadd.f32 %v1533, %v1575
  %1577 = vmatmul.bf16.gmra.mxu0 %v652
  %v1578 = vpop.f32.mrf.mxu0
  %v1579 = vadd.f32 %v1536, %v1578
  %v1580 = vpop.f32.mrf.mxu0
  %1581 = vdwg.mxu0
  %1582 = vmatpush.bf16.msra.mxu0 %v1192
  %1583 = vmatpush.bf16.msra.mxu0 %v1191
  %1584 = vmatpush.bf16.msra.mxu0 %v1190
  %1585 = vmatpush.bf16.msra.mxu0 %v1189
  %1586 = vmatpush.bf16.msra.mxu0 %v1188
  %1587 = vmatpush.bf16.msra.mxu0 %v1187
  %1588 = vmatpush.bf16.msra.mxu0 %v1186
  %1589 = vmatpush.bf16.msra.mxu0 %v1185
  %1590 = vmatmul.bf16.gmra.mxu0 %v575
  %v1591 = vpop.f32.mrf.mxu0
  %v1592 = vadd.f32 %v1549, %v1591
  %v1593 = vpop.f32.mrf.mxu0
  %v1594 = vadd.f32 %v1551, %v1593
  %1595 = vmatmul.bf16.gmra.mxu0 %v588
  %v1596 = vpop.f32.mrf.mxu0
  %v1597 = vadd.f32 %v1554, %v1596
  %v1598 = vpop.f32.mrf.mxu0
  %v1599 = vadd.f32 %v1556, %v1598
  %1600 = vmatmul.bf16.gmra.mxu0 %v601
  %v1601 = vpop.f32.mrf.mxu0
  %v1602 = vadd.f32 %v1559, %v1601
  %v1603 = vpop.f32.mrf.mxu0
  %v1604 = vadd.f32 %v1561, %v1603
  %1605 = vmatmul.bf16.gmra.mxu0 %v614
  %v1606 = vpop.f32.mrf.mxu0
  %v1607 = vadd.f32 %v1564, %v1606
  %v1608 = vpop.f32.mrf.mxu0
  %v1609 = vadd.f32 %v1566, %v1608
  %1610 = vmatmul.bf16.gmra.mxu0 %v627
  %v1611 = vpop.f32.mrf.mxu0
  %v1612 = vadd.f32 %v1569, %v1611
  %v1613 = vpop.f32.mrf.mxu0
  %v1614 = vadd.f32 %v1571, %v1613
  %1615 = vmatmul.bf16.gmra.mxu0 %v640
  %v1616 = vpop.f32.mrf.mxu0
  %v1617 = vadd.f32 %v1574, %v1616
  %v1618 = vpop.f32.mrf.mxu0
  %v1619 = vadd.f32 %v1576, %v1618
  %1620 = vmatmul.bf16.gmra.mxu0 %v653
  %v1621 = vpop.f32.mrf.mxu0
  %v1622 = vadd.f32 %v1579, %v1621
  %v1623 = vpop.f32.mrf.mxu0
  %1624 = vdwg.mxu0
  %1625 = vmatpush.bf16.msra.mxu0 %v1200
  %1626 = vmatpush.bf16.msra.mxu0 %v1199
  %1627 = vmatpush.bf16.msra.mxu0 %v1198
  %1628 = vmatpush.bf16.msra.mxu0 %v1197
  %1629 = vmatpush.bf16.msra.mxu0 %v1196
  %1630 = vmatpush.bf16.msra.mxu0 %v1195
  %1631 = vmatpush.bf16.msra.mxu0 %v1194
  %1632 = vmatpush.bf16.msra.mxu0 %v1193
  %1633 = vmatmul.bf16.gmra.mxu0 %v576
  %v1634 = vpop.f32.mrf.mxu0
  %v1635 = vadd.f32 %v1592, %v1634
  %v1636 = vpop.f32.mrf.mxu0
  %v1637 = vadd.f32 %v1594, %v1636
  %1638 = vmatmul.bf16.gmra.mxu0 %v589
  %v1639 = vpop.f32.mrf.mxu0
  %v1640 = vadd.f32 %v1597, %v1639
  %v1641 = vpop.f32.mrf.mxu0
  %v1642 = vadd.f32 %v1599, %v1641
  %1643 = vmatmul.bf16.gmra.mxu0 %v602
  %v1644 = vpop.f32.mrf.mxu0
  %v1645 = vadd.f32 %v1602, %v1644
  %v1646 = vpop.f32.mrf.mxu0
  %v1647 = vadd.f32 %v1604, %v1646
  %1648 = vmatmul.bf16.gmra.mxu0 %v615
  %v1649 = vpop.f32.mrf.mxu0
  %v1650 = vadd.f32 %v1607, %v1649
  %v1651 = vpop.f32.mrf.mxu0
  %v1652 = vadd.f32 %v1609, %v1651
  %1653 = vmatmul.bf16.gmra.mxu0 %v628
  %v1654 = vpop.f32.mrf.mxu0
  %v1655 = vadd.f32 %v1612, %v1654
  %v1656 = vpop.f32.mrf.mxu0
  %v1657 = vadd.f32 %v1614, %v1656
  %1658 = vmatmul.bf16.gmra.mxu0 %v641
  %v1659 = vpop.f32.mrf.mxu0
  %v1660 = vadd.f32 %v1617, %v1659
  %v1661 = vpop.f32.mrf.mxu0
  %v1662 = vadd.f32 %v1619, %v1661
  %1663 = vmatmul.bf16.gmra.mxu0 %v654
  %v1664 = vpop.f32.mrf.mxu0
  %v1665 = vadd.f32 %v1622, %v1664
  %v1666 = vpop.f32.mrf.mxu0
  %1667 = vdwg.mxu0
  %1668 = vmatpush.bf16.msra.mxu0 %v1208
  %1669 = vmatpush.bf16.msra.mxu0 %v1207
  %1670 = vmatpush.bf16.msra.mxu0 %v1206
  %1671 = vmatpush.bf16.msra.mxu0 %v1205
  %1672 = vmatpush.bf16.msra.mxu0 %v1204
  %1673 = vmatpush.bf16.msra.mxu0 %v1203
  %1674 = vmatpush.bf16.msra.mxu0 %v1202
  %1675 = vmatpush.bf16.msra.mxu0 %v1201
  %1676 = vmatmul.bf16.gmra.mxu0 %v577
  %v1677 = vpop.f32.mrf.mxu0
  %v1678 = vadd.f32 %v1635, %v1677
  %v1679 = vpop.f32.mrf.mxu0
  %v1680 = vadd.f32 %v1637, %v1679
  %1681 = vmatmul.bf16.gmra.mxu0 %v590
  %v1682 = vpop.f32.mrf.mxu0
  %v1683 = vadd.f32 %v1640, %v1682
  %v1684 = vpop.f32.mrf.mxu0
  %v1685 = vadd.f32 %v1642, %v1684
  %1686 = vmatmul.bf16.gmra.mxu0 %v603
  %v1687 = vpop.f32.mrf.mxu0
  %v1688 = vadd.f32 %v1645, %v1687
  %v1689 = vpop.f32.mrf.mxu0
  %v1690 = vadd.f32 %v1647, %v1689
  %1691 = vmatmul.bf16.gmra.mxu0 %v616
  %v1692 = vpop.f32.mrf.mxu0
  %v1693 = vadd.f32 %v1650, %v1692
  %v1694 = vpop.f32.mrf.mxu0
  %v1695 = vadd.f32 %v1652, %v1694
  %1696 = vmatmul.bf16.gmra.mxu0 %v629
  %v1697 = vpop.f32.mrf.mxu0
  %v1698 = vadd.f32 %v1655, %v1697
  %v1699 = vpop.f32.mrf.mxu0
  %v1700 = vadd.f32 %v1657, %v1699
  %1701 = vmatmul.bf16.gmra.mxu0 %v642
  %v1702 = vpop.f32.mrf.mxu0
  %v1703 = vadd.f32 %v1660, %v1702
  %v1704 = vpop.f32.mrf.mxu0
  %v1705 = vadd.f32 %v1662, %v1704
  %1706 = vmatmul.bf16.gmra.mxu0 %v655
  %v1707 = vpop.f32.mrf.mxu0
  %v1708 = vadd.f32 %v1665, %v1707
  %v1709 = vpop.f32.mrf.mxu0
  %1710 = vdwg.mxu0
  %1711 = vmatpush.bf16.msra.mxu0 %v1216
  %1712 = vmatpush.bf16.msra.mxu0 %v1215
  %1713 = vmatpush.bf16.msra.mxu0 %v1214
  %1714 = vmatpush.bf16.msra.mxu0 %v1213
  %1715 = vmatpush.bf16.msra.mxu0 %v1212
  %1716 = vmatpush.bf16.msra.mxu0 %v1211
  %1717 = vmatpush.bf16.msra.mxu0 %v1210
  %1718 = vmatpush.bf16.msra.mxu0 %v1209
  %1719 = vmatmul.bf16.gmra.mxu0 %v578
  %v1720 = vpop.f32.mrf.mxu0
  %v1721 = vadd.f32 %v1678, %v1720
  %v1722 = vpop.f32.mrf.mxu0
  %v1723 = vadd.f32 %v1680, %v1722
  %1724 = vmatmul.bf16.gmra.mxu0 %v591
  %v1725 = vpop.f32.mrf.mxu0
  %v1726 = vadd.f32 %v1683, %v1725
  %v1727 = vpop.f32.mrf.mxu0
  %v1728 = vadd.f32 %v1685, %v1727
  %1729 = vmatmul.bf16.gmra.mxu0 %v604
  %v1730 = vpop.f32.mrf.mxu0
  %v1731 = vadd.f32 %v1688, %v1730
  %v1732 = vpop.f32.mrf.mxu0
  %v1733 = vadd.f32 %v1690, %v1732
  %1734 = vmatmul.bf16.gmra.mxu0 %v617
  %v1735 = vpop.f32.mrf.mxu0
  %v1736 = vadd.f32 %v1693, %v1735
  %v1737 = vpop.f32.mrf.mxu0
  %v1738 = vadd.f32 %v1695, %v1737
  %1739 = vmatmul.bf16.gmra.mxu0 %v630
  %v1740 = vpop.f32.mrf.mxu0
  %v1741 = vadd.f32 %v1698, %v1740
  %v1742 = vpop.f32.mrf.mxu0
  %v1743 = vadd.f32 %v1700, %v1742
  %1744 = vmatmul.bf16.gmra.mxu0 %v643
  %v1745 = vpop.f32.mrf.mxu0
  %v1746 = vadd.f32 %v1703, %v1745
  %v1747 = vpop.f32.mrf.mxu0
  %v1748 = vadd.f32 %v1705, %v1747
  %1749 = vmatmul.bf16.gmra.mxu0 %v656
  %v1750 = vpop.f32.mrf.mxu0
  %v1751 = vadd.f32 %v1708, %v1750
  %v1752 = vpop.f32.mrf.mxu0
  %1753 = vdwg.mxu0
  %1754 = vmatpush.bf16.msra.mxu0 %v1224
  %1755 = vmatpush.bf16.msra.mxu0 %v1223
  %1756 = vmatpush.bf16.msra.mxu0 %v1222
  %1757 = vmatpush.bf16.msra.mxu0 %v1221
  %1758 = vmatpush.bf16.msra.mxu0 %v1220
  %1759 = vmatpush.bf16.msra.mxu0 %v1219
  %1760 = vmatpush.bf16.msra.mxu0 %v1218
  %1761 = vmatpush.bf16.msra.mxu0 %v1217
  %1762 = vmatmul.bf16.gmra.mxu0 %v579
  %v1763 = vpop.f32.mrf.mxu0
  %v1764 = vadd.f32 %v1721, %v1763
  %v1765 = vpop.f32.mrf.mxu0
  %v1766 = vadd.f32 %v1723, %v1765
  %1767 = vmatmul.bf16.gmra.mxu0 %v592
  %v1768 = vpop.f32.mrf.mxu0
  %v1769 = vadd.f32 %v1726, %v1768
  %v1770 = vpop.f32.mrf.mxu0
  %v1771 = vadd.f32 %v1728, %v1770
  %1772 = vmatmul.bf16.gmra.mxu0 %v605
  %v1773 = vpop.f32.mrf.mxu0
  %v1774 = vadd.f32 %v1731, %v1773
  %v1775 = vpop.f32.mrf.mxu0
  %v1776 = vadd.f32 %v1733, %v1775
  %1777 = vmatmul.bf16.gmra.mxu0 %v618
  %v1778 = vpop.f32.mrf.mxu0
  %v1779 = vadd.f32 %v1736, %v1778
  %v1780 = vpop.f32.mrf.mxu0
  %v1781 = vadd.f32 %v1738, %v1780
  %1782 = vmatmul.bf16.gmra.mxu0 %v631
  %v1783 = vpop.f32.mrf.mxu0
  %v1784 = vadd.f32 %v1741, %v1783
  %v1785 = vpop.f32.mrf.mxu0
  %v1786 = vadd.f32 %v1743, %v1785
  %1787 = vmatmul.bf16.gmra.mxu0 %v644
  %v1788 = vpop.f32.mrf.mxu0
  %v1789 = vadd.f32 %v1746, %v1788
  %v1790 = vpop.f32.mrf.mxu0
  %v1791 = vadd.f32 %v1748, %v1790
  %1792 = vmatmul.bf16.gmra.mxu0 %v657
  %v1793 = vpop.f32.mrf.mxu0
  %v1794 = vadd.f32 %v1751, %v1793
  %v1795 = vpop.f32.mrf.mxu0
  %1796 = vdwg.mxu0
  %1797 = vmatpush.bf16.msra.mxu0 %v1232
  %1798 = vmatpush.bf16.msra.mxu0 %v1231
  %1799 = vmatpush.bf16.msra.mxu0 %v1230
  %1800 = vmatpush.bf16.msra.mxu0 %v1229
  %1801 = vmatpush.bf16.msra.mxu0 %v1228
  %1802 = vmatpush.bf16.msra.mxu0 %v1227
  %1803 = vmatpush.bf16.msra.mxu0 %v1226
  %1804 = vmatpush.bf16.msra.mxu0 %v1225
  %1805 = vmatmul.bf16.gmra.mxu0 %v580
  %v1806 = vpop.f32.mrf.mxu0
  %v1807 = vadd.f32 %v1764, %v1806
  %v1808 = vpop.f32.mrf.mxu0
  %v1809 = vadd.f32 %v1766, %v1808
  %1810 = vmatmul.bf16.gmra.mxu0 %v593
  %v1811 = vpop.f32.mrf.mxu0
  %v1812 = vadd.f32 %v1769, %v1811
  %v1813 = vpop.f32.mrf.mxu0
  %v1814 = vadd.f32 %v1771, %v1813
  %1815 = vmatmul.bf16.gmra.mxu0 %v606
  %v1816 = vpop.f32.mrf.mxu0
  %v1817 = vadd.f32 %v1774, %v1816
  %v1818 = vpop.f32.mrf.mxu0
  %v1819 = vadd.f32 %v1776, %v1818
  %1820 = vmatmul.bf16.gmra.mxu0 %v619
  %v1821 = vpop.f32.mrf.mxu0
  %v1822 = vadd.f32 %v1779, %v1821
  %v1823 = vpop.f32.mrf.mxu0
  %v1824 = vadd.f32 %v1781, %v1823
  %1825 = vmatmul.bf16.gmra.mxu0 %v632
  %v1826 = vpop.f32.mrf.mxu0
  %v1827 = vadd.f32 %v1784, %v1826
  %v1828 = vpop.f32.mrf.mxu0
  %v1829 = vadd.f32 %v1786, %v1828
  %1830 = vmatmul.bf16.gmra.mxu0 %v645
  %v1831 = vpop.f32.mrf.mxu0
  %v1832 = vadd.f32 %v1789, %v1831
  %v1833 = vpop.f32.mrf.mxu0
  %v1834 = vadd.f32 %v1791, %v1833
  %1835 = vmatmul.bf16.gmra.mxu0 %v658
  %v1836 = vpop.f32.mrf.mxu0
  %v1837 = vadd.f32 %v1794, %v1836
  %v1838 = vpop.f32.mrf.mxu0
  %1839 = vdwg.mxu0
  %1840 = vmatpush.bf16.msra.mxu0 %v1240
  %1841 = vmatpush.bf16.msra.mxu0 %v1239
  %1842 = vmatpush.bf16.msra.mxu0 %v1238
  %1843 = vmatpush.bf16.msra.mxu0 %v1237
  %1844 = vmatpush.bf16.msra.mxu0 %v1236
  %1845 = vmatpush.bf16.msra.mxu0 %v1235
  %1846 = vmatpush.bf16.msra.mxu0 %v1234
  %1847 = vmatpush.bf16.msra.mxu0 %v1233
  %1848 = vmatmul.bf16.gmra.mxu0 %v581
  %v1849 = vpop.f32.mrf.mxu0
  %v1850 = vadd.f32 %v1807, %v1849
  %v1851 = vpop.f32.mrf.mxu0
  %v1852 = vadd.f32 %v1809, %v1851
  %1853 = vmatmul.bf16.gmra.mxu0 %v594
  %v1854 = vpop.f32.mrf.mxu0
  %v1855 = vadd.f32 %v1812, %v1854
  %v1856 = vpop.f32.mrf.mxu0
  %v1857 = vadd.f32 %v1814, %v1856
  %1858 = vmatmul.bf16.gmra.mxu0 %v607
  %v1859 = vpop.f32.mrf.mxu0
  %v1860 = vadd.f32 %v1817, %v1859
  %v1861 = vpop.f32.mrf.mxu0
  %v1862 = vadd.f32 %v1819, %v1861
  %1863 = vmatmul.bf16.gmra.mxu0 %v620
  %v1864 = vpop.f32.mrf.mxu0
  %v1865 = vadd.f32 %v1822, %v1864
  %v1866 = vpop.f32.mrf.mxu0
  %v1867 = vadd.f32 %v1824, %v1866
  %1868 = vmatmul.bf16.gmra.mxu0 %v633
  %v1869 = vpop.f32.mrf.mxu0
  %v1870 = vadd.f32 %v1827, %v1869
  %v1871 = vpop.f32.mrf.mxu0
  %v1872 = vadd.f32 %v1829, %v1871
  %1873 = vmatmul.bf16.gmra.mxu0 %v646
  %v1874 = vpop.f32.mrf.mxu0
  %v1875 = vadd.f32 %v1832, %v1874
  %v1876 = vpop.f32.mrf.mxu0
  %v1877 = vadd.f32 %v1834, %v1876
  %1878 = vmatmul.bf16.gmra.mxu0 %v659
  %v1879 = vpop.f32.mrf.mxu0
  %v1880 = vadd.f32 %v1837, %v1879
  %v1881 = vpop.f32.mrf.mxu0
  %1882 = vdwg.mxu0
  %1883 = vmatpush.bf16.msra.mxu0 0
  %1884 = vmatpush.bf16.msra.mxu0 0
  %1885 = vmatpush.bf16.msra.mxu0 0
  %1886 = vmatpush.bf16.msra.mxu0 0
  %1887 = vmatpush.bf16.msra.mxu0 %v1244
  %1888 = vmatpush.bf16.msra.mxu0 %v1243
  %1889 = vmatpush.bf16.msra.mxu0 %v1242
  %1890 = vmatpush.bf16.msra.mxu0 %v1241
  %1891 = vmatmul.bf16.gmra.mxu0 %v1347
  %v1892 = vpop.f32.mrf.mxu0
  %v1893 = vadd.f32 %v1850, %v1892
  %v1894 = vpop.f32.mrf.mxu0
  %v1895 = vadd.f32 %v1852, %v1894
  %1896 = vmatmul.bf16.gmra.mxu0 %v1350
  %v1897 = vpop.f32.mrf.mxu0
  %v1898 = vadd.f32 %v1855, %v1897
  %v1899 = vpop.f32.mrf.mxu0
  %v1900 = vadd.f32 %v1857, %v1899
  %1901 = vmatmul.bf16.gmra.mxu0 %v1353
  %v1902 = vpop.f32.mrf.mxu0
  %v1903 = vadd.f32 %v1860, %v1902
  %v1904 = vpop.f32.mrf.mxu0
  %v1905 = vadd.f32 %v1862, %v1904
  %1906 = vmatmul.bf16.gmra.mxu0 %v1356
  %v1907 = vpop.f32.mrf.mxu0
  %v1908 = vadd.f32 %v1865, %v1907
  %v1909 = vpop.f32.mrf.mxu0
  %v1910 = vadd.f32 %v1867, %v1909
  %1911 = vmatmul.bf16.gmra.mxu0 %v1359
  %v1912 = vpop.f32.mrf.mxu0
  %v1913 = vadd.f32 %v1870, %v1912
  %v1914 = vpop.f32.mrf.mxu0
  %v1915 = vadd.f32 %v1872, %v1914
  %1916 = vmatmul.bf16.gmra.mxu0 %v1362
  %v1917 = vpop.f32.mrf.mxu0
  %v1918 = vadd.f32 %v1875, %v1917
  %v1919 = vpop.f32.mrf.mxu0
  %v1920 = vadd.f32 %v1877, %v1919
  %1921 = vmatmul.bf16.gmra.mxu0 %v1365
  %v1922 = vpop.f32.mrf.mxu0
  %v1923 = vadd.f32 %v1880, %v1922
  %v1924 = vpop.f32.mrf.mxu0
  %1925 = vdwg.mxu0
  %v1926 = vmax.f32 %v1893, 0.0
  %v1927 = vmax.f32 %v1895, 0.0
  %v1928 = vmax.f32 %v1898, 0.0
  %v1929 = vmax.f32 %v1900, 0.0
  %v1930 = vmax.f32 %v1903, 0.0
  %v1931 = vmax.f32 %v1905, 0.0
  %v1932 = vmax.f32 %v1908, 0.0
  %v1933 = vmax.f32 %v1910, 0.0
  %v1934 = vmax.f32 %v1913, 0.0
  %v1935 = vmax.f32 %v1915, 0.0
  %v1936 = vmax.f32 %v1918, 0.0
  %v1937 = vmax.f32 %v1920, 0.0
  %v1938 = vmax.f32 %v1923, 0.0
  %v1939 = vpack.c.bf16 %v1926, %v1926
  %v1940 = vpack.c.bf16 %v1927, %v1927
  %v1941 = vpack.c.bf16 %v1928, %v1928
  %v1942 = vpack.c.bf16 %v1929, %v1929
  %v1943 = vpack.c.bf16 %v1930, %v1930
  %v1944 = vpack.c.bf16 %v1931, %v1931
  %v1945 = vpack.c.bf16 %v1932, %v1932
  %v1946 = vpack.c.bf16 %v1933, %v1933
  %v1947 = vpack.c.bf16 %v1934, %v1934
  %v1948 = vpack.c.bf16 %v1935, %v1935
  %v1949 = vpack.c.bf16 %v1936, %v1936
  %v1950 = vpack.c.bf16 %v1937, %v1937
  %v1951 = vpack.c.bf16 %v1938, %v1938
  %1952 = vst [vmem:[%s3] sm:$0xf] %v1939
  %1953 = vst [vmem:[%s3 + $0x4] sm:$0xf] %v1940
  %1954 = vst [vmem:[%s3 + $0x8] sm:$0xf] %v1941
  %1955 = vst [vmem:[%s3 + $0xc] sm:$0xf] %v1942
  %1956 = vst [vmem:[%s3 + $0x10] sm:$0xf] %v1943
  %1957 = vst [vmem:[%s3 + $0x14] sm:$0xf] %v1944
  %1958 = vst [vmem:[%s3 + $0x18] sm:$0xf] %v1945
  %1959 = vst [vmem:[%s3 + $0x1c] sm:$0xf] %v1946
  %1960 = vst [vmem:[%s3 + $0x20] sm:$0xf] %v1947
  %1961 = vst [vmem:[%s3 + $0x24] sm:$0xf] %v1948
  %1962 = vst [vmem:[%s3 + $0x28] sm:$0xf] %v1949
  %1963 = vst [vmem:[%s3 + $0x2c] sm:$0xf] %v1950
  %1964 = vst [vmem:[%s3 + $0x30] sm:$0xf] %v1951
  // Predicated region
  $region14: #{discriminator_forward.5} parent=0 // pred_check
    _
  $region15: #{discriminator_forward.5} parent=0 // pred_check_branch
    %1966 = sbr.rel (0) target = $region17
  $region16: #{discriminator_forward.5} parent=0 // pred_region
    _
  $region17: #{discriminator_forward.5} parent=0 // pred_fallthru
    _
  // Predicated region
  $region18: #{discriminator_forward.5} parent=0 // pred_check
    _
  $region19: #{discriminator_forward.5} parent=0 // pred_check_branch
    %1968 = sbr.rel (0) target = $region21
  $region20: #{discriminator_forward.5} parent=0 // pred_region
    _
  $region21: #{discriminator_forward.5} parent=0 // pred_fallthru
    _

// kernel: discriminator_forward.6
$region0: #{discriminator_forward.6}
  #allocation0 [shape = 'u32[]', space=smem, size = 0x4, offset = 0x4, fixed_abs, tag = 'smem constant byte address 0x4 - core index']
  #allocation1 [shape = 'u32[72,128]{1,0:T(1,128)}', space=vmem, size = 0x9000, scoped, tag = 'internal scratch']
  %s0 = inlined_call_operand.vmem [shape: bf16[32,3200], index: 0, kind: input, shape index: {}]
  %s1 = inlined_call_operand.vmem [shape: bf16[3200,256], index: 1, kind: input, shape index: {}]
  %s2 = inlined_call_operand.vmem [shape: f32[1,256], index: 2, kind: input, shape index: {}]
  %s3 = inlined_call_operand.vmem [shape: bf16[32,256], index: 3, kind: output, shape index: {}]
  %s4 = sld [smem:[#allocation0]]
  $region22: #{discriminator_forward.6} parent=0
    _
  %s6 = ssub.s32 1, %s4
  %s7 = scalar_select 0, %s6, %s4
  // Predicated region
  $region2: #{discriminator_forward.6} parent=0 // pred_check
    _
  $region3: #{discriminator_forward.6} parent=0 // pred_check_branch
    %9 = sbr.rel (0) target = $region5
  $region4: #{discriminator_forward.6} parent=0 // pred_region
    _
  $region5: #{discriminator_forward.6} parent=0 // pred_fallthru
    _
  // Predicated region
  $region6: #{discriminator_forward.6} parent=0 // pred_check
    _
  $region7: #{discriminator_forward.6} parent=0 // pred_check_branch
    %11 = sbr.rel (0) target = $region9
  $region8: #{discriminator_forward.6} parent=0 // pred_region
    _
  $region9: #{discriminator_forward.6} parent=0 // pred_fallthru
    _
  // Predicated region
  $region10: #{discriminator_forward.6} parent=0 // pred_check
    _
  $region11: #{discriminator_forward.6} parent=0 // pred_check_branch
    %13 = sbr.rel (0) target = $region13
  $region12: #{discriminator_forward.6} parent=0 // pred_region
    _
  $region13: #{discriminator_forward.6} parent=0 // pred_fallthru
    _
  %v14 = vld [vmem:[%s0] sm:$0xff]
  %v15 = vld [vmem:[%s0 + $0x8] sm:$0xff]
  %v16 = vld [vmem:[%s0 + $0x10] sm:$0xff]
  %v17 = vld [vmem:[%s0 + $0x18] sm:$0xff]
  %v18 = vld [vmem:[%s0 + $0x20] sm:$0xff]
  %v19 = vld [vmem:[%s0 + $0x28] sm:$0xff]
  %v20 = vld [vmem:[%s0 + $0x30] sm:$0xff]
  %v21 = vld [vmem:[%s0 + $0x38] sm:$0xff]
  %v22 = vld [vmem:[%s0 + $0x40] sm:$0xff]
  %v23 = vld [vmem:[%s0 + $0x48] sm:$0xff]
  %v24 = vld [vmem:[%s0 + $0x50] sm:$0xff]
  %v25 = vld [vmem:[%s0 + $0x58] sm:$0xff]
  %v26 = vld [vmem:[%s0 + $0x60] sm:$0xf]
  %v27 = vld [vmem:[%s0 + $0x64] sm:$0xff]
  %v28 = vld [vmem:[%s0 + $0x6c] sm:$0xff]
  %v29 = vld [vmem:[%s0 + $0x74] sm:$0xff]
  %v30 = vld [vmem:[%s0 + $0x7c] sm:$0xff]
  %v31 = vld [vmem:[%s0 + $0x84] sm:$0xff]
  %v32 = vld [vmem:[%s0 + $0x8c] sm:$0xff]
  %v33 = vld [vmem:[%s0 + $0x94] sm:$0xff]
  %v34 = vld [vmem:[%s0 + $0x9c] sm:$0xff]
  %v35 = vld [vmem:[%s0 + $0xa4] sm:$0xff]
  %v36 = vld [vmem:[%s0 + $0xac] sm:$0xff]
  %v37 = vld [vmem:[%s0 + $0xb4] sm:$0xff]
  %v38 = vld [vmem:[%s0 + $0xbc] sm:$0xff]
  %v39 = vld [vmem:[%s0 + $0xc4] sm:$0xf]
  %v40 = vld [vmem:[%s0 + $0xc8] sm:$0xff]
  %v41 = vld [vmem:[%s0 + $0xd0] sm:$0xff]
  %v42 = vld [vmem:[%s0 + $0xd8] sm:$0xff]
  %v43 = vld [vmem:[%s0 + $0xe0] sm:$0xff]
  %v44 = vld [vmem:[%s0 + $0xe8] sm:$0xff]
  %v45 = vld [vmem:[%s0 + $0xf0] sm:$0xff]
  %v46 = vld [vmem:[%s0 + $0xf8] sm:$0xff]
  %v47 = vld [vmem:[%s0 + $0x100] sm:$0xff]
  %v48 = vld [vmem:[%s0 + $0x108] sm:$0xff]
  %v49 = vld [vmem:[%s0 + $0x110] sm:$0xff]
  %v50 = vld [vmem:[%s0 + $0x118] sm:$0xff]
  %v51 = vld [vmem:[%s0 + $0x120] sm:$0xff]
  %v52 = vld [vmem:[%s0 + $0x128] sm:$0xf]
  %v53 = vld [vmem:[%s0 + $0x12c] sm:$0xff]
  %v54 = vld [vmem:[%s0 + $0x134] sm:$0xff]
  %v55 = vld [vmem:[%s0 + $0x13c] sm:$0xff]
  %v56 = vld [vmem:[%s0 + $0x144] sm:$0xff]
  %v57 = vld [vmem:[%s0 + $0x14c] sm:$0xff]
  %v58 = vld [vmem:[%s0 + $0x154] sm:$0xff]
  %v59 = vld [vmem:[%s0 + $0x15c] sm:$0xff]
  %v60 = vld [vmem:[%s0 + $0x164] sm:$0xff]
  %v61 = vld [vmem:[%s0 + $0x16c] sm:$0xff]
  %v62 = vld [vmem:[%s0 + $0x174] sm:$0xff]
  %v63 = vld [vmem:[%s0 + $0x17c] sm:$0xff]
  %v64 = vld [vmem:[%s0 + $0x184] sm:$0xff]
  %v65 = vld [vmem:[%s0 + $0x18c] sm:$0xf]
  %v66 = vld [vmem:[%s1] sm:$0xff]
  %v67 = vld [vmem:[%s1 + $0x8] sm:$0xff]
  %v68 = vld [vmem:[%s1 + $0x10] sm:$0xff]
  %v69 = vld [vmem:[%s1 + $0x18] sm:$0xff]
  %v70 = vld [vmem:[%s1 + $0x20] sm:$0xff]
  %v71 = vld [vmem:[%s1 + $0x28] sm:$0xff]
  %v72 = vld [vmem:[%s1 + $0x30] sm:$0xff]
  %v73 = vld [vmem:[%s1 + $0x38] sm:$0xff]
  %v74 = vld [vmem:[%s1 + $0x40] sm:$0xff]
  %v75 = vld [vmem:[%s1 + $0x48] sm:$0xff]
  %v76 = vld [vmem:[%s1 + $0x50] sm:$0xff]
  %v77 = vld [vmem:[%s1 + $0x58] sm:$0xff]
  %v78 = vld [vmem:[%s1 + $0x60] sm:$0xff]
  %v79 = vld [vmem:[%s1 + $0x68] sm:$0xff]
  %v80 = vld [vmem:[%s1 + $0x70] sm:$0xff]
  %v81 = vld [vmem:[%s1 + $0x78] sm:$0xff]
  %v82 = vld [vmem:[%s1 + $0x80] sm:$0xff]
  %v83 = vld [vmem:[%s1 + $0x88] sm:$0xff]
  %v84 = vld [vmem:[%s1 + $0x90] sm:$0xff]
  %v85 = vld [vmem:[%s1 + $0x98] sm:$0xff]
  %v86 = vld [vmem:[%s1 + $0xa0] sm:$0xff]
  %v87 = vld [vmem:[%s1 + $0xa8] sm:$0xff]
  %v88 = vld [vmem:[%s1 + $0xb0] sm:$0xff]
  %v89 = vld [vmem:[%s1 + $0xb8] sm:$0xff]
  %v90 = vld [vmem:[%s1 + $0xc0] sm:$0xff]
  %v91 = vld [vmem:[%s1 + $0xc8] sm:$0xff]
  %v92 = vld [vmem:[%s1 + $0xd0] sm:$0xff]
  %v93 = vld [vmem:[%s1 + $0xd8] sm:$0xff]
  %v94 = vld [vmem:[%s1 + $0xe0] sm:$0xff]
  %v95 = vld [vmem:[%s1 + $0xe8] sm:$0xff]
  %v96 = vld [vmem:[%s1 + $0xf0] sm:$0xff]
  %v97 = vld [vmem:[%s1 + $0xf8] sm:$0xff]
  %v98 = vld [vmem:[%s1 + $0x100] sm:$0xff]
  %v99 = vld [vmem:[%s1 + $0x108] sm:$0xff]
  %v100 = vld [vmem:[%s1 + $0x110] sm:$0xff]
  %v101 = vld [vmem:[%s1 + $0x118] sm:$0xff]
  %v102 = vld [vmem:[%s1 + $0x120] sm:$0xff]
  %v103 = vld [vmem:[%s1 + $0x128] sm:$0xff]
  %v104 = vld [vmem:[%s1 + $0x130] sm:$0xff]
  %v105 = vld [vmem:[%s1 + $0x138] sm:$0xff]
  %v106 = vld [vmem:[%s1 + $0x140] sm:$0xff]
  %v107 = vld [vmem:[%s1 + $0x148] sm:$0xff]
  %v108 = vld [vmem:[%s1 + $0x150] sm:$0xff]
  %v109 = vld [vmem:[%s1 + $0x158] sm:$0xff]
  %v110 = vld [vmem:[%s1 + $0x160] sm:$0xff]
  %v111 = vld [vmem:[%s1 + $0x168] sm:$0xff]
  %v112 = vld [vmem:[%s1 + $0x170] sm:$0xff]
  %v113 = vld [vmem:[%s1 + $0x178] sm:$0xff]
  %v114 = vld [vmem:[%s1 + $0x180] sm:$0xff]
  %v115 = vld [vmem:[%s1 + $0x188] sm:$0xff]
  %v116 = vld [vmem:[%s1 + $0x190] sm:$0xff]
  %v117 = vld [vmem:[%s1 + $0x198] sm:$0xff]
  %v118 = vld [vmem:[%s1 + $0x1a0] sm:$0xff]
  %v119 = vld [vmem:[%s1 + $0x1a8] sm:$0xff]
  %v120 = vld [vmem:[%s1 + $0x1b0] sm:$0xff]
  %v121 = vld [vmem:[%s1 + $0x1b8] sm:$0xff]
  %v122 = vld [vmem:[%s1 + $0x1c0] sm:$0xff]
  %v123 = vld [vmem:[%s1 + $0x1c8] sm:$0xff]
  %v124 = vld [vmem:[%s1 + $0x1d0] sm:$0xff]
  %v125 = vld [vmem:[%s1 + $0x1d8] sm:$0xff]
  %v126 = vld [vmem:[%s1 + $0x1e0] sm:$0xff]
  %v127 = vld [vmem:[%s1 + $0x1e8] sm:$0xff]
  %v128 = vld [vmem:[%s1 + $0x1f0] sm:$0xff]
  %v129 = vld [vmem:[%s1 + $0x1f8] sm:$0xff]
  %v130 = vld [vmem:[%s1 + $0x200] sm:$0xff]
  %v131 = vld [vmem:[%s1 + $0x208] sm:$0xff]
  %v132 = vld [vmem:[%s1 + $0x210] sm:$0xff]
  %v133 = vld [vmem:[%s1 + $0x218] sm:$0xff]
  %v134 = vld [vmem:[%s1 + $0x220] sm:$0xff]
  %v135 = vld [vmem:[%s1 + $0x228] sm:$0xff]
  %v136 = vld [vmem:[%s1 + $0x230] sm:$0xff]
  %v137 = vld [vmem:[%s1 + $0x238] sm:$0xff]
  %v138 = vld [vmem:[%s1 + $0x240] sm:$0xff]
  %v139 = vld [vmem:[%s1 + $0x248] sm:$0xff]
  %v140 = vld [vmem:[%s1 + $0x250] sm:$0xff]
  %v141 = vld [vmem:[%s1 + $0x258] sm:$0xff]
  %v142 = vld [vmem:[%s1 + $0x260] sm:$0xff]
  %v143 = vld [vmem:[%s1 + $0x268] sm:$0xff]
  %v144 = vld [vmem:[%s1 + $0x270] sm:$0xff]
  %v145 = vld [vmem:[%s1 + $0x278] sm:$0xff]
  %v146 = vld [vmem:[%s1 + $0x280] sm:$0xff]
  %v147 = vld [vmem:[%s1 + $0x288] sm:$0xff]
  %v148 = vld [vmem:[%s1 + $0x290] sm:$0xff]
  %v149 = vld [vmem:[%s1 + $0x298] sm:$0xff]
  %v150 = vld [vmem:[%s1 + $0x2a0] sm:$0xff]
  %v151 = vld [vmem:[%s1 + $0x2a8] sm:$0xff]
  %v152 = vld [vmem:[%s1 + $0x2b0] sm:$0xff]
  %v153 = vld [vmem:[%s1 + $0x2b8] sm:$0xff]
  %v154 = vld [vmem:[%s1 + $0x2c0] sm:$0xff]
  %v155 = vld [vmem:[%s1 + $0x2c8] sm:$0xff]
  %v156 = vld [vmem:[%s1 + $0x2d0] sm:$0xff]
  %v157 = vld [vmem:[%s1 + $0x2d8] sm:$0xff]
  %v158 = vld [vmem:[%s1 + $0x2e0] sm:$0xff]
  %v159 = vld [vmem:[%s1 + $0x2e8] sm:$0xff]
  %v160 = vld [vmem:[%s1 + $0x2f0] sm:$0xff]
  %v161 = vld [vmem:[%s1 + $0x2f8] sm:$0xff]
  %v162 = vld [vmem:[%s1 + $0x300] sm:$0xff]
  %v163 = vld [vmem:[%s1 + $0x308] sm:$0xff]
  %v164 = vld [vmem:[%s1 + $0x310] sm:$0xff]
  %v165 = vld [vmem:[%s1 + $0x318] sm:$0xff]
  %v166 = vld [vmem:[%s1 + $0x320] sm:$0xff]
  %v167 = vld [vmem:[%s1 + $0x328] sm:$0xff]
  %v168 = vld [vmem:[%s1 + $0x330] sm:$0xff]
  %v169 = vld [vmem:[%s1 + $0x338] sm:$0xff]
  %v170 = vld [vmem:[%s1 + $0x340] sm:$0xff]
  %v171 = vld [vmem:[%s1 + $0x348] sm:$0xff]
  %v172 = vld [vmem:[%s1 + $0x350] sm:$0xff]
  %v173 = vld [vmem:[%s1 + $0x358] sm:$0xff]
  %v174 = vld [vmem:[%s1 + $0x360] sm:$0xff]
  %v175 = vld [vmem:[%s1 + $0x368] sm:$0xff]
  %v176 = vld [vmem:[%s1 + $0x370] sm:$0xff]
  %v177 = vld [vmem:[%s1 + $0x378] sm:$0xff]
  %v178 = vld [vmem:[%s1 + $0x380] sm:$0xff]
  %v179 = vld [vmem:[%s1 + $0x388] sm:$0xff]
  %v180 = vld [vmem:[%s1 + $0x390] sm:$0xff]
  %v181 = vld [vmem:[%s1 + $0x398] sm:$0xff]
  %v182 = vld [vmem:[%s1 + $0x3a0] sm:$0xff]
  %v183 = vld [vmem:[%s1 + $0x3a8] sm:$0xff]
  %v184 = vld [vmem:[%s1 + $0x3b0] sm:$0xff]
  %v185 = vld [vmem:[%s1 + $0x3b8] sm:$0xff]
  %v186 = vld [vmem:[%s1 + $0x3c0] sm:$0xff]
  %v187 = vld [vmem:[%s1 + $0x3c8] sm:$0xff]
  %v188 = vld [vmem:[%s1 + $0x3d0] sm:$0xff]
  %v189 = vld [vmem:[%s1 + $0x3d8] sm:$0xff]
  %v190 = vld [vmem:[%s1 + $0x3e0] sm:$0xff]
  %v191 = vld [vmem:[%s1 + $0x3e8] sm:$0xff]
  %v192 = vld [vmem:[%s1 + $0x3f0] sm:$0xff]
  %v193 = vld [vmem:[%s1 + $0x3f8] sm:$0xff]
  %v194 = vld [vmem:[%s1 + $0x400] sm:$0xff]
  %v195 = vld [vmem:[%s1 + $0x408] sm:$0xff]
  %v196 = vld [vmem:[%s1 + $0x410] sm:$0xff]
  %v197 = vld [vmem:[%s1 + $0x418] sm:$0xff]
  %v198 = vld [vmem:[%s1 + $0x420] sm:$0xff]
  %v199 = vld [vmem:[%s1 + $0x428] sm:$0xff]
  %v200 = vld [vmem:[%s1 + $0x430] sm:$0xff]
  %v201 = vld [vmem:[%s1 + $0x438] sm:$0xff]
  %v202 = vld [vmem:[%s1 + $0x440] sm:$0xff]
  %v203 = vld [vmem:[%s1 + $0x448] sm:$0xff]
  %v204 = vld [vmem:[%s1 + $0x450] sm:$0xff]
  %v205 = vld [vmem:[%s1 + $0x458] sm:$0xff]
  %v206 = vld [vmem:[%s1 + $0x460] sm:$0xff]
  %v207 = vld [vmem:[%s1 + $0x468] sm:$0xff]
  %v208 = vld [vmem:[%s1 + $0x470] sm:$0xff]
  %v209 = vld [vmem:[%s1 + $0x478] sm:$0xff]
  %v210 = vld [vmem:[%s1 + $0x480] sm:$0xff]
  %v211 = vld [vmem:[%s1 + $0x488] sm:$0xff]
  %v212 = vld [vmem:[%s1 + $0x490] sm:$0xff]
  %v213 = vld [vmem:[%s1 + $0x498] sm:$0xff]
  %v214 = vld [vmem:[%s1 + $0x4a0] sm:$0xff]
  %v215 = vld [vmem:[%s1 + $0x4a8] sm:$0xff]
  %v216 = vld [vmem:[%s1 + $0x4b0] sm:$0xff]
  %v217 = vld [vmem:[%s1 + $0x4b8] sm:$0xff]
  %v218 = vld [vmem:[%s1 + $0x4c0] sm:$0xff]
  %v219 = vld [vmem:[%s1 + $0x4c8] sm:$0xff]
  %v220 = vld [vmem:[%s1 + $0x4d0] sm:$0xff]
  %v221 = vld [vmem:[%s1 + $0x4d8] sm:$0xff]
  %v222 = vld [vmem:[%s1 + $0x4e0] sm:$0xff]
  %v223 = vld [vmem:[%s1 + $0x4e8] sm:$0xff]
  %v224 = vld [vmem:[%s1 + $0x4f0] sm:$0xff]
  %v225 = vld [vmem:[%s1 + $0x4f8] sm:$0xff]
  %v226 = vld [vmem:[%s1 + $0x500] sm:$0xff]
  %v227 = vld [vmem:[%s1 + $0x508] sm:$0xff]
  %v228 = vld [vmem:[%s1 + $0x510] sm:$0xff]
  %v229 = vld [vmem:[%s1 + $0x518] sm:$0xff]
  %v230 = vld [vmem:[%s1 + $0x520] sm:$0xff]
  %v231 = vld [vmem:[%s1 + $0x528] sm:$0xff]
  %v232 = vld [vmem:[%s1 + $0x530] sm:$0xff]
  %v233 = vld [vmem:[%s1 + $0x538] sm:$0xff]
  %v234 = vld [vmem:[%s1 + $0x540] sm:$0xff]
  %v235 = vld [vmem:[%s1 + $0x548] sm:$0xff]
  %v236 = vld [vmem:[%s1 + $0x550] sm:$0xff]
  %v237 = vld [vmem:[%s1 + $0x558] sm:$0xff]
  %v238 = vld [vmem:[%s1 + $0x560] sm:$0xff]
  %v239 = vld [vmem:[%s1 + $0x568] sm:$0xff]
  %v240 = vld [vmem:[%s1 + $0x570] sm:$0xff]
  %v241 = vld [vmem:[%s1 + $0x578] sm:$0xff]
  %v242 = vld [vmem:[%s1 + $0x580] sm:$0xff]
  %v243 = vld [vmem:[%s1 + $0x588] sm:$0xff]
  %v244 = vld [vmem:[%s1 + $0x590] sm:$0xff]
  %v245 = vld [vmem:[%s1 + $0x598] sm:$0xff]
  %v246 = vld [vmem:[%s1 + $0x5a0] sm:$0xff]
  %v247 = vld [vmem:[%s1 + $0x5a8] sm:$0xff]
  %v248 = vld [vmem:[%s1 + $0x5b0] sm:$0xff]
  %v249 = vld [vmem:[%s1 + $0x5b8] sm:$0xff]
  %v250 = vld [vmem:[%s1 + $0x5c0] sm:$0xff]
  %v251 = vld [vmem:[%s1 + $0x5c8] sm:$0xff]
  %v252 = vld [vmem:[%s1 + $0x5d0] sm:$0xff]
  %v253 = vld [vmem:[%s1 + $0x5d8] sm:$0xff]
  %v254 = vld [vmem:[%s1 + $0x5e0] sm:$0xff]
  %v255 = vld [vmem:[%s1 + $0x5e8] sm:$0xff]
  %v256 = vld [vmem:[%s1 + $0x5f0] sm:$0xff]
  %v257 = vld [vmem:[%s1 + $0x5f8] sm:$0xff]
  %v258 = vld [vmem:[%s1 + $0x600] sm:$0xff]
  %v259 = vld [vmem:[%s1 + $0x608] sm:$0xff]
  %v260 = vld [vmem:[%s1 + $0x610] sm:$0xff]
  %v261 = vld [vmem:[%s1 + $0x618] sm:$0xff]
  %v262 = vld [vmem:[%s1 + $0x620] sm:$0xff]
  %v263 = vld [vmem:[%s1 + $0x628] sm:$0xff]
  %v264 = vld [vmem:[%s1 + $0x630] sm:$0xff]
  %v265 = vld [vmem:[%s1 + $0x638] sm:$0xff]
  %v266 = vld [vmem:[%s1 + $0x640] sm:$0xff]
  %v267 = vld [vmem:[%s1 + $0x648] sm:$0xff]
  %v268 = vld [vmem:[%s1 + $0x650] sm:$0xff]
  %v269 = vld [vmem:[%s1 + $0x658] sm:$0xff]
  %v270 = vld [vmem:[%s1 + $0x660] sm:$0xff]
  %v271 = vld [vmem:[%s1 + $0x668] sm:$0xff]
  %v272 = vld [vmem:[%s1 + $0x670] sm:$0xff]
  %v273 = vld [vmem:[%s1 + $0x678] sm:$0xff]
  %v274 = vld [vmem:[%s1 + $0x680] sm:$0xff]
  %v275 = vld [vmem:[%s1 + $0x688] sm:$0xff]
  %v276 = vld [vmem:[%s1 + $0x690] sm:$0xff]
  %v277 = vld [vmem:[%s1 + $0x698] sm:$0xff]
  %v278 = vld [vmem:[%s1 + $0x6a0] sm:$0xff]
  %v279 = vld [vmem:[%s1 + $0x6a8] sm:$0xff]
  %v280 = vld [vmem:[%s1 + $0x6b0] sm:$0xff]
  %v281 = vld [vmem:[%s1 + $0x6b8] sm:$0xff]
  %v282 = vld [vmem:[%s1 + $0x6c0] sm:$0xff]
  %v283 = vld [vmem:[%s1 + $0x6c8] sm:$0xff]
  %v284 = vld [vmem:[%s1 + $0x6d0] sm:$0xff]
  %v285 = vld [vmem:[%s1 + $0x6d8] sm:$0xff]
  %v286 = vld [vmem:[%s1 + $0x6e0] sm:$0xff]
  %v287 = vld [vmem:[%s1 + $0x6e8] sm:$0xff]
  %v288 = vld [vmem:[%s1 + $0x6f0] sm:$0xff]
  %v289 = vld [vmem:[%s1 + $0x6f8] sm:$0xff]
  %v290 = vld [vmem:[%s1 + $0x700] sm:$0xff]
  %v291 = vld [vmem:[%s1 + $0x708] sm:$0xff]
  %v292 = vld [vmem:[%s1 + $0x710] sm:$0xff]
  %v293 = vld [vmem:[%s1 + $0x718] sm:$0xff]
  %v294 = vld [vmem:[%s1 + $0x720] sm:$0xff]
  %v295 = vld [vmem:[%s1 + $0x728] sm:$0xff]
  %v296 = vld [vmem:[%s1 + $0x730] sm:$0xff]
  %v297 = vld [vmem:[%s1 + $0x738] sm:$0xff]
  %v298 = vld [vmem:[%s1 + $0x740] sm:$0xff]
  %v299 = vld [vmem:[%s1 + $0x748] sm:$0xff]
  %v300 = vld [vmem:[%s1 + $0x750] sm:$0xff]
  %v301 = vld [vmem:[%s1 + $0x758] sm:$0xff]
  %v302 = vld [vmem:[%s1 + $0x760] sm:$0xff]
  %v303 = vld [vmem:[%s1 + $0x768] sm:$0xff]
  %v304 = vld [vmem:[%s1 + $0x770] sm:$0xff]
  %v305 = vld [vmem:[%s1 + $0x778] sm:$0xff]
  %v306 = vld [vmem:[%s1 + $0x780] sm:$0xff]
  %v307 = vld [vmem:[%s1 + $0x788] sm:$0xff]
  %v308 = vld [vmem:[%s1 + $0x790] sm:$0xff]
  %v309 = vld [vmem:[%s1 + $0x798] sm:$0xff]
  %v310 = vld [vmem:[%s1 + $0x7a0] sm:$0xff]
  %v311 = vld [vmem:[%s1 + $0x7a8] sm:$0xff]
  %v312 = vld [vmem:[%s1 + $0x7b0] sm:$0xff]
  %v313 = vld [vmem:[%s1 + $0x7b8] sm:$0xff]
  %v314 = vld [vmem:[%s1 + $0x7c0] sm:$0xff]
  %v315 = vld [vmem:[%s1 + $0x7c8] sm:$0xff]
  %v316 = vld [vmem:[%s1 + $0x7d0] sm:$0xff]
  %v317 = vld [vmem:[%s1 + $0x7d8] sm:$0xff]
  %v318 = vld [vmem:[%s1 + $0x7e0] sm:$0xff]
  %v319 = vld [vmem:[%s1 + $0x7e8] sm:$0xff]
  %v320 = vld [vmem:[%s1 + $0x7f0] sm:$0xff]
  %v321 = vld [vmem:[%s1 + $0x7f8] sm:$0xff]
  %v322 = vld [vmem:[%s1 + $0x800] sm:$0xff]
  %v323 = vld [vmem:[%s1 + $0x808] sm:$0xff]
  %v324 = vld [vmem:[%s1 + $0x810] sm:$0xff]
  %v325 = vld [vmem:[%s1 + $0x818] sm:$0xff]
  %v326 = vld [vmem:[%s1 + $0x820] sm:$0xff]
  %v327 = vld [vmem:[%s1 + $0x828] sm:$0xff]
  %v328 = vld [vmem:[%s1 + $0x830] sm:$0xff]
  %v329 = vld [vmem:[%s1 + $0x838] sm:$0xff]
  %v330 = vld [vmem:[%s1 + $0x840] sm:$0xff]
  %v331 = vld [vmem:[%s1 + $0x848] sm:$0xff]
  %v332 = vld [vmem:[%s1 + $0x850] sm:$0xff]
  %v333 = vld [vmem:[%s1 + $0x858] sm:$0xff]
  %v334 = vld [vmem:[%s1 + $0x860] sm:$0xff]
  %v335 = vld [vmem:[%s1 + $0x868] sm:$0xff]
  %v336 = vld [vmem:[%s1 + $0x870] sm:$0xff]
  %v337 = vld [vmem:[%s1 + $0x878] sm:$0xff]
  %v338 = vld [vmem:[%s1 + $0x880] sm:$0xff]
  %v339 = vld [vmem:[%s1 + $0x888] sm:$0xff]
  %v340 = vld [vmem:[%s1 + $0x890] sm:$0xff]
  %v341 = vld [vmem:[%s1 + $0x898] sm:$0xff]
  %v342 = vld [vmem:[%s1 + $0x8a0] sm:$0xff]
  %v343 = vld [vmem:[%s1 + $0x8a8] sm:$0xff]
  %v344 = vld [vmem:[%s1 + $0x8b0] sm:$0xff]
  %v345 = vld [vmem:[%s1 + $0x8b8] sm:$0xff]
  %v346 = vld [vmem:[%s1 + $0x8c0] sm:$0xff]
  %v347 = vld [vmem:[%s1 + $0x8c8] sm:$0xff]
  %v348 = vld [vmem:[%s1 + $0x8d0] sm:$0xff]
  %v349 = vld [vmem:[%s1 + $0x8d8] sm:$0xff]
  %v350 = vld [vmem:[%s1 + $0x8e0] sm:$0xff]
  %v351 = vld [vmem:[%s1 + $0x8e8] sm:$0xff]
  %v352 = vld [vmem:[%s1 + $0x8f0] sm:$0xff]
  %v353 = vld [vmem:[%s1 + $0x8f8] sm:$0xff]
  %v354 = vld [vmem:[%s1 + $0x900] sm:$0xff]
  %v355 = vld [vmem:[%s1 + $0x908] sm:$0xff]
  %v356 = vld [vmem:[%s1 + $0x910] sm:$0xff]
  %v357 = vld [vmem:[%s1 + $0x918] sm:$0xff]
  %v358 = vld [vmem:[%s1 + $0x920] sm:$0xff]
  %v359 = vld [vmem:[%s1 + $0x928] sm:$0xff]
  %v360 = vld [vmem:[%s1 + $0x930] sm:$0xff]
  %v361 = vld [vmem:[%s1 + $0x938] sm:$0xff]
  %v362 = vld [vmem:[%s1 + $0x940] sm:$0xff]
  %v363 = vld [vmem:[%s1 + $0x948] sm:$0xff]
  %v364 = vld [vmem:[%s1 + $0x950] sm:$0xff]
  %v365 = vld [vmem:[%s1 + $0x958] sm:$0xff]
  %v366 = vld [vmem:[%s1 + $0x960] sm:$0xff]
  %v367 = vld [vmem:[%s1 + $0x968] sm:$0xff]
  %v368 = vld [vmem:[%s1 + $0x970] sm:$0xff]
  %v369 = vld [vmem:[%s1 + $0x978] sm:$0xff]
  %v370 = vld [vmem:[%s1 + $0x980] sm:$0xff]
  %v371 = vld [vmem:[%s1 + $0x988] sm:$0xff]
  %v372 = vld [vmem:[%s1 + $0x990] sm:$0xff]
  %v373 = vld [vmem:[%s1 + $0x998] sm:$0xff]
  %v374 = vld [vmem:[%s1 + $0x9a0] sm:$0xff]
  %v375 = vld [vmem:[%s1 + $0x9a8] sm:$0xff]
  %v376 = vld [vmem:[%s1 + $0x9b0] sm:$0xff]
  %v377 = vld [vmem:[%s1 + $0x9b8] sm:$0xff]
  %v378 = vld [vmem:[%s1 + $0x9c0] sm:$0xff]
  %v379 = vld [vmem:[%s1 + $0x9c8] sm:$0xff]
  %v380 = vld [vmem:[%s1 + $0x9d0] sm:$0xff]
  %v381 = vld [vmem:[%s1 + $0x9d8] sm:$0xff]
  %v382 = vld [vmem:[%s1 + $0x9e0] sm:$0xff]
  %v383 = vld [vmem:[%s1 + $0x9e8] sm:$0xff]
  %v384 = vld [vmem:[%s1 + $0x9f0] sm:$0xff]
  %v385 = vld [vmem:[%s1 + $0x9f8] sm:$0xff]
  %v386 = vld [vmem:[%s1 + $0xa00] sm:$0xff]
  %v387 = vld [vmem:[%s1 + $0xa08] sm:$0xff]
  %v388 = vld [vmem:[%s1 + $0xa10] sm:$0xff]
  %v389 = vld [vmem:[%s1 + $0xa18] sm:$0xff]
  %v390 = vld [vmem:[%s1 + $0xa20] sm:$0xff]
  %v391 = vld [vmem:[%s1 + $0xa28] sm:$0xff]
  %v392 = vld [vmem:[%s1 + $0xa30] sm:$0xff]
  %v393 = vld [vmem:[%s1 + $0xa38] sm:$0xff]
  %v394 = vld [vmem:[%s1 + $0xa40] sm:$0xff]
  %v395 = vld [vmem:[%s1 + $0xa48] sm:$0xff]
  %v396 = vld [vmem:[%s1 + $0xa50] sm:$0xff]
  %v397 = vld [vmem:[%s1 + $0xa58] sm:$0xff]
  %v398 = vld [vmem:[%s1 + $0xa60] sm:$0xff]
  %v399 = vld [vmem:[%s1 + $0xa68] sm:$0xff]
  %v400 = vld [vmem:[%s1 + $0xa70] sm:$0xff]
  %v401 = vld [vmem:[%s1 + $0xa78] sm:$0xff]
  %v402 = vld [vmem:[%s1 + $0xa80] sm:$0xff]
  %v403 = vld [vmem:[%s1 + $0xa88] sm:$0xff]
  %v404 = vld [vmem:[%s1 + $0xa90] sm:$0xff]
  %v405 = vld [vmem:[%s1 + $0xa98] sm:$0xff]
  %v406 = vld [vmem:[%s1 + $0xaa0] sm:$0xff]
  %v407 = vld [vmem:[%s1 + $0xaa8] sm:$0xff]
  %v408 = vld [vmem:[%s1 + $0xab0] sm:$0xff]
  %v409 = vld [vmem:[%s1 + $0xab8] sm:$0xff]
  %v410 = vld [vmem:[%s1 + $0xac0] sm:$0xff]
  %v411 = vld [vmem:[%s1 + $0xac8] sm:$0xff]
  %v412 = vld [vmem:[%s1 + $0xad0] sm:$0xff]
  %v413 = vld [vmem:[%s1 + $0xad8] sm:$0xff]
  %v414 = vld [vmem:[%s1 + $0xae0] sm:$0xff]
  %v415 = vld [vmem:[%s1 + $0xae8] sm:$0xff]
  %v416 = vld [vmem:[%s1 + $0xaf0] sm:$0xff]
  %v417 = vld [vmem:[%s1 + $0xaf8] sm:$0xff]
  %v418 = vld [vmem:[%s1 + $0xb00] sm:$0xff]
  %v419 = vld [vmem:[%s1 + $0xb08] sm:$0xff]
  %v420 = vld [vmem:[%s1 + $0xb10] sm:$0xff]
  %v421 = vld [vmem:[%s1 + $0xb18] sm:$0xff]
  %v422 = vld [vmem:[%s1 + $0xb20] sm:$0xff]
  %v423 = vld [vmem:[%s1 + $0xb28] sm:$0xff]
  %v424 = vld [vmem:[%s1 + $0xb30] sm:$0xff]
  %v425 = vld [vmem:[%s1 + $0xb38] sm:$0xff]
  %v426 = vld [vmem:[%s1 + $0xb40] sm:$0xff]
  %v427 = vld [vmem:[%s1 + $0xb48] sm:$0xff]
  %v428 = vld [vmem:[%s1 + $0xb50] sm:$0xff]
  %v429 = vld [vmem:[%s1 + $0xb58] sm:$0xff]
  %v430 = vld [vmem:[%s1 + $0xb60] sm:$0xff]
  %v431 = vld [vmem:[%s1 + $0xb68] sm:$0xff]
  %v432 = vld [vmem:[%s1 + $0xb70] sm:$0xff]
  %v433 = vld [vmem:[%s1 + $0xb78] sm:$0xff]
  %v434 = vld [vmem:[%s1 + $0xb80] sm:$0xff]
  %v435 = vld [vmem:[%s1 + $0xb88] sm:$0xff]
  %v436 = vld [vmem:[%s1 + $0xb90] sm:$0xff]
  %v437 = vld [vmem:[%s1 + $0xb98] sm:$0xff]
  %v438 = vld [vmem:[%s1 + $0xba0] sm:$0xff]
  %v439 = vld [vmem:[%s1 + $0xba8] sm:$0xff]
  %v440 = vld [vmem:[%s1 + $0xbb0] sm:$0xff]
  %v441 = vld [vmem:[%s1 + $0xbb8] sm:$0xff]
  %v442 = vld [vmem:[%s1 + $0xbc0] sm:$0xff]
  %v443 = vld [vmem:[%s1 + $0xbc8] sm:$0xff]
  %v444 = vld [vmem:[%s1 + $0xbd0] sm:$0xff]
  %v445 = vld [vmem:[%s1 + $0xbd8] sm:$0xff]
  %v446 = vld [vmem:[%s1 + $0xbe0] sm:$0xff]
  %v447 = vld [vmem:[%s1 + $0xbe8] sm:$0xff]
  %v448 = vld [vmem:[%s1 + $0xbf0] sm:$0xff]
  %v449 = vld [vmem:[%s1 + $0xbf8] sm:$0xff]
  %v450 = vld [vmem:[%s1 + $0xc00] sm:$0xff]
  %v451 = vld [vmem:[%s1 + $0xc08] sm:$0xff]
  %v452 = vld [vmem:[%s1 + $0xc10] sm:$0xff]
  %v453 = vld [vmem:[%s1 + $0xc18] sm:$0xff]
  %v454 = vld [vmem:[%s1 + $0xc20] sm:$0xff]
  %v455 = vld [vmem:[%s1 + $0xc28] sm:$0xff]
  %v456 = vld [vmem:[%s1 + $0xc30] sm:$0xff]
  %v457 = vld [vmem:[%s1 + $0xc38] sm:$0xff]
  %v458 = vld [vmem:[%s1 + $0xc40] sm:$0xff]
  %v459 = vld [vmem:[%s1 + $0xc48] sm:$0xff]
  %v460 = vld [vmem:[%s1 + $0xc50] sm:$0xff]
  %v461 = vld [vmem:[%s1 + $0xc58] sm:$0xff]
  %v462 = vld [vmem:[%s1 + $0xc60] sm:$0xff]
  %v463 = vld [vmem:[%s1 + $0xc68] sm:$0xff]
  %v464 = vld [vmem:[%s1 + $0xc70] sm:$0xff]
  %v465 = vld [vmem:[%s1 + $0xc78] sm:$0xff]
  %v466 = vld [vmem:[%s2] sm:$0x3]
  %v468 = vperm.slane %v466, 0
  %v469 = vperm.slane %v466, 1
  %v524 = vunpack.c.l.b16 %v14
  %v525 = vunpack.c.h.b16 %v14
  %v526 = vunpack.c.l.b16 %v15
  %v527 = vunpack.c.h.b16 %v15
  %v528 = vunpack.c.l.b16 %v16
  %v529 = vunpack.c.h.b16 %v16
  %v530 = vunpack.c.l.b16 %v17
  %v531 = vunpack.c.h.b16 %v17
  %v532 = vunpack.c.l.b16 %v18
  %v533 = vunpack.c.h.b16 %v18
  %v534 = vunpack.c.l.b16 %v19
  %v535 = vunpack.c.h.b16 %v19
  %v536 = vunpack.c.l.b16 %v20
  %v537 = vunpack.c.h.b16 %v20
  %v538 = vunpack.c.l.b16 %v21
  %v539 = vunpack.c.h.b16 %v21
  %v540 = vunpack.c.l.b16 %v22
  %v541 = vunpack.c.h.b16 %v22
  %v542 = vunpack.c.l.b16 %v23
  %v543 = vunpack.c.h.b16 %v23
  %v544 = vunpack.c.l.b16 %v24
  %v545 = vunpack.c.h.b16 %v24
  %v546 = vunpack.c.l.b16 %v25
  %v547 = vunpack.c.h.b16 %v25
  %v548 = vunpack.c.l.b16 %v26
  %v549 = vunpack.c.l.b16 %v27
  %v550 = vunpack.c.h.b16 %v27
  %v551 = vunpack.c.l.b16 %v28
  %v552 = vunpack.c.h.b16 %v28
  %v553 = vunpack.c.l.b16 %v29
  %v554 = vunpack.c.h.b16 %v29
  %v555 = vunpack.c.l.b16 %v30
  %v556 = vunpack.c.h.b16 %v30
  %v557 = vunpack.c.l.b16 %v31
  %v558 = vunpack.c.h.b16 %v31
  %v559 = vunpack.c.l.b16 %v32
  %v560 = vunpack.c.h.b16 %v32
  %v561 = vunpack.c.l.b16 %v33
  %v562 = vunpack.c.h.b16 %v33
  %v563 = vunpack.c.l.b16 %v34
  %v564 = vunpack.c.h.b16 %v34
  %v565 = vunpack.c.l.b16 %v35
  %v566 = vunpack.c.h.b16 %v35
  %v567 = vunpack.c.l.b16 %v36
  %v568 = vunpack.c.h.b16 %v36
  %v569 = vunpack.c.l.b16 %v37
  %v570 = vunpack.c.h.b16 %v37
  %v571 = vunpack.c.l.b16 %v38
  %v572 = vunpack.c.h.b16 %v38
  %v573 = vunpack.c.l.b16 %v39
  %v574 = vunpack.c.l.b16 %v40
  %v575 = vunpack.c.h.b16 %v40
  %v576 = vunpack.c.l.b16 %v41
  %v577 = vunpack.c.h.b16 %v41
  %v578 = vunpack.c.l.b16 %v42
  %v579 = vunpack.c.h.b16 %v42
  %v580 = vunpack.c.l.b16 %v43
  %v581 = vunpack.c.h.b16 %v43
  %v582 = vunpack.c.l.b16 %v44
  %v583 = vunpack.c.h.b16 %v44
  %v584 = vunpack.c.l.b16 %v45
  %v585 = vunpack.c.h.b16 %v45
  %v586 = vunpack.c.l.b16 %v46
  %v587 = vunpack.c.h.b16 %v46
  %v588 = vunpack.c.l.b16 %v47
  %v589 = vunpack.c.h.b16 %v47
  %v590 = vunpack.c.l.b16 %v48
  %v591 = vunpack.c.h.b16 %v48
  %v592 = vunpack.c.l.b16 %v49
  %v593 = vunpack.c.h.b16 %v49
  %v594 = vunpack.c.l.b16 %v50
  %v595 = vunpack.c.h.b16 %v50
  %v596 = vunpack.c.l.b16 %v51
  %v597 = vunpack.c.h.b16 %v51
  %v598 = vunpack.c.l.b16 %v52
  %v599 = vunpack.c.l.b16 %v53
  %v600 = vunpack.c.h.b16 %v53
  %v601 = vunpack.c.l.b16 %v54
  %v602 = vunpack.c.h.b16 %v54
  %v603 = vunpack.c.l.b16 %v55
  %v604 = vunpack.c.h.b16 %v55
  %v605 = vunpack.c.l.b16 %v56
  %v606 = vunpack.c.h.b16 %v56
  %v607 = vunpack.c.l.b16 %v57
  %v608 = vunpack.c.h.b16 %v57
  %v609 = vunpack.c.l.b16 %v58
  %v610 = vunpack.c.h.b16 %v58
  %v611 = vunpack.c.l.b16 %v59
  %v612 = vunpack.c.h.b16 %v59
  %v613 = vunpack.c.l.b16 %v60
  %v614 = vunpack.c.h.b16 %v60
  %v615 = vunpack.c.l.b16 %v61
  %v616 = vunpack.c.h.b16 %v61
  %v617 = vunpack.c.l.b16 %v62
  %v618 = vunpack.c.h.b16 %v62
  %v619 = vunpack.c.l.b16 %v63
  %v620 = vunpack.c.h.b16 %v63
  %v621 = vunpack.c.l.b16 %v64
  %v622 = vunpack.c.h.b16 %v64
  %v623 = vunpack.c.l.b16 %v65
  %v624 = vpack.c.b16 %v549, %v524
  %v625 = vpack.c.b16 %v550, %v525
  %v626 = vpack.c.b16 %v551, %v526
  %v627 = vpack.c.b16 %v552, %v527
  %v628 = vpack.c.b16 %v553, %v528
  %v629 = vpack.c.b16 %v554, %v529
  %v630 = vpack.c.b16 %v555, %v530
  %v631 = vpack.c.b16 %v556, %v531
  %v632 = vpack.c.b16 %v557, %v532
  %v633 = vpack.c.b16 %v558, %v533
  %v634 = vpack.c.b16 %v559, %v534
  %v635 = vpack.c.b16 %v560, %v535
  %v636 = vpack.c.b16 %v561, %v536
  %v637 = vpack.c.b16 %v562, %v537
  %v638 = vpack.c.b16 %v563, %v538
  %v639 = vpack.c.b16 %v564, %v539
  %v640 = vpack.c.b16 %v565, %v540
  %v641 = vpack.c.b16 %v566, %v541
  %v642 = vpack.c.b16 %v567, %v542
  %v643 = vpack.c.b16 %v568, %v543
  %v644 = vpack.c.b16 %v569, %v544
  %v645 = vpack.c.b16 %v570, %v545
  %v646 = vpack.c.b16 %v571, %v546
  %v647 = vpack.c.b16 %v572, %v547
  %v648 = vpack.c.b16 %v573, %v548
  %v649 = vpack.c.b16 %v599, %v574
  %v650 = vpack.c.b16 %v600, %v575
  %v651 = vpack.c.b16 %v601, %v576
  %v652 = vpack.c.b16 %v602, %v577
  %v653 = vpack.c.b16 %v603, %v578
  %v654 = vpack.c.b16 %v604, %v579
  %v655 = vpack.c.b16 %v605, %v580
  %v656 = vpack.c.b16 %v606, %v581
  %v657 = vpack.c.b16 %v607, %v582
  %v658 = vpack.c.b16 %v608, %v583
  %v659 = vpack.c.b16 %v609, %v584
  %v660 = vpack.c.b16 %v610, %v585
  %v661 = vpack.c.b16 %v611, %v586
  %v662 = vpack.c.b16 %v612, %v587
  %v663 = vpack.c.b16 %v613, %v588
  %v664 = vpack.c.b16 %v614, %v589
  %v665 = vpack.c.b16 %v615, %v590
  %v666 = vpack.c.b16 %v616, %v591
  %v667 = vpack.c.b16 %v617, %v592
  %v668 = vpack.c.b16 %v618, %v593
  %v669 = vpack.c.b16 %v619, %v594
  %v670 = vpack.c.b16 %v620, %v595
  %v671 = vpack.c.b16 %v621, %v596
  %v672 = vpack.c.b16 %v622, %v597
  %v673 = vpack.c.b16 %v623, %v598
  %v1124 = vunpack.c.l.b16 %v66
  %v1125 = vunpack.c.h.b16 %v66
  %v1126 = vunpack.c.l.b16 %v67
  %v1127 = vunpack.c.h.b16 %v67
  %v1128 = vunpack.c.l.b16 %v68
  %v1129 = vunpack.c.h.b16 %v68
  %v1130 = vunpack.c.l.b16 %v69
  %v1131 = vunpack.c.h.b16 %v69
  %v1132 = vunpack.c.l.b16 %v70
  %v1133 = vunpack.c.h.b16 %v70
  %v1134 = vunpack.c.l.b16 %v71
  %v1135 = vunpack.c.h.b16 %v71
  %v1136 = vunpack.c.l.b16 %v72
  %v1137 = vunpack.c.h.b16 %v72
  %v1138 = vunpack.c.l.b16 %v73
  %v1139 = vunpack.c.h.b16 %v73
  %v1140 = vunpack.c.l.b16 %v74
  %v1141 = vunpack.c.h.b16 %v74
  %v1142 = vunpack.c.l.b16 %v75
  %v1143 = vunpack.c.h.b16 %v75
  %v1144 = vunpack.c.l.b16 %v76
  %v1145 = vunpack.c.h.b16 %v76
  %v1146 = vunpack.c.l.b16 %v77
  %v1147 = vunpack.c.h.b16 %v77
  %v1148 = vunpack.c.l.b16 %v78
  %v1149 = vunpack.c.h.b16 %v78
  %v1150 = vunpack.c.l.b16 %v79
  %v1151 = vunpack.c.h.b16 %v79
  %v1152 = vunpack.c.l.b16 %v80
  %v1153 = vunpack.c.h.b16 %v80
  %v1154 = vunpack.c.l.b16 %v81
  %v1155 = vunpack.c.h.b16 %v81
  %v1156 = vunpack.c.l.b16 %v82
  %v1157 = vunpack.c.h.b16 %v82
  %v1158 = vunpack.c.l.b16 %v83
  %v1159 = vunpack.c.h.b16 %v83
  %v1160 = vunpack.c.l.b16 %v84
  %v1161 = vunpack.c.h.b16 %v84
  %v1162 = vunpack.c.l.b16 %v85
  %v1163 = vunpack.c.h.b16 %v85
  %v1164 = vunpack.c.l.b16 %v86
  %v1165 = vunpack.c.h.b16 %v86
  %v1166 = vunpack.c.l.b16 %v87
  %v1167 = vunpack.c.h.b16 %v87
  %v1168 = vunpack.c.l.b16 %v88
  %v1169 = vunpack.c.h.b16 %v88
  %v1170 = vunpack.c.l.b16 %v89
  %v1171 = vunpack.c.h.b16 %v89
  %v1172 = vunpack.c.l.b16 %v90
  %v1173 = vunpack.c.h.b16 %v90
  %v1174 = vunpack.c.l.b16 %v91
  %v1175 = vunpack.c.h.b16 %v91
  %v1176 = vunpack.c.l.b16 %v92
  %v1177 = vunpack.c.h.b16 %v92
  %v1178 = vunpack.c.l.b16 %v93
  %v1179 = vunpack.c.h.b16 %v93
  %v1180 = vunpack.c.l.b16 %v94
  %v1181 = vunpack.c.h.b16 %v94
  %v1182 = vunpack.c.l.b16 %v95
  %v1183 = vunpack.c.h.b16 %v95
  %v1184 = vunpack.c.l.b16 %v96
  %v1185 = vunpack.c.h.b16 %v96
  %v1186 = vunpack.c.l.b16 %v97
  %v1187 = vunpack.c.h.b16 %v97
  %v1188 = vunpack.c.l.b16 %v98
  %v1189 = vunpack.c.h.b16 %v98
  %v1190 = vunpack.c.l.b16 %v99
  %v1191 = vunpack.c.h.b16 %v99
  %v1192 = vunpack.c.l.b16 %v100
  %v1193 = vunpack.c.h.b16 %v100
  %v1194 = vunpack.c.l.b16 %v101
  %v1195 = vunpack.c.h.b16 %v101
  %v1196 = vunpack.c.l.b16 %v102
  %v1197 = vunpack.c.h.b16 %v102
  %v1198 = vunpack.c.l.b16 %v103
  %v1199 = vunpack.c.h.b16 %v103
  %v1200 = vunpack.c.l.b16 %v104
  %v1201 = vunpack.c.h.b16 %v104
  %v1202 = vunpack.c.l.b16 %v105
  %v1203 = vunpack.c.h.b16 %v105
  %v1204 = vunpack.c.l.b16 %v106
  %v1205 = vunpack.c.h.b16 %v106
  %v1206 = vunpack.c.l.b16 %v107
  %v1207 = vunpack.c.h.b16 %v107
  %v1208 = vunpack.c.l.b16 %v108
  %v1209 = vunpack.c.h.b16 %v108
  %v1210 = vunpack.c.l.b16 %v109
  %v1211 = vunpack.c.h.b16 %v109
  %v1212 = vunpack.c.l.b16 %v110
  %v1213 = vunpack.c.h.b16 %v110
  %v1214 = vunpack.c.l.b16 %v111
  %v1215 = vunpack.c.h.b16 %v111
  %v1216 = vunpack.c.l.b16 %v112
  %v1217 = vunpack.c.h.b16 %v112
  %v1218 = vunpack.c.l.b16 %v113
  %v1219 = vunpack.c.h.b16 %v113
  %v1220 = vunpack.c.l.b16 %v114
  %v1221 = vunpack.c.h.b16 %v114
  %v1222 = vunpack.c.l.b16 %v115
  %v1223 = vunpack.c.h.b16 %v115
  %v1224 = vunpack.c.l.b16 %v116
  %v1225 = vunpack.c.h.b16 %v116
  %v1226 = vunpack.c.l.b16 %v117
  %v1227 = vunpack.c.h.b16 %v117
  %v1228 = vunpack.c.l.b16 %v118
  %v1229 = vunpack.c.h.b16 %v118
  %v1230 = vunpack.c.l.b16 %v119
  %v1231 = vunpack.c.h.b16 %v119
  %v1232 = vunpack.c.l.b16 %v120
  %v1233 = vunpack.c.h.b16 %v120
  %v1234 = vunpack.c.l.b16 %v121
  %v1235 = vunpack.c.h.b16 %v121
  %v1236 = vunpack.c.l.b16 %v122
  %v1237 = vunpack.c.h.b16 %v122
  %v1238 = vunpack.c.l.b16 %v123
  %v1239 = vunpack.c.h.b16 %v123
  %v1240 = vunpack.c.l.b16 %v124
  %v1241 = vunpack.c.h.b16 %v124
  %v1242 = vunpack.c.l.b16 %v125
  %v1243 = vunpack.c.h.b16 %v125
  %v1244 = vunpack.c.l.b16 %v126
  %v1245 = vunpack.c.h.b16 %v126
  %v1246 = vunpack.c.l.b16 %v127
  %v1247 = vunpack.c.h.b16 %v127
  %v1248 = vunpack.c.l.b16 %v128
  %v1249 = vunpack.c.h.b16 %v128
  %v1250 = vunpack.c.l.b16 %v129
  %v1251 = vunpack.c.h.b16 %v129
  %v1252 = vunpack.c.l.b16 %v130
  %v1253 = vunpack.c.h.b16 %v130
  %v1254 = vunpack.c.l.b16 %v131
  %v1255 = vunpack.c.h.b16 %v131
  %v1256 = vunpack.c.l.b16 %v132
  %v1257 = vunpack.c.h.b16 %v132
  %v1258 = vunpack.c.l.b16 %v133
  %v1259 = vunpack.c.h.b16 %v133
  %v1260 = vunpack.c.l.b16 %v134
  %v1261 = vunpack.c.h.b16 %v134
  %v1262 = vunpack.c.l.b16 %v135
  %v1263 = vunpack.c.h.b16 %v135
  %v1264 = vunpack.c.l.b16 %v136
  %v1265 = vunpack.c.h.b16 %v136
  %v1266 = vunpack.c.l.b16 %v137
  %v1267 = vunpack.c.h.b16 %v137
  %v1268 = vunpack.c.l.b16 %v138
  %v1269 = vunpack.c.h.b16 %v138
  %v1270 = vunpack.c.l.b16 %v139
  %v1271 = vunpack.c.h.b16 %v139
  %v1272 = vunpack.c.l.b16 %v140
  %v1273 = vunpack.c.h.b16 %v140
  %v1274 = vunpack.c.l.b16 %v141
  %v1275 = vunpack.c.h.b16 %v141
  %v1276 = vunpack.c.l.b16 %v142
  %v1277 = vunpack.c.h.b16 %v142
  %v1278 = vunpack.c.l.b16 %v143
  %v1279 = vunpack.c.h.b16 %v143
  %v1280 = vunpack.c.l.b16 %v144
  %v1281 = vunpack.c.h.b16 %v144
  %v1282 = vunpack.c.l.b16 %v145
  %v1283 = vunpack.c.h.b16 %v145
  %v1284 = vunpack.c.l.b16 %v146
  %v1285 = vunpack.c.h.b16 %v146
  %v1286 = vunpack.c.l.b16 %v147
  %v1287 = vunpack.c.h.b16 %v147
  %v1288 = vunpack.c.l.b16 %v148
  %v1289 = vunpack.c.h.b16 %v148
  %v1290 = vunpack.c.l.b16 %v149
  %v1291 = vunpack.c.h.b16 %v149
  %v1292 = vunpack.c.l.b16 %v150
  %v1293 = vunpack.c.h.b16 %v150
  %v1294 = vunpack.c.l.b16 %v151
  %v1295 = vunpack.c.h.b16 %v151
  %v1296 = vunpack.c.l.b16 %v152
  %v1297 = vunpack.c.h.b16 %v152
  %v1298 = vunpack.c.l.b16 %v153
  %v1299 = vunpack.c.h.b16 %v153
  %v1300 = vunpack.c.l.b16 %v154
  %v1301 = vunpack.c.h.b16 %v154
  %v1302 = vunpack.c.l.b16 %v155
  %v1303 = vunpack.c.h.b16 %v155
  %v1304 = vunpack.c.l.b16 %v156
  %v1305 = vunpack.c.h.b16 %v156
  %v1306 = vunpack.c.l.b16 %v157
  %v1307 = vunpack.c.h.b16 %v157
  %v1308 = vunpack.c.l.b16 %v158
  %v1309 = vunpack.c.h.b16 %v158
  %v1310 = vunpack.c.l.b16 %v159
  %v1311 = vunpack.c.h.b16 %v159
  %v1312 = vunpack.c.l.b16 %v160
  %v1313 = vunpack.c.h.b16 %v160
  %v1314 = vunpack.c.l.b16 %v161
  %v1315 = vunpack.c.h.b16 %v161
  %v1316 = vunpack.c.l.b16 %v162
  %v1317 = vunpack.c.h.b16 %v162
  %v1318 = vunpack.c.l.b16 %v163
  %v1319 = vunpack.c.h.b16 %v163
  %v1320 = vunpack.c.l.b16 %v164
  %v1321 = vunpack.c.h.b16 %v164
  %v1322 = vunpack.c.l.b16 %v165
  %v1323 = vunpack.c.h.b16 %v165
  %v1324 = vunpack.c.l.b16 %v166
  %v1325 = vunpack.c.h.b16 %v166
  %v1326 = vunpack.c.l.b16 %v167
  %v1327 = vunpack.c.h.b16 %v167
  %v1328 = vunpack.c.l.b16 %v168
  %v1329 = vunpack.c.h.b16 %v168
  %v1330 = vunpack.c.l.b16 %v169
  %v1331 = vunpack.c.h.b16 %v169
  %v1332 = vunpack.c.l.b16 %v170
  %v1333 = vunpack.c.h.b16 %v170
  %v1334 = vunpack.c.l.b16 %v171
  %v1335 = vunpack.c.h.b16 %v171
  %v1336 = vunpack.c.l.b16 %v172
  %v1337 = vunpack.c.h.b16 %v172
  %v1338 = vunpack.c.l.b16 %v173
  %v1339 = vunpack.c.h.b16 %v173
  %v1340 = vunpack.c.l.b16 %v174
  %v1341 = vunpack.c.h.b16 %v174
  %v1342 = vunpack.c.l.b16 %v175
  %v1343 = vunpack.c.h.b16 %v175
  %v1344 = vunpack.c.l.b16 %v176
  %v1345 = vunpack.c.h.b16 %v176
  %v1346 = vunpack.c.l.b16 %v177
  %v1347 = vunpack.c.h.b16 %v177
  %v1348 = vunpack.c.l.b16 %v178
  %v1349 = vunpack.c.h.b16 %v178
  %v1350 = vunpack.c.l.b16 %v179
  %v1351 = vunpack.c.h.b16 %v179
  %v1352 = vunpack.c.l.b16 %v180
  %v1353 = vunpack.c.h.b16 %v180
  %v1354 = vunpack.c.l.b16 %v181
  %v1355 = vunpack.c.h.b16 %v181
  %v1356 = vunpack.c.l.b16 %v182
  %v1357 = vunpack.c.h.b16 %v182
  %v1358 = vunpack.c.l.b16 %v183
  %v1359 = vunpack.c.h.b16 %v183
  %v1360 = vunpack.c.l.b16 %v184
  %v1361 = vunpack.c.h.b16 %v184
  %v1362 = vunpack.c.l.b16 %v185
  %v1363 = vunpack.c.h.b16 %v185
  %v1364 = vunpack.c.l.b16 %v186
  %v1365 = vunpack.c.h.b16 %v186
  %v1366 = vunpack.c.l.b16 %v187
  %v1367 = vunpack.c.h.b16 %v187
  %v1368 = vunpack.c.l.b16 %v188
  %v1369 = vunpack.c.h.b16 %v188
  %v1370 = vunpack.c.l.b16 %v189
  %v1371 = vunpack.c.h.b16 %v189
  %v1372 = vunpack.c.l.b16 %v190
  %v1373 = vunpack.c.h.b16 %v190
  %v1374 = vunpack.c.l.b16 %v191
  %v1375 = vunpack.c.h.b16 %v191
  %v1376 = vunpack.c.l.b16 %v192
  %v1377 = vunpack.c.h.b16 %v192
  %v1378 = vunpack.c.l.b16 %v193
  %v1379 = vunpack.c.h.b16 %v193
  %v1380 = vunpack.c.l.b16 %v194
  %v1381 = vunpack.c.h.b16 %v194
  %v1382 = vunpack.c.l.b16 %v195
  %v1383 = vunpack.c.h.b16 %v195
  %v1384 = vunpack.c.l.b16 %v196
  %v1385 = vunpack.c.h.b16 %v196
  %v1386 = vunpack.c.l.b16 %v197
  %v1387 = vunpack.c.h.b16 %v197
  %v1388 = vunpack.c.l.b16 %v198
  %v1389 = vunpack.c.h.b16 %v198
  %v1390 = vunpack.c.l.b16 %v199
  %v1391 = vunpack.c.h.b16 %v199
  %v1392 = vunpack.c.l.b16 %v200
  %v1393 = vunpack.c.h.b16 %v200
  %v1394 = vunpack.c.l.b16 %v201
  %v1395 = vunpack.c.h.b16 %v201
  %v1396 = vunpack.c.l.b16 %v202
  %v1397 = vunpack.c.h.b16 %v202
  %v1398 = vunpack.c.l.b16 %v203
  %v1399 = vunpack.c.h.b16 %v203
  %v1400 = vunpack.c.l.b16 %v204
  %v1401 = vunpack.c.h.b16 %v204
  %v1402 = vunpack.c.l.b16 %v205
  %v1403 = vunpack.c.h.b16 %v205
  %v1404 = vunpack.c.l.b16 %v206
  %v1405 = vunpack.c.h.b16 %v206
  %v1406 = vunpack.c.l.b16 %v207
  %v1407 = vunpack.c.h.b16 %v207
  %v1408 = vunpack.c.l.b16 %v208
  %v1409 = vunpack.c.h.b16 %v208
  %v1410 = vunpack.c.l.b16 %v209
  %v1411 = vunpack.c.h.b16 %v209
  %v1412 = vunpack.c.l.b16 %v210
  %v1413 = vunpack.c.h.b16 %v210
  %v1414 = vunpack.c.l.b16 %v211
  %v1415 = vunpack.c.h.b16 %v211
  %v1416 = vunpack.c.l.b16 %v212
  %v1417 = vunpack.c.h.b16 %v212
  %v1418 = vunpack.c.l.b16 %v213
  %v1419 = vunpack.c.h.b16 %v213
  %v1420 = vunpack.c.l.b16 %v214
  %v1421 = vunpack.c.h.b16 %v214
  %v1422 = vunpack.c.l.b16 %v215
  %v1423 = vunpack.c.h.b16 %v215
  %v1424 = vunpack.c.l.b16 %v216
  %v1425 = vunpack.c.h.b16 %v216
  %v1426 = vunpack.c.l.b16 %v217
  %v1427 = vunpack.c.h.b16 %v217
  %v1428 = vunpack.c.l.b16 %v218
  %v1429 = vunpack.c.h.b16 %v218
  %v1430 = vunpack.c.l.b16 %v219
  %v1431 = vunpack.c.h.b16 %v219
  %v1432 = vunpack.c.l.b16 %v220
  %v1433 = vunpack.c.h.b16 %v220
  %v1434 = vunpack.c.l.b16 %v221
  %v1435 = vunpack.c.h.b16 %v221
  %v1436 = vunpack.c.l.b16 %v222
  %v1437 = vunpack.c.h.b16 %v222
  %v1438 = vunpack.c.l.b16 %v223
  %v1439 = vunpack.c.h.b16 %v223
  %v1440 = vunpack.c.l.b16 %v224
  %v1441 = vunpack.c.h.b16 %v224
  %v1442 = vunpack.c.l.b16 %v225
  %v1443 = vunpack.c.h.b16 %v225
  %v1444 = vunpack.c.l.b16 %v226
  %v1445 = vunpack.c.h.b16 %v226
  %v1446 = vunpack.c.l.b16 %v227
  %v1447 = vunpack.c.h.b16 %v227
  %v1448 = vunpack.c.l.b16 %v228
  %v1449 = vunpack.c.h.b16 %v228
  %v1450 = vunpack.c.l.b16 %v229
  %v1451 = vunpack.c.h.b16 %v229
  %v1452 = vunpack.c.l.b16 %v230
  %v1453 = vunpack.c.h.b16 %v230
  %v1454 = vunpack.c.l.b16 %v231
  %v1455 = vunpack.c.h.b16 %v231
  %v1456 = vunpack.c.l.b16 %v232
  %v1457 = vunpack.c.h.b16 %v232
  %v1458 = vunpack.c.l.b16 %v233
  %v1459 = vunpack.c.h.b16 %v233
  %v1460 = vunpack.c.l.b16 %v234
  %v1461 = vunpack.c.h.b16 %v234
  %v1462 = vunpack.c.l.b16 %v235
  %v1463 = vunpack.c.h.b16 %v235
  %v1464 = vunpack.c.l.b16 %v236
  %v1465 = vunpack.c.h.b16 %v236
  %v1466 = vunpack.c.l.b16 %v237
  %v1467 = vunpack.c.h.b16 %v237
  %v1468 = vunpack.c.l.b16 %v238
  %v1469 = vunpack.c.h.b16 %v238
  %v1470 = vunpack.c.l.b16 %v239
  %v1471 = vunpack.c.h.b16 %v239
  %v1472 = vunpack.c.l.b16 %v240
  %v1473 = vunpack.c.h.b16 %v240
  %v1474 = vunpack.c.l.b16 %v241
  %v1475 = vunpack.c.h.b16 %v241
  %v1476 = vunpack.c.l.b16 %v242
  %v1477 = vunpack.c.h.b16 %v242
  %v1478 = vunpack.c.l.b16 %v243
  %v1479 = vunpack.c.h.b16 %v243
  %v1480 = vunpack.c.l.b16 %v244
  %v1481 = vunpack.c.h.b16 %v244
  %v1482 = vunpack.c.l.b16 %v245
  %v1483 = vunpack.c.h.b16 %v245
  %v1484 = vunpack.c.l.b16 %v246
  %v1485 = vunpack.c.h.b16 %v246
  %v1486 = vunpack.c.l.b16 %v247
  %v1487 = vunpack.c.h.b16 %v247
  %v1488 = vunpack.c.l.b16 %v248
  %v1489 = vunpack.c.h.b16 %v248
  %v1490 = vunpack.c.l.b16 %v249
  %v1491 = vunpack.c.h.b16 %v249
  %v1492 = vunpack.c.l.b16 %v250
  %v1493 = vunpack.c.h.b16 %v250
  %v1494 = vunpack.c.l.b16 %v251
  %v1495 = vunpack.c.h.b16 %v251
  %v1496 = vunpack.c.l.b16 %v252
  %v1497 = vunpack.c.h.b16 %v252
  %v1498 = vunpack.c.l.b16 %v253
  %v1499 = vunpack.c.h.b16 %v253
  %v1500 = vunpack.c.l.b16 %v254
  %v1501 = vunpack.c.h.b16 %v254
  %v1502 = vunpack.c.l.b16 %v255
  %v1503 = vunpack.c.h.b16 %v255
  %v1504 = vunpack.c.l.b16 %v256
  %v1505 = vunpack.c.h.b16 %v256
  %v1506 = vunpack.c.l.b16 %v257
  %v1507 = vunpack.c.h.b16 %v257
  %v1508 = vunpack.c.l.b16 %v258
  %v1509 = vunpack.c.h.b16 %v258
  %v1510 = vunpack.c.l.b16 %v259
  %v1511 = vunpack.c.h.b16 %v259
  %v1512 = vunpack.c.l.b16 %v260
  %v1513 = vunpack.c.h.b16 %v260
  %v1514 = vunpack.c.l.b16 %v261
  %v1515 = vunpack.c.h.b16 %v261
  %v1516 = vunpack.c.l.b16 %v262
  %v1517 = vunpack.c.h.b16 %v262
  %v1518 = vunpack.c.l.b16 %v263
  %v1519 = vunpack.c.h.b16 %v263
  %v1520 = vunpack.c.l.b16 %v264
  %v1521 = vunpack.c.h.b16 %v264
  %v1522 = vunpack.c.l.b16 %v265
  %v1523 = vunpack.c.h.b16 %v265
  %v1524 = vunpack.c.l.b16 %v266
  %v1525 = vunpack.c.h.b16 %v266
  %v1526 = vunpack.c.l.b16 %v267
  %v1527 = vunpack.c.h.b16 %v267
  %v1528 = vunpack.c.l.b16 %v268
  %v1529 = vunpack.c.h.b16 %v268
  %v1530 = vunpack.c.l.b16 %v269
  %v1531 = vunpack.c.h.b16 %v269
  %v1532 = vunpack.c.l.b16 %v270
  %v1533 = vunpack.c.h.b16 %v270
  %v1534 = vunpack.c.l.b16 %v271
  %v1535 = vunpack.c.h.b16 %v271
  %v1536 = vunpack.c.l.b16 %v272
  %v1537 = vunpack.c.h.b16 %v272
  %v1538 = vunpack.c.l.b16 %v273
  %v1539 = vunpack.c.h.b16 %v273
  %v1540 = vunpack.c.l.b16 %v274
  %v1541 = vunpack.c.h.b16 %v274
  %v1542 = vunpack.c.l.b16 %v275
  %v1543 = vunpack.c.h.b16 %v275
  %v1544 = vunpack.c.l.b16 %v276
  %v1545 = vunpack.c.h.b16 %v276
  %v1546 = vunpack.c.l.b16 %v277
  %v1547 = vunpack.c.h.b16 %v277
  %v1548 = vunpack.c.l.b16 %v278
  %v1549 = vunpack.c.h.b16 %v278
  %v1550 = vunpack.c.l.b16 %v279
  %v1551 = vunpack.c.h.b16 %v279
  %v1552 = vunpack.c.l.b16 %v280
  %v1553 = vunpack.c.h.b16 %v280
  %v1554 = vunpack.c.l.b16 %v281
  %v1555 = vunpack.c.h.b16 %v281
  %v1556 = vunpack.c.l.b16 %v282
  %v1557 = vunpack.c.h.b16 %v282
  %v1558 = vunpack.c.l.b16 %v283
  %v1559 = vunpack.c.h.b16 %v283
  %v1560 = vunpack.c.l.b16 %v284
  %v1561 = vunpack.c.h.b16 %v284
  %v1562 = vunpack.c.l.b16 %v285
  %v1563 = vunpack.c.h.b16 %v285
  %v1564 = vunpack.c.l.b16 %v286
  %v1565 = vunpack.c.h.b16 %v286
  %v1566 = vunpack.c.l.b16 %v287
  %v1567 = vunpack.c.h.b16 %v287
  %v1568 = vunpack.c.l.b16 %v288
  %v1569 = vunpack.c.h.b16 %v288
  %v1570 = vunpack.c.l.b16 %v289
  %v1571 = vunpack.c.h.b16 %v289
  %v1572 = vunpack.c.l.b16 %v290
  %v1573 = vunpack.c.h.b16 %v290
  %v1574 = vunpack.c.l.b16 %v291
  %v1575 = vunpack.c.h.b16 %v291
  %v1576 = vunpack.c.l.b16 %v292
  %v1577 = vunpack.c.h.b16 %v292
  %v1578 = vunpack.c.l.b16 %v293
  %v1579 = vunpack.c.h.b16 %v293
  %v1580 = vunpack.c.l.b16 %v294
  %v1581 = vunpack.c.h.b16 %v294
  %v1582 = vunpack.c.l.b16 %v295
  %v1583 = vunpack.c.h.b16 %v295
  %v1584 = vunpack.c.l.b16 %v296
  %v1585 = vunpack.c.h.b16 %v296
  %v1586 = vunpack.c.l.b16 %v297
  %v1587 = vunpack.c.h.b16 %v297
  %v1588 = vunpack.c.l.b16 %v298
  %v1589 = vunpack.c.h.b16 %v298
  %v1590 = vunpack.c.l.b16 %v299
  %v1591 = vunpack.c.h.b16 %v299
  %v1592 = vunpack.c.l.b16 %v300
  %v1593 = vunpack.c.h.b16 %v300
  %v1594 = vunpack.c.l.b16 %v301
  %v1595 = vunpack.c.h.b16 %v301
  %v1596 = vunpack.c.l.b16 %v302
  %v1597 = vunpack.c.h.b16 %v302
  %v1598 = vunpack.c.l.b16 %v303
  %v1599 = vunpack.c.h.b16 %v303
  %v1600 = vunpack.c.l.b16 %v304
  %v1601 = vunpack.c.h.b16 %v304
  %v1602 = vunpack.c.l.b16 %v305
  %v1603 = vunpack.c.h.b16 %v305
  %v1604 = vunpack.c.l.b16 %v306
  %v1605 = vunpack.c.h.b16 %v306
  %v1606 = vunpack.c.l.b16 %v307
  %v1607 = vunpack.c.h.b16 %v307
  %v1608 = vunpack.c.l.b16 %v308
  %v1609 = vunpack.c.h.b16 %v308
  %v1610 = vunpack.c.l.b16 %v309
  %v1611 = vunpack.c.h.b16 %v309
  %v1612 = vunpack.c.l.b16 %v310
  %v1613 = vunpack.c.h.b16 %v310
  %v1614 = vunpack.c.l.b16 %v311
  %v1615 = vunpack.c.h.b16 %v311
  %v1616 = vunpack.c.l.b16 %v312
  %v1617 = vunpack.c.h.b16 %v312
  %v1618 = vunpack.c.l.b16 %v313
  %v1619 = vunpack.c.h.b16 %v313
  %v1620 = vunpack.c.l.b16 %v314
  %v1621 = vunpack.c.h.b16 %v314
  %v1622 = vunpack.c.l.b16 %v315
  %v1623 = vunpack.c.h.b16 %v315
  %v1624 = vunpack.c.l.b16 %v316
  %v1625 = vunpack.c.h.b16 %v316
  %v1626 = vunpack.c.l.b16 %v317
  %v1627 = vunpack.c.h.b16 %v317
  %v1628 = vunpack.c.l.b16 %v318
  %v1629 = vunpack.c.h.b16 %v318
  %v1630 = vunpack.c.l.b16 %v319
  %v1631 = vunpack.c.h.b16 %v319
  %v1632 = vunpack.c.l.b16 %v320
  %v1633 = vunpack.c.h.b16 %v320
  %v1634 = vunpack.c.l.b16 %v321
  %v1635 = vunpack.c.h.b16 %v321
  %v1636 = vunpack.c.l.b16 %v322
  %v1637 = vunpack.c.h.b16 %v322
  %v1638 = vunpack.c.l.b16 %v323
  %v1639 = vunpack.c.h.b16 %v323
  %v1640 = vunpack.c.l.b16 %v324
  %v1641 = vunpack.c.h.b16 %v324
  %v1642 = vunpack.c.l.b16 %v325
  %v1643 = vunpack.c.h.b16 %v325
  %v1644 = vunpack.c.l.b16 %v326
  %v1645 = vunpack.c.h.b16 %v326
  %v1646 = vunpack.c.l.b16 %v327
  %v1647 = vunpack.c.h.b16 %v327
  %v1648 = vunpack.c.l.b16 %v328
  %v1649 = vunpack.c.h.b16 %v328
  %v1650 = vunpack.c.l.b16 %v329
  %v1651 = vunpack.c.h.b16 %v329
  %v1652 = vunpack.c.l.b16 %v330
  %v1653 = vunpack.c.h.b16 %v330
  %v1654 = vunpack.c.l.b16 %v331
  %v1655 = vunpack.c.h.b16 %v331
  %v1656 = vunpack.c.l.b16 %v332
  %v1657 = vunpack.c.h.b16 %v332
  %v1658 = vunpack.c.l.b16 %v333
  %v1659 = vunpack.c.h.b16 %v333
  %v1660 = vunpack.c.l.b16 %v334
  %v1661 = vunpack.c.h.b16 %v334
  %v1662 = vunpack.c.l.b16 %v335
  %v1663 = vunpack.c.h.b16 %v335
  %v1664 = vunpack.c.l.b16 %v336
  %v1665 = vunpack.c.h.b16 %v336
  %v1666 = vunpack.c.l.b16 %v337
  %v1667 = vunpack.c.h.b16 %v337
  %v1668 = vunpack.c.l.b16 %v338
  %v1669 = vunpack.c.h.b16 %v338
  %v1670 = vunpack.c.l.b16 %v339
  %v1671 = vunpack.c.h.b16 %v339
  %v1672 = vunpack.c.l.b16 %v340
  %v1673 = vunpack.c.h.b16 %v340
  %v1674 = vunpack.c.l.b16 %v341
  %v1675 = vunpack.c.h.b16 %v341
  %v1676 = vunpack.c.l.b16 %v342
  %v1677 = vunpack.c.h.b16 %v342
  %v1678 = vunpack.c.l.b16 %v343
  %v1679 = vunpack.c.h.b16 %v343
  %v1680 = vunpack.c.l.b16 %v344
  %v1681 = vunpack.c.h.b16 %v344
  %v1682 = vunpack.c.l.b16 %v345
  %v1683 = vunpack.c.h.b16 %v345
  %v1684 = vunpack.c.l.b16 %v346
  %v1685 = vunpack.c.h.b16 %v346
  %v1686 = vunpack.c.l.b16 %v347
  %v1687 = vunpack.c.h.b16 %v347
  %v1688 = vunpack.c.l.b16 %v348
  %v1689 = vunpack.c.h.b16 %v348
  %v1690 = vunpack.c.l.b16 %v349
  %v1691 = vunpack.c.h.b16 %v349
  %v1692 = vunpack.c.l.b16 %v350
  %v1693 = vunpack.c.h.b16 %v350
  %v1694 = vunpack.c.l.b16 %v351
  %v1695 = vunpack.c.h.b16 %v351
  %v1696 = vunpack.c.l.b16 %v352
  %v1697 = vunpack.c.h.b16 %v352
  %v1698 = vunpack.c.l.b16 %v353
  %v1699 = vunpack.c.h.b16 %v353
  %v1700 = vunpack.c.l.b16 %v354
  %v1701 = vunpack.c.h.b16 %v354
  %v1702 = vunpack.c.l.b16 %v355
  %v1703 = vunpack.c.h.b16 %v355
  %v1704 = vunpack.c.l.b16 %v356
  %v1705 = vunpack.c.h.b16 %v356
  %v1706 = vunpack.c.l.b16 %v357
  %v1707 = vunpack.c.h.b16 %v357
  %v1708 = vunpack.c.l.b16 %v358
  %v1709 = vunpack.c.h.b16 %v358
  %v1710 = vunpack.c.l.b16 %v359
  %v1711 = vunpack.c.h.b16 %v359
  %v1712 = vunpack.c.l.b16 %v360
  %v1713 = vunpack.c.h.b16 %v360
  %v1714 = vunpack.c.l.b16 %v361
  %v1715 = vunpack.c.h.b16 %v361
  %v1716 = vunpack.c.l.b16 %v362
  %v1717 = vunpack.c.h.b16 %v362
  %v1718 = vunpack.c.l.b16 %v363
  %v1719 = vunpack.c.h.b16 %v363
  %v1720 = vunpack.c.l.b16 %v364
  %v1721 = vunpack.c.h.b16 %v364
  %v1722 = vunpack.c.l.b16 %v365
  %v1723 = vunpack.c.h.b16 %v365
  %v1724 = vunpack.c.l.b16 %v366
  %v1725 = vunpack.c.h.b16 %v366
  %v1726 = vunpack.c.l.b16 %v367
  %v1727 = vunpack.c.h.b16 %v367
  %v1728 = vunpack.c.l.b16 %v368
  %v1729 = vunpack.c.h.b16 %v368
  %v1730 = vunpack.c.l.b16 %v369
  %v1731 = vunpack.c.h.b16 %v369
  %v1732 = vunpack.c.l.b16 %v370
  %v1733 = vunpack.c.h.b16 %v370
  %v1734 = vunpack.c.l.b16 %v371
  %v1735 = vunpack.c.h.b16 %v371
  %v1736 = vunpack.c.l.b16 %v372
  %v1737 = vunpack.c.h.b16 %v372
  %v1738 = vunpack.c.l.b16 %v373
  %v1739 = vunpack.c.h.b16 %v373
  %v1740 = vunpack.c.l.b16 %v374
  %v1741 = vunpack.c.h.b16 %v374
  %v1742 = vunpack.c.l.b16 %v375
  %v1743 = vunpack.c.h.b16 %v375
  %v1744 = vunpack.c.l.b16 %v376
  %v1745 = vunpack.c.h.b16 %v376
  %v1746 = vunpack.c.l.b16 %v377
  %v1747 = vunpack.c.h.b16 %v377
  %v1748 = vunpack.c.l.b16 %v378
  %v1749 = vunpack.c.h.b16 %v378
  %v1750 = vunpack.c.l.b16 %v379
  %v1751 = vunpack.c.h.b16 %v379
  %v1752 = vunpack.c.l.b16 %v380
  %v1753 = vunpack.c.h.b16 %v380
  %v1754 = vunpack.c.l.b16 %v381
  %v1755 = vunpack.c.h.b16 %v381
  %v1756 = vunpack.c.l.b16 %v382
  %v1757 = vunpack.c.h.b16 %v382
  %v1758 = vunpack.c.l.b16 %v383
  %v1759 = vunpack.c.h.b16 %v383
  %v1760 = vunpack.c.l.b16 %v384
  %v1761 = vunpack.c.h.b16 %v384
  %v1762 = vunpack.c.l.b16 %v385
  %v1763 = vunpack.c.h.b16 %v385
  %v1764 = vunpack.c.l.b16 %v386
  %v1765 = vunpack.c.h.b16 %v386
  %v1766 = vunpack.c.l.b16 %v387
  %v1767 = vunpack.c.h.b16 %v387
  %v1768 = vunpack.c.l.b16 %v388
  %v1769 = vunpack.c.h.b16 %v388
  %v1770 = vunpack.c.l.b16 %v389
  %v1771 = vunpack.c.h.b16 %v389
  %v1772 = vunpack.c.l.b16 %v390
  %v1773 = vunpack.c.h.b16 %v390
  %v1774 = vunpack.c.l.b16 %v391
  %v1775 = vunpack.c.h.b16 %v391
  %v1776 = vunpack.c.l.b16 %v392
  %v1777 = vunpack.c.h.b16 %v392
  %v1778 = vunpack.c.l.b16 %v393
  %v1779 = vunpack.c.h.b16 %v393
  %v1780 = vunpack.c.l.b16 %v394
  %v1781 = vunpack.c.h.b16 %v394
  %v1782 = vunpack.c.l.b16 %v395
  %v1783 = vunpack.c.h.b16 %v395
  %v1784 = vunpack.c.l.b16 %v396
  %v1785 = vunpack.c.h.b16 %v396
  %v1786 = vunpack.c.l.b16 %v397
  %v1787 = vunpack.c.h.b16 %v397
  %v1788 = vunpack.c.l.b16 %v398
  %v1789 = vunpack.c.h.b16 %v398
  %v1790 = vunpack.c.l.b16 %v399
  %v1791 = vunpack.c.h.b16 %v399
  %v1792 = vunpack.c.l.b16 %v400
  %v1793 = vunpack.c.h.b16 %v400
  %v1794 = vunpack.c.l.b16 %v401
  %v1795 = vunpack.c.h.b16 %v401
  %v1796 = vunpack.c.l.b16 %v402
  %v1797 = vunpack.c.h.b16 %v402
  %v1798 = vunpack.c.l.b16 %v403
  %v1799 = vunpack.c.h.b16 %v403
  %v1800 = vunpack.c.l.b16 %v404
  %v1801 = vunpack.c.h.b16 %v404
  %v1802 = vunpack.c.l.b16 %v405
  %v1803 = vunpack.c.h.b16 %v405
  %v1804 = vunpack.c.l.b16 %v406
  %v1805 = vunpack.c.h.b16 %v406
  %v1806 = vunpack.c.l.b16 %v407
  %v1807 = vunpack.c.h.b16 %v407
  %v1808 = vunpack.c.l.b16 %v408
  %v1809 = vunpack.c.h.b16 %v408
  %v1810 = vunpack.c.l.b16 %v409
  %v1811 = vunpack.c.h.b16 %v409
  %v1812 = vunpack.c.l.b16 %v410
  %v1813 = vunpack.c.h.b16 %v410
  %v1814 = vunpack.c.l.b16 %v411
  %v1815 = vunpack.c.h.b16 %v411
  %v1816 = vunpack.c.l.b16 %v412
  %v1817 = vunpack.c.h.b16 %v412
  %v1818 = vunpack.c.l.b16 %v413
  %v1819 = vunpack.c.h.b16 %v413
  %v1820 = vunpack.c.l.b16 %v414
  %v1821 = vunpack.c.h.b16 %v414
  %v1822 = vunpack.c.l.b16 %v415
  %v1823 = vunpack.c.h.b16 %v415
  %v1824 = vunpack.c.l.b16 %v416
  %v1825 = vunpack.c.h.b16 %v416
  %v1826 = vunpack.c.l.b16 %v417
  %v1827 = vunpack.c.h.b16 %v417
  %v1828 = vunpack.c.l.b16 %v418
  %v1829 = vunpack.c.h.b16 %v418
  %v1830 = vunpack.c.l.b16 %v419
  %v1831 = vunpack.c.h.b16 %v419
  %v1832 = vunpack.c.l.b16 %v420
  %v1833 = vunpack.c.h.b16 %v420
  %v1834 = vunpack.c.l.b16 %v421
  %v1835 = vunpack.c.h.b16 %v421
  %v1836 = vunpack.c.l.b16 %v422
  %v1837 = vunpack.c.h.b16 %v422
  %v1838 = vunpack.c.l.b16 %v423
  %v1839 = vunpack.c.h.b16 %v423
  %v1840 = vunpack.c.l.b16 %v424
  %v1841 = vunpack.c.h.b16 %v424
  %v1842 = vunpack.c.l.b16 %v425
  %v1843 = vunpack.c.h.b16 %v425
  %v1844 = vunpack.c.l.b16 %v426
  %v1845 = vunpack.c.h.b16 %v426
  %v1846 = vunpack.c.l.b16 %v427
  %v1847 = vunpack.c.h.b16 %v427
  %v1848 = vunpack.c.l.b16 %v428
  %v1849 = vunpack.c.h.b16 %v428
  %v1850 = vunpack.c.l.b16 %v429
  %v1851 = vunpack.c.h.b16 %v429
  %v1852 = vunpack.c.l.b16 %v430
  %v1853 = vunpack.c.h.b16 %v430
  %v1854 = vunpack.c.l.b16 %v431
  %v1855 = vunpack.c.h.b16 %v431
  %v1856 = vunpack.c.l.b16 %v432
  %v1857 = vunpack.c.h.b16 %v432
  %v1858 = vunpack.c.l.b16 %v433
  %v1859 = vunpack.c.h.b16 %v433
  %v1860 = vunpack.c.l.b16 %v434
  %v1861 = vunpack.c.h.b16 %v434
  %v1862 = vunpack.c.l.b16 %v435
  %v1863 = vunpack.c.h.b16 %v435
  %v1864 = vunpack.c.l.b16 %v436
  %v1865 = vunpack.c.h.b16 %v436
  %v1866 = vunpack.c.l.b16 %v437
  %v1867 = vunpack.c.h.b16 %v437
  %v1868 = vunpack.c.l.b16 %v438
  %v1869 = vunpack.c.h.b16 %v438
  %v1870 = vunpack.c.l.b16 %v439
  %v1871 = vunpack.c.h.b16 %v439
  %v1872 = vunpack.c.l.b16 %v440
  %v1873 = vunpack.c.h.b16 %v440
  %v1874 = vunpack.c.l.b16 %v441
  %v1875 = vunpack.c.h.b16 %v441
  %v1876 = vunpack.c.l.b16 %v442
  %v1877 = vunpack.c.h.b16 %v442
  %v1878 = vunpack.c.l.b16 %v443
  %v1879 = vunpack.c.h.b16 %v443
  %v1880 = vunpack.c.l.b16 %v444
  %v1881 = vunpack.c.h.b16 %v444
  %v1882 = vunpack.c.l.b16 %v445
  %v1883 = vunpack.c.h.b16 %v445
  %v1884 = vunpack.c.l.b16 %v446
  %v1885 = vunpack.c.h.b16 %v446
  %v1886 = vunpack.c.l.b16 %v447
  %v1887 = vunpack.c.h.b16 %v447
  %v1888 = vunpack.c.l.b16 %v448
  %v1889 = vunpack.c.h.b16 %v448
  %v1890 = vunpack.c.l.b16 %v449
  %v1891 = vunpack.c.h.b16 %v449
  %v1892 = vunpack.c.l.b16 %v450
  %v1893 = vunpack.c.h.b16 %v450
  %v1894 = vunpack.c.l.b16 %v451
  %v1895 = vunpack.c.h.b16 %v451
  %v1896 = vunpack.c.l.b16 %v452
  %v1897 = vunpack.c.h.b16 %v452
  %v1898 = vunpack.c.l.b16 %v453
  %v1899 = vunpack.c.h.b16 %v453
  %v1900 = vunpack.c.l.b16 %v454
  %v1901 = vunpack.c.h.b16 %v454
  %v1902 = vunpack.c.l.b16 %v455
  %v1903 = vunpack.c.h.b16 %v455
  %v1904 = vunpack.c.l.b16 %v456
  %v1905 = vunpack.c.h.b16 %v456
  %v1906 = vunpack.c.l.b16 %v457
  %v1907 = vunpack.c.h.b16 %v457
  %v1908 = vunpack.c.l.b16 %v458
  %v1909 = vunpack.c.h.b16 %v458
  %v1910 = vunpack.c.l.b16 %v459
  %v1911 = vunpack.c.h.b16 %v459
  %v1912 = vunpack.c.l.b16 %v460
  %v1913 = vunpack.c.h.b16 %v460
  %v1914 = vunpack.c.l.b16 %v461
  %v1915 = vunpack.c.h.b16 %v461
  %v1916 = vunpack.c.l.b16 %v462
  %v1917 = vunpack.c.h.b16 %v462
  %v1918 = vunpack.c.l.b16 %v463
  %v1919 = vunpack.c.h.b16 %v463
  %v1920 = vunpack.c.l.b16 %v464
  %v1921 = vunpack.c.h.b16 %v464
  %v1922 = vunpack.c.l.b16 %v465
  %v1923 = vunpack.c.h.b16 %v465
  %v1924 = vpack.c.b16 %v1126, %v1124
  %v1925 = vpack.c.b16 %v1127, %v1125
  %v1926 = vpack.c.b16 %v1130, %v1128
  %v1927 = vpack.c.b16 %v1131, %v1129
  %v1928 = vpack.c.b16 %v1134, %v1132
  %v1929 = vpack.c.b16 %v1135, %v1133
  %v1930 = vpack.c.b16 %v1138, %v1136
  %v1931 = vpack.c.b16 %v1139, %v1137
  %v1932 = vpack.c.b16 %v1142, %v1140
  %v1933 = vpack.c.b16 %v1143, %v1141
  %v1934 = vpack.c.b16 %v1146, %v1144
  %v1935 = vpack.c.b16 %v1147, %v1145
  %v1936 = vpack.c.b16 %v1150, %v1148
  %v1937 = vpack.c.b16 %v1151, %v1149
  %v1938 = vpack.c.b16 %v1154, %v1152
  %v1939 = vpack.c.b16 %v1155, %v1153
  %v1940 = vpack.c.b16 %v1158, %v1156
  %v1941 = vpack.c.b16 %v1159, %v1157
  %v1942 = vpack.c.b16 %v1162, %v1160
  %v1943 = vpack.c.b16 %v1163, %v1161
  %v1944 = vpack.c.b16 %v1166, %v1164
  %v1945 = vpack.c.b16 %v1167, %v1165
  %v1946 = vpack.c.b16 %v1170, %v1168
  %v1947 = vpack.c.b16 %v1171, %v1169
  %v1948 = vpack.c.b16 %v1174, %v1172
  %v1949 = vpack.c.b16 %v1175, %v1173
  %v1950 = vpack.c.b16 %v1178, %v1176
  %v1951 = vpack.c.b16 %v1179, %v1177
  %v1952 = vpack.c.b16 %v1182, %v1180
  %v1953 = vpack.c.b16 %v1183, %v1181
  %v1954 = vpack.c.b16 %v1186, %v1184
  %v1955 = vpack.c.b16 %v1187, %v1185
  %v1956 = vpack.c.b16 %v1190, %v1188
  %v1957 = vpack.c.b16 %v1191, %v1189
  %v1958 = vpack.c.b16 %v1194, %v1192
  %v1959 = vpack.c.b16 %v1195, %v1193
  %v1960 = vpack.c.b16 %v1198, %v1196
  %v1961 = vpack.c.b16 %v1199, %v1197
  %v1962 = vpack.c.b16 %v1202, %v1200
  %v1963 = vpack.c.b16 %v1203, %v1201
  %v1964 = vpack.c.b16 %v1206, %v1204
  %v1965 = vpack.c.b16 %v1207, %v1205
  %v1966 = vpack.c.b16 %v1210, %v1208
  %v1967 = vpack.c.b16 %v1211, %v1209
  %v1968 = vpack.c.b16 %v1214, %v1212
  %v1969 = vpack.c.b16 %v1215, %v1213
  %v1970 = vpack.c.b16 %v1218, %v1216
  %v1971 = vpack.c.b16 %v1219, %v1217
  %v1972 = vpack.c.b16 %v1222, %v1220
  %v1973 = vpack.c.b16 %v1223, %v1221
  %v1974 = vpack.c.b16 %v1226, %v1224
  %v1975 = vpack.c.b16 %v1227, %v1225
  %v1976 = vpack.c.b16 %v1230, %v1228
  %v1977 = vpack.c.b16 %v1231, %v1229
  %v1978 = vpack.c.b16 %v1234, %v1232
  %v1979 = vpack.c.b16 %v1235, %v1233
  %v1980 = vpack.c.b16 %v1238, %v1236
  %v1981 = vpack.c.b16 %v1239, %v1237
  %v1982 = vpack.c.b16 %v1242, %v1240
  %v1983 = vpack.c.b16 %v1243, %v1241
  %v1984 = vpack.c.b16 %v1246, %v1244
  %v1985 = vpack.c.b16 %v1247, %v1245
  %v1986 = vpack.c.b16 %v1250, %v1248
  %v1987 = vpack.c.b16 %v1251, %v1249
  %v1988 = vpack.c.b16 %v1254, %v1252
  %v1989 = vpack.c.b16 %v1255, %v1253
  %v1990 = vpack.c.b16 %v1258, %v1256
  %v1991 = vpack.c.b16 %v1259, %v1257
  %v1992 = vpack.c.b16 %v1262, %v1260
  %v1993 = vpack.c.b16 %v1263, %v1261
  %v1994 = vpack.c.b16 %v1266, %v1264
  %v1995 = vpack.c.b16 %v1267, %v1265
  %v1996 = vpack.c.b16 %v1270, %v1268
  %v1997 = vpack.c.b16 %v1271, %v1269
  %v1998 = vpack.c.b16 %v1274, %v1272
  %v1999 = vpack.c.b16 %v1275, %v1273
  %v2000 = vpack.c.b16 %v1278, %v1276
  %v2001 = vpack.c.b16 %v1279, %v1277
  %v2002 = vpack.c.b16 %v1282, %v1280
  %v2003 = vpack.c.b16 %v1283, %v1281
  %v2004 = vpack.c.b16 %v1286, %v1284
  %v2005 = vpack.c.b16 %v1287, %v1285
  %v2006 = vpack.c.b16 %v1290, %v1288
  %v2007 = vpack.c.b16 %v1291, %v1289
  %v2008 = vpack.c.b16 %v1294, %v1292
  %v2009 = vpack.c.b16 %v1295, %v1293
  %v2010 = vpack.c.b16 %v1298, %v1296
  %v2011 = vpack.c.b16 %v1299, %v1297
  %v2012 = vpack.c.b16 %v1302, %v1300
  %v2013 = vpack.c.b16 %v1303, %v1301
  %v2014 = vpack.c.b16 %v1306, %v1304
  %v2015 = vpack.c.b16 %v1307, %v1305
  %v2016 = vpack.c.b16 %v1310, %v1308
  %v2017 = vpack.c.b16 %v1311, %v1309
  %v2018 = vpack.c.b16 %v1314, %v1312
  %v2019 = vpack.c.b16 %v1315, %v1313
  %v2020 = vpack.c.b16 %v1318, %v1316
  %v2021 = vpack.c.b16 %v1319, %v1317
  %v2022 = vpack.c.b16 %v1322, %v1320
  %v2023 = vpack.c.b16 %v1323, %v1321
  %v2024 = vpack.c.b16 %v1326, %v1324
  %v2025 = vpack.c.b16 %v1327, %v1325
  %v2026 = vpack.c.b16 %v1330, %v1328
  %v2027 = vpack.c.b16 %v1331, %v1329
  %v2028 = vpack.c.b16 %v1334, %v1332
  %v2029 = vpack.c.b16 %v1335, %v1333
  %v2030 = vpack.c.b16 %v1338, %v1336
  %v2031 = vpack.c.b16 %v1339, %v1337
  %v2032 = vpack.c.b16 %v1342, %v1340
  %v2033 = vpack.c.b16 %v1343, %v1341
  %v2034 = vpack.c.b16 %v1346, %v1344
  %v2035 = vpack.c.b16 %v1347, %v1345
  %v2036 = vpack.c.b16 %v1350, %v1348
  %v2037 = vpack.c.b16 %v1351, %v1349
  %v2038 = vpack.c.b16 %v1354, %v1352
  %v2039 = vpack.c.b16 %v1355, %v1353
  %v2040 = vpack.c.b16 %v1358, %v1356
  %v2041 = vpack.c.b16 %v1359, %v1357
  %v2042 = vpack.c.b16 %v1362, %v1360
  %v2043 = vpack.c.b16 %v1363, %v1361
  %v2044 = vpack.c.b16 %v1366, %v1364
  %v2045 = vpack.c.b16 %v1367, %v1365
  %v2046 = vpack.c.b16 %v1370, %v1368
  %v2047 = vpack.c.b16 %v1371, %v1369
  %v2048 = vpack.c.b16 %v1374, %v1372
  %v2049 = vpack.c.b16 %v1375, %v1373
  %v2050 = vpack.c.b16 %v1378, %v1376
  %v2051 = vpack.c.b16 %v1379, %v1377
  %v2052 = vpack.c.b16 %v1382, %v1380
  %v2053 = vpack.c.b16 %v1383, %v1381
  %v2054 = vpack.c.b16 %v1386, %v1384
  %v2055 = vpack.c.b16 %v1387, %v1385
  %v2056 = vpack.c.b16 %v1390, %v1388
  %v2057 = vpack.c.b16 %v1391, %v1389
  %v2058 = vpack.c.b16 %v1394, %v1392
  %v2059 = vpack.c.b16 %v1395, %v1393
  %v2060 = vpack.c.b16 %v1398, %v1396
  %v2061 = vpack.c.b16 %v1399, %v1397
  %v2062 = vpack.c.b16 %v1402, %v1400
  %v2063 = vpack.c.b16 %v1403, %v1401
  %v2064 = vpack.c.b16 %v1406, %v1404
  %v2065 = vpack.c.b16 %v1407, %v1405
  %v2066 = vpack.c.b16 %v1410, %v1408
  %v2067 = vpack.c.b16 %v1411, %v1409
  %v2068 = vpack.c.b16 %v1414, %v1412
  %v2069 = vpack.c.b16 %v1415, %v1413
  %v2070 = vpack.c.b16 %v1418, %v1416
  %v2071 = vpack.c.b16 %v1419, %v1417
  %v2072 = vpack.c.b16 %v1422, %v1420
  %v2073 = vpack.c.b16 %v1423, %v1421
  %v2074 = vpack.c.b16 %v1426, %v1424
  %v2075 = vpack.c.b16 %v1427, %v1425
  %v2076 = vpack.c.b16 %v1430, %v1428
  %v2077 = vpack.c.b16 %v1431, %v1429
  %v2078 = vpack.c.b16 %v1434, %v1432
  %v2079 = vpack.c.b16 %v1435, %v1433
  %v2080 = vpack.c.b16 %v1438, %v1436
  %v2081 = vpack.c.b16 %v1439, %v1437
  %v2082 = vpack.c.b16 %v1442, %v1440
  %v2083 = vpack.c.b16 %v1443, %v1441
  %v2084 = vpack.c.b16 %v1446, %v1444
  %v2085 = vpack.c.b16 %v1447, %v1445
  %v2086 = vpack.c.b16 %v1450, %v1448
  %v2087 = vpack.c.b16 %v1451, %v1449
  %v2088 = vpack.c.b16 %v1454, %v1452
  %v2089 = vpack.c.b16 %v1455, %v1453
  %v2090 = vpack.c.b16 %v1458, %v1456
  %v2091 = vpack.c.b16 %v1459, %v1457
  %v2092 = vpack.c.b16 %v1462, %v1460
  %v2093 = vpack.c.b16 %v1463, %v1461
  %v2094 = vpack.c.b16 %v1466, %v1464
  %v2095 = vpack.c.b16 %v1467, %v1465
  %v2096 = vpack.c.b16 %v1470, %v1468
  %v2097 = vpack.c.b16 %v1471, %v1469
  %v2098 = vpack.c.b16 %v1474, %v1472
  %v2099 = vpack.c.b16 %v1475, %v1473
  %v2100 = vpack.c.b16 %v1478, %v1476
  %v2101 = vpack.c.b16 %v1479, %v1477
  %v2102 = vpack.c.b16 %v1482, %v1480
  %v2103 = vpack.c.b16 %v1483, %v1481
  %v2104 = vpack.c.b16 %v1486, %v1484
  %v2105 = vpack.c.b16 %v1487, %v1485
  %v2106 = vpack.c.b16 %v1490, %v1488
  %v2107 = vpack.c.b16 %v1491, %v1489
  %v2108 = vpack.c.b16 %v1494, %v1492
  %v2109 = vpack.c.b16 %v1495, %v1493
  %v2110 = vpack.c.b16 %v1498, %v1496
  %v2111 = vpack.c.b16 %v1499, %v1497
  %v2112 = vpack.c.b16 %v1502, %v1500
  %v2113 = vpack.c.b16 %v1503, %v1501
  %v2114 = vpack.c.b16 %v1506, %v1504
  %v2115 = vpack.c.b16 %v1507, %v1505
  %v2116 = vpack.c.b16 %v1510, %v1508
  %v2117 = vpack.c.b16 %v1511, %v1509
  %v2118 = vpack.c.b16 %v1514, %v1512
  %v2119 = vpack.c.b16 %v1515, %v1513
  %v2120 = vpack.c.b16 %v1518, %v1516
  %v2121 = vpack.c.b16 %v1519, %v1517
  %v2122 = vpack.c.b16 %v1522, %v1520
  %v2123 = vpack.c.b16 %v1523, %v1521
  %v2124 = vpack.c.b16 %v1526, %v1524
  %v2125 = vpack.c.b16 %v1527, %v1525
  %v2126 = vpack.c.b16 %v1530, %v1528
  %v2127 = vpack.c.b16 %v1531, %v1529
  %v2128 = vpack.c.b16 %v1534, %v1532
  %v2129 = vpack.c.b16 %v1535, %v1533
  %v2130 = vpack.c.b16 %v1538, %v1536
  %v2131 = vpack.c.b16 %v1539, %v1537
  %v2132 = vpack.c.b16 %v1542, %v1540
  %v2133 = vpack.c.b16 %v1543, %v1541
  %v2134 = vpack.c.b16 %v1546, %v1544
  %v2135 = vpack.c.b16 %v1547, %v1545
  %v2136 = vpack.c.b16 %v1550, %v1548
  %v2137 = vpack.c.b16 %v1551, %v1549
  %v2138 = vpack.c.b16 %v1554, %v1552
  %v2139 = vpack.c.b16 %v1555, %v1553
  %v2140 = vpack.c.b16 %v1558, %v1556
  %v2141 = vpack.c.b16 %v1559, %v1557
  %v2142 = vpack.c.b16 %v1562, %v1560
  %v2143 = vpack.c.b16 %v1563, %v1561
  %v2144 = vpack.c.b16 %v1566, %v1564
  %v2145 = vpack.c.b16 %v1567, %v1565
  %v2146 = vpack.c.b16 %v1570, %v1568
  %v2147 = vpack.c.b16 %v1571, %v1569
  %v2148 = vpack.c.b16 %v1574, %v1572
  %v2149 = vpack.c.b16 %v1575, %v1573
  %v2150 = vpack.c.b16 %v1578, %v1576
  %v2151 = vpack.c.b16 %v1579, %v1577
  %v2152 = vpack.c.b16 %v1582, %v1580
  %v2153 = vpack.c.b16 %v1583, %v1581
  %v2154 = vpack.c.b16 %v1586, %v1584
  %v2155 = vpack.c.b16 %v1587, %v1585
  %v2156 = vpack.c.b16 %v1590, %v1588
  %v2157 = vpack.c.b16 %v1591, %v1589
  %v2158 = vpack.c.b16 %v1594, %v1592
  %v2159 = vpack.c.b16 %v1595, %v1593
  %v2160 = vpack.c.b16 %v1598, %v1596
  %v2161 = vpack.c.b16 %v1599, %v1597
  %v2162 = vpack.c.b16 %v1602, %v1600
  %v2163 = vpack.c.b16 %v1603, %v1601
  %v2164 = vpack.c.b16 %v1606, %v1604
  %v2165 = vpack.c.b16 %v1607, %v1605
  %v2166 = vpack.c.b16 %v1610, %v1608
  %v2167 = vpack.c.b16 %v1611, %v1609
  %v2168 = vpack.c.b16 %v1614, %v1612
  %v2169 = vpack.c.b16 %v1615, %v1613
  %v2170 = vpack.c.b16 %v1618, %v1616
  %v2171 = vpack.c.b16 %v1619, %v1617
  %v2172 = vpack.c.b16 %v1622, %v1620
  %v2173 = vpack.c.b16 %v1623, %v1621
  %v2174 = vpack.c.b16 %v1626, %v1624
  %v2175 = vpack.c.b16 %v1627, %v1625
  %v2176 = vpack.c.b16 %v1630, %v1628
  %v2177 = vpack.c.b16 %v1631, %v1629
  %v2178 = vpack.c.b16 %v1634, %v1632
  %v2179 = vpack.c.b16 %v1635, %v1633
  %v2180 = vpack.c.b16 %v1638, %v1636
  %v2181 = vpack.c.b16 %v1639, %v1637
  %v2182 = vpack.c.b16 %v1642, %v1640
  %v2183 = vpack.c.b16 %v1643, %v1641
  %v2184 = vpack.c.b16 %v1646, %v1644
  %v2185 = vpack.c.b16 %v1647, %v1645
  %v2186 = vpack.c.b16 %v1650, %v1648
  %v2187 = vpack.c.b16 %v1651, %v1649
  %v2188 = vpack.c.b16 %v1654, %v1652
  %v2189 = vpack.c.b16 %v1655, %v1653
  %v2190 = vpack.c.b16 %v1658, %v1656
  %v2191 = vpack.c.b16 %v1659, %v1657
  %v2192 = vpack.c.b16 %v1662, %v1660
  %v2193 = vpack.c.b16 %v1663, %v1661
  %v2194 = vpack.c.b16 %v1666, %v1664
  %v2195 = vpack.c.b16 %v1667, %v1665
  %v2196 = vpack.c.b16 %v1670, %v1668
  %v2197 = vpack.c.b16 %v1671, %v1669
  %v2198 = vpack.c.b16 %v1674, %v1672
  %v2199 = vpack.c.b16 %v1675, %v1673
  %v2200 = vpack.c.b16 %v1678, %v1676
  %v2201 = vpack.c.b16 %v1679, %v1677
  %v2202 = vpack.c.b16 %v1682, %v1680
  %v2203 = vpack.c.b16 %v1683, %v1681
  %v2204 = vpack.c.b16 %v1686, %v1684
  %v2205 = vpack.c.b16 %v1687, %v1685
  %v2206 = vpack.c.b16 %v1690, %v1688
  %v2207 = vpack.c.b16 %v1691, %v1689
  %v2208 = vpack.c.b16 %v1694, %v1692
  %v2209 = vpack.c.b16 %v1695, %v1693
  %v2210 = vpack.c.b16 %v1698, %v1696
  %v2211 = vpack.c.b16 %v1699, %v1697
  %v2212 = vpack.c.b16 %v1702, %v1700
  %v2213 = vpack.c.b16 %v1703, %v1701
  %v2214 = vpack.c.b16 %v1706, %v1704
  %v2215 = vpack.c.b16 %v1707, %v1705
  %v2216 = vpack.c.b16 %v1710, %v1708
  %v2217 = vpack.c.b16 %v1711, %v1709
  %v2218 = vpack.c.b16 %v1714, %v1712
  %v2219 = vpack.c.b16 %v1715, %v1713
  %v2220 = vpack.c.b16 %v1718, %v1716
  %v2221 = vpack.c.b16 %v1719, %v1717
  %v2222 = vpack.c.b16 %v1722, %v1720
  %v2223 = vpack.c.b16 %v1723, %v1721
  %v2224 = vpack.c.b16 %v1726, %v1724
  %v2225 = vpack.c.b16 %v1727, %v1725
  %v2226 = vpack.c.b16 %v1730, %v1728
  %v2227 = vpack.c.b16 %v1731, %v1729
  %v2228 = vpack.c.b16 %v1734, %v1732
  %v2229 = vpack.c.b16 %v1735, %v1733
  %v2230 = vpack.c.b16 %v1738, %v1736
  %v2231 = vpack.c.b16 %v1739, %v1737
  %v2232 = vpack.c.b16 %v1742, %v1740
  %v2233 = vpack.c.b16 %v1743, %v1741
  %v2234 = vpack.c.b16 %v1746, %v1744
  %v2235 = vpack.c.b16 %v1747, %v1745
  %v2236 = vpack.c.b16 %v1750, %v1748
  %v2237 = vpack.c.b16 %v1751, %v1749
  %v2238 = vpack.c.b16 %v1754, %v1752
  %v2239 = vpack.c.b16 %v1755, %v1753
  %v2240 = vpack.c.b16 %v1758, %v1756
  %v2241 = vpack.c.b16 %v1759, %v1757
  %v2242 = vpack.c.b16 %v1762, %v1760
  %v2243 = vpack.c.b16 %v1763, %v1761
  %v2244 = vpack.c.b16 %v1766, %v1764
  %v2245 = vpack.c.b16 %v1767, %v1765
  %v2246 = vpack.c.b16 %v1770, %v1768
  %v2247 = vpack.c.b16 %v1771, %v1769
  %v2248 = vpack.c.b16 %v1774, %v1772
  %v2249 = vpack.c.b16 %v1775, %v1773
  %v2250 = vpack.c.b16 %v1778, %v1776
  %v2251 = vpack.c.b16 %v1779, %v1777
  %v2252 = vpack.c.b16 %v1782, %v1780
  %v2253 = vpack.c.b16 %v1783, %v1781
  %v2254 = vpack.c.b16 %v1786, %v1784
  %v2255 = vpack.c.b16 %v1787, %v1785
  %v2256 = vpack.c.b16 %v1790, %v1788
  %v2257 = vpack.c.b16 %v1791, %v1789
  %v2258 = vpack.c.b16 %v1794, %v1792
  %v2259 = vpack.c.b16 %v1795, %v1793
  %v2260 = vpack.c.b16 %v1798, %v1796
  %v2261 = vpack.c.b16 %v1799, %v1797
  %v2262 = vpack.c.b16 %v1802, %v1800
  %v2263 = vpack.c.b16 %v1803, %v1801
  %v2264 = vpack.c.b16 %v1806, %v1804
  %v2265 = vpack.c.b16 %v1807, %v1805
  %v2266 = vpack.c.b16 %v1810, %v1808
  %v2267 = vpack.c.b16 %v1811, %v1809
  %v2268 = vpack.c.b16 %v1814, %v1812
  %v2269 = vpack.c.b16 %v1815, %v1813
  %v2270 = vpack.c.b16 %v1818, %v1816
  %v2271 = vpack.c.b16 %v1819, %v1817
  %v2272 = vpack.c.b16 %v1822, %v1820
  %v2273 = vpack.c.b16 %v1823, %v1821
  %v2274 = vpack.c.b16 %v1826, %v1824
  %v2275 = vpack.c.b16 %v1827, %v1825
  %v2276 = vpack.c.b16 %v1830, %v1828
  %v2277 = vpack.c.b16 %v1831, %v1829
  %v2278 = vpack.c.b16 %v1834, %v1832
  %v2279 = vpack.c.b16 %v1835, %v1833
  %v2280 = vpack.c.b16 %v1838, %v1836
  %v2281 = vpack.c.b16 %v1839, %v1837
  %v2282 = vpack.c.b16 %v1842, %v1840
  %v2283 = vpack.c.b16 %v1843, %v1841
  %v2284 = vpack.c.b16 %v1846, %v1844
  %v2285 = vpack.c.b16 %v1847, %v1845
  %v2286 = vpack.c.b16 %v1850, %v1848
  %v2287 = vpack.c.b16 %v1851, %v1849
  %v2288 = vpack.c.b16 %v1854, %v1852
  %v2289 = vpack.c.b16 %v1855, %v1853
  %v2290 = vpack.c.b16 %v1858, %v1856
  %v2291 = vpack.c.b16 %v1859, %v1857
  %v2292 = vpack.c.b16 %v1862, %v1860
  %v2293 = vpack.c.b16 %v1863, %v1861
  %v2294 = vpack.c.b16 %v1866, %v1864
  %v2295 = vpack.c.b16 %v1867, %v1865
  %v2296 = vpack.c.b16 %v1870, %v1868
  %v2297 = vpack.c.b16 %v1871, %v1869
  %v2298 = vpack.c.b16 %v1874, %v1872
  %v2299 = vpack.c.b16 %v1875, %v1873
  %v2300 = vpack.c.b16 %v1878, %v1876
  %v2301 = vpack.c.b16 %v1879, %v1877
  %v2302 = vpack.c.b16 %v1882, %v1880
  %v2303 = vpack.c.b16 %v1883, %v1881
  %v2304 = vpack.c.b16 %v1886, %v1884
  %v2305 = vpack.c.b16 %v1887, %v1885
  %v2306 = vpack.c.b16 %v1890, %v1888
  %v2307 = vpack.c.b16 %v1891, %v1889
  %v2308 = vpack.c.b16 %v1894, %v1892
  %v2309 = vpack.c.b16 %v1895, %v1893
  %v2310 = vpack.c.b16 %v1898, %v1896
  %v2311 = vpack.c.b16 %v1899, %v1897
  %v2312 = vpack.c.b16 %v1902, %v1900
  %v2313 = vpack.c.b16 %v1903, %v1901
  %v2314 = vpack.c.b16 %v1906, %v1904
  %v2315 = vpack.c.b16 %v1907, %v1905
  %v2316 = vpack.c.b16 %v1910, %v1908
  %v2317 = vpack.c.b16 %v1911, %v1909
  %v2318 = vpack.c.b16 %v1914, %v1912
  %v2319 = vpack.c.b16 %v1915, %v1913
  %v2320 = vpack.c.b16 %v1918, %v1916
  %v2321 = vpack.c.b16 %v1919, %v1917
  %v2322 = vpack.c.b16 %v1922, %v1920
  %v2323 = vpack.c.b16 %v1923, %v1921
  %2724 = vmatpush.bf16.msra.mxu0 %v1938
  %2725 = vmatpush.bf16.msra.mxu0 %v1936
  %2726 = vmatpush.bf16.msra.mxu0 %v1934
  %2727 = vmatpush.bf16.msra.mxu0 %v1932
  %2728 = vmatpush.bf16.msra.mxu0 %v1930
  %2729 = vmatpush.bf16.msra.mxu0 %v1928
  %2730 = vmatpush.bf16.msra.mxu0 %v1926
  %2731 = vmatpush.bf16.msra.mxu0 %v1924
  %2732 = vmatmul.bf16.gmra.mxu0 %v624
  %v2733 = vpop.f32.mrf.mxu0
  %v2734 = vadd.f32 %v468, %v2733
  %v2735 = vpop.f32.mrf.mxu0
  %v2736 = vadd.f32 %v468, %v2735
  %2737 = vmatmul.bf16.gmra.mxu0 %v649
  %v2738 = vpop.f32.mrf.mxu0
  %v2739 = vadd.f32 %v468, %v2738
  %v2740 = vpop.f32.mrf.mxu0
  %v2741 = vadd.f32 %v468, %v2740
  %2742 = vdwg.mxu0
  %2743 = vmatpush.bf16.msra.mxu0 %v1954
  %2744 = vmatpush.bf16.msra.mxu0 %v1952
  %2745 = vmatpush.bf16.msra.mxu0 %v1950
  %2746 = vmatpush.bf16.msra.mxu0 %v1948
  %2747 = vmatpush.bf16.msra.mxu0 %v1946
  %2748 = vmatpush.bf16.msra.mxu0 %v1944
  %2749 = vmatpush.bf16.msra.mxu0 %v1942
  %2750 = vmatpush.bf16.msra.mxu0 %v1940
  %2751 = vmatmul.bf16.gmra.mxu0 %v625
  %v2752 = vpop.f32.mrf.mxu0
  %v2753 = vadd.f32 %v2734, %v2752
  %v2754 = vpop.f32.mrf.mxu0
  %v2755 = vadd.f32 %v2736, %v2754
  %2756 = vmatmul.bf16.gmra.mxu0 %v650
  %v2757 = vpop.f32.mrf.mxu0
  %v2758 = vadd.f32 %v2739, %v2757
  %v2759 = vpop.f32.mrf.mxu0
  %v2760 = vadd.f32 %v2741, %v2759
  %2761 = vdwg.mxu0
  %2762 = vmatpush.bf16.msra.mxu0 %v1970
  %2763 = vmatpush.bf16.msra.mxu0 %v1968
  %2764 = vmatpush.bf16.msra.mxu0 %v1966
  %2765 = vmatpush.bf16.msra.mxu0 %v1964
  %2766 = vmatpush.bf16.msra.mxu0 %v1962
  %2767 = vmatpush.bf16.msra.mxu0 %v1960
  %2768 = vmatpush.bf16.msra.mxu0 %v1958
  %2769 = vmatpush.bf16.msra.mxu0 %v1956
  %2770 = vmatmul.bf16.gmra.mxu0 %v626
  %v2771 = vpop.f32.mrf.mxu0
  %v2772 = vadd.f32 %v2753, %v2771
  %v2773 = vpop.f32.mrf.mxu0
  %v2774 = vadd.f32 %v2755, %v2773
  %2775 = vmatmul.bf16.gmra.mxu0 %v651
  %v2776 = vpop.f32.mrf.mxu0
  %v2777 = vadd.f32 %v2758, %v2776
  %v2778 = vpop.f32.mrf.mxu0
  %v2779 = vadd.f32 %v2760, %v2778
  %2780 = vdwg.mxu0
  %2781 = vmatpush.bf16.msra.mxu0 %v1986
  %2782 = vmatpush.bf16.msra.mxu0 %v1984
  %2783 = vmatpush.bf16.msra.mxu0 %v1982
  %2784 = vmatpush.bf16.msra.mxu0 %v1980
  %2785 = vmatpush.bf16.msra.mxu0 %v1978
  %2786 = vmatpush.bf16.msra.mxu0 %v1976
  %2787 = vmatpush.bf16.msra.mxu0 %v1974
  %2788 = vmatpush.bf16.msra.mxu0 %v1972
  %2789 = vmatmul.bf16.gmra.mxu0 %v627
  %v2790 = vpop.f32.mrf.mxu0
  %v2791 = vadd.f32 %v2772, %v2790
  %v2792 = vpop.f32.mrf.mxu0
  %v2793 = vadd.f32 %v2774, %v2792
  %2794 = vmatmul.bf16.gmra.mxu0 %v652
  %v2795 = vpop.f32.mrf.mxu0
  %v2796 = vadd.f32 %v2777, %v2795
  %v2797 = vpop.f32.mrf.mxu0
  %v2798 = vadd.f32 %v2779, %v2797
  %2799 = vdwg.mxu0
  %2800 = vmatpush.bf16.msra.mxu0 %v2002
  %2801 = vmatpush.bf16.msra.mxu0 %v2000
  %2802 = vmatpush.bf16.msra.mxu0 %v1998
  %2803 = vmatpush.bf16.msra.mxu0 %v1996
  %2804 = vmatpush.bf16.msra.mxu0 %v1994
  %2805 = vmatpush.bf16.msra.mxu0 %v1992
  %2806 = vmatpush.bf16.msra.mxu0 %v1990
  %2807 = vmatpush.bf16.msra.mxu0 %v1988
  %2808 = vmatmul.bf16.gmra.mxu0 %v628
  %v2809 = vpop.f32.mrf.mxu0
  %v2810 = vadd.f32 %v2791, %v2809
  %v2811 = vpop.f32.mrf.mxu0
  %v2812 = vadd.f32 %v2793, %v2811
  %2813 = vmatmul.bf16.gmra.mxu0 %v653
  %v2814 = vpop.f32.mrf.mxu0
  %v2815 = vadd.f32 %v2796, %v2814
  %v2816 = vpop.f32.mrf.mxu0
  %v2817 = vadd.f32 %v2798, %v2816
  %2818 = vdwg.mxu0
  %2819 = vmatpush.bf16.msra.mxu0 %v2018
  %2820 = vmatpush.bf16.msra.mxu0 %v2016
  %2821 = vmatpush.bf16.msra.mxu0 %v2014
  %2822 = vmatpush.bf16.msra.mxu0 %v2012
  %2823 = vmatpush.bf16.msra.mxu0 %v2010
  %2824 = vmatpush.bf16.msra.mxu0 %v2008
  %2825 = vmatpush.bf16.msra.mxu0 %v2006
  %2826 = vmatpush.bf16.msra.mxu0 %v2004
  %2827 = vmatmul.bf16.gmra.mxu0 %v629
  %v2828 = vpop.f32.mrf.mxu0
  %v2829 = vadd.f32 %v2810, %v2828
  %v2830 = vpop.f32.mrf.mxu0
  %v2831 = vadd.f32 %v2812, %v2830
  %2832 = vmatmul.bf16.gmra.mxu0 %v654
  %v2833 = vpop.f32.mrf.mxu0
  %v2834 = vadd.f32 %v2815, %v2833
  %v2835 = vpop.f32.mrf.mxu0
  %v2836 = vadd.f32 %v2817, %v2835
  %2837 = vdwg.mxu0
  %2838 = vmatpush.bf16.msra.mxu0 %v2034
  %2839 = vmatpush.bf16.msra.mxu0 %v2032
  %2840 = vmatpush.bf16.msra.mxu0 %v2030
  %2841 = vmatpush.bf16.msra.mxu0 %v2028
  %2842 = vmatpush.bf16.msra.mxu0 %v2026
  %2843 = vmatpush.bf16.msra.mxu0 %v2024
  %2844 = vmatpush.bf16.msra.mxu0 %v2022
  %2845 = vmatpush.bf16.msra.mxu0 %v2020
  %2846 = vmatmul.bf16.gmra.mxu0 %v630
  %v2847 = vpop.f32.mrf.mxu0
  %v2848 = vadd.f32 %v2829, %v2847
  %v2849 = vpop.f32.mrf.mxu0
  %v2850 = vadd.f32 %v2831, %v2849
  %2851 = vmatmul.bf16.gmra.mxu0 %v655
  %v2852 = vpop.f32.mrf.mxu0
  %v2853 = vadd.f32 %v2834, %v2852
  %v2854 = vpop.f32.mrf.mxu0
  %v2855 = vadd.f32 %v2836, %v2854
  %2856 = vdwg.mxu0
  %2857 = vmatpush.bf16.msra.mxu0 %v2050
  %2858 = vmatpush.bf16.msra.mxu0 %v2048
  %2859 = vmatpush.bf16.msra.mxu0 %v2046
  %2860 = vmatpush.bf16.msra.mxu0 %v2044
  %2861 = vmatpush.bf16.msra.mxu0 %v2042
  %2862 = vmatpush.bf16.msra.mxu0 %v2040
  %2863 = vmatpush.bf16.msra.mxu0 %v2038
  %2864 = vmatpush.bf16.msra.mxu0 %v2036
  %2865 = vmatmul.bf16.gmra.mxu0 %v631
  %v2866 = vpop.f32.mrf.mxu0
  %v2867 = vadd.f32 %v2848, %v2866
  %v2868 = vpop.f32.mrf.mxu0
  %v2869 = vadd.f32 %v2850, %v2868
  %2870 = vmatmul.bf16.gmra.mxu0 %v656
  %v2871 = vpop.f32.mrf.mxu0
  %v2872 = vadd.f32 %v2853, %v2871
  %v2873 = vpop.f32.mrf.mxu0
  %v2874 = vadd.f32 %v2855, %v2873
  %2875 = vdwg.mxu0
  %2876 = vmatpush.bf16.msra.mxu0 %v2066
  %2877 = vmatpush.bf16.msra.mxu0 %v2064
  %2878 = vmatpush.bf16.msra.mxu0 %v2062
  %2879 = vmatpush.bf16.msra.mxu0 %v2060
  %2880 = vmatpush.bf16.msra.mxu0 %v2058
  %2881 = vmatpush.bf16.msra.mxu0 %v2056
  %2882 = vmatpush.bf16.msra.mxu0 %v2054
  %2883 = vmatpush.bf16.msra.mxu0 %v2052
  %2884 = vmatmul.bf16.gmra.mxu0 %v632
  %v2885 = vpop.f32.mrf.mxu0
  %v2886 = vadd.f32 %v2867, %v2885
  %v2887 = vpop.f32.mrf.mxu0
  %v2888 = vadd.f32 %v2869, %v2887
  %2889 = vmatmul.bf16.gmra.mxu0 %v657
  %v2890 = vpop.f32.mrf.mxu0
  %v2891 = vadd.f32 %v2872, %v2890
  %v2892 = vpop.f32.mrf.mxu0
  %v2893 = vadd.f32 %v2874, %v2892
  %2894 = vdwg.mxu0
  %2895 = vmatpush.bf16.msra.mxu0 %v2082
  %2896 = vmatpush.bf16.msra.mxu0 %v2080
  %2897 = vmatpush.bf16.msra.mxu0 %v2078
  %2898 = vmatpush.bf16.msra.mxu0 %v2076
  %2899 = vmatpush.bf16.msra.mxu0 %v2074
  %2900 = vmatpush.bf16.msra.mxu0 %v2072
  %2901 = vmatpush.bf16.msra.mxu0 %v2070
  %2902 = vmatpush.bf16.msra.mxu0 %v2068
  %2903 = vmatmul.bf16.gmra.mxu0 %v633
  %v2904 = vpop.f32.mrf.mxu0
  %v2905 = vadd.f32 %v2886, %v2904
  %v2906 = vpop.f32.mrf.mxu0
  %v2907 = vadd.f32 %v2888, %v2906
  %2908 = vmatmul.bf16.gmra.mxu0 %v658
  %v2909 = vpop.f32.mrf.mxu0
  %v2910 = vadd.f32 %v2891, %v2909
  %v2911 = vpop.f32.mrf.mxu0
  %v2912 = vadd.f32 %v2893, %v2911
  %2913 = vdwg.mxu0
  %2914 = vmatpush.bf16.msra.mxu0 %v2098
  %2915 = vmatpush.bf16.msra.mxu0 %v2096
  %2916 = vmatpush.bf16.msra.mxu0 %v2094
  %2917 = vmatpush.bf16.msra.mxu0 %v2092
  %2918 = vmatpush.bf16.msra.mxu0 %v2090
  %2919 = vmatpush.bf16.msra.mxu0 %v2088
  %2920 = vmatpush.bf16.msra.mxu0 %v2086
  %2921 = vmatpush.bf16.msra.mxu0 %v2084
  %2922 = vmatmul.bf16.gmra.mxu0 %v634
  %v2923 = vpop.f32.mrf.mxu0
  %v2924 = vadd.f32 %v2905, %v2923
  %v2925 = vpop.f32.mrf.mxu0
  %v2926 = vadd.f32 %v2907, %v2925
  %2927 = vmatmul.bf16.gmra.mxu0 %v659
  %v2928 = vpop.f32.mrf.mxu0
  %v2929 = vadd.f32 %v2910, %v2928
  %v2930 = vpop.f32.mrf.mxu0
  %v2931 = vadd.f32 %v2912, %v2930
  %2932 = vdwg.mxu0
  %2933 = vmatpush.bf16.msra.mxu0 %v2114
  %2934 = vmatpush.bf16.msra.mxu0 %v2112
  %2935 = vmatpush.bf16.msra.mxu0 %v2110
  %2936 = vmatpush.bf16.msra.mxu0 %v2108
  %2937 = vmatpush.bf16.msra.mxu0 %v2106
  %2938 = vmatpush.bf16.msra.mxu0 %v2104
  %2939 = vmatpush.bf16.msra.mxu0 %v2102
  %2940 = vmatpush.bf16.msra.mxu0 %v2100
  %2941 = vmatmul.bf16.gmra.mxu0 %v635
  %v2942 = vpop.f32.mrf.mxu0
  %v2943 = vadd.f32 %v2924, %v2942
  %v2944 = vpop.f32.mrf.mxu0
  %v2945 = vadd.f32 %v2926, %v2944
  %2946 = vmatmul.bf16.gmra.mxu0 %v660
  %v2947 = vpop.f32.mrf.mxu0
  %v2948 = vadd.f32 %v2929, %v2947
  %v2949 = vpop.f32.mrf.mxu0
  %v2950 = vadd.f32 %v2931, %v2949
  %2951 = vdwg.mxu0
  %2952 = vmatpush.bf16.msra.mxu0 %v2130
  %2953 = vmatpush.bf16.msra.mxu0 %v2128
  %2954 = vmatpush.bf16.msra.mxu0 %v2126
  %2955 = vmatpush.bf16.msra.mxu0 %v2124
  %2956 = vmatpush.bf16.msra.mxu0 %v2122
  %2957 = vmatpush.bf16.msra.mxu0 %v2120
  %2958 = vmatpush.bf16.msra.mxu0 %v2118
  %2959 = vmatpush.bf16.msra.mxu0 %v2116
  %2960 = vmatmul.bf16.gmra.mxu0 %v636
  %v2961 = vpop.f32.mrf.mxu0
  %v2962 = vadd.f32 %v2943, %v2961
  %v2963 = vpop.f32.mrf.mxu0
  %v2964 = vadd.f32 %v2945, %v2963
  %2965 = vmatmul.bf16.gmra.mxu0 %v661
  %v2966 = vpop.f32.mrf.mxu0
  %v2967 = vadd.f32 %v2948, %v2966
  %v2968 = vpop.f32.mrf.mxu0
  %v2969 = vadd.f32 %v2950, %v2968
  %2970 = vdwg.mxu0
  %2971 = vmatpush.bf16.msra.mxu0 %v2146
  %2972 = vmatpush.bf16.msra.mxu0 %v2144
  %2973 = vmatpush.bf16.msra.mxu0 %v2142
  %2974 = vmatpush.bf16.msra.mxu0 %v2140
  %2975 = vmatpush.bf16.msra.mxu0 %v2138
  %2976 = vmatpush.bf16.msra.mxu0 %v2136
  %2977 = vmatpush.bf16.msra.mxu0 %v2134
  %2978 = vmatpush.bf16.msra.mxu0 %v2132
  %2979 = vmatmul.bf16.gmra.mxu0 %v637
  %v2980 = vpop.f32.mrf.mxu0
  %v2981 = vadd.f32 %v2962, %v2980
  %v2982 = vpop.f32.mrf.mxu0
  %v2983 = vadd.f32 %v2964, %v2982
  %2984 = vmatmul.bf16.gmra.mxu0 %v662
  %v2985 = vpop.f32.mrf.mxu0
  %v2986 = vadd.f32 %v2967, %v2985
  %v2987 = vpop.f32.mrf.mxu0
  %v2988 = vadd.f32 %v2969, %v2987
  %2989 = vdwg.mxu0
  %2990 = vmatpush.bf16.msra.mxu0 %v2162
  %2991 = vmatpush.bf16.msra.mxu0 %v2160
  %2992 = vmatpush.bf16.msra.mxu0 %v2158
  %2993 = vmatpush.bf16.msra.mxu0 %v2156
  %2994 = vmatpush.bf16.msra.mxu0 %v2154
  %2995 = vmatpush.bf16.msra.mxu0 %v2152
  %2996 = vmatpush.bf16.msra.mxu0 %v2150
  %2997 = vmatpush.bf16.msra.mxu0 %v2148
  %2998 = vmatmul.bf16.gmra.mxu0 %v638
  %v2999 = vpop.f32.mrf.mxu0
  %v3000 = vadd.f32 %v2981, %v2999
  %v3001 = vpop.f32.mrf.mxu0
  %v3002 = vadd.f32 %v2983, %v3001
  %3003 = vmatmul.bf16.gmra.mxu0 %v663
  %v3004 = vpop.f32.mrf.mxu0
  %v3005 = vadd.f32 %v2986, %v3004
  %v3006 = vpop.f32.mrf.mxu0
  %v3007 = vadd.f32 %v2988, %v3006
  %3008 = vdwg.mxu0
  %3009 = vmatpush.bf16.msra.mxu0 %v2178
  %3010 = vmatpush.bf16.msra.mxu0 %v2176
  %3011 = vmatpush.bf16.msra.mxu0 %v2174
  %3012 = vmatpush.bf16.msra.mxu0 %v2172
  %3013 = vmatpush.bf16.msra.mxu0 %v2170
  %3014 = vmatpush.bf16.msra.mxu0 %v2168
  %3015 = vmatpush.bf16.msra.mxu0 %v2166
  %3016 = vmatpush.bf16.msra.mxu0 %v2164
  %3017 = vmatmul.bf16.gmra.mxu0 %v639
  %v3018 = vpop.f32.mrf.mxu0
  %v3019 = vadd.f32 %v3000, %v3018
  %v3020 = vpop.f32.mrf.mxu0
  %v3021 = vadd.f32 %v3002, %v3020
  %3022 = vmatmul.bf16.gmra.mxu0 %v664
  %v3023 = vpop.f32.mrf.mxu0
  %v3024 = vadd.f32 %v3005, %v3023
  %v3025 = vpop.f32.mrf.mxu0
  %v3026 = vadd.f32 %v3007, %v3025
  %3027 = vdwg.mxu0
  %3028 = vmatpush.bf16.msra.mxu0 %v2194
  %3029 = vmatpush.bf16.msra.mxu0 %v2192
  %3030 = vmatpush.bf16.msra.mxu0 %v2190
  %3031 = vmatpush.bf16.msra.mxu0 %v2188
  %3032 = vmatpush.bf16.msra.mxu0 %v2186
  %3033 = vmatpush.bf16.msra.mxu0 %v2184
  %3034 = vmatpush.bf16.msra.mxu0 %v2182
  %3035 = vmatpush.bf16.msra.mxu0 %v2180
  %3036 = vmatmul.bf16.gmra.mxu0 %v640
  %v3037 = vpop.f32.mrf.mxu0
  %v3038 = vadd.f32 %v3019, %v3037
  %v3039 = vpop.f32.mrf.mxu0
  %v3040 = vadd.f32 %v3021, %v3039
  %3041 = vmatmul.bf16.gmra.mxu0 %v665
  %v3042 = vpop.f32.mrf.mxu0
  %v3043 = vadd.f32 %v3024, %v3042
  %v3044 = vpop.f32.mrf.mxu0
  %v3045 = vadd.f32 %v3026, %v3044
  %3046 = vdwg.mxu0
  %3047 = vmatpush.bf16.msra.mxu0 %v2210
  %3048 = vmatpush.bf16.msra.mxu0 %v2208
  %3049 = vmatpush.bf16.msra.mxu0 %v2206
  %3050 = vmatpush.bf16.msra.mxu0 %v2204
  %3051 = vmatpush.bf16.msra.mxu0 %v2202
  %3052 = vmatpush.bf16.msra.mxu0 %v2200
  %3053 = vmatpush.bf16.msra.mxu0 %v2198
  %3054 = vmatpush.bf16.msra.mxu0 %v2196
  %3055 = vmatmul.bf16.gmra.mxu0 %v641
  %v3056 = vpop.f32.mrf.mxu0
  %v3057 = vadd.f32 %v3038, %v3056
  %v3058 = vpop.f32.mrf.mxu0
  %v3059 = vadd.f32 %v3040, %v3058
  %3060 = vmatmul.bf16.gmra.mxu0 %v666
  %v3061 = vpop.f32.mrf.mxu0
  %v3062 = vadd.f32 %v3043, %v3061
  %v3063 = vpop.f32.mrf.mxu0
  %v3064 = vadd.f32 %v3045, %v3063
  %3065 = vdwg.mxu0
  %3066 = vmatpush.bf16.msra.mxu0 %v2226
  %3067 = vmatpush.bf16.msra.mxu0 %v2224
  %3068 = vmatpush.bf16.msra.mxu0 %v2222
  %3069 = vmatpush.bf16.msra.mxu0 %v2220
  %3070 = vmatpush.bf16.msra.mxu0 %v2218
  %3071 = vmatpush.bf16.msra.mxu0 %v2216
  %3072 = vmatpush.bf16.msra.mxu0 %v2214
  %3073 = vmatpush.bf16.msra.mxu0 %v2212
  %3074 = vmatmul.bf16.gmra.mxu0 %v642
  %v3075 = vpop.f32.mrf.mxu0
  %v3076 = vadd.f32 %v3057, %v3075
  %v3077 = vpop.f32.mrf.mxu0
  %v3078 = vadd.f32 %v3059, %v3077
  %3079 = vmatmul.bf16.gmra.mxu0 %v667
  %v3080 = vpop.f32.mrf.mxu0
  %v3081 = vadd.f32 %v3062, %v3080
  %v3082 = vpop.f32.mrf.mxu0
  %v3083 = vadd.f32 %v3064, %v3082
  %3084 = vdwg.mxu0
  %3085 = vmatpush.bf16.msra.mxu0 %v2242
  %3086 = vmatpush.bf16.msra.mxu0 %v2240
  %3087 = vmatpush.bf16.msra.mxu0 %v2238
  %3088 = vmatpush.bf16.msra.mxu0 %v2236
  %3089 = vmatpush.bf16.msra.mxu0 %v2234
  %3090 = vmatpush.bf16.msra.mxu0 %v2232
  %3091 = vmatpush.bf16.msra.mxu0 %v2230
  %3092 = vmatpush.bf16.msra.mxu0 %v2228
  %3093 = vmatmul.bf16.gmra.mxu0 %v643
  %v3094 = vpop.f32.mrf.mxu0
  %v3095 = vadd.f32 %v3076, %v3094
  %v3096 = vpop.f32.mrf.mxu0
  %v3097 = vadd.f32 %v3078, %v3096
  %3098 = vmatmul.bf16.gmra.mxu0 %v668
  %v3099 = vpop.f32.mrf.mxu0
  %v3100 = vadd.f32 %v3081, %v3099
  %v3101 = vpop.f32.mrf.mxu0
  %v3102 = vadd.f32 %v3083, %v3101
  %3103 = vdwg.mxu0
  %3104 = vmatpush.bf16.msra.mxu0 %v2258
  %3105 = vmatpush.bf16.msra.mxu0 %v2256
  %3106 = vmatpush.bf16.msra.mxu0 %v2254
  %3107 = vmatpush.bf16.msra.mxu0 %v2252
  %3108 = vmatpush.bf16.msra.mxu0 %v2250
  %3109 = vmatpush.bf16.msra.mxu0 %v2248
  %3110 = vmatpush.bf16.msra.mxu0 %v2246
  %3111 = vmatpush.bf16.msra.mxu0 %v2244
  %3112 = vmatmul.bf16.gmra.mxu0 %v644
  %v3113 = vpop.f32.mrf.mxu0
  %v3114 = vadd.f32 %v3095, %v3113
  %v3115 = vpop.f32.mrf.mxu0
  %v3116 = vadd.f32 %v3097, %v3115
  %3117 = vmatmul.bf16.gmra.mxu0 %v669
  %v3118 = vpop.f32.mrf.mxu0
  %v3119 = vadd.f32 %v3100, %v3118
  %v3120 = vpop.f32.mrf.mxu0
  %v3121 = vadd.f32 %v3102, %v3120
  %3122 = vdwg.mxu0
  %3123 = vmatpush.bf16.msra.mxu0 %v2274
  %3124 = vmatpush.bf16.msra.mxu0 %v2272
  %3125 = vmatpush.bf16.msra.mxu0 %v2270
  %3126 = vmatpush.bf16.msra.mxu0 %v2268
  %3127 = vmatpush.bf16.msra.mxu0 %v2266
  %3128 = vmatpush.bf16.msra.mxu0 %v2264
  %3129 = vmatpush.bf16.msra.mxu0 %v2262
  %3130 = vmatpush.bf16.msra.mxu0 %v2260
  %3131 = vmatmul.bf16.gmra.mxu0 %v645
  %v3132 = vpop.f32.mrf.mxu0
  %v3133 = vadd.f32 %v3114, %v3132
  %v3134 = vpop.f32.mrf.mxu0
  %v3135 = vadd.f32 %v3116, %v3134
  %3136 = vmatmul.bf16.gmra.mxu0 %v670
  %v3137 = vpop.f32.mrf.mxu0
  %v3138 = vadd.f32 %v3119, %v3137
  %v3139 = vpop.f32.mrf.mxu0
  %v3140 = vadd.f32 %v3121, %v3139
  %3141 = vdwg.mxu0
  %3142 = vmatpush.bf16.msra.mxu0 %v2290
  %3143 = vmatpush.bf16.msra.mxu0 %v2288
  %3144 = vmatpush.bf16.msra.mxu0 %v2286
  %3145 = vmatpush.bf16.msra.mxu0 %v2284
  %3146 = vmatpush.bf16.msra.mxu0 %v2282
  %3147 = vmatpush.bf16.msra.mxu0 %v2280
  %3148 = vmatpush.bf16.msra.mxu0 %v2278
  %3149 = vmatpush.bf16.msra.mxu0 %v2276
  %3150 = vmatmul.bf16.gmra.mxu0 %v646
  %v3151 = vpop.f32.mrf.mxu0
  %v3152 = vadd.f32 %v3133, %v3151
  %v3153 = vpop.f32.mrf.mxu0
  %v3154 = vadd.f32 %v3135, %v3153
  %3155 = vmatmul.bf16.gmra.mxu0 %v671
  %v3156 = vpop.f32.mrf.mxu0
  %v3157 = vadd.f32 %v3138, %v3156
  %v3158 = vpop.f32.mrf.mxu0
  %v3159 = vadd.f32 %v3140, %v3158
  %3160 = vdwg.mxu0
  %3161 = vmatpush.bf16.msra.mxu0 %v2306
  %3162 = vmatpush.bf16.msra.mxu0 %v2304
  %3163 = vmatpush.bf16.msra.mxu0 %v2302
  %3164 = vmatpush.bf16.msra.mxu0 %v2300
  %3165 = vmatpush.bf16.msra.mxu0 %v2298
  %3166 = vmatpush.bf16.msra.mxu0 %v2296
  %3167 = vmatpush.bf16.msra.mxu0 %v2294
  %3168 = vmatpush.bf16.msra.mxu0 %v2292
  %3169 = vmatmul.bf16.gmra.mxu0 %v647
  %v3170 = vpop.f32.mrf.mxu0
  %v3171 = vadd.f32 %v3152, %v3170
  %v3172 = vpop.f32.mrf.mxu0
  %v3173 = vadd.f32 %v3154, %v3172
  %3174 = vmatmul.bf16.gmra.mxu0 %v672
  %v3175 = vpop.f32.mrf.mxu0
  %v3176 = vadd.f32 %v3157, %v3175
  %v3177 = vpop.f32.mrf.mxu0
  %v3178 = vadd.f32 %v3159, %v3177
  %3179 = vdwg.mxu0
  %3180 = vmatpush.bf16.msra.mxu0 %v2322
  %3181 = vmatpush.bf16.msra.mxu0 %v2320
  %3182 = vmatpush.bf16.msra.mxu0 %v2318
  %3183 = vmatpush.bf16.msra.mxu0 %v2316
  %3184 = vmatpush.bf16.msra.mxu0 %v2314
  %3185 = vmatpush.bf16.msra.mxu0 %v2312
  %3186 = vmatpush.bf16.msra.mxu0 %v2310
  %3187 = vmatpush.bf16.msra.mxu0 %v2308
  %3188 = vmatmul.bf16.gmra.mxu0 %v648
  %v3189 = vpop.f32.mrf.mxu0
  %v3190 = vadd.f32 %v3171, %v3189
  %v3191 = vpop.f32.mrf.mxu0
  %v3192 = vadd.f32 %v3173, %v3191
  %3193 = vmatmul.bf16.gmra.mxu0 %v673
  %v3194 = vpop.f32.mrf.mxu0
  %v3195 = vadd.f32 %v3176, %v3194
  %v3196 = vpop.f32.mrf.mxu0
  %v3197 = vadd.f32 %v3178, %v3196
  %3198 = vdwg.mxu0
  %3199 = vmatpush.bf16.msra.mxu0 %v1939
  %3200 = vmatpush.bf16.msra.mxu0 %v1937
  %3201 = vmatpush.bf16.msra.mxu0 %v1935
  %3202 = vmatpush.bf16.msra.mxu0 %v1933
  %3203 = vmatpush.bf16.msra.mxu0 %v1931
  %3204 = vmatpush.bf16.msra.mxu0 %v1929
  %3205 = vmatpush.bf16.msra.mxu0 %v1927
  %3206 = vmatpush.bf16.msra.mxu0 %v1925
  %3207 = vmatmul.bf16.gmra.mxu0 %v624
  %v3208 = vpop.f32.mrf.mxu0
  %v3209 = vadd.f32 %v469, %v3208
  %v3210 = vpop.f32.mrf.mxu0
  %v3211 = vadd.f32 %v469, %v3210
  %3212 = vmatmul.bf16.gmra.mxu0 %v649
  %v3213 = vpop.f32.mrf.mxu0
  %v3214 = vadd.f32 %v469, %v3213
  %v3215 = vpop.f32.mrf.mxu0
  %v3216 = vadd.f32 %v469, %v3215
  %3217 = vdwg.mxu0
  %3218 = vmatpush.bf16.msra.mxu0 %v1955
  %3219 = vmatpush.bf16.msra.mxu0 %v1953
  %3220 = vmatpush.bf16.msra.mxu0 %v1951
  %3221 = vmatpush.bf16.msra.mxu0 %v1949
  %3222 = vmatpush.bf16.msra.mxu0 %v1947
  %3223 = vmatpush.bf16.msra.mxu0 %v1945
  %3224 = vmatpush.bf16.msra.mxu0 %v1943
  %3225 = vmatpush.bf16.msra.mxu0 %v1941
  %3226 = vmatmul.bf16.gmra.mxu0 %v625
  %v3227 = vpop.f32.mrf.mxu0
  %v3228 = vadd.f32 %v3209, %v3227
  %v3229 = vpop.f32.mrf.mxu0
  %v3230 = vadd.f32 %v3211, %v3229
  %3231 = vmatmul.bf16.gmra.mxu0 %v650
  %v3232 = vpop.f32.mrf.mxu0
  %v3233 = vadd.f32 %v3214, %v3232
  %v3234 = vpop.f32.mrf.mxu0
  %v3235 = vadd.f32 %v3216, %v3234
  %3236 = vdwg.mxu0
  %3237 = vmatpush.bf16.msra.mxu0 %v1971
  %3238 = vmatpush.bf16.msra.mxu0 %v1969
  %3239 = vmatpush.bf16.msra.mxu0 %v1967
  %3240 = vmatpush.bf16.msra.mxu0 %v1965
  %3241 = vmatpush.bf16.msra.mxu0 %v1963
  %3242 = vmatpush.bf16.msra.mxu0 %v1961
  %3243 = vmatpush.bf16.msra.mxu0 %v1959
  %3244 = vmatpush.bf16.msra.mxu0 %v1957
  %3245 = vmatmul.bf16.gmra.mxu0 %v626
  %v3246 = vpop.f32.mrf.mxu0
  %v3247 = vadd.f32 %v3228, %v3246
  %v3248 = vpop.f32.mrf.mxu0
  %v3249 = vadd.f32 %v3230, %v3248
  %3250 = vmatmul.bf16.gmra.mxu0 %v651
  %v3251 = vpop.f32.mrf.mxu0
  %v3252 = vadd.f32 %v3233, %v3251
  %v3253 = vpop.f32.mrf.mxu0
  %v3254 = vadd.f32 %v3235, %v3253
  %3255 = vdwg.mxu0
  %3256 = vmatpush.bf16.msra.mxu0 %v1987
  %3257 = vmatpush.bf16.msra.mxu0 %v1985
  %3258 = vmatpush.bf16.msra.mxu0 %v1983
  %3259 = vmatpush.bf16.msra.mxu0 %v1981
  %3260 = vmatpush.bf16.msra.mxu0 %v1979
  %3261 = vmatpush.bf16.msra.mxu0 %v1977
  %3262 = vmatpush.bf16.msra.mxu0 %v1975
  %3263 = vmatpush.bf16.msra.mxu0 %v1973
  %3264 = vmatmul.bf16.gmra.mxu0 %v627
  %v3265 = vpop.f32.mrf.mxu0
  %v3266 = vadd.f32 %v3247, %v3265
  %v3267 = vpop.f32.mrf.mxu0
  %v3268 = vadd.f32 %v3249, %v3267
  %3269 = vmatmul.bf16.gmra.mxu0 %v652
  %v3270 = vpop.f32.mrf.mxu0
  %v3271 = vadd.f32 %v3252, %v3270
  %v3272 = vpop.f32.mrf.mxu0
  %v3273 = vadd.f32 %v3254, %v3272
  %3274 = vdwg.mxu0
  %3275 = vmatpush.bf16.msra.mxu0 %v2003
  %3276 = vmatpush.bf16.msra.mxu0 %v2001
  %3277 = vmatpush.bf16.msra.mxu0 %v1999
  %3278 = vmatpush.bf16.msra.mxu0 %v1997
  %3279 = vmatpush.bf16.msra.mxu0 %v1995
  %3280 = vmatpush.bf16.msra.mxu0 %v1993
  %3281 = vmatpush.bf16.msra.mxu0 %v1991
  %3282 = vmatpush.bf16.msra.mxu0 %v1989
  %3283 = vmatmul.bf16.gmra.mxu0 %v628
  %v3284 = vpop.f32.mrf.mxu0
  %v3285 = vadd.f32 %v3266, %v3284
  %v3286 = vpop.f32.mrf.mxu0
  %v3287 = vadd.f32 %v3268, %v3286
  %3288 = vmatmul.bf16.gmra.mxu0 %v653
  %v3289 = vpop.f32.mrf.mxu0
  %v3290 = vadd.f32 %v3271, %v3289
  %v3291 = vpop.f32.mrf.mxu0
  %v3292 = vadd.f32 %v3273, %v3291
  %3293 = vdwg.mxu0
  %3294 = vmatpush.bf16.msra.mxu0 %v2019
  %3295 = vmatpush.bf16.msra.mxu0 %v2017
  %3296 = vmatpush.bf16.msra.mxu0 %v2015
  %3297 = vmatpush.bf16.msra.mxu0 %v2013
  %3298 = vmatpush.bf16.msra.mxu0 %v2011
  %3299 = vmatpush.bf16.msra.mxu0 %v2009
  %3300 = vmatpush.bf16.msra.mxu0 %v2007
  %3301 = vmatpush.bf16.msra.mxu0 %v2005
  %3302 = vmatmul.bf16.gmra.mxu0 %v629
  %v3303 = vpop.f32.mrf.mxu0
  %v3304 = vadd.f32 %v3285, %v3303
  %v3305 = vpop.f32.mrf.mxu0
  %v3306 = vadd.f32 %v3287, %v3305
  %3307 = vmatmul.bf16.gmra.mxu0 %v654
  %v3308 = vpop.f32.mrf.mxu0
  %v3309 = vadd.f32 %v3290, %v3308
  %v3310 = vpop.f32.mrf.mxu0
  %v3311 = vadd.f32 %v3292, %v3310
  %3312 = vdwg.mxu0
  %3313 = vmatpush.bf16.msra.mxu0 %v2035
  %3314 = vmatpush.bf16.msra.mxu0 %v2033
  %3315 = vmatpush.bf16.msra.mxu0 %v2031
  %3316 = vmatpush.bf16.msra.mxu0 %v2029
  %3317 = vmatpush.bf16.msra.mxu0 %v2027
  %3318 = vmatpush.bf16.msra.mxu0 %v2025
  %3319 = vmatpush.bf16.msra.mxu0 %v2023
  %3320 = vmatpush.bf16.msra.mxu0 %v2021
  %3321 = vmatmul.bf16.gmra.mxu0 %v630
  %v3322 = vpop.f32.mrf.mxu0
  %v3323 = vadd.f32 %v3304, %v3322
  %v3324 = vpop.f32.mrf.mxu0
  %v3325 = vadd.f32 %v3306, %v3324
  %3326 = vmatmul.bf16.gmra.mxu0 %v655
  %v3327 = vpop.f32.mrf.mxu0
  %v3328 = vadd.f32 %v3309, %v3327
  %v3329 = vpop.f32.mrf.mxu0
  %v3330 = vadd.f32 %v3311, %v3329
  %3331 = vdwg.mxu0
  %3332 = vmatpush.bf16.msra.mxu0 %v2051
  %3333 = vmatpush.bf16.msra.mxu0 %v2049
  %3334 = vmatpush.bf16.msra.mxu0 %v2047
  %3335 = vmatpush.bf16.msra.mxu0 %v2045
  %3336 = vmatpush.bf16.msra.mxu0 %v2043
  %3337 = vmatpush.bf16.msra.mxu0 %v2041
  %3338 = vmatpush.bf16.msra.mxu0 %v2039
  %3339 = vmatpush.bf16.msra.mxu0 %v2037
  %3340 = vmatmul.bf16.gmra.mxu0 %v631
  %v3341 = vpop.f32.mrf.mxu0
  %v3342 = vadd.f32 %v3323, %v3341
  %v3343 = vpop.f32.mrf.mxu0
  %v3344 = vadd.f32 %v3325, %v3343
  %3345 = vmatmul.bf16.gmra.mxu0 %v656
  %v3346 = vpop.f32.mrf.mxu0
  %v3347 = vadd.f32 %v3328, %v3346
  %v3348 = vpop.f32.mrf.mxu0
  %v3349 = vadd.f32 %v3330, %v3348
  %3350 = vdwg.mxu0
  %3351 = vmatpush.bf16.msra.mxu0 %v2067
  %3352 = vmatpush.bf16.msra.mxu0 %v2065
  %3353 = vmatpush.bf16.msra.mxu0 %v2063
  %3354 = vmatpush.bf16.msra.mxu0 %v2061
  %3355 = vmatpush.bf16.msra.mxu0 %v2059
  %3356 = vmatpush.bf16.msra.mxu0 %v2057
  %3357 = vmatpush.bf16.msra.mxu0 %v2055
  %3358 = vmatpush.bf16.msra.mxu0 %v2053
  %3359 = vmatmul.bf16.gmra.mxu0 %v632
  %v3360 = vpop.f32.mrf.mxu0
  %v3361 = vadd.f32 %v3342, %v3360
  %v3362 = vpop.f32.mrf.mxu0
  %v3363 = vadd.f32 %v3344, %v3362
  %3364 = vmatmul.bf16.gmra.mxu0 %v657
  %v3365 = vpop.f32.mrf.mxu0
  %v3366 = vadd.f32 %v3347, %v3365
  %v3367 = vpop.f32.mrf.mxu0
  %v3368 = vadd.f32 %v3349, %v3367
  %3369 = vdwg.mxu0
  %3370 = vmatpush.bf16.msra.mxu0 %v2083
  %3371 = vmatpush.bf16.msra.mxu0 %v2081
  %3372 = vmatpush.bf16.msra.mxu0 %v2079
  %3373 = vmatpush.bf16.msra.mxu0 %v2077
  %3374 = vmatpush.bf16.msra.mxu0 %v2075
  %3375 = vmatpush.bf16.msra.mxu0 %v2073
  %3376 = vmatpush.bf16.msra.mxu0 %v2071
  %3377 = vmatpush.bf16.msra.mxu0 %v2069
  %3378 = vmatmul.bf16.gmra.mxu0 %v633
  %v3379 = vpop.f32.mrf.mxu0
  %v3380 = vadd.f32 %v3361, %v3379
  %v3381 = vpop.f32.mrf.mxu0
  %v3382 = vadd.f32 %v3363, %v3381
  %3383 = vmatmul.bf16.gmra.mxu0 %v658
  %v3384 = vpop.f32.mrf.mxu0
  %v3385 = vadd.f32 %v3366, %v3384
  %v3386 = vpop.f32.mrf.mxu0
  %v3387 = vadd.f32 %v3368, %v3386
  %3388 = vdwg.mxu0
  %3389 = vmatpush.bf16.msra.mxu0 %v2099
  %3390 = vmatpush.bf16.msra.mxu0 %v2097
  %3391 = vmatpush.bf16.msra.mxu0 %v2095
  %3392 = vmatpush.bf16.msra.mxu0 %v2093
  %3393 = vmatpush.bf16.msra.mxu0 %v2091
  %3394 = vmatpush.bf16.msra.mxu0 %v2089
  %3395 = vmatpush.bf16.msra.mxu0 %v2087
  %3396 = vmatpush.bf16.msra.mxu0 %v2085
  %3397 = vmatmul.bf16.gmra.mxu0 %v634
  %v3398 = vpop.f32.mrf.mxu0
  %v3399 = vadd.f32 %v3380, %v3398
  %v3400 = vpop.f32.mrf.mxu0
  %v3401 = vadd.f32 %v3382, %v3400
  %3402 = vmatmul.bf16.gmra.mxu0 %v659
  %v3403 = vpop.f32.mrf.mxu0
  %v3404 = vadd.f32 %v3385, %v3403
  %v3405 = vpop.f32.mrf.mxu0
  %v3406 = vadd.f32 %v3387, %v3405
  %3407 = vdwg.mxu0
  %3408 = vmatpush.bf16.msra.mxu0 %v2115
  %3409 = vmatpush.bf16.msra.mxu0 %v2113
  %3410 = vmatpush.bf16.msra.mxu0 %v2111
  %3411 = vmatpush.bf16.msra.mxu0 %v2109
  %3412 = vmatpush.bf16.msra.mxu0 %v2107
  %3413 = vmatpush.bf16.msra.mxu0 %v2105
  %3414 = vmatpush.bf16.msra.mxu0 %v2103
  %3415 = vmatpush.bf16.msra.mxu0 %v2101
  %3416 = vmatmul.bf16.gmra.mxu0 %v635
  %v3417 = vpop.f32.mrf.mxu0
  %v3418 = vadd.f32 %v3399, %v3417
  %v3419 = vpop.f32.mrf.mxu0
  %v3420 = vadd.f32 %v3401, %v3419
  %3421 = vmatmul.bf16.gmra.mxu0 %v660
  %v3422 = vpop.f32.mrf.mxu0
  %v3423 = vadd.f32 %v3404, %v3422
  %v3424 = vpop.f32.mrf.mxu0
  %v3425 = vadd.f32 %v3406, %v3424
  %3426 = vdwg.mxu0
  %3427 = vmatpush.bf16.msra.mxu0 %v2131
  %3428 = vmatpush.bf16.msra.mxu0 %v2129
  %3429 = vmatpush.bf16.msra.mxu0 %v2127
  %3430 = vmatpush.bf16.msra.mxu0 %v2125
  %3431 = vmatpush.bf16.msra.mxu0 %v2123
  %3432 = vmatpush.bf16.msra.mxu0 %v2121
  %3433 = vmatpush.bf16.msra.mxu0 %v2119
  %3434 = vmatpush.bf16.msra.mxu0 %v2117
  %3435 = vmatmul.bf16.gmra.mxu0 %v636
  %v3436 = vpop.f32.mrf.mxu0
  %v3437 = vadd.f32 %v3418, %v3436
  %v3438 = vpop.f32.mrf.mxu0
  %v3439 = vadd.f32 %v3420, %v3438
  %3440 = vmatmul.bf16.gmra.mxu0 %v661
  %v3441 = vpop.f32.mrf.mxu0
  %v3442 = vadd.f32 %v3423, %v3441
  %v3443 = vpop.f32.mrf.mxu0
  %v3444 = vadd.f32 %v3425, %v3443
  %3445 = vdwg.mxu0
  %3446 = vmatpush.bf16.msra.mxu0 %v2147
  %3447 = vmatpush.bf16.msra.mxu0 %v2145
  %3448 = vmatpush.bf16.msra.mxu0 %v2143
  %3449 = vmatpush.bf16.msra.mxu0 %v2141
  %3450 = vmatpush.bf16.msra.mxu0 %v2139
  %3451 = vmatpush.bf16.msra.mxu0 %v2137
  %3452 = vmatpush.bf16.msra.mxu0 %v2135
  %3453 = vmatpush.bf16.msra.mxu0 %v2133
  %3454 = vmatmul.bf16.gmra.mxu0 %v637
  %v3455 = vpop.f32.mrf.mxu0
  %v3456 = vadd.f32 %v3437, %v3455
  %v3457 = vpop.f32.mrf.mxu0
  %v3458 = vadd.f32 %v3439, %v3457
  %3459 = vmatmul.bf16.gmra.mxu0 %v662
  %v3460 = vpop.f32.mrf.mxu0
  %v3461 = vadd.f32 %v3442, %v3460
  %v3462 = vpop.f32.mrf.mxu0
  %v3463 = vadd.f32 %v3444, %v3462
  %3464 = vdwg.mxu0
  %3465 = vmatpush.bf16.msra.mxu0 %v2163
  %3466 = vmatpush.bf16.msra.mxu0 %v2161
  %3467 = vmatpush.bf16.msra.mxu0 %v2159
  %3468 = vmatpush.bf16.msra.mxu0 %v2157
  %3469 = vmatpush.bf16.msra.mxu0 %v2155
  %3470 = vmatpush.bf16.msra.mxu0 %v2153
  %3471 = vmatpush.bf16.msra.mxu0 %v2151
  %3472 = vmatpush.bf16.msra.mxu0 %v2149
  %3473 = vmatmul.bf16.gmra.mxu0 %v638
  %v3474 = vpop.f32.mrf.mxu0
  %v3475 = vadd.f32 %v3456, %v3474
  %v3476 = vpop.f32.mrf.mxu0
  %v3477 = vadd.f32 %v3458, %v3476
  %3478 = vmatmul.bf16.gmra.mxu0 %v663
  %v3479 = vpop.f32.mrf.mxu0
  %v3480 = vadd.f32 %v3461, %v3479
  %v3481 = vpop.f32.mrf.mxu0
  %v3482 = vadd.f32 %v3463, %v3481
  %3483 = vdwg.mxu0
  %3484 = vmatpush.bf16.msra.mxu0 %v2179
  %3485 = vmatpush.bf16.msra.mxu0 %v2177
  %3486 = vmatpush.bf16.msra.mxu0 %v2175
  %3487 = vmatpush.bf16.msra.mxu0 %v2173
  %3488 = vmatpush.bf16.msra.mxu0 %v2171
  %3489 = vmatpush.bf16.msra.mxu0 %v2169
  %3490 = vmatpush.bf16.msra.mxu0 %v2167
  %3491 = vmatpush.bf16.msra.mxu0 %v2165
  %3492 = vmatmul.bf16.gmra.mxu0 %v639
  %v3493 = vpop.f32.mrf.mxu0
  %v3494 = vadd.f32 %v3475, %v3493
  %v3495 = vpop.f32.mrf.mxu0
  %v3496 = vadd.f32 %v3477, %v3495
  %3497 = vmatmul.bf16.gmra.mxu0 %v664
  %v3498 = vpop.f32.mrf.mxu0
  %v3499 = vadd.f32 %v3480, %v3498
  %v3500 = vpop.f32.mrf.mxu0
  %v3501 = vadd.f32 %v3482, %v3500
  %3502 = vdwg.mxu0
  %3503 = vmatpush.bf16.msra.mxu0 %v2195
  %3504 = vmatpush.bf16.msra.mxu0 %v2193
  %3505 = vmatpush.bf16.msra.mxu0 %v2191
  %3506 = vmatpush.bf16.msra.mxu0 %v2189
  %3507 = vmatpush.bf16.msra.mxu0 %v2187
  %3508 = vmatpush.bf16.msra.mxu0 %v2185
  %3509 = vmatpush.bf16.msra.mxu0 %v2183
  %3510 = vmatpush.bf16.msra.mxu0 %v2181
  %3511 = vmatmul.bf16.gmra.mxu0 %v640
  %v3512 = vpop.f32.mrf.mxu0
  %v3513 = vadd.f32 %v3494, %v3512
  %v3514 = vpop.f32.mrf.mxu0
  %v3515 = vadd.f32 %v3496, %v3514
  %3516 = vmatmul.bf16.gmra.mxu0 %v665
  %v3517 = vpop.f32.mrf.mxu0
  %v3518 = vadd.f32 %v3499, %v3517
  %v3519 = vpop.f32.mrf.mxu0
  %v3520 = vadd.f32 %v3501, %v3519
  %3521 = vdwg.mxu0
  %3522 = vmatpush.bf16.msra.mxu0 %v2211
  %3523 = vmatpush.bf16.msra.mxu0 %v2209
  %3524 = vmatpush.bf16.msra.mxu0 %v2207
  %3525 = vmatpush.bf16.msra.mxu0 %v2205
  %3526 = vmatpush.bf16.msra.mxu0 %v2203
  %3527 = vmatpush.bf16.msra.mxu0 %v2201
  %3528 = vmatpush.bf16.msra.mxu0 %v2199
  %3529 = vmatpush.bf16.msra.mxu0 %v2197
  %3530 = vmatmul.bf16.gmra.mxu0 %v641
  %v3531 = vpop.f32.mrf.mxu0
  %v3532 = vadd.f32 %v3513, %v3531
  %v3533 = vpop.f32.mrf.mxu0
  %v3534 = vadd.f32 %v3515, %v3533
  %3535 = vmatmul.bf16.gmra.mxu0 %v666
  %v3536 = vpop.f32.mrf.mxu0
  %v3537 = vadd.f32 %v3518, %v3536
  %v3538 = vpop.f32.mrf.mxu0
  %v3539 = vadd.f32 %v3520, %v3538
  %3540 = vdwg.mxu0
  %3541 = vmatpush.bf16.msra.mxu0 %v2227
  %3542 = vmatpush.bf16.msra.mxu0 %v2225
  %3543 = vmatpush.bf16.msra.mxu0 %v2223
  %3544 = vmatpush.bf16.msra.mxu0 %v2221
  %3545 = vmatpush.bf16.msra.mxu0 %v2219
  %3546 = vmatpush.bf16.msra.mxu0 %v2217
  %3547 = vmatpush.bf16.msra.mxu0 %v2215
  %3548 = vmatpush.bf16.msra.mxu0 %v2213
  %3549 = vmatmul.bf16.gmra.mxu0 %v642
  %v3550 = vpop.f32.mrf.mxu0
  %v3551 = vadd.f32 %v3532, %v3550
  %v3552 = vpop.f32.mrf.mxu0
  %v3553 = vadd.f32 %v3534, %v3552
  %3554 = vmatmul.bf16.gmra.mxu0 %v667
  %v3555 = vpop.f32.mrf.mxu0
  %v3556 = vadd.f32 %v3537, %v3555
  %v3557 = vpop.f32.mrf.mxu0
  %v3558 = vadd.f32 %v3539, %v3557
  %3559 = vdwg.mxu0
  %3560 = vmatpush.bf16.msra.mxu0 %v2243
  %3561 = vmatpush.bf16.msra.mxu0 %v2241
  %3562 = vmatpush.bf16.msra.mxu0 %v2239
  %3563 = vmatpush.bf16.msra.mxu0 %v2237
  %3564 = vmatpush.bf16.msra.mxu0 %v2235
  %3565 = vmatpush.bf16.msra.mxu0 %v2233
  %3566 = vmatpush.bf16.msra.mxu0 %v2231
  %3567 = vmatpush.bf16.msra.mxu0 %v2229
  %3568 = vmatmul.bf16.gmra.mxu0 %v643
  %v3569 = vpop.f32.mrf.mxu0
  %v3570 = vadd.f32 %v3551, %v3569
  %v3571 = vpop.f32.mrf.mxu0
  %v3572 = vadd.f32 %v3553, %v3571
  %3573 = vmatmul.bf16.gmra.mxu0 %v668
  %v3574 = vpop.f32.mrf.mxu0
  %v3575 = vadd.f32 %v3556, %v3574
  %v3576 = vpop.f32.mrf.mxu0
  %v3577 = vadd.f32 %v3558, %v3576
  %3578 = vdwg.mxu0
  %3579 = vmatpush.bf16.msra.mxu0 %v2259
  %3580 = vmatpush.bf16.msra.mxu0 %v2257
  %3581 = vmatpush.bf16.msra.mxu0 %v2255
  %3582 = vmatpush.bf16.msra.mxu0 %v2253
  %3583 = vmatpush.bf16.msra.mxu0 %v2251
  %3584 = vmatpush.bf16.msra.mxu0 %v2249
  %3585 = vmatpush.bf16.msra.mxu0 %v2247
  %3586 = vmatpush.bf16.msra.mxu0 %v2245
  %3587 = vmatmul.bf16.gmra.mxu0 %v644
  %v3588 = vpop.f32.mrf.mxu0
  %v3589 = vadd.f32 %v3570, %v3588
  %v3590 = vpop.f32.mrf.mxu0
  %v3591 = vadd.f32 %v3572, %v3590
  %3592 = vmatmul.bf16.gmra.mxu0 %v669
  %v3593 = vpop.f32.mrf.mxu0
  %v3594 = vadd.f32 %v3575, %v3593
  %v3595 = vpop.f32.mrf.mxu0
  %v3596 = vadd.f32 %v3577, %v3595
  %3597 = vdwg.mxu0
  %3598 = vmatpush.bf16.msra.mxu0 %v2275
  %3599 = vmatpush.bf16.msra.mxu0 %v2273
  %3600 = vmatpush.bf16.msra.mxu0 %v2271
  %3601 = vmatpush.bf16.msra.mxu0 %v2269
  %3602 = vmatpush.bf16.msra.mxu0 %v2267
  %3603 = vmatpush.bf16.msra.mxu0 %v2265
  %3604 = vmatpush.bf16.msra.mxu0 %v2263
  %3605 = vmatpush.bf16.msra.mxu0 %v2261
  %3606 = vmatmul.bf16.gmra.mxu0 %v645
  %v3607 = vpop.f32.mrf.mxu0
  %v3608 = vadd.f32 %v3589, %v3607
  %v3609 = vpop.f32.mrf.mxu0
  %v3610 = vadd.f32 %v3591, %v3609
  %3611 = vmatmul.bf16.gmra.mxu0 %v670
  %v3612 = vpop.f32.mrf.mxu0
  %v3613 = vadd.f32 %v3594, %v3612
  %v3614 = vpop.f32.mrf.mxu0
  %v3615 = vadd.f32 %v3596, %v3614
  %3616 = vdwg.mxu0
  %3617 = vmatpush.bf16.msra.mxu0 %v2291
  %3618 = vmatpush.bf16.msra.mxu0 %v2289
  %3619 = vmatpush.bf16.msra.mxu0 %v2287
  %3620 = vmatpush.bf16.msra.mxu0 %v2285
  %3621 = vmatpush.bf16.msra.mxu0 %v2283
  %3622 = vmatpush.bf16.msra.mxu0 %v2281
  %3623 = vmatpush.bf16.msra.mxu0 %v2279
  %3624 = vmatpush.bf16.msra.mxu0 %v2277
  %3625 = vmatmul.bf16.gmra.mxu0 %v646
  %v3626 = vpop.f32.mrf.mxu0
  %v3627 = vadd.f32 %v3608, %v3626
  %v3628 = vpop.f32.mrf.mxu0
  %v3629 = vadd.f32 %v3610, %v3628
  %3630 = vmatmul.bf16.gmra.mxu0 %v671
  %v3631 = vpop.f32.mrf.mxu0
  %v3632 = vadd.f32 %v3613, %v3631
  %v3633 = vpop.f32.mrf.mxu0
  %v3634 = vadd.f32 %v3615, %v3633
  %3635 = vdwg.mxu0
  %3636 = vmatpush.bf16.msra.mxu0 %v2307
  %3637 = vmatpush.bf16.msra.mxu0 %v2305
  %3638 = vmatpush.bf16.msra.mxu0 %v2303
  %3639 = vmatpush.bf16.msra.mxu0 %v2301
  %3640 = vmatpush.bf16.msra.mxu0 %v2299
  %3641 = vmatpush.bf16.msra.mxu0 %v2297
  %3642 = vmatpush.bf16.msra.mxu0 %v2295
  %3643 = vmatpush.bf16.msra.mxu0 %v2293
  %3644 = vmatmul.bf16.gmra.mxu0 %v647
  %v3645 = vpop.f32.mrf.mxu0
  %v3646 = vadd.f32 %v3627, %v3645
  %v3647 = vpop.f32.mrf.mxu0
  %v3648 = vadd.f32 %v3629, %v3647
  %3649 = vmatmul.bf16.gmra.mxu0 %v672
  %v3650 = vpop.f32.mrf.mxu0
  %v3651 = vadd.f32 %v3632, %v3650
  %v3652 = vpop.f32.mrf.mxu0
  %v3653 = vadd.f32 %v3634, %v3652
  %3654 = vdwg.mxu0
  %3655 = vmatpush.bf16.msra.mxu0 %v2323
  %3656 = vmatpush.bf16.msra.mxu0 %v2321
  %3657 = vmatpush.bf16.msra.mxu0 %v2319
  %3658 = vmatpush.bf16.msra.mxu0 %v2317
  %3659 = vmatpush.bf16.msra.mxu0 %v2315
  %3660 = vmatpush.bf16.msra.mxu0 %v2313
  %3661 = vmatpush.bf16.msra.mxu0 %v2311
  %3662 = vmatpush.bf16.msra.mxu0 %v2309
  %3663 = vmatmul.bf16.gmra.mxu0 %v648
  %v3664 = vpop.f32.mrf.mxu0
  %v3665 = vadd.f32 %v3646, %v3664
  %v3666 = vpop.f32.mrf.mxu0
  %v3667 = vadd.f32 %v3648, %v3666
  %3668 = vmatmul.bf16.gmra.mxu0 %v673
  %v3669 = vpop.f32.mrf.mxu0
  %v3670 = vadd.f32 %v3651, %v3669
  %v3671 = vpop.f32.mrf.mxu0
  %v3672 = vadd.f32 %v3653, %v3671
  %3673 = vdwg.mxu0
  %v3674 = vmax.f32 %v3190, 0.0
  %v3675 = vmax.f32 %v3665, 0.0
  %v3676 = vmax.f32 %v3192, 0.0
  %v3677 = vmax.f32 %v3667, 0.0
  %v3678 = vmax.f32 %v3195, 0.0
  %v3679 = vmax.f32 %v3670, 0.0
  %v3680 = vmax.f32 %v3197, 0.0
  %v3681 = vmax.f32 %v3672, 0.0
  %v3682 = vpack.c.bf16 %v3675, %v3674
  %v3683 = vpack.c.bf16 %v3677, %v3676
  %v3684 = vpack.c.bf16 %v3679, %v3678
  %v3685 = vpack.c.bf16 %v3681, %v3680
  %3686 = vst [vmem:[%s3] sm:$0xff] %v3682
  %3687 = vst [vmem:[%s3 + $0x8] sm:$0xff] %v3683
  %3688 = vst [vmem:[%s3 + $0x10] sm:$0xff] %v3684
  %3689 = vst [vmem:[%s3 + $0x18] sm:$0xff] %v3685
  // Predicated region
  $region14: #{discriminator_forward.6} parent=0 // pred_check
    _
  $region15: #{discriminator_forward.6} parent=0 // pred_check_branch
    %3691 = sbr.rel (0) target = $region17
  $region16: #{discriminator_forward.6} parent=0 // pred_region
    _
  $region17: #{discriminator_forward.6} parent=0 // pred_fallthru
    _
  // Predicated region
  $region18: #{discriminator_forward.6} parent=0 // pred_check
    _
  $region19: #{discriminator_forward.6} parent=0 // pred_check_branch
    %3693 = sbr.rel (0) target = $region21
  $region20: #{discriminator_forward.6} parent=0 // pred_region
    _
  $region21: #{discriminator_forward.6} parent=0 // pred_fallthru
    _

// kernel: discriminator_forward.7
$region0: #{discriminator_forward.7}
  #allocation0 [shape = 'u32[]', space=smem, size = 0x4, offset = 0x4, fixed_abs, tag = 'smem constant byte address 0x4 - core index']
  #allocation1 [shape = 'u32[72,128]{1,0:T(1,128)}', space=vmem, size = 0x9000, scoped, tag = 'internal scratch']
  %s0 = inlined_call_operand.vmem [shape: bf16[8,4096], index: 0, kind: input, shape index: {}]
  %s1 = inlined_call_operand.vmem [shape: bf16[4096,128], index: 1, kind: input, shape index: {}]
  %s2 = inlined_call_operand.vmem [shape: f32[1,128], index: 2, kind: input, shape index: {}]
  %s3 = inlined_call_operand.vmem [shape: f32[8,128], index: 3, kind: output, shape index: {}]
  %s4 = sld [smem:[#allocation0]]
  $region22: #{discriminator_forward.7} parent=0
    _
  %s6 = ssub.s32 1, %s4
  %s7 = scalar_select 0, %s6, %s4
  // Predicated region
  $region2: #{discriminator_forward.7} parent=0 // pred_check
    _
  $region3: #{discriminator_forward.7} parent=0 // pred_check_branch
    %9 = sbr.rel (0) target = $region5
  $region4: #{discriminator_forward.7} parent=0 // pred_region
    _
  $region5: #{discriminator_forward.7} parent=0 // pred_fallthru
    _
  // Predicated region
  $region6: #{discriminator_forward.7} parent=0 // pred_check
    _
  $region7: #{discriminator_forward.7} parent=0 // pred_check_branch
    %11 = sbr.rel (0) target = $region9
  $region8: #{discriminator_forward.7} parent=0 // pred_region
    _
  $region9: #{discriminator_forward.7} parent=0 // pred_fallthru
    _
  // Predicated region
  $region10: #{discriminator_forward.7} parent=0 // pred_check
    _
  $region11: #{discriminator_forward.7} parent=0 // pred_check_branch
    %13 = sbr.rel (0) target = $region13
  $region12: #{discriminator_forward.7} parent=0 // pred_region
    _
  $region13: #{discriminator_forward.7} parent=0 // pred_fallthru
    _
  %v14 = vld [vmem:[%s0] sm:$0xff]
  %v15 = vld [vmem:[%s0 + $0x8] sm:$0xff]
  %v16 = vld [vmem:[%s0 + $0x10] sm:$0xff]
  %v17 = vld [vmem:[%s0 + $0x18] sm:$0xff]
  %v18 = vld [vmem:[%s0 + $0x20] sm:$0xff]
  %v19 = vld [vmem:[%s0 + $0x28] sm:$0xff]
  %v20 = vld [vmem:[%s0 + $0x30] sm:$0xff]
  %v21 = vld [vmem:[%s0 + $0x38] sm:$0xff]
  %v22 = vld [vmem:[%s0 + $0x40] sm:$0xff]
  %v23 = vld [vmem:[%s0 + $0x48] sm:$0xff]
  %v24 = vld [vmem:[%s0 + $0x50] sm:$0xff]
  %v25 = vld [vmem:[%s0 + $0x58] sm:$0xff]
  %v26 = vld [vmem:[%s0 + $0x60] sm:$0xff]
  %v27 = vld [vmem:[%s0 + $0x68] sm:$0xff]
  %v28 = vld [vmem:[%s0 + $0x70] sm:$0xff]
  %v29 = vld [vmem:[%s0 + $0x78] sm:$0xff]
  %v30 = vld [vmem:[%s1] sm:$0xf]
  %v31 = vld [vmem:[%s1 + $0x4] sm:$0xf]
  %v32 = vld [vmem:[%s1 + $0x8] sm:$0xf]
  %v33 = vld [vmem:[%s1 + $0xc] sm:$0xf]
  %v34 = vld [vmem:[%s1 + $0x10] sm:$0xf]
  %v35 = vld [vmem:[%s1 + $0x14] sm:$0xf]
  %v36 = vld [vmem:[%s1 + $0x18] sm:$0xf]
  %v37 = vld [vmem:[%s1 + $0x1c] sm:$0xf]
  %v38 = vld [vmem:[%s1 + $0x20] sm:$0xf]
  %v39 = vld [vmem:[%s1 + $0x24] sm:$0xf]
  %v40 = vld [vmem:[%s1 + $0x28] sm:$0xf]
  %v41 = vld [vmem:[%s1 + $0x2c] sm:$0xf]
  %v42 = vld [vmem:[%s1 + $0x30] sm:$0xf]
  %v43 = vld [vmem:[%s1 + $0x34] sm:$0xf]
  %v44 = vld [vmem:[%s1 + $0x38] sm:$0xf]
  %v45 = vld [vmem:[%s1 + $0x3c] sm:$0xf]
  %v46 = vld [vmem:[%s1 + $0x40] sm:$0xf]
  %v47 = vld [vmem:[%s1 + $0x44] sm:$0xf]
  %v48 = vld [vmem:[%s1 + $0x48] sm:$0xf]
  %v49 = vld [vmem:[%s1 + $0x4c] sm:$0xf]
  %v50 = vld [vmem:[%s1 + $0x50] sm:$0xf]
  %v51 = vld [vmem:[%s1 + $0x54] sm:$0xf]
  %v52 = vld [vmem:[%s1 + $0x58] sm:$0xf]
  %v53 = vld [vmem:[%s1 + $0x5c] sm:$0xf]
  %v54 = vld [vmem:[%s1 + $0x60] sm:$0xf]
  %v55 = vld [vmem:[%s1 + $0x64] sm:$0xf]
  %v56 = vld [vmem:[%s1 + $0x68] sm:$0xf]
  %v57 = vld [vmem:[%s1 + $0x6c] sm:$0xf]
  %v58 = vld [vmem:[%s1 + $0x70] sm:$0xf]
  %v59 = vld [vmem:[%s1 + $0x74] sm:$0xf]
  %v60 = vld [vmem:[%s1 + $0x78] sm:$0xf]
  %v61 = vld [vmem:[%s1 + $0x7c] sm:$0xf]
  %v62 = vld [vmem:[%s1 + $0x80] sm:$0xf]
  %v63 = vld [vmem:[%s1 + $0x84] sm:$0xf]
  %v64 = vld [vmem:[%s1 + $0x88] sm:$0xf]
  %v65 = vld [vmem:[%s1 + $0x8c] sm:$0xf]
  %v66 = vld [vmem:[%s1 + $0x90] sm:$0xf]
  %v67 = vld [vmem:[%s1 + $0x94] sm:$0xf]
  %v68 = vld [vmem:[%s1 + $0x98] sm:$0xf]
  %v69 = vld [vmem:[%s1 + $0x9c] sm:$0xf]
  %v70 = vld [vmem:[%s1 + $0xa0] sm:$0xf]
  %v71 = vld [vmem:[%s1 + $0xa4] sm:$0xf]
  %v72 = vld [vmem:[%s1 + $0xa8] sm:$0xf]
  %v73 = vld [vmem:[%s1 + $0xac] sm:$0xf]
  %v74 = vld [vmem:[%s1 + $0xb0] sm:$0xf]
  %v75 = vld [vmem:[%s1 + $0xb4] sm:$0xf]
  %v76 = vld [vmem:[%s1 + $0xb8] sm:$0xf]
  %v77 = vld [vmem:[%s1 + $0xbc] sm:$0xf]
  %v78 = vld [vmem:[%s1 + $0xc0] sm:$0xf]
  %v79 = vld [vmem:[%s1 + $0xc4] sm:$0xf]
  %v80 = vld [vmem:[%s1 + $0xc8] sm:$0xf]
  %v81 = vld [vmem:[%s1 + $0xcc] sm:$0xf]
  %v82 = vld [vmem:[%s1 + $0xd0] sm:$0xf]
  %v83 = vld [vmem:[%s1 + $0xd4] sm:$0xf]
  %v84 = vld [vmem:[%s1 + $0xd8] sm:$0xf]
  %v85 = vld [vmem:[%s1 + $0xdc] sm:$0xf]
  %v86 = vld [vmem:[%s1 + $0xe0] sm:$0xf]
  %v87 = vld [vmem:[%s1 + $0xe4] sm:$0xf]
  %v88 = vld [vmem:[%s1 + $0xe8] sm:$0xf]
  %v89 = vld [vmem:[%s1 + $0xec] sm:$0xf]
  %v90 = vld [vmem:[%s1 + $0xf0] sm:$0xf]
  %v91 = vld [vmem:[%s1 + $0xf4] sm:$0xf]
  %v92 = vld [vmem:[%s1 + $0xf8] sm:$0xf]
  %v93 = vld [vmem:[%s1 + $0xfc] sm:$0xf]
  %v94 = vld [vmem:[%s1 + $0x100] sm:$0xf]
  %v95 = vld [vmem:[%s1 + $0x104] sm:$0xf]
  %v96 = vld [vmem:[%s1 + $0x108] sm:$0xf]
  %v97 = vld [vmem:[%s1 + $0x10c] sm:$0xf]
  %v98 = vld [vmem:[%s1 + $0x110] sm:$0xf]
  %v99 = vld [vmem:[%s1 + $0x114] sm:$0xf]
  %v100 = vld [vmem:[%s1 + $0x118] sm:$0xf]
  %v101 = vld [vmem:[%s1 + $0x11c] sm:$0xf]
  %v102 = vld [vmem:[%s1 + $0x120] sm:$0xf]
  %v103 = vld [vmem:[%s1 + $0x124] sm:$0xf]
  %v104 = vld [vmem:[%s1 + $0x128] sm:$0xf]
  %v105 = vld [vmem:[%s1 + $0x12c] sm:$0xf]
  %v106 = vld [vmem:[%s1 + $0x130] sm:$0xf]
  %v107 = vld [vmem:[%s1 + $0x134] sm:$0xf]
  %v108 = vld [vmem:[%s1 + $0x138] sm:$0xf]
  %v109 = vld [vmem:[%s1 + $0x13c] sm:$0xf]
  %v110 = vld [vmem:[%s1 + $0x140] sm:$0xf]
  %v111 = vld [vmem:[%s1 + $0x144] sm:$0xf]
  %v112 = vld [vmem:[%s1 + $0x148] sm:$0xf]
  %v113 = vld [vmem:[%s1 + $0x14c] sm:$0xf]
  %v114 = vld [vmem:[%s1 + $0x150] sm:$0xf]
  %v115 = vld [vmem:[%s1 + $0x154] sm:$0xf]
  %v116 = vld [vmem:[%s1 + $0x158] sm:$0xf]
  %v117 = vld [vmem:[%s1 + $0x15c] sm:$0xf]
  %v118 = vld [vmem:[%s1 + $0x160] sm:$0xf]
  %v119 = vld [vmem:[%s1 + $0x164] sm:$0xf]
  %v120 = vld [vmem:[%s1 + $0x168] sm:$0xf]
  %v121 = vld [vmem:[%s1 + $0x16c] sm:$0xf]
  %v122 = vld [vmem:[%s1 + $0x170] sm:$0xf]
  %v123 = vld [vmem:[%s1 + $0x174] sm:$0xf]
  %v124 = vld [vmem:[%s1 + $0x178] sm:$0xf]
  %v125 = vld [vmem:[%s1 + $0x17c] sm:$0xf]
  %v126 = vld [vmem:[%s1 + $0x180] sm:$0xf]
  %v127 = vld [vmem:[%s1 + $0x184] sm:$0xf]
  %v128 = vld [vmem:[%s1 + $0x188] sm:$0xf]
  %v129 = vld [vmem:[%s1 + $0x18c] sm:$0xf]
  %v130 = vld [vmem:[%s1 + $0x190] sm:$0xf]
  %v131 = vld [vmem:[%s1 + $0x194] sm:$0xf]
  %v132 = vld [vmem:[%s1 + $0x198] sm:$0xf]
  %v133 = vld [vmem:[%s1 + $0x19c] sm:$0xf]
  %v134 = vld [vmem:[%s1 + $0x1a0] sm:$0xf]
  %v135 = vld [vmem:[%s1 + $0x1a4] sm:$0xf]
  %v136 = vld [vmem:[%s1 + $0x1a8] sm:$0xf]
  %v137 = vld [vmem:[%s1 + $0x1ac] sm:$0xf]
  %v138 = vld [vmem:[%s1 + $0x1b0] sm:$0xf]
  %v139 = vld [vmem:[%s1 + $0x1b4] sm:$0xf]
  %v140 = vld [vmem:[%s1 + $0x1b8] sm:$0xf]
  %v141 = vld [vmem:[%s1 + $0x1bc] sm:$0xf]
  %v142 = vld [vmem:[%s1 + $0x1c0] sm:$0xf]
  %v143 = vld [vmem:[%s1 + $0x1c4] sm:$0xf]
  %v144 = vld [vmem:[%s1 + $0x1c8] sm:$0xf]
  %v145 = vld [vmem:[%s1 + $0x1cc] sm:$0xf]
  %v146 = vld [vmem:[%s1 + $0x1d0] sm:$0xf]
  %v147 = vld [vmem:[%s1 + $0x1d4] sm:$0xf]
  %v148 = vld [vmem:[%s1 + $0x1d8] sm:$0xf]
  %v149 = vld [vmem:[%s1 + $0x1dc] sm:$0xf]
  %v150 = vld [vmem:[%s1 + $0x1e0] sm:$0xf]
  %v151 = vld [vmem:[%s1 + $0x1e4] sm:$0xf]
  %v152 = vld [vmem:[%s1 + $0x1e8] sm:$0xf]
  %v153 = vld [vmem:[%s1 + $0x1ec] sm:$0xf]
  %v154 = vld [vmem:[%s1 + $0x1f0] sm:$0xf]
  %v155 = vld [vmem:[%s1 + $0x1f4] sm:$0xf]
  %v156 = vld [vmem:[%s1 + $0x1f8] sm:$0xf]
  %v157 = vld [vmem:[%s1 + $0x1fc] sm:$0xf]
  %v158 = vld [vmem:[%s1 + $0x200] sm:$0xf]
  %v159 = vld [vmem:[%s1 + $0x204] sm:$0xf]
  %v160 = vld [vmem:[%s1 + $0x208] sm:$0xf]
  %v161 = vld [vmem:[%s1 + $0x20c] sm:$0xf]
  %v162 = vld [vmem:[%s1 + $0x210] sm:$0xf]
  %v163 = vld [vmem:[%s1 + $0x214] sm:$0xf]
  %v164 = vld [vmem:[%s1 + $0x218] sm:$0xf]
  %v165 = vld [vmem:[%s1 + $0x21c] sm:$0xf]
  %v166 = vld [vmem:[%s1 + $0x220] sm:$0xf]
  %v167 = vld [vmem:[%s1 + $0x224] sm:$0xf]
  %v168 = vld [vmem:[%s1 + $0x228] sm:$0xf]
  %v169 = vld [vmem:[%s1 + $0x22c] sm:$0xf]
  %v170 = vld [vmem:[%s1 + $0x230] sm:$0xf]
  %v171 = vld [vmem:[%s1 + $0x234] sm:$0xf]
  %v172 = vld [vmem:[%s1 + $0x238] sm:$0xf]
  %v173 = vld [vmem:[%s1 + $0x23c] sm:$0xf]
  %v174 = vld [vmem:[%s1 + $0x240] sm:$0xf]
  %v175 = vld [vmem:[%s1 + $0x244] sm:$0xf]
  %v176 = vld [vmem:[%s1 + $0x248] sm:$0xf]
  %v177 = vld [vmem:[%s1 + $0x24c] sm:$0xf]
  %v178 = vld [vmem:[%s1 + $0x250] sm:$0xf]
  %v179 = vld [vmem:[%s1 + $0x254] sm:$0xf]
  %v180 = vld [vmem:[%s1 + $0x258] sm:$0xf]
  %v181 = vld [vmem:[%s1 + $0x25c] sm:$0xf]
  %v182 = vld [vmem:[%s1 + $0x260] sm:$0xf]
  %v183 = vld [vmem:[%s1 + $0x264] sm:$0xf]
  %v184 = vld [vmem:[%s1 + $0x268] sm:$0xf]
  %v185 = vld [vmem:[%s1 + $0x26c] sm:$0xf]
  %v186 = vld [vmem:[%s1 + $0x270] sm:$0xf]
  %v187 = vld [vmem:[%s1 + $0x274] sm:$0xf]
  %v188 = vld [vmem:[%s1 + $0x278] sm:$0xf]
  %v189 = vld [vmem:[%s1 + $0x27c] sm:$0xf]
  %v190 = vld [vmem:[%s1 + $0x280] sm:$0xf]
  %v191 = vld [vmem:[%s1 + $0x284] sm:$0xf]
  %v192 = vld [vmem:[%s1 + $0x288] sm:$0xf]
  %v193 = vld [vmem:[%s1 + $0x28c] sm:$0xf]
  %v194 = vld [vmem:[%s1 + $0x290] sm:$0xf]
  %v195 = vld [vmem:[%s1 + $0x294] sm:$0xf]
  %v196 = vld [vmem:[%s1 + $0x298] sm:$0xf]
  %v197 = vld [vmem:[%s1 + $0x29c] sm:$0xf]
  %v198 = vld [vmem:[%s1 + $0x2a0] sm:$0xf]
  %v199 = vld [vmem:[%s1 + $0x2a4] sm:$0xf]
  %v200 = vld [vmem:[%s1 + $0x2a8] sm:$0xf]
  %v201 = vld [vmem:[%s1 + $0x2ac] sm:$0xf]
  %v202 = vld [vmem:[%s1 + $0x2b0] sm:$0xf]
  %v203 = vld [vmem:[%s1 + $0x2b4] sm:$0xf]
  %v204 = vld [vmem:[%s1 + $0x2b8] sm:$0xf]
  %v205 = vld [vmem:[%s1 + $0x2bc] sm:$0xf]
  %v206 = vld [vmem:[%s1 + $0x2c0] sm:$0xf]
  %v207 = vld [vmem:[%s1 + $0x2c4] sm:$0xf]
  %v208 = vld [vmem:[%s1 + $0x2c8] sm:$0xf]
  %v209 = vld [vmem:[%s1 + $0x2cc] sm:$0xf]
  %v210 = vld [vmem:[%s1 + $0x2d0] sm:$0xf]
  %v211 = vld [vmem:[%s1 + $0x2d4] sm:$0xf]
  %v212 = vld [vmem:[%s1 + $0x2d8] sm:$0xf]
  %v213 = vld [vmem:[%s1 + $0x2dc] sm:$0xf]
  %v214 = vld [vmem:[%s1 + $0x2e0] sm:$0xf]
  %v215 = vld [vmem:[%s1 + $0x2e4] sm:$0xf]
  %v216 = vld [vmem:[%s1 + $0x2e8] sm:$0xf]
  %v217 = vld [vmem:[%s1 + $0x2ec] sm:$0xf]
  %v218 = vld [vmem:[%s1 + $0x2f0] sm:$0xf]
  %v219 = vld [vmem:[%s1 + $0x2f4] sm:$0xf]
  %v220 = vld [vmem:[%s1 + $0x2f8] sm:$0xf]
  %v221 = vld [vmem:[%s1 + $0x2fc] sm:$0xf]
  %v222 = vld [vmem:[%s1 + $0x300] sm:$0xf]
  %v223 = vld [vmem:[%s1 + $0x304] sm:$0xf]
  %v224 = vld [vmem:[%s1 + $0x308] sm:$0xf]
  %v225 = vld [vmem:[%s1 + $0x30c] sm:$0xf]
  %v226 = vld [vmem:[%s1 + $0x310] sm:$0xf]
  %v227 = vld [vmem:[%s1 + $0x314] sm:$0xf]
  %v228 = vld [vmem:[%s1 + $0x318] sm:$0xf]
  %v229 = vld [vmem:[%s1 + $0x31c] sm:$0xf]
  %v230 = vld [vmem:[%s1 + $0x320] sm:$0xf]
  %v231 = vld [vmem:[%s1 + $0x324] sm:$0xf]
  %v232 = vld [vmem:[%s1 + $0x328] sm:$0xf]
  %v233 = vld [vmem:[%s1 + $0x32c] sm:$0xf]
  %v234 = vld [vmem:[%s1 + $0x330] sm:$0xf]
  %v235 = vld [vmem:[%s1 + $0x334] sm:$0xf]
  %v236 = vld [vmem:[%s1 + $0x338] sm:$0xf]
  %v237 = vld [vmem:[%s1 + $0x33c] sm:$0xf]
  %v238 = vld [vmem:[%s1 + $0x340] sm:$0xf]
  %v239 = vld [vmem:[%s1 + $0x344] sm:$0xf]
  %v240 = vld [vmem:[%s1 + $0x348] sm:$0xf]
  %v241 = vld [vmem:[%s1 + $0x34c] sm:$0xf]
  %v242 = vld [vmem:[%s1 + $0x350] sm:$0xf]
  %v243 = vld [vmem:[%s1 + $0x354] sm:$0xf]
  %v244 = vld [vmem:[%s1 + $0x358] sm:$0xf]
  %v245 = vld [vmem:[%s1 + $0x35c] sm:$0xf]
  %v246 = vld [vmem:[%s1 + $0x360] sm:$0xf]
  %v247 = vld [vmem:[%s1 + $0x364] sm:$0xf]
  %v248 = vld [vmem:[%s1 + $0x368] sm:$0xf]
  %v249 = vld [vmem:[%s1 + $0x36c] sm:$0xf]
  %v250 = vld [vmem:[%s1 + $0x370] sm:$0xf]
  %v251 = vld [vmem:[%s1 + $0x374] sm:$0xf]
  %v252 = vld [vmem:[%s1 + $0x378] sm:$0xf]
  %v253 = vld [vmem:[%s1 + $0x37c] sm:$0xf]
  %v254 = vld [vmem:[%s1 + $0x380] sm:$0xf]
  %v255 = vld [vmem:[%s1 + $0x384] sm:$0xf]
  %v256 = vld [vmem:[%s1 + $0x388] sm:$0xf]
  %v257 = vld [vmem:[%s1 + $0x38c] sm:$0xf]
  %v258 = vld [vmem:[%s1 + $0x390] sm:$0xf]
  %v259 = vld [vmem:[%s1 + $0x394] sm:$0xf]
  %v260 = vld [vmem:[%s1 + $0x398] sm:$0xf]
  %v261 = vld [vmem:[%s1 + $0x39c] sm:$0xf]
  %v262 = vld [vmem:[%s1 + $0x3a0] sm:$0xf]
  %v263 = vld [vmem:[%s1 + $0x3a4] sm:$0xf]
  %v264 = vld [vmem:[%s1 + $0x3a8] sm:$0xf]
  %v265 = vld [vmem:[%s1 + $0x3ac] sm:$0xf]
  %v266 = vld [vmem:[%s1 + $0x3b0] sm:$0xf]
  %v267 = vld [vmem:[%s1 + $0x3b4] sm:$0xf]
  %v268 = vld [vmem:[%s1 + $0x3b8] sm:$0xf]
  %v269 = vld [vmem:[%s1 + $0x3bc] sm:$0xf]
  %v270 = vld [vmem:[%s1 + $0x3c0] sm:$0xf]
  %v271 = vld [vmem:[%s1 + $0x3c4] sm:$0xf]
  %v272 = vld [vmem:[%s1 + $0x3c8] sm:$0xf]
  %v273 = vld [vmem:[%s1 + $0x3cc] sm:$0xf]
  %v274 = vld [vmem:[%s1 + $0x3d0] sm:$0xf]
  %v275 = vld [vmem:[%s1 + $0x3d4] sm:$0xf]
  %v276 = vld [vmem:[%s1 + $0x3d8] sm:$0xf]
  %v277 = vld [vmem:[%s1 + $0x3dc] sm:$0xf]
  %v278 = vld [vmem:[%s1 + $0x3e0] sm:$0xf]
  %v279 = vld [vmem:[%s1 + $0x3e4] sm:$0xf]
  %v280 = vld [vmem:[%s1 + $0x3e8] sm:$0xf]
  %v281 = vld [vmem:[%s1 + $0x3ec] sm:$0xf]
  %v282 = vld [vmem:[%s1 + $0x3f0] sm:$0xf]
  %v283 = vld [vmem:[%s1 + $0x3f4] sm:$0xf]
  %v284 = vld [vmem:[%s1 + $0x3f8] sm:$0xf]
  %v285 = vld [vmem:[%s1 + $0x3fc] sm:$0xf]
  %v286 = vld [vmem:[%s1 + $0x400] sm:$0xf]
  %v287 = vld [vmem:[%s1 + $0x404] sm:$0xf]
  %v288 = vld [vmem:[%s1 + $0x408] sm:$0xf]
  %v289 = vld [vmem:[%s1 + $0x40c] sm:$0xf]
  %v290 = vld [vmem:[%s1 + $0x410] sm:$0xf]
  %v291 = vld [vmem:[%s1 + $0x414] sm:$0xf]
  %v292 = vld [vmem:[%s1 + $0x418] sm:$0xf]
  %v293 = vld [vmem:[%s1 + $0x41c] sm:$0xf]
  %v294 = vld [vmem:[%s1 + $0x420] sm:$0xf]
  %v295 = vld [vmem:[%s1 + $0x424] sm:$0xf]
  %v296 = vld [vmem:[%s1 + $0x428] sm:$0xf]
  %v297 = vld [vmem:[%s1 + $0x42c] sm:$0xf]
  %v298 = vld [vmem:[%s1 + $0x430] sm:$0xf]
  %v299 = vld [vmem:[%s1 + $0x434] sm:$0xf]
  %v300 = vld [vmem:[%s1 + $0x438] sm:$0xf]
  %v301 = vld [vmem:[%s1 + $0x43c] sm:$0xf]
  %v302 = vld [vmem:[%s1 + $0x440] sm:$0xf]
  %v303 = vld [vmem:[%s1 + $0x444] sm:$0xf]
  %v304 = vld [vmem:[%s1 + $0x448] sm:$0xf]
  %v305 = vld [vmem:[%s1 + $0x44c] sm:$0xf]
  %v306 = vld [vmem:[%s1 + $0x450] sm:$0xf]
  %v307 = vld [vmem:[%s1 + $0x454] sm:$0xf]
  %v308 = vld [vmem:[%s1 + $0x458] sm:$0xf]
  %v309 = vld [vmem:[%s1 + $0x45c] sm:$0xf]
  %v310 = vld [vmem:[%s1 + $0x460] sm:$0xf]
  %v311 = vld [vmem:[%s1 + $0x464] sm:$0xf]
  %v312 = vld [vmem:[%s1 + $0x468] sm:$0xf]
  %v313 = vld [vmem:[%s1 + $0x46c] sm:$0xf]
  %v314 = vld [vmem:[%s1 + $0x470] sm:$0xf]
  %v315 = vld [vmem:[%s1 + $0x474] sm:$0xf]
  %v316 = vld [vmem:[%s1 + $0x478] sm:$0xf]
  %v317 = vld [vmem:[%s1 + $0x47c] sm:$0xf]
  %v318 = vld [vmem:[%s1 + $0x480] sm:$0xf]
  %v319 = vld [vmem:[%s1 + $0x484] sm:$0xf]
  %v320 = vld [vmem:[%s1 + $0x488] sm:$0xf]
  %v321 = vld [vmem:[%s1 + $0x48c] sm:$0xf]
  %v322 = vld [vmem:[%s1 + $0x490] sm:$0xf]
  %v323 = vld [vmem:[%s1 + $0x494] sm:$0xf]
  %v324 = vld [vmem:[%s1 + $0x498] sm:$0xf]
  %v325 = vld [vmem:[%s1 + $0x49c] sm:$0xf]
  %v326 = vld [vmem:[%s1 + $0x4a0] sm:$0xf]
  %v327 = vld [vmem:[%s1 + $0x4a4] sm:$0xf]
  %v328 = vld [vmem:[%s1 + $0x4a8] sm:$0xf]
  %v329 = vld [vmem:[%s1 + $0x4ac] sm:$0xf]
  %v330 = vld [vmem:[%s1 + $0x4b0] sm:$0xf]
  %v331 = vld [vmem:[%s1 + $0x4b4] sm:$0xf]
  %v332 = vld [vmem:[%s1 + $0x4b8] sm:$0xf]
  %v333 = vld [vmem:[%s1 + $0x4bc] sm:$0xf]
  %v334 = vld [vmem:[%s1 + $0x4c0] sm:$0xf]
  %v335 = vld [vmem:[%s1 + $0x4c4] sm:$0xf]
  %v336 = vld [vmem:[%s1 + $0x4c8] sm:$0xf]
  %v337 = vld [vmem:[%s1 + $0x4cc] sm:$0xf]
  %v338 = vld [vmem:[%s1 + $0x4d0] sm:$0xf]
  %v339 = vld [vmem:[%s1 + $0x4d4] sm:$0xf]
  %v340 = vld [vmem:[%s1 + $0x4d8] sm:$0xf]
  %v341 = vld [vmem:[%s1 + $0x4dc] sm:$0xf]
  %v342 = vld [vmem:[%s1 + $0x4e0] sm:$0xf]
  %v343 = vld [vmem:[%s1 + $0x4e4] sm:$0xf]
  %v344 = vld [vmem:[%s1 + $0x4e8] sm:$0xf]
  %v345 = vld [vmem:[%s1 + $0x4ec] sm:$0xf]
  %v346 = vld [vmem:[%s1 + $0x4f0] sm:$0xf]
  %v347 = vld [vmem:[%s1 + $0x4f4] sm:$0xf]
  %v348 = vld [vmem:[%s1 + $0x4f8] sm:$0xf]
  %v349 = vld [vmem:[%s1 + $0x4fc] sm:$0xf]
  %v350 = vld [vmem:[%s1 + $0x500] sm:$0xf]
  %v351 = vld [vmem:[%s1 + $0x504] sm:$0xf]
  %v352 = vld [vmem:[%s1 + $0x508] sm:$0xf]
  %v353 = vld [vmem:[%s1 + $0x50c] sm:$0xf]
  %v354 = vld [vmem:[%s1 + $0x510] sm:$0xf]
  %v355 = vld [vmem:[%s1 + $0x514] sm:$0xf]
  %v356 = vld [vmem:[%s1 + $0x518] sm:$0xf]
  %v357 = vld [vmem:[%s1 + $0x51c] sm:$0xf]
  %v358 = vld [vmem:[%s1 + $0x520] sm:$0xf]
  %v359 = vld [vmem:[%s1 + $0x524] sm:$0xf]
  %v360 = vld [vmem:[%s1 + $0x528] sm:$0xf]
  %v361 = vld [vmem:[%s1 + $0x52c] sm:$0xf]
  %v362 = vld [vmem:[%s1 + $0x530] sm:$0xf]
  %v363 = vld [vmem:[%s1 + $0x534] sm:$0xf]
  %v364 = vld [vmem:[%s1 + $0x538] sm:$0xf]
  %v365 = vld [vmem:[%s1 + $0x53c] sm:$0xf]
  %v366 = vld [vmem:[%s1 + $0x540] sm:$0xf]
  %v367 = vld [vmem:[%s1 + $0x544] sm:$0xf]
  %v368 = vld [vmem:[%s1 + $0x548] sm:$0xf]
  %v369 = vld [vmem:[%s1 + $0x54c] sm:$0xf]
  %v370 = vld [vmem:[%s1 + $0x550] sm:$0xf]
  %v371 = vld [vmem:[%s1 + $0x554] sm:$0xf]
  %v372 = vld [vmem:[%s1 + $0x558] sm:$0xf]
  %v373 = vld [vmem:[%s1 + $0x55c] sm:$0xf]
  %v374 = vld [vmem:[%s1 + $0x560] sm:$0xf]
  %v375 = vld [vmem:[%s1 + $0x564] sm:$0xf]
  %v376 = vld [vmem:[%s1 + $0x568] sm:$0xf]
  %v377 = vld [vmem:[%s1 + $0x56c] sm:$0xf]
  %v378 = vld [vmem:[%s1 + $0x570] sm:$0xf]
  %v379 = vld [vmem:[%s1 + $0x574] sm:$0xf]
  %v380 = vld [vmem:[%s1 + $0x578] sm:$0xf]
  %v381 = vld [vmem:[%s1 + $0x57c] sm:$0xf]
  %v382 = vld [vmem:[%s1 + $0x580] sm:$0xf]
  %v383 = vld [vmem:[%s1 + $0x584] sm:$0xf]
  %v384 = vld [vmem:[%s1 + $0x588] sm:$0xf]
  %v385 = vld [vmem:[%s1 + $0x58c] sm:$0xf]
  %v386 = vld [vmem:[%s1 + $0x590] sm:$0xf]
  %v387 = vld [vmem:[%s1 + $0x594] sm:$0xf]
  %v388 = vld [vmem:[%s1 + $0x598] sm:$0xf]
  %v389 = vld [vmem:[%s1 + $0x59c] sm:$0xf]
  %v390 = vld [vmem:[%s1 + $0x5a0] sm:$0xf]
  %v391 = vld [vmem:[%s1 + $0x5a4] sm:$0xf]
  %v392 = vld [vmem:[%s1 + $0x5a8] sm:$0xf]
  %v393 = vld [vmem:[%s1 + $0x5ac] sm:$0xf]
  %v394 = vld [vmem:[%s1 + $0x5b0] sm:$0xf]
  %v395 = vld [vmem:[%s1 + $0x5b4] sm:$0xf]
  %v396 = vld [vmem:[%s1 + $0x5b8] sm:$0xf]
  %v397 = vld [vmem:[%s1 + $0x5bc] sm:$0xf]
  %v398 = vld [vmem:[%s1 + $0x5c0] sm:$0xf]
  %v399 = vld [vmem:[%s1 + $0x5c4] sm:$0xf]
  %v400 = vld [vmem:[%s1 + $0x5c8] sm:$0xf]
  %v401 = vld [vmem:[%s1 + $0x5cc] sm:$0xf]
  %v402 = vld [vmem:[%s1 + $0x5d0] sm:$0xf]
  %v403 = vld [vmem:[%s1 + $0x5d4] sm:$0xf]
  %v404 = vld [vmem:[%s1 + $0x5d8] sm:$0xf]
  %v405 = vld [vmem:[%s1 + $0x5dc] sm:$0xf]
  %v406 = vld [vmem:[%s1 + $0x5e0] sm:$0xf]
  %v407 = vld [vmem:[%s1 + $0x5e4] sm:$0xf]
  %v408 = vld [vmem:[%s1 + $0x5e8] sm:$0xf]
  %v409 = vld [vmem:[%s1 + $0x5ec] sm:$0xf]
  %v410 = vld [vmem:[%s1 + $0x5f0] sm:$0xf]
  %v411 = vld [vmem:[%s1 + $0x5f4] sm:$0xf]
  %v412 = vld [vmem:[%s1 + $0x5f8] sm:$0xf]
  %v413 = vld [vmem:[%s1 + $0x5fc] sm:$0xf]
  %v414 = vld [vmem:[%s1 + $0x600] sm:$0xf]
  %v415 = vld [vmem:[%s1 + $0x604] sm:$0xf]
  %v416 = vld [vmem:[%s1 + $0x608] sm:$0xf]
  %v417 = vld [vmem:[%s1 + $0x60c] sm:$0xf]
  %v418 = vld [vmem:[%s1 + $0x610] sm:$0xf]
  %v419 = vld [vmem:[%s1 + $0x614] sm:$0xf]
  %v420 = vld [vmem:[%s1 + $0x618] sm:$0xf]
  %v421 = vld [vmem:[%s1 + $0x61c] sm:$0xf]
  %v422 = vld [vmem:[%s1 + $0x620] sm:$0xf]
  %v423 = vld [vmem:[%s1 + $0x624] sm:$0xf]
  %v424 = vld [vmem:[%s1 + $0x628] sm:$0xf]
  %v425 = vld [vmem:[%s1 + $0x62c] sm:$0xf]
  %v426 = vld [vmem:[%s1 + $0x630] sm:$0xf]
  %v427 = vld [vmem:[%s1 + $0x634] sm:$0xf]
  %v428 = vld [vmem:[%s1 + $0x638] sm:$0xf]
  %v429 = vld [vmem:[%s1 + $0x63c] sm:$0xf]
  %v430 = vld [vmem:[%s1 + $0x640] sm:$0xf]
  %v431 = vld [vmem:[%s1 + $0x644] sm:$0xf]
  %v432 = vld [vmem:[%s1 + $0x648] sm:$0xf]
  %v433 = vld [vmem:[%s1 + $0x64c] sm:$0xf]
  %v434 = vld [vmem:[%s1 + $0x650] sm:$0xf]
  %v435 = vld [vmem:[%s1 + $0x654] sm:$0xf]
  %v436 = vld [vmem:[%s1 + $0x658] sm:$0xf]
  %v437 = vld [vmem:[%s1 + $0x65c] sm:$0xf]
  %v438 = vld [vmem:[%s1 + $0x660] sm:$0xf]
  %v439 = vld [vmem:[%s1 + $0x664] sm:$0xf]
  %v440 = vld [vmem:[%s1 + $0x668] sm:$0xf]
  %v441 = vld [vmem:[%s1 + $0x66c] sm:$0xf]
  %v442 = vld [vmem:[%s1 + $0x670] sm:$0xf]
  %v443 = vld [vmem:[%s1 + $0x674] sm:$0xf]
  %v444 = vld [vmem:[%s1 + $0x678] sm:$0xf]
  %v445 = vld [vmem:[%s1 + $0x67c] sm:$0xf]
  %v446 = vld [vmem:[%s1 + $0x680] sm:$0xf]
  %v447 = vld [vmem:[%s1 + $0x684] sm:$0xf]
  %v448 = vld [vmem:[%s1 + $0x688] sm:$0xf]
  %v449 = vld [vmem:[%s1 + $0x68c] sm:$0xf]
  %v450 = vld [vmem:[%s1 + $0x690] sm:$0xf]
  %v451 = vld [vmem:[%s1 + $0x694] sm:$0xf]
  %v452 = vld [vmem:[%s1 + $0x698] sm:$0xf]
  %v453 = vld [vmem:[%s1 + $0x69c] sm:$0xf]
  %v454 = vld [vmem:[%s1 + $0x6a0] sm:$0xf]
  %v455 = vld [vmem:[%s1 + $0x6a4] sm:$0xf]
  %v456 = vld [vmem:[%s1 + $0x6a8] sm:$0xf]
  %v457 = vld [vmem:[%s1 + $0x6ac] sm:$0xf]
  %v458 = vld [vmem:[%s1 + $0x6b0] sm:$0xf]
  %v459 = vld [vmem:[%s1 + $0x6b4] sm:$0xf]
  %v460 = vld [vmem:[%s1 + $0x6b8] sm:$0xf]
  %v461 = vld [vmem:[%s1 + $0x6bc] sm:$0xf]
  %v462 = vld [vmem:[%s1 + $0x6c0] sm:$0xf]
  %v463 = vld [vmem:[%s1 + $0x6c4] sm:$0xf]
  %v464 = vld [vmem:[%s1 + $0x6c8] sm:$0xf]
  %v465 = vld [vmem:[%s1 + $0x6cc] sm:$0xf]
  %v466 = vld [vmem:[%s1 + $0x6d0] sm:$0xf]
  %v467 = vld [vmem:[%s1 + $0x6d4] sm:$0xf]
  %v468 = vld [vmem:[%s1 + $0x6d8] sm:$0xf]
  %v469 = vld [vmem:[%s1 + $0x6dc] sm:$0xf]
  %v470 = vld [vmem:[%s1 + $0x6e0] sm:$0xf]
  %v471 = vld [vmem:[%s1 + $0x6e4] sm:$0xf]
  %v472 = vld [vmem:[%s1 + $0x6e8] sm:$0xf]
  %v473 = vld [vmem:[%s1 + $0x6ec] sm:$0xf]
  %v474 = vld [vmem:[%s1 + $0x6f0] sm:$0xf]
  %v475 = vld [vmem:[%s1 + $0x6f4] sm:$0xf]
  %v476 = vld [vmem:[%s1 + $0x6f8] sm:$0xf]
  %v477 = vld [vmem:[%s1 + $0x6fc] sm:$0xf]
  %v478 = vld [vmem:[%s1 + $0x700] sm:$0xf]
  %v479 = vld [vmem:[%s1 + $0x704] sm:$0xf]
  %v480 = vld [vmem:[%s1 + $0x708] sm:$0xf]
  %v481 = vld [vmem:[%s1 + $0x70c] sm:$0xf]
  %v482 = vld [vmem:[%s1 + $0x710] sm:$0xf]
  %v483 = vld [vmem:[%s1 + $0x714] sm:$0xf]
  %v484 = vld [vmem:[%s1 + $0x718] sm:$0xf]
  %v485 = vld [vmem:[%s1 + $0x71c] sm:$0xf]
  %v486 = vld [vmem:[%s1 + $0x720] sm:$0xf]
  %v487 = vld [vmem:[%s1 + $0x724] sm:$0xf]
  %v488 = vld [vmem:[%s1 + $0x728] sm:$0xf]
  %v489 = vld [vmem:[%s1 + $0x72c] sm:$0xf]
  %v490 = vld [vmem:[%s1 + $0x730] sm:$0xf]
  %v491 = vld [vmem:[%s1 + $0x734] sm:$0xf]
  %v492 = vld [vmem:[%s1 + $0x738] sm:$0xf]
  %v493 = vld [vmem:[%s1 + $0x73c] sm:$0xf]
  %v494 = vld [vmem:[%s1 + $0x740] sm:$0xf]
  %v495 = vld [vmem:[%s1 + $0x744] sm:$0xf]
  %v496 = vld [vmem:[%s1 + $0x748] sm:$0xf]
  %v497 = vld [vmem:[%s1 + $0x74c] sm:$0xf]
  %v498 = vld [vmem:[%s1 + $0x750] sm:$0xf]
  %v499 = vld [vmem:[%s1 + $0x754] sm:$0xf]
  %v500 = vld [vmem:[%s1 + $0x758] sm:$0xf]
  %v501 = vld [vmem:[%s1 + $0x75c] sm:$0xf]
  %v502 = vld [vmem:[%s1 + $0x760] sm:$0xf]
  %v503 = vld [vmem:[%s1 + $0x764] sm:$0xf]
  %v504 = vld [vmem:[%s1 + $0x768] sm:$0xf]
  %v505 = vld [vmem:[%s1 + $0x76c] sm:$0xf]
  %v506 = vld [vmem:[%s1 + $0x770] sm:$0xf]
  %v507 = vld [vmem:[%s1 + $0x774] sm:$0xf]
  %v508 = vld [vmem:[%s1 + $0x778] sm:$0xf]
  %v509 = vld [vmem:[%s1 + $0x77c] sm:$0xf]
  %v510 = vld [vmem:[%s1 + $0x780] sm:$0xf]
  %v511 = vld [vmem:[%s1 + $0x784] sm:$0xf]
  %v512 = vld [vmem:[%s1 + $0x788] sm:$0xf]
  %v513 = vld [vmem:[%s1 + $0x78c] sm:$0xf]
  %v514 = vld [vmem:[%s1 + $0x790] sm:$0xf]
  %v515 = vld [vmem:[%s1 + $0x794] sm:$0xf]
  %v516 = vld [vmem:[%s1 + $0x798] sm:$0xf]
  %v517 = vld [vmem:[%s1 + $0x79c] sm:$0xf]
  %v518 = vld [vmem:[%s1 + $0x7a0] sm:$0xf]
  %v519 = vld [vmem:[%s1 + $0x7a4] sm:$0xf]
  %v520 = vld [vmem:[%s1 + $0x7a8] sm:$0xf]
  %v521 = vld [vmem:[%s1 + $0x7ac] sm:$0xf]
  %v522 = vld [vmem:[%s1 + $0x7b0] sm:$0xf]
  %v523 = vld [vmem:[%s1 + $0x7b4] sm:$0xf]
  %v524 = vld [vmem:[%s1 + $0x7b8] sm:$0xf]
  %v525 = vld [vmem:[%s1 + $0x7bc] sm:$0xf]
  %v526 = vld [vmem:[%s1 + $0x7c0] sm:$0xf]
  %v527 = vld [vmem:[%s1 + $0x7c4] sm:$0xf]
  %v528 = vld [vmem:[%s1 + $0x7c8] sm:$0xf]
  %v529 = vld [vmem:[%s1 + $0x7cc] sm:$0xf]
  %v530 = vld [vmem:[%s1 + $0x7d0] sm:$0xf]
  %v531 = vld [vmem:[%s1 + $0x7d4] sm:$0xf]
  %v532 = vld [vmem:[%s1 + $0x7d8] sm:$0xf]
  %v533 = vld [vmem:[%s1 + $0x7dc] sm:$0xf]
  %v534 = vld [vmem:[%s1 + $0x7e0] sm:$0xf]
  %v535 = vld [vmem:[%s1 + $0x7e4] sm:$0xf]
  %v536 = vld [vmem:[%s1 + $0x7e8] sm:$0xf]
  %v537 = vld [vmem:[%s1 + $0x7ec] sm:$0xf]
  %v538 = vld [vmem:[%s1 + $0x7f0] sm:$0xf]
  %v539 = vld [vmem:[%s1 + $0x7f4] sm:$0xf]
  %v540 = vld [vmem:[%s1 + $0x7f8] sm:$0xf]
  %v541 = vld [vmem:[%s1 + $0x7fc] sm:$0xf]
  %v542 = vld [vmem:[%s2] sm:$0x1]
  %v544 = vperm.slane %v542, 0
  %v562 = vunpack.c.l.b16 %v14
  %v563 = vunpack.c.h.b16 %v14
  %v564 = vunpack.c.l.b16 %v15
  %v565 = vunpack.c.h.b16 %v15
  %v566 = vunpack.c.l.b16 %v16
  %v567 = vunpack.c.h.b16 %v16
  %v568 = vunpack.c.l.b16 %v17
  %v569 = vunpack.c.h.b16 %v17
  %v570 = vunpack.c.l.b16 %v18
  %v571 = vunpack.c.h.b16 %v18
  %v572 = vunpack.c.l.b16 %v19
  %v573 = vunpack.c.h.b16 %v19
  %v574 = vunpack.c.l.b16 %v20
  %v575 = vunpack.c.h.b16 %v20
  %v576 = vunpack.c.l.b16 %v21
  %v577 = vunpack.c.h.b16 %v21
  %v578 = vunpack.c.l.b16 %v22
  %v579 = vunpack.c.h.b16 %v22
  %v580 = vunpack.c.l.b16 %v23
  %v581 = vunpack.c.h.b16 %v23
  %v582 = vunpack.c.l.b16 %v24
  %v583 = vunpack.c.h.b16 %v24
  %v584 = vunpack.c.l.b16 %v25
  %v585 = vunpack.c.h.b16 %v25
  %v586 = vunpack.c.l.b16 %v26
  %v587 = vunpack.c.h.b16 %v26
  %v588 = vunpack.c.l.b16 %v27
  %v589 = vunpack.c.h.b16 %v27
  %v590 = vunpack.c.l.b16 %v28
  %v591 = vunpack.c.h.b16 %v28
  %v592 = vunpack.c.l.b16 %v29
  %v593 = vunpack.c.h.b16 %v29
  %v594 = vpack.c.b16 %v562, %v562
  %v595 = vpack.c.b16 %v563, %v563
  %v596 = vpack.c.b16 %v564, %v564
  %v597 = vpack.c.b16 %v565, %v565
  %v598 = vpack.c.b16 %v566, %v566
  %v599 = vpack.c.b16 %v567, %v567
  %v600 = vpack.c.b16 %v568, %v568
  %v601 = vpack.c.b16 %v569, %v569
  %v602 = vpack.c.b16 %v570, %v570
  %v603 = vpack.c.b16 %v571, %v571
  %v604 = vpack.c.b16 %v572, %v572
  %v605 = vpack.c.b16 %v573, %v573
  %v606 = vpack.c.b16 %v574, %v574
  %v607 = vpack.c.b16 %v575, %v575
  %v608 = vpack.c.b16 %v576, %v576
  %v609 = vpack.c.b16 %v577, %v577
  %v610 = vpack.c.b16 %v578, %v578
  %v611 = vpack.c.b16 %v579, %v579
  %v612 = vpack.c.b16 %v580, %v580
  %v613 = vpack.c.b16 %v581, %v581
  %v614 = vpack.c.b16 %v582, %v582
  %v615 = vpack.c.b16 %v583, %v583
  %v616 = vpack.c.b16 %v584, %v584
  %v617 = vpack.c.b16 %v585, %v585
  %v618 = vpack.c.b16 %v586, %v586
  %v619 = vpack.c.b16 %v587, %v587
  %v620 = vpack.c.b16 %v588, %v588
  %v621 = vpack.c.b16 %v589, %v589
  %v622 = vpack.c.b16 %v590, %v590
  %v623 = vpack.c.b16 %v591, %v591
  %v624 = vpack.c.b16 %v592, %v592
  %v625 = vpack.c.b16 %v593, %v593
  %v1170 = vunpack.c.l.b16 %v30
  %v1171 = vunpack.c.l.b16 %v31
  %v1172 = vunpack.c.l.b16 %v32
  %v1173 = vunpack.c.l.b16 %v33
  %v1174 = vunpack.c.l.b16 %v34
  %v1175 = vunpack.c.l.b16 %v35
  %v1176 = vunpack.c.l.b16 %v36
  %v1177 = vunpack.c.l.b16 %v37
  %v1178 = vunpack.c.l.b16 %v38
  %v1179 = vunpack.c.l.b16 %v39
  %v1180 = vunpack.c.l.b16 %v40
  %v1181 = vunpack.c.l.b16 %v41
  %v1182 = vunpack.c.l.b16 %v42
  %v1183 = vunpack.c.l.b16 %v43
  %v1184 = vunpack.c.l.b16 %v44
  %v1185 = vunpack.c.l.b16 %v45
  %v1186 = vunpack.c.l.b16 %v46
  %v1187 = vunpack.c.l.b16 %v47
  %v1188 = vunpack.c.l.b16 %v48
  %v1189 = vunpack.c.l.b16 %v49
  %v1190 = vunpack.c.l.b16 %v50
  %v1191 = vunpack.c.l.b16 %v51
  %v1192 = vunpack.c.l.b16 %v52
  %v1193 = vunpack.c.l.b16 %v53
  %v1194 = vunpack.c.l.b16 %v54
  %v1195 = vunpack.c.l.b16 %v55
  %v1196 = vunpack.c.l.b16 %v56
  %v1197 = vunpack.c.l.b16 %v57
  %v1198 = vunpack.c.l.b16 %v58
  %v1199 = vunpack.c.l.b16 %v59
  %v1200 = vunpack.c.l.b16 %v60
  %v1201 = vunpack.c.l.b16 %v61
  %v1202 = vunpack.c.l.b16 %v62
  %v1203 = vunpack.c.l.b16 %v63
  %v1204 = vunpack.c.l.b16 %v64
  %v1205 = vunpack.c.l.b16 %v65
  %v1206 = vunpack.c.l.b16 %v66
  %v1207 = vunpack.c.l.b16 %v67
  %v1208 = vunpack.c.l.b16 %v68
  %v1209 = vunpack.c.l.b16 %v69
  %v1210 = vunpack.c.l.b16 %v70
  %v1211 = vunpack.c.l.b16 %v71
  %v1212 = vunpack.c.l.b16 %v72
  %v1213 = vunpack.c.l.b16 %v73
  %v1214 = vunpack.c.l.b16 %v74
  %v1215 = vunpack.c.l.b16 %v75
  %v1216 = vunpack.c.l.b16 %v76
  %v1217 = vunpack.c.l.b16 %v77
  %v1218 = vunpack.c.l.b16 %v78
  %v1219 = vunpack.c.l.b16 %v79
  %v1220 = vunpack.c.l.b16 %v80
  %v1221 = vunpack.c.l.b16 %v81
  %v1222 = vunpack.c.l.b16 %v82
  %v1223 = vunpack.c.l.b16 %v83
  %v1224 = vunpack.c.l.b16 %v84
  %v1225 = vunpack.c.l.b16 %v85
  %v1226 = vunpack.c.l.b16 %v86
  %v1227 = vunpack.c.l.b16 %v87
  %v1228 = vunpack.c.l.b16 %v88
  %v1229 = vunpack.c.l.b16 %v89
  %v1230 = vunpack.c.l.b16 %v90
  %v1231 = vunpack.c.l.b16 %v91
  %v1232 = vunpack.c.l.b16 %v92
  %v1233 = vunpack.c.l.b16 %v93
  %v1234 = vunpack.c.l.b16 %v94
  %v1235 = vunpack.c.l.b16 %v95
  %v1236 = vunpack.c.l.b16 %v96
  %v1237 = vunpack.c.l.b16 %v97
  %v1238 = vunpack.c.l.b16 %v98
  %v1239 = vunpack.c.l.b16 %v99
  %v1240 = vunpack.c.l.b16 %v100
  %v1241 = vunpack.c.l.b16 %v101
  %v1242 = vunpack.c.l.b16 %v102
  %v1243 = vunpack.c.l.b16 %v103
  %v1244 = vunpack.c.l.b16 %v104
  %v1245 = vunpack.c.l.b16 %v105
  %v1246 = vunpack.c.l.b16 %v106
  %v1247 = vunpack.c.l.b16 %v107
  %v1248 = vunpack.c.l.b16 %v108
  %v1249 = vunpack.c.l.b16 %v109
  %v1250 = vunpack.c.l.b16 %v110
  %v1251 = vunpack.c.l.b16 %v111
  %v1252 = vunpack.c.l.b16 %v112
  %v1253 = vunpack.c.l.b16 %v113
  %v1254 = vunpack.c.l.b16 %v114
  %v1255 = vunpack.c.l.b16 %v115
  %v1256 = vunpack.c.l.b16 %v116
  %v1257 = vunpack.c.l.b16 %v117
  %v1258 = vunpack.c.l.b16 %v118
  %v1259 = vunpack.c.l.b16 %v119
  %v1260 = vunpack.c.l.b16 %v120
  %v1261 = vunpack.c.l.b16 %v121
  %v1262 = vunpack.c.l.b16 %v122
  %v1263 = vunpack.c.l.b16 %v123
  %v1264 = vunpack.c.l.b16 %v124
  %v1265 = vunpack.c.l.b16 %v125
  %v1266 = vunpack.c.l.b16 %v126
  %v1267 = vunpack.c.l.b16 %v127
  %v1268 = vunpack.c.l.b16 %v128
  %v1269 = vunpack.c.l.b16 %v129
  %v1270 = vunpack.c.l.b16 %v130
  %v1271 = vunpack.c.l.b16 %v131
  %v1272 = vunpack.c.l.b16 %v132
  %v1273 = vunpack.c.l.b16 %v133
  %v1274 = vunpack.c.l.b16 %v134
  %v1275 = vunpack.c.l.b16 %v135
  %v1276 = vunpack.c.l.b16 %v136
  %v1277 = vunpack.c.l.b16 %v137
  %v1278 = vunpack.c.l.b16 %v138
  %v1279 = vunpack.c.l.b16 %v139
  %v1280 = vunpack.c.l.b16 %v140
  %v1281 = vunpack.c.l.b16 %v141
  %v1282 = vunpack.c.l.b16 %v142
  %v1283 = vunpack.c.l.b16 %v143
  %v1284 = vunpack.c.l.b16 %v144
  %v1285 = vunpack.c.l.b16 %v145
  %v1286 = vunpack.c.l.b16 %v146
  %v1287 = vunpack.c.l.b16 %v147
  %v1288 = vunpack.c.l.b16 %v148
  %v1289 = vunpack.c.l.b16 %v149
  %v1290 = vunpack.c.l.b16 %v150
  %v1291 = vunpack.c.l.b16 %v151
  %v1292 = vunpack.c.l.b16 %v152
  %v1293 = vunpack.c.l.b16 %v153
  %v1294 = vunpack.c.l.b16 %v154
  %v1295 = vunpack.c.l.b16 %v155
  %v1296 = vunpack.c.l.b16 %v156
  %v1297 = vunpack.c.l.b16 %v157
  %v1298 = vunpack.c.l.b16 %v158
  %v1299 = vunpack.c.l.b16 %v159
  %v1300 = vunpack.c.l.b16 %v160
  %v1301 = vunpack.c.l.b16 %v161
  %v1302 = vunpack.c.l.b16 %v162
  %v1303 = vunpack.c.l.b16 %v163
  %v1304 = vunpack.c.l.b16 %v164
  %v1305 = vunpack.c.l.b16 %v165
  %v1306 = vunpack.c.l.b16 %v166
  %v1307 = vunpack.c.l.b16 %v167
  %v1308 = vunpack.c.l.b16 %v168
  %v1309 = vunpack.c.l.b16 %v169
  %v1310 = vunpack.c.l.b16 %v170
  %v1311 = vunpack.c.l.b16 %v171
  %v1312 = vunpack.c.l.b16 %v172
  %v1313 = vunpack.c.l.b16 %v173
  %v1314 = vunpack.c.l.b16 %v174
  %v1315 = vunpack.c.l.b16 %v175
  %v1316 = vunpack.c.l.b16 %v176
  %v1317 = vunpack.c.l.b16 %v177
  %v1318 = vunpack.c.l.b16 %v178
  %v1319 = vunpack.c.l.b16 %v179
  %v1320 = vunpack.c.l.b16 %v180
  %v1321 = vunpack.c.l.b16 %v181
  %v1322 = vunpack.c.l.b16 %v182
  %v1323 = vunpack.c.l.b16 %v183
  %v1324 = vunpack.c.l.b16 %v184
  %v1325 = vunpack.c.l.b16 %v185
  %v1326 = vunpack.c.l.b16 %v186
  %v1327 = vunpack.c.l.b16 %v187
  %v1328 = vunpack.c.l.b16 %v188
  %v1329 = vunpack.c.l.b16 %v189
  %v1330 = vunpack.c.l.b16 %v190
  %v1331 = vunpack.c.l.b16 %v191
  %v1332 = vunpack.c.l.b16 %v192
  %v1333 = vunpack.c.l.b16 %v193
  %v1334 = vunpack.c.l.b16 %v194
  %v1335 = vunpack.c.l.b16 %v195
  %v1336 = vunpack.c.l.b16 %v196
  %v1337 = vunpack.c.l.b16 %v197
  %v1338 = vunpack.c.l.b16 %v198
  %v1339 = vunpack.c.l.b16 %v199
  %v1340 = vunpack.c.l.b16 %v200
  %v1341 = vunpack.c.l.b16 %v201
  %v1342 = vunpack.c.l.b16 %v202
  %v1343 = vunpack.c.l.b16 %v203
  %v1344 = vunpack.c.l.b16 %v204
  %v1345 = vunpack.c.l.b16 %v205
  %v1346 = vunpack.c.l.b16 %v206
  %v1347 = vunpack.c.l.b16 %v207
  %v1348 = vunpack.c.l.b16 %v208
  %v1349 = vunpack.c.l.b16 %v209
  %v1350 = vunpack.c.l.b16 %v210
  %v1351 = vunpack.c.l.b16 %v211
  %v1352 = vunpack.c.l.b16 %v212
  %v1353 = vunpack.c.l.b16 %v213
  %v1354 = vunpack.c.l.b16 %v214
  %v1355 = vunpack.c.l.b16 %v215
  %v1356 = vunpack.c.l.b16 %v216
  %v1357 = vunpack.c.l.b16 %v217
  %v1358 = vunpack.c.l.b16 %v218
  %v1359 = vunpack.c.l.b16 %v219
  %v1360 = vunpack.c.l.b16 %v220
  %v1361 = vunpack.c.l.b16 %v221
  %v1362 = vunpack.c.l.b16 %v222
  %v1363 = vunpack.c.l.b16 %v223
  %v1364 = vunpack.c.l.b16 %v224
  %v1365 = vunpack.c.l.b16 %v225
  %v1366 = vunpack.c.l.b16 %v226
  %v1367 = vunpack.c.l.b16 %v227
  %v1368 = vunpack.c.l.b16 %v228
  %v1369 = vunpack.c.l.b16 %v229
  %v1370 = vunpack.c.l.b16 %v230
  %v1371 = vunpack.c.l.b16 %v231
  %v1372 = vunpack.c.l.b16 %v232
  %v1373 = vunpack.c.l.b16 %v233
  %v1374 = vunpack.c.l.b16 %v234
  %v1375 = vunpack.c.l.b16 %v235
  %v1376 = vunpack.c.l.b16 %v236
  %v1377 = vunpack.c.l.b16 %v237
  %v1378 = vunpack.c.l.b16 %v238
  %v1379 = vunpack.c.l.b16 %v239
  %v1380 = vunpack.c.l.b16 %v240
  %v1381 = vunpack.c.l.b16 %v241
  %v1382 = vunpack.c.l.b16 %v242
  %v1383 = vunpack.c.l.b16 %v243
  %v1384 = vunpack.c.l.b16 %v244
  %v1385 = vunpack.c.l.b16 %v245
  %v1386 = vunpack.c.l.b16 %v246
  %v1387 = vunpack.c.l.b16 %v247
  %v1388 = vunpack.c.l.b16 %v248
  %v1389 = vunpack.c.l.b16 %v249
  %v1390 = vunpack.c.l.b16 %v250
  %v1391 = vunpack.c.l.b16 %v251
  %v1392 = vunpack.c.l.b16 %v252
  %v1393 = vunpack.c.l.b16 %v253
  %v1394 = vunpack.c.l.b16 %v254
  %v1395 = vunpack.c.l.b16 %v255
  %v1396 = vunpack.c.l.b16 %v256
  %v1397 = vunpack.c.l.b16 %v257
  %v1398 = vunpack.c.l.b16 %v258
  %v1399 = vunpack.c.l.b16 %v259
  %v1400 = vunpack.c.l.b16 %v260
  %v1401 = vunpack.c.l.b16 %v261
  %v1402 = vunpack.c.l.b16 %v262
  %v1403 = vunpack.c.l.b16 %v263
  %v1404 = vunpack.c.l.b16 %v264
  %v1405 = vunpack.c.l.b16 %v265
  %v1406 = vunpack.c.l.b16 %v266
  %v1407 = vunpack.c.l.b16 %v267
  %v1408 = vunpack.c.l.b16 %v268
  %v1409 = vunpack.c.l.b16 %v269
  %v1410 = vunpack.c.l.b16 %v270
  %v1411 = vunpack.c.l.b16 %v271
  %v1412 = vunpack.c.l.b16 %v272
  %v1413 = vunpack.c.l.b16 %v273
  %v1414 = vunpack.c.l.b16 %v274
  %v1415 = vunpack.c.l.b16 %v275
  %v1416 = vunpack.c.l.b16 %v276
  %v1417 = vunpack.c.l.b16 %v277
  %v1418 = vunpack.c.l.b16 %v278
  %v1419 = vunpack.c.l.b16 %v279
  %v1420 = vunpack.c.l.b16 %v280
  %v1421 = vunpack.c.l.b16 %v281
  %v1422 = vunpack.c.l.b16 %v282
  %v1423 = vunpack.c.l.b16 %v283
  %v1424 = vunpack.c.l.b16 %v284
  %v1425 = vunpack.c.l.b16 %v285
  %v1426 = vunpack.c.l.b16 %v286
  %v1427 = vunpack.c.l.b16 %v287
  %v1428 = vunpack.c.l.b16 %v288
  %v1429 = vunpack.c.l.b16 %v289
  %v1430 = vunpack.c.l.b16 %v290
  %v1431 = vunpack.c.l.b16 %v291
  %v1432 = vunpack.c.l.b16 %v292
  %v1433 = vunpack.c.l.b16 %v293
  %v1434 = vunpack.c.l.b16 %v294
  %v1435 = vunpack.c.l.b16 %v295
  %v1436 = vunpack.c.l.b16 %v296
  %v1437 = vunpack.c.l.b16 %v297
  %v1438 = vunpack.c.l.b16 %v298
  %v1439 = vunpack.c.l.b16 %v299
  %v1440 = vunpack.c.l.b16 %v300
  %v1441 = vunpack.c.l.b16 %v301
  %v1442 = vunpack.c.l.b16 %v302
  %v1443 = vunpack.c.l.b16 %v303
  %v1444 = vunpack.c.l.b16 %v304
  %v1445 = vunpack.c.l.b16 %v305
  %v1446 = vunpack.c.l.b16 %v306
  %v1447 = vunpack.c.l.b16 %v307
  %v1448 = vunpack.c.l.b16 %v308
  %v1449 = vunpack.c.l.b16 %v309
  %v1450 = vunpack.c.l.b16 %v310
  %v1451 = vunpack.c.l.b16 %v311
  %v1452 = vunpack.c.l.b16 %v312
  %v1453 = vunpack.c.l.b16 %v313
  %v1454 = vunpack.c.l.b16 %v314
  %v1455 = vunpack.c.l.b16 %v315
  %v1456 = vunpack.c.l.b16 %v316
  %v1457 = vunpack.c.l.b16 %v317
  %v1458 = vunpack.c.l.b16 %v318
  %v1459 = vunpack.c.l.b16 %v319
  %v1460 = vunpack.c.l.b16 %v320
  %v1461 = vunpack.c.l.b16 %v321
  %v1462 = vunpack.c.l.b16 %v322
  %v1463 = vunpack.c.l.b16 %v323
  %v1464 = vunpack.c.l.b16 %v324
  %v1465 = vunpack.c.l.b16 %v325
  %v1466 = vunpack.c.l.b16 %v326
  %v1467 = vunpack.c.l.b16 %v327
  %v1468 = vunpack.c.l.b16 %v328
  %v1469 = vunpack.c.l.b16 %v329
  %v1470 = vunpack.c.l.b16 %v330
  %v1471 = vunpack.c.l.b16 %v331
  %v1472 = vunpack.c.l.b16 %v332
  %v1473 = vunpack.c.l.b16 %v333
  %v1474 = vunpack.c.l.b16 %v334
  %v1475 = vunpack.c.l.b16 %v335
  %v1476 = vunpack.c.l.b16 %v336
  %v1477 = vunpack.c.l.b16 %v337
  %v1478 = vunpack.c.l.b16 %v338
  %v1479 = vunpack.c.l.b16 %v339
  %v1480 = vunpack.c.l.b16 %v340
  %v1481 = vunpack.c.l.b16 %v341
  %v1482 = vunpack.c.l.b16 %v342
  %v1483 = vunpack.c.l.b16 %v343
  %v1484 = vunpack.c.l.b16 %v344
  %v1485 = vunpack.c.l.b16 %v345
  %v1486 = vunpack.c.l.b16 %v346
  %v1487 = vunpack.c.l.b16 %v347
  %v1488 = vunpack.c.l.b16 %v348
  %v1489 = vunpack.c.l.b16 %v349
  %v1490 = vunpack.c.l.b16 %v350
  %v1491 = vunpack.c.l.b16 %v351
  %v1492 = vunpack.c.l.b16 %v352
  %v1493 = vunpack.c.l.b16 %v353
  %v1494 = vunpack.c.l.b16 %v354
  %v1495 = vunpack.c.l.b16 %v355
  %v1496 = vunpack.c.l.b16 %v356
  %v1497 = vunpack.c.l.b16 %v357
  %v1498 = vunpack.c.l.b16 %v358
  %v1499 = vunpack.c.l.b16 %v359
  %v1500 = vunpack.c.l.b16 %v360
  %v1501 = vunpack.c.l.b16 %v361
  %v1502 = vunpack.c.l.b16 %v362
  %v1503 = vunpack.c.l.b16 %v363
  %v1504 = vunpack.c.l.b16 %v364
  %v1505 = vunpack.c.l.b16 %v365
  %v1506 = vunpack.c.l.b16 %v366
  %v1507 = vunpack.c.l.b16 %v367
  %v1508 = vunpack.c.l.b16 %v368
  %v1509 = vunpack.c.l.b16 %v369
  %v1510 = vunpack.c.l.b16 %v370
  %v1511 = vunpack.c.l.b16 %v371
  %v1512 = vunpack.c.l.b16 %v372
  %v1513 = vunpack.c.l.b16 %v373
  %v1514 = vunpack.c.l.b16 %v374
  %v1515 = vunpack.c.l.b16 %v375
  %v1516 = vunpack.c.l.b16 %v376
  %v1517 = vunpack.c.l.b16 %v377
  %v1518 = vunpack.c.l.b16 %v378
  %v1519 = vunpack.c.l.b16 %v379
  %v1520 = vunpack.c.l.b16 %v380
  %v1521 = vunpack.c.l.b16 %v381
  %v1522 = vunpack.c.l.b16 %v382
  %v1523 = vunpack.c.l.b16 %v383
  %v1524 = vunpack.c.l.b16 %v384
  %v1525 = vunpack.c.l.b16 %v385
  %v1526 = vunpack.c.l.b16 %v386
  %v1527 = vunpack.c.l.b16 %v387
  %v1528 = vunpack.c.l.b16 %v388
  %v1529 = vunpack.c.l.b16 %v389
  %v1530 = vunpack.c.l.b16 %v390
  %v1531 = vunpack.c.l.b16 %v391
  %v1532 = vunpack.c.l.b16 %v392
  %v1533 = vunpack.c.l.b16 %v393
  %v1534 = vunpack.c.l.b16 %v394
  %v1535 = vunpack.c.l.b16 %v395
  %v1536 = vunpack.c.l.b16 %v396
  %v1537 = vunpack.c.l.b16 %v397
  %v1538 = vunpack.c.l.b16 %v398
  %v1539 = vunpack.c.l.b16 %v399
  %v1540 = vunpack.c.l.b16 %v400
  %v1541 = vunpack.c.l.b16 %v401
  %v1542 = vunpack.c.l.b16 %v402
  %v1543 = vunpack.c.l.b16 %v403
  %v1544 = vunpack.c.l.b16 %v404
  %v1545 = vunpack.c.l.b16 %v405
  %v1546 = vunpack.c.l.b16 %v406
  %v1547 = vunpack.c.l.b16 %v407
  %v1548 = vunpack.c.l.b16 %v408
  %v1549 = vunpack.c.l.b16 %v409
  %v1550 = vunpack.c.l.b16 %v410
  %v1551 = vunpack.c.l.b16 %v411
  %v1552 = vunpack.c.l.b16 %v412
  %v1553 = vunpack.c.l.b16 %v413
  %v1554 = vunpack.c.l.b16 %v414
  %v1555 = vunpack.c.l.b16 %v415
  %v1556 = vunpack.c.l.b16 %v416
  %v1557 = vunpack.c.l.b16 %v417
  %v1558 = vunpack.c.l.b16 %v418
  %v1559 = vunpack.c.l.b16 %v419
  %v1560 = vunpack.c.l.b16 %v420
  %v1561 = vunpack.c.l.b16 %v421
  %v1562 = vunpack.c.l.b16 %v422
  %v1563 = vunpack.c.l.b16 %v423
  %v1564 = vunpack.c.l.b16 %v424
  %v1565 = vunpack.c.l.b16 %v425
  %v1566 = vunpack.c.l.b16 %v426
  %v1567 = vunpack.c.l.b16 %v427
  %v1568 = vunpack.c.l.b16 %v428
  %v1569 = vunpack.c.l.b16 %v429
  %v1570 = vunpack.c.l.b16 %v430
  %v1571 = vunpack.c.l.b16 %v431
  %v1572 = vunpack.c.l.b16 %v432
  %v1573 = vunpack.c.l.b16 %v433
  %v1574 = vunpack.c.l.b16 %v434
  %v1575 = vunpack.c.l.b16 %v435
  %v1576 = vunpack.c.l.b16 %v436
  %v1577 = vunpack.c.l.b16 %v437
  %v1578 = vunpack.c.l.b16 %v438
  %v1579 = vunpack.c.l.b16 %v439
  %v1580 = vunpack.c.l.b16 %v440
  %v1581 = vunpack.c.l.b16 %v441
  %v1582 = vunpack.c.l.b16 %v442
  %v1583 = vunpack.c.l.b16 %v443
  %v1584 = vunpack.c.l.b16 %v444
  %v1585 = vunpack.c.l.b16 %v445
  %v1586 = vunpack.c.l.b16 %v446
  %v1587 = vunpack.c.l.b16 %v447
  %v1588 = vunpack.c.l.b16 %v448
  %v1589 = vunpack.c.l.b16 %v449
  %v1590 = vunpack.c.l.b16 %v450
  %v1591 = vunpack.c.l.b16 %v451
  %v1592 = vunpack.c.l.b16 %v452
  %v1593 = vunpack.c.l.b16 %v453
  %v1594 = vunpack.c.l.b16 %v454
  %v1595 = vunpack.c.l.b16 %v455
  %v1596 = vunpack.c.l.b16 %v456
  %v1597 = vunpack.c.l.b16 %v457
  %v1598 = vunpack.c.l.b16 %v458
  %v1599 = vunpack.c.l.b16 %v459
  %v1600 = vunpack.c.l.b16 %v460
  %v1601 = vunpack.c.l.b16 %v461
  %v1602 = vunpack.c.l.b16 %v462
  %v1603 = vunpack.c.l.b16 %v463
  %v1604 = vunpack.c.l.b16 %v464
  %v1605 = vunpack.c.l.b16 %v465
  %v1606 = vunpack.c.l.b16 %v466
  %v1607 = vunpack.c.l.b16 %v467
  %v1608 = vunpack.c.l.b16 %v468
  %v1609 = vunpack.c.l.b16 %v469
  %v1610 = vunpack.c.l.b16 %v470
  %v1611 = vunpack.c.l.b16 %v471
  %v1612 = vunpack.c.l.b16 %v472
  %v1613 = vunpack.c.l.b16 %v473
  %v1614 = vunpack.c.l.b16 %v474
  %v1615 = vunpack.c.l.b16 %v475
  %v1616 = vunpack.c.l.b16 %v476
  %v1617 = vunpack.c.l.b16 %v477
  %v1618 = vunpack.c.l.b16 %v478
  %v1619 = vunpack.c.l.b16 %v479
  %v1620 = vunpack.c.l.b16 %v480
  %v1621 = vunpack.c.l.b16 %v481
  %v1622 = vunpack.c.l.b16 %v482
  %v1623 = vunpack.c.l.b16 %v483
  %v1624 = vunpack.c.l.b16 %v484
  %v1625 = vunpack.c.l.b16 %v485
  %v1626 = vunpack.c.l.b16 %v486
  %v1627 = vunpack.c.l.b16 %v487
  %v1628 = vunpack.c.l.b16 %v488
  %v1629 = vunpack.c.l.b16 %v489
  %v1630 = vunpack.c.l.b16 %v490
  %v1631 = vunpack.c.l.b16 %v491
  %v1632 = vunpack.c.l.b16 %v492
  %v1633 = vunpack.c.l.b16 %v493
  %v1634 = vunpack.c.l.b16 %v494
  %v1635 = vunpack.c.l.b16 %v495
  %v1636 = vunpack.c.l.b16 %v496
  %v1637 = vunpack.c.l.b16 %v497
  %v1638 = vunpack.c.l.b16 %v498
  %v1639 = vunpack.c.l.b16 %v499
  %v1640 = vunpack.c.l.b16 %v500
  %v1641 = vunpack.c.l.b16 %v501
  %v1642 = vunpack.c.l.b16 %v502
  %v1643 = vunpack.c.l.b16 %v503
  %v1644 = vunpack.c.l.b16 %v504
  %v1645 = vunpack.c.l.b16 %v505
  %v1646 = vunpack.c.l.b16 %v506
  %v1647 = vunpack.c.l.b16 %v507
  %v1648 = vunpack.c.l.b16 %v508
  %v1649 = vunpack.c.l.b16 %v509
  %v1650 = vunpack.c.l.b16 %v510
  %v1651 = vunpack.c.l.b16 %v511
  %v1652 = vunpack.c.l.b16 %v512
  %v1653 = vunpack.c.l.b16 %v513
  %v1654 = vunpack.c.l.b16 %v514
  %v1655 = vunpack.c.l.b16 %v515
  %v1656 = vunpack.c.l.b16 %v516
  %v1657 = vunpack.c.l.b16 %v517
  %v1658 = vunpack.c.l.b16 %v518
  %v1659 = vunpack.c.l.b16 %v519
  %v1660 = vunpack.c.l.b16 %v520
  %v1661 = vunpack.c.l.b16 %v521
  %v1662 = vunpack.c.l.b16 %v522
  %v1663 = vunpack.c.l.b16 %v523
  %v1664 = vunpack.c.l.b16 %v524
  %v1665 = vunpack.c.l.b16 %v525
  %v1666 = vunpack.c.l.b16 %v526
  %v1667 = vunpack.c.l.b16 %v527
  %v1668 = vunpack.c.l.b16 %v528
  %v1669 = vunpack.c.l.b16 %v529
  %v1670 = vunpack.c.l.b16 %v530
  %v1671 = vunpack.c.l.b16 %v531
  %v1672 = vunpack.c.l.b16 %v532
  %v1673 = vunpack.c.l.b16 %v533
  %v1674 = vunpack.c.l.b16 %v534
  %v1675 = vunpack.c.l.b16 %v535
  %v1676 = vunpack.c.l.b16 %v536
  %v1677 = vunpack.c.l.b16 %v537
  %v1678 = vunpack.c.l.b16 %v538
  %v1679 = vunpack.c.l.b16 %v539
  %v1680 = vunpack.c.l.b16 %v540
  %v1681 = vunpack.c.l.b16 %v541
  %v1682 = vpack.c.b16 %v1171, %v1170
  %v1683 = vpack.c.b16 %v1173, %v1172
  %v1684 = vpack.c.b16 %v1175, %v1174
  %v1685 = vpack.c.b16 %v1177, %v1176
  %v1686 = vpack.c.b16 %v1179, %v1178
  %v1687 = vpack.c.b16 %v1181, %v1180
  %v1688 = vpack.c.b16 %v1183, %v1182
  %v1689 = vpack.c.b16 %v1185, %v1184
  %v1690 = vpack.c.b16 %v1187, %v1186
  %v1691 = vpack.c.b16 %v1189, %v1188
  %v1692 = vpack.c.b16 %v1191, %v1190
  %v1693 = vpack.c.b16 %v1193, %v1192
  %v1694 = vpack.c.b16 %v1195, %v1194
  %v1695 = vpack.c.b16 %v1197, %v1196
  %v1696 = vpack.c.b16 %v1199, %v1198
  %v1697 = vpack.c.b16 %v1201, %v1200
  %v1698 = vpack.c.b16 %v1203, %v1202
  %v1699 = vpack.c.b16 %v1205, %v1204
  %v1700 = vpack.c.b16 %v1207, %v1206
  %v1701 = vpack.c.b16 %v1209, %v1208
  %v1702 = vpack.c.b16 %v1211, %v1210
  %v1703 = vpack.c.b16 %v1213, %v1212
  %v1704 = vpack.c.b16 %v1215, %v1214
  %v1705 = vpack.c.b16 %v1217, %v1216
  %v1706 = vpack.c.b16 %v1219, %v1218
  %v1707 = vpack.c.b16 %v1221, %v1220
  %v1708 = vpack.c.b16 %v1223, %v1222
  %v1709 = vpack.c.b16 %v1225, %v1224
  %v1710 = vpack.c.b16 %v1227, %v1226
  %v1711 = vpack.c.b16 %v1229, %v1228
  %v1712 = vpack.c.b16 %v1231, %v1230
  %v1713 = vpack.c.b16 %v1233, %v1232
  %v1714 = vpack.c.b16 %v1235, %v1234
  %v1715 = vpack.c.b16 %v1237, %v1236
  %v1716 = vpack.c.b16 %v1239, %v1238
  %v1717 = vpack.c.b16 %v1241, %v1240
  %v1718 = vpack.c.b16 %v1243, %v1242
  %v1719 = vpack.c.b16 %v1245, %v1244
  %v1720 = vpack.c.b16 %v1247, %v1246
  %v1721 = vpack.c.b16 %v1249, %v1248
  %v1722 = vpack.c.b16 %v1251, %v1250
  %v1723 = vpack.c.b16 %v1253, %v1252
  %v1724 = vpack.c.b16 %v1255, %v1254
  %v1725 = vpack.c.b16 %v1257, %v1256
  %v1726 = vpack.c.b16 %v1259, %v1258
  %v1727 = vpack.c.b16 %v1261, %v1260
  %v1728 = vpack.c.b16 %v1263, %v1262
  %v1729 = vpack.c.b16 %v1265, %v1264
  %v1730 = vpack.c.b16 %v1267, %v1266
  %v1731 = vpack.c.b16 %v1269, %v1268
  %v1732 = vpack.c.b16 %v1271, %v1270
  %v1733 = vpack.c.b16 %v1273, %v1272
  %v1734 = vpack.c.b16 %v1275, %v1274
  %v1735 = vpack.c.b16 %v1277, %v1276
  %v1736 = vpack.c.b16 %v1279, %v1278
  %v1737 = vpack.c.b16 %v1281, %v1280
  %v1738 = vpack.c.b16 %v1283, %v1282
  %v1739 = vpack.c.b16 %v1285, %v1284
  %v1740 = vpack.c.b16 %v1287, %v1286
  %v1741 = vpack.c.b16 %v1289, %v1288
  %v1742 = vpack.c.b16 %v1291, %v1290
  %v1743 = vpack.c.b16 %v1293, %v1292
  %v1744 = vpack.c.b16 %v1295, %v1294
  %v1745 = vpack.c.b16 %v1297, %v1296
  %v1746 = vpack.c.b16 %v1299, %v1298
  %v1747 = vpack.c.b16 %v1301, %v1300
  %v1748 = vpack.c.b16 %v1303, %v1302
  %v1749 = vpack.c.b16 %v1305, %v1304
  %v1750 = vpack.c.b16 %v1307, %v1306
  %v1751 = vpack.c.b16 %v1309, %v1308
  %v1752 = vpack.c.b16 %v1311, %v1310
  %v1753 = vpack.c.b16 %v1313, %v1312
  %v1754 = vpack.c.b16 %v1315, %v1314
  %v1755 = vpack.c.b16 %v1317, %v1316
  %v1756 = vpack.c.b16 %v1319, %v1318
  %v1757 = vpack.c.b16 %v1321, %v1320
  %v1758 = vpack.c.b16 %v1323, %v1322
  %v1759 = vpack.c.b16 %v1325, %v1324
  %v1760 = vpack.c.b16 %v1327, %v1326
  %v1761 = vpack.c.b16 %v1329, %v1328
  %v1762 = vpack.c.b16 %v1331, %v1330
  %v1763 = vpack.c.b16 %v1333, %v1332
  %v1764 = vpack.c.b16 %v1335, %v1334
  %v1765 = vpack.c.b16 %v1337, %v1336
  %v1766 = vpack.c.b16 %v1339, %v1338
  %v1767 = vpack.c.b16 %v1341, %v1340
  %v1768 = vpack.c.b16 %v1343, %v1342
  %v1769 = vpack.c.b16 %v1345, %v1344
  %v1770 = vpack.c.b16 %v1347, %v1346
  %v1771 = vpack.c.b16 %v1349, %v1348
  %v1772 = vpack.c.b16 %v1351, %v1350
  %v1773 = vpack.c.b16 %v1353, %v1352
  %v1774 = vpack.c.b16 %v1355, %v1354
  %v1775 = vpack.c.b16 %v1357, %v1356
  %v1776 = vpack.c.b16 %v1359, %v1358
  %v1777 = vpack.c.b16 %v1361, %v1360
  %v1778 = vpack.c.b16 %v1363, %v1362
  %v1779 = vpack.c.b16 %v1365, %v1364
  %v1780 = vpack.c.b16 %v1367, %v1366
  %v1781 = vpack.c.b16 %v1369, %v1368
  %v1782 = vpack.c.b16 %v1371, %v1370
  %v1783 = vpack.c.b16 %v1373, %v1372
  %v1784 = vpack.c.b16 %v1375, %v1374
  %v1785 = vpack.c.b16 %v1377, %v1376
  %v1786 = vpack.c.b16 %v1379, %v1378
  %v1787 = vpack.c.b16 %v1381, %v1380
  %v1788 = vpack.c.b16 %v1383, %v1382
  %v1789 = vpack.c.b16 %v1385, %v1384
  %v1790 = vpack.c.b16 %v1387, %v1386
  %v1791 = vpack.c.b16 %v1389, %v1388
  %v1792 = vpack.c.b16 %v1391, %v1390
  %v1793 = vpack.c.b16 %v1393, %v1392
  %v1794 = vpack.c.b16 %v1395, %v1394
  %v1795 = vpack.c.b16 %v1397, %v1396
  %v1796 = vpack.c.b16 %v1399, %v1398
  %v1797 = vpack.c.b16 %v1401, %v1400
  %v1798 = vpack.c.b16 %v1403, %v1402
  %v1799 = vpack.c.b16 %v1405, %v1404
  %v1800 = vpack.c.b16 %v1407, %v1406
  %v1801 = vpack.c.b16 %v1409, %v1408
  %v1802 = vpack.c.b16 %v1411, %v1410
  %v1803 = vpack.c.b16 %v1413, %v1412
  %v1804 = vpack.c.b16 %v1415, %v1414
  %v1805 = vpack.c.b16 %v1417, %v1416
  %v1806 = vpack.c.b16 %v1419, %v1418
  %v1807 = vpack.c.b16 %v1421, %v1420
  %v1808 = vpack.c.b16 %v1423, %v1422
  %v1809 = vpack.c.b16 %v1425, %v1424
  %v1810 = vpack.c.b16 %v1427, %v1426
  %v1811 = vpack.c.b16 %v1429, %v1428
  %v1812 = vpack.c.b16 %v1431, %v1430
  %v1813 = vpack.c.b16 %v1433, %v1432
  %v1814 = vpack.c.b16 %v1435, %v1434
  %v1815 = vpack.c.b16 %v1437, %v1436
  %v1816 = vpack.c.b16 %v1439, %v1438
  %v1817 = vpack.c.b16 %v1441, %v1440
  %v1818 = vpack.c.b16 %v1443, %v1442
  %v1819 = vpack.c.b16 %v1445, %v1444
  %v1820 = vpack.c.b16 %v1447, %v1446
  %v1821 = vpack.c.b16 %v1449, %v1448
  %v1822 = vpack.c.b16 %v1451, %v1450
  %v1823 = vpack.c.b16 %v1453, %v1452
  %v1824 = vpack.c.b16 %v1455, %v1454
  %v1825 = vpack.c.b16 %v1457, %v1456
  %v1826 = vpack.c.b16 %v1459, %v1458
  %v1827 = vpack.c.b16 %v1461, %v1460
  %v1828 = vpack.c.b16 %v1463, %v1462
  %v1829 = vpack.c.b16 %v1465, %v1464
  %v1830 = vpack.c.b16 %v1467, %v1466
  %v1831 = vpack.c.b16 %v1469, %v1468
  %v1832 = vpack.c.b16 %v1471, %v1470
  %v1833 = vpack.c.b16 %v1473, %v1472
  %v1834 = vpack.c.b16 %v1475, %v1474
  %v1835 = vpack.c.b16 %v1477, %v1476
  %v1836 = vpack.c.b16 %v1479, %v1478
  %v1837 = vpack.c.b16 %v1481, %v1480
  %v1838 = vpack.c.b16 %v1483, %v1482
  %v1839 = vpack.c.b16 %v1485, %v1484
  %v1840 = vpack.c.b16 %v1487, %v1486
  %v1841 = vpack.c.b16 %v1489, %v1488
  %v1842 = vpack.c.b16 %v1491, %v1490
  %v1843 = vpack.c.b16 %v1493, %v1492
  %v1844 = vpack.c.b16 %v1495, %v1494
  %v1845 = vpack.c.b16 %v1497, %v1496
  %v1846 = vpack.c.b16 %v1499, %v1498
  %v1847 = vpack.c.b16 %v1501, %v1500
  %v1848 = vpack.c.b16 %v1503, %v1502
  %v1849 = vpack.c.b16 %v1505, %v1504
  %v1850 = vpack.c.b16 %v1507, %v1506
  %v1851 = vpack.c.b16 %v1509, %v1508
  %v1852 = vpack.c.b16 %v1511, %v1510
  %v1853 = vpack.c.b16 %v1513, %v1512
  %v1854 = vpack.c.b16 %v1515, %v1514
  %v1855 = vpack.c.b16 %v1517, %v1516
  %v1856 = vpack.c.b16 %v1519, %v1518
  %v1857 = vpack.c.b16 %v1521, %v1520
  %v1858 = vpack.c.b16 %v1523, %v1522
  %v1859 = vpack.c.b16 %v1525, %v1524
  %v1860 = vpack.c.b16 %v1527, %v1526
  %v1861 = vpack.c.b16 %v1529, %v1528
  %v1862 = vpack.c.b16 %v1531, %v1530
  %v1863 = vpack.c.b16 %v1533, %v1532
  %v1864 = vpack.c.b16 %v1535, %v1534
  %v1865 = vpack.c.b16 %v1537, %v1536
  %v1866 = vpack.c.b16 %v1539, %v1538
  %v1867 = vpack.c.b16 %v1541, %v1540
  %v1868 = vpack.c.b16 %v1543, %v1542
  %v1869 = vpack.c.b16 %v1545, %v1544
  %v1870 = vpack.c.b16 %v1547, %v1546
  %v1871 = vpack.c.b16 %v1549, %v1548
  %v1872 = vpack.c.b16 %v1551, %v1550
  %v1873 = vpack.c.b16 %v1553, %v1552
  %v1874 = vpack.c.b16 %v1555, %v1554
  %v1875 = vpack.c.b16 %v1557, %v1556
  %v1876 = vpack.c.b16 %v1559, %v1558
  %v1877 = vpack.c.b16 %v1561, %v1560
  %v1878 = vpack.c.b16 %v1563, %v1562
  %v1879 = vpack.c.b16 %v1565, %v1564
  %v1880 = vpack.c.b16 %v1567, %v1566
  %v1881 = vpack.c.b16 %v1569, %v1568
  %v1882 = vpack.c.b16 %v1571, %v1570
  %v1883 = vpack.c.b16 %v1573, %v1572
  %v1884 = vpack.c.b16 %v1575, %v1574
  %v1885 = vpack.c.b16 %v1577, %v1576
  %v1886 = vpack.c.b16 %v1579, %v1578
  %v1887 = vpack.c.b16 %v1581, %v1580
  %v1888 = vpack.c.b16 %v1583, %v1582
  %v1889 = vpack.c.b16 %v1585, %v1584
  %v1890 = vpack.c.b16 %v1587, %v1586
  %v1891 = vpack.c.b16 %v1589, %v1588
  %v1892 = vpack.c.b16 %v1591, %v1590
  %v1893 = vpack.c.b16 %v1593, %v1592
  %v1894 = vpack.c.b16 %v1595, %v1594
  %v1895 = vpack.c.b16 %v1597, %v1596
  %v1896 = vpack.c.b16 %v1599, %v1598
  %v1897 = vpack.c.b16 %v1601, %v1600
  %v1898 = vpack.c.b16 %v1603, %v1602
  %v1899 = vpack.c.b16 %v1605, %v1604
  %v1900 = vpack.c.b16 %v1607, %v1606
  %v1901 = vpack.c.b16 %v1609, %v1608
  %v1902 = vpack.c.b16 %v1611, %v1610
  %v1903 = vpack.c.b16 %v1613, %v1612
  %v1904 = vpack.c.b16 %v1615, %v1614
  %v1905 = vpack.c.b16 %v1617, %v1616
  %v1906 = vpack.c.b16 %v1619, %v1618
  %v1907 = vpack.c.b16 %v1621, %v1620
  %v1908 = vpack.c.b16 %v1623, %v1622
  %v1909 = vpack.c.b16 %v1625, %v1624
  %v1910 = vpack.c.b16 %v1627, %v1626
  %v1911 = vpack.c.b16 %v1629, %v1628
  %v1912 = vpack.c.b16 %v1631, %v1630
  %v1913 = vpack.c.b16 %v1633, %v1632
  %v1914 = vpack.c.b16 %v1635, %v1634
  %v1915 = vpack.c.b16 %v1637, %v1636
  %v1916 = vpack.c.b16 %v1639, %v1638
  %v1917 = vpack.c.b16 %v1641, %v1640
  %v1918 = vpack.c.b16 %v1643, %v1642
  %v1919 = vpack.c.b16 %v1645, %v1644
  %v1920 = vpack.c.b16 %v1647, %v1646
  %v1921 = vpack.c.b16 %v1649, %v1648
  %v1922 = vpack.c.b16 %v1651, %v1650
  %v1923 = vpack.c.b16 %v1653, %v1652
  %v1924 = vpack.c.b16 %v1655, %v1654
  %v1925 = vpack.c.b16 %v1657, %v1656
  %v1926 = vpack.c.b16 %v1659, %v1658
  %v1927 = vpack.c.b16 %v1661, %v1660
  %v1928 = vpack.c.b16 %v1663, %v1662
  %v1929 = vpack.c.b16 %v1665, %v1664
  %v1930 = vpack.c.b16 %v1667, %v1666
  %v1931 = vpack.c.b16 %v1669, %v1668
  %v1932 = vpack.c.b16 %v1671, %v1670
  %v1933 = vpack.c.b16 %v1673, %v1672
  %v1934 = vpack.c.b16 %v1675, %v1674
  %v1935 = vpack.c.b16 %v1677, %v1676
  %v1936 = vpack.c.b16 %v1679, %v1678
  %v1937 = vpack.c.b16 %v1681, %v1680
  %2194 = vmatpush.bf16.msra.mxu0 %v1689
  %2195 = vmatpush.bf16.msra.mxu0 %v1688
  %2196 = vmatpush.bf16.msra.mxu0 %v1687
  %2197 = vmatpush.bf16.msra.mxu0 %v1686
  %2198 = vmatpush.bf16.msra.mxu0 %v1685
  %2199 = vmatpush.bf16.msra.mxu0 %v1684
  %2200 = vmatpush.bf16.msra.mxu0 %v1683
  %2201 = vmatpush.bf16.msra.mxu0 %v1682
  %2202 = vmatmul.bf16.gmra.mxu0 %v594
  %v2203 = vpop.f32.mrf.mxu0
  %v2204 = vadd.f32 %v544, %v2203
  %v2205 = vpop.f32.mrf.mxu0
  %2206 = vdwg.mxu0
  %2207 = vmatpush.bf16.msra.mxu0 %v1697
  %2208 = vmatpush.bf16.msra.mxu0 %v1696
  %2209 = vmatpush.bf16.msra.mxu0 %v1695
  %2210 = vmatpush.bf16.msra.mxu0 %v1694
  %2211 = vmatpush.bf16.msra.mxu0 %v1693
  %2212 = vmatpush.bf16.msra.mxu0 %v1692
  %2213 = vmatpush.bf16.msra.mxu0 %v1691
  %2214 = vmatpush.bf16.msra.mxu0 %v1690
  %2215 = vmatmul.bf16.gmra.mxu0 %v595
  %v2216 = vpop.f32.mrf.mxu0
  %v2217 = vadd.f32 %v2204, %v2216
  %v2218 = vpop.f32.mrf.mxu0
  %2219 = vdwg.mxu0
  %2220 = vmatpush.bf16.msra.mxu0 %v1705
  %2221 = vmatpush.bf16.msra.mxu0 %v1704
  %2222 = vmatpush.bf16.msra.mxu0 %v1703
  %2223 = vmatpush.bf16.msra.mxu0 %v1702
  %2224 = vmatpush.bf16.msra.mxu0 %v1701
  %2225 = vmatpush.bf16.msra.mxu0 %v1700
  %2226 = vmatpush.bf16.msra.mxu0 %v1699
  %2227 = vmatpush.bf16.msra.mxu0 %v1698
  %2228 = vmatmul.bf16.gmra.mxu0 %v596
  %v2229 = vpop.f32.mrf.mxu0
  %v2230 = vadd.f32 %v2217, %v2229
  %v2231 = vpop.f32.mrf.mxu0
  %2232 = vdwg.mxu0
  %2233 = vmatpush.bf16.msra.mxu0 %v1713
  %2234 = vmatpush.bf16.msra.mxu0 %v1712
  %2235 = vmatpush.bf16.msra.mxu0 %v1711
  %2236 = vmatpush.bf16.msra.mxu0 %v1710
  %2237 = vmatpush.bf16.msra.mxu0 %v1709
  %2238 = vmatpush.bf16.msra.mxu0 %v1708
  %2239 = vmatpush.bf16.msra.mxu0 %v1707
  %2240 = vmatpush.bf16.msra.mxu0 %v1706
  %2241 = vmatmul.bf16.gmra.mxu0 %v597
  %v2242 = vpop.f32.mrf.mxu0
  %v2243 = vadd.f32 %v2230, %v2242
  %v2244 = vpop.f32.mrf.mxu0
  %2245 = vdwg.mxu0
  %2246 = vmatpush.bf16.msra.mxu0 %v1721
  %2247 = vmatpush.bf16.msra.mxu0 %v1720
  %2248 = vmatpush.bf16.msra.mxu0 %v1719
  %2249 = vmatpush.bf16.msra.mxu0 %v1718
  %2250 = vmatpush.bf16.msra.mxu0 %v1717
  %2251 = vmatpush.bf16.msra.mxu0 %v1716
  %2252 = vmatpush.bf16.msra.mxu0 %v1715
  %2253 = vmatpush.bf16.msra.mxu0 %v1714
  %2254 = vmatmul.bf16.gmra.mxu0 %v598
  %v2255 = vpop.f32.mrf.mxu0
  %v2256 = vadd.f32 %v2243, %v2255
  %v2257 = vpop.f32.mrf.mxu0
  %2258 = vdwg.mxu0
  %2259 = vmatpush.bf16.msra.mxu0 %v1729
  %2260 = vmatpush.bf16.msra.mxu0 %v1728
  %2261 = vmatpush.bf16.msra.mxu0 %v1727
  %2262 = vmatpush.bf16.msra.mxu0 %v1726
  %2263 = vmatpush.bf16.msra.mxu0 %v1725
  %2264 = vmatpush.bf16.msra.mxu0 %v1724
  %2265 = vmatpush.bf16.msra.mxu0 %v1723
  %2266 = vmatpush.bf16.msra.mxu0 %v1722
  %2267 = vmatmul.bf16.gmra.mxu0 %v599
  %v2268 = vpop.f32.mrf.mxu0
  %v2269 = vadd.f32 %v2256, %v2268
  %v2270 = vpop.f32.mrf.mxu0
  %2271 = vdwg.mxu0
  %2272 = vmatpush.bf16.msra.mxu0 %v1737
  %2273 = vmatpush.bf16.msra.mxu0 %v1736
  %2274 = vmatpush.bf16.msra.mxu0 %v1735
  %2275 = vmatpush.bf16.msra.mxu0 %v1734
  %2276 = vmatpush.bf16.msra.mxu0 %v1733
  %2277 = vmatpush.bf16.msra.mxu0 %v1732
  %2278 = vmatpush.bf16.msra.mxu0 %v1731
  %2279 = vmatpush.bf16.msra.mxu0 %v1730
  %2280 = vmatmul.bf16.gmra.mxu0 %v600
  %v2281 = vpop.f32.mrf.mxu0
  %v2282 = vadd.f32 %v2269, %v2281
  %v2283 = vpop.f32.mrf.mxu0
  %2284 = vdwg.mxu0
  %2285 = vmatpush.bf16.msra.mxu0 %v1745
  %2286 = vmatpush.bf16.msra.mxu0 %v1744
  %2287 = vmatpush.bf16.msra.mxu0 %v1743
  %2288 = vmatpush.bf16.msra.mxu0 %v1742
  %2289 = vmatpush.bf16.msra.mxu0 %v1741
  %2290 = vmatpush.bf16.msra.mxu0 %v1740
  %2291 = vmatpush.bf16.msra.mxu0 %v1739
  %2292 = vmatpush.bf16.msra.mxu0 %v1738
  %2293 = vmatmul.bf16.gmra.mxu0 %v601
  %v2294 = vpop.f32.mrf.mxu0
  %v2295 = vadd.f32 %v2282, %v2294
  %v2296 = vpop.f32.mrf.mxu0
  %2297 = vdwg.mxu0
  %2298 = vmatpush.bf16.msra.mxu0 %v1753
  %2299 = vmatpush.bf16.msra.mxu0 %v1752
  %2300 = vmatpush.bf16.msra.mxu0 %v1751
  %2301 = vmatpush.bf16.msra.mxu0 %v1750
  %2302 = vmatpush.bf16.msra.mxu0 %v1749
  %2303 = vmatpush.bf16.msra.mxu0 %v1748
  %2304 = vmatpush.bf16.msra.mxu0 %v1747
  %2305 = vmatpush.bf16.msra.mxu0 %v1746
  %2306 = vmatmul.bf16.gmra.mxu0 %v602
  %v2307 = vpop.f32.mrf.mxu0
  %v2308 = vadd.f32 %v2295, %v2307
  %v2309 = vpop.f32.mrf.mxu0
  %2310 = vdwg.mxu0
  %2311 = vmatpush.bf16.msra.mxu0 %v1761
  %2312 = vmatpush.bf16.msra.mxu0 %v1760
  %2313 = vmatpush.bf16.msra.mxu0 %v1759
  %2314 = vmatpush.bf16.msra.mxu0 %v1758
  %2315 = vmatpush.bf16.msra.mxu0 %v1757
  %2316 = vmatpush.bf16.msra.mxu0 %v1756
  %2317 = vmatpush.bf16.msra.mxu0 %v1755
  %2318 = vmatpush.bf16.msra.mxu0 %v1754
  %2319 = vmatmul.bf16.gmra.mxu0 %v603
  %v2320 = vpop.f32.mrf.mxu0
  %v2321 = vadd.f32 %v2308, %v2320
  %v2322 = vpop.f32.mrf.mxu0
  %2323 = vdwg.mxu0
  %2324 = vmatpush.bf16.msra.mxu0 %v1769
  %2325 = vmatpush.bf16.msra.mxu0 %v1768
  %2326 = vmatpush.bf16.msra.mxu0 %v1767
  %2327 = vmatpush.bf16.msra.mxu0 %v1766
  %2328 = vmatpush.bf16.msra.mxu0 %v1765
  %2329 = vmatpush.bf16.msra.mxu0 %v1764
  %2330 = vmatpush.bf16.msra.mxu0 %v1763
  %2331 = vmatpush.bf16.msra.mxu0 %v1762
  %2332 = vmatmul.bf16.gmra.mxu0 %v604
  %v2333 = vpop.f32.mrf.mxu0
  %v2334 = vadd.f32 %v2321, %v2333
  %v2335 = vpop.f32.mrf.mxu0
  %2336 = vdwg.mxu0
  %2337 = vmatpush.bf16.msra.mxu0 %v1777
  %2338 = vmatpush.bf16.msra.mxu0 %v1776
  %2339 = vmatpush.bf16.msra.mxu0 %v1775
  %2340 = vmatpush.bf16.msra.mxu0 %v1774
  %2341 = vmatpush.bf16.msra.mxu0 %v1773
  %2342 = vmatpush.bf16.msra.mxu0 %v1772
  %2343 = vmatpush.bf16.msra.mxu0 %v1771
  %2344 = vmatpush.bf16.msra.mxu0 %v1770
  %2345 = vmatmul.bf16.gmra.mxu0 %v605
  %v2346 = vpop.f32.mrf.mxu0
  %v2347 = vadd.f32 %v2334, %v2346
  %v2348 = vpop.f32.mrf.mxu0
  %2349 = vdwg.mxu0
  %2350 = vmatpush.bf16.msra.mxu0 %v1785
  %2351 = vmatpush.bf16.msra.mxu0 %v1784
  %2352 = vmatpush.bf16.msra.mxu0 %v1783
  %2353 = vmatpush.bf16.msra.mxu0 %v1782
  %2354 = vmatpush.bf16.msra.mxu0 %v1781
  %2355 = vmatpush.bf16.msra.mxu0 %v1780
  %2356 = vmatpush.bf16.msra.mxu0 %v1779
  %2357 = vmatpush.bf16.msra.mxu0 %v1778
  %2358 = vmatmul.bf16.gmra.mxu0 %v606
  %v2359 = vpop.f32.mrf.mxu0
  %v2360 = vadd.f32 %v2347, %v2359
  %v2361 = vpop.f32.mrf.mxu0
  %2362 = vdwg.mxu0
  %2363 = vmatpush.bf16.msra.mxu0 %v1793
  %2364 = vmatpush.bf16.msra.mxu0 %v1792
  %2365 = vmatpush.bf16.msra.mxu0 %v1791
  %2366 = vmatpush.bf16.msra.mxu0 %v1790
  %2367 = vmatpush.bf16.msra.mxu0 %v1789
  %2368 = vmatpush.bf16.msra.mxu0 %v1788
  %2369 = vmatpush.bf16.msra.mxu0 %v1787
  %2370 = vmatpush.bf16.msra.mxu0 %v1786
  %2371 = vmatmul.bf16.gmra.mxu0 %v607
  %v2372 = vpop.f32.mrf.mxu0
  %v2373 = vadd.f32 %v2360, %v2372
  %v2374 = vpop.f32.mrf.mxu0
  %2375 = vdwg.mxu0
  %2376 = vmatpush.bf16.msra.mxu0 %v1801
  %2377 = vmatpush.bf16.msra.mxu0 %v1800
  %2378 = vmatpush.bf16.msra.mxu0 %v1799
  %2379 = vmatpush.bf16.msra.mxu0 %v1798
  %2380 = vmatpush.bf16.msra.mxu0 %v1797
  %2381 = vmatpush.bf16.msra.mxu0 %v1796
  %2382 = vmatpush.bf16.msra.mxu0 %v1795
  %2383 = vmatpush.bf16.msra.mxu0 %v1794
  %2384 = vmatmul.bf16.gmra.mxu0 %v608
  %v2385 = vpop.f32.mrf.mxu0
  %v2386 = vadd.f32 %v2373, %v2385
  %v2387 = vpop.f32.mrf.mxu0
  %2388 = vdwg.mxu0
  %2389 = vmatpush.bf16.msra.mxu0 %v1809
  %2390 = vmatpush.bf16.msra.mxu0 %v1808
  %2391 = vmatpush.bf16.msra.mxu0 %v1807
  %2392 = vmatpush.bf16.msra.mxu0 %v1806
  %2393 = vmatpush.bf16.msra.mxu0 %v1805
  %2394 = vmatpush.bf16.msra.mxu0 %v1804
  %2395 = vmatpush.bf16.msra.mxu0 %v1803
  %2396 = vmatpush.bf16.msra.mxu0 %v1802
  %2397 = vmatmul.bf16.gmra.mxu0 %v609
  %v2398 = vpop.f32.mrf.mxu0
  %v2399 = vadd.f32 %v2386, %v2398
  %v2400 = vpop.f32.mrf.mxu0
  %2401 = vdwg.mxu0
  %2402 = vmatpush.bf16.msra.mxu0 %v1817
  %2403 = vmatpush.bf16.msra.mxu0 %v1816
  %2404 = vmatpush.bf16.msra.mxu0 %v1815
  %2405 = vmatpush.bf16.msra.mxu0 %v1814
  %2406 = vmatpush.bf16.msra.mxu0 %v1813
  %2407 = vmatpush.bf16.msra.mxu0 %v1812
  %2408 = vmatpush.bf16.msra.mxu0 %v1811
  %2409 = vmatpush.bf16.msra.mxu0 %v1810
  %2410 = vmatmul.bf16.gmra.mxu0 %v610
  %v2411 = vpop.f32.mrf.mxu0
  %v2412 = vadd.f32 %v2399, %v2411
  %v2413 = vpop.f32.mrf.mxu0
  %2414 = vdwg.mxu0
  %2415 = vmatpush.bf16.msra.mxu0 %v1825
  %2416 = vmatpush.bf16.msra.mxu0 %v1824
  %2417 = vmatpush.bf16.msra.mxu0 %v1823
  %2418 = vmatpush.bf16.msra.mxu0 %v1822
  %2419 = vmatpush.bf16.msra.mxu0 %v1821
  %2420 = vmatpush.bf16.msra.mxu0 %v1820
  %2421 = vmatpush.bf16.msra.mxu0 %v1819
  %2422 = vmatpush.bf16.msra.mxu0 %v1818
  %2423 = vmatmul.bf16.gmra.mxu0 %v611
  %v2424 = vpop.f32.mrf.mxu0
  %v2425 = vadd.f32 %v2412, %v2424
  %v2426 = vpop.f32.mrf.mxu0
  %2427 = vdwg.mxu0
  %2428 = vmatpush.bf16.msra.mxu0 %v1833
  %2429 = vmatpush.bf16.msra.mxu0 %v1832
  %2430 = vmatpush.bf16.msra.mxu0 %v1831
  %2431 = vmatpush.bf16.msra.mxu0 %v1830
  %2432 = vmatpush.bf16.msra.mxu0 %v1829
  %2433 = vmatpush.bf16.msra.mxu0 %v1828
  %2434 = vmatpush.bf16.msra.mxu0 %v1827
  %2435 = vmatpush.bf16.msra.mxu0 %v1826
  %2436 = vmatmul.bf16.gmra.mxu0 %v612
  %v2437 = vpop.f32.mrf.mxu0
  %v2438 = vadd.f32 %v2425, %v2437
  %v2439 = vpop.f32.mrf.mxu0
  %2440 = vdwg.mxu0
  %2441 = vmatpush.bf16.msra.mxu0 %v1841
  %2442 = vmatpush.bf16.msra.mxu0 %v1840
  %2443 = vmatpush.bf16.msra.mxu0 %v1839
  %2444 = vmatpush.bf16.msra.mxu0 %v1838
  %2445 = vmatpush.bf16.msra.mxu0 %v1837
  %2446 = vmatpush.bf16.msra.mxu0 %v1836
  %2447 = vmatpush.bf16.msra.mxu0 %v1835
  %2448 = vmatpush.bf16.msra.mxu0 %v1834
  %2449 = vmatmul.bf16.gmra.mxu0 %v613
  %v2450 = vpop.f32.mrf.mxu0
  %v2451 = vadd.f32 %v2438, %v2450
  %v2452 = vpop.f32.mrf.mxu0
  %2453 = vdwg.mxu0
  %2454 = vmatpush.bf16.msra.mxu0 %v1849
  %2455 = vmatpush.bf16.msra.mxu0 %v1848
  %2456 = vmatpush.bf16.msra.mxu0 %v1847
  %2457 = vmatpush.bf16.msra.mxu0 %v1846
  %2458 = vmatpush.bf16.msra.mxu0 %v1845
  %2459 = vmatpush.bf16.msra.mxu0 %v1844
  %2460 = vmatpush.bf16.msra.mxu0 %v1843
  %2461 = vmatpush.bf16.msra.mxu0 %v1842
  %2462 = vmatmul.bf16.gmra.mxu0 %v614
  %v2463 = vpop.f32.mrf.mxu0
  %v2464 = vadd.f32 %v2451, %v2463
  %v2465 = vpop.f32.mrf.mxu0
  %2466 = vdwg.mxu0
  %2467 = vmatpush.bf16.msra.mxu0 %v1857
  %2468 = vmatpush.bf16.msra.mxu0 %v1856
  %2469 = vmatpush.bf16.msra.mxu0 %v1855
  %2470 = vmatpush.bf16.msra.mxu0 %v1854
  %2471 = vmatpush.bf16.msra.mxu0 %v1853
  %2472 = vmatpush.bf16.msra.mxu0 %v1852
  %2473 = vmatpush.bf16.msra.mxu0 %v1851
  %2474 = vmatpush.bf16.msra.mxu0 %v1850
  %2475 = vmatmul.bf16.gmra.mxu0 %v615
  %v2476 = vpop.f32.mrf.mxu0
  %v2477 = vadd.f32 %v2464, %v2476
  %v2478 = vpop.f32.mrf.mxu0
  %2479 = vdwg.mxu0
  %2480 = vmatpush.bf16.msra.mxu0 %v1865
  %2481 = vmatpush.bf16.msra.mxu0 %v1864
  %2482 = vmatpush.bf16.msra.mxu0 %v1863
  %2483 = vmatpush.bf16.msra.mxu0 %v1862
  %2484 = vmatpush.bf16.msra.mxu0 %v1861
  %2485 = vmatpush.bf16.msra.mxu0 %v1860
  %2486 = vmatpush.bf16.msra.mxu0 %v1859
  %2487 = vmatpush.bf16.msra.mxu0 %v1858
  %2488 = vmatmul.bf16.gmra.mxu0 %v616
  %v2489 = vpop.f32.mrf.mxu0
  %v2490 = vadd.f32 %v2477, %v2489
  %v2491 = vpop.f32.mrf.mxu0
  %2492 = vdwg.mxu0
  %2493 = vmatpush.bf16.msra.mxu0 %v1873
  %2494 = vmatpush.bf16.msra.mxu0 %v1872
  %2495 = vmatpush.bf16.msra.mxu0 %v1871
  %2496 = vmatpush.bf16.msra.mxu0 %v1870
  %2497 = vmatpush.bf16.msra.mxu0 %v1869
  %2498 = vmatpush.bf16.msra.mxu0 %v1868
  %2499 = vmatpush.bf16.msra.mxu0 %v1867
  %2500 = vmatpush.bf16.msra.mxu0 %v1866
  %2501 = vmatmul.bf16.gmra.mxu0 %v617
  %v2502 = vpop.f32.mrf.mxu0
  %v2503 = vadd.f32 %v2490, %v2502
  %v2504 = vpop.f32.mrf.mxu0
  %2505 = vdwg.mxu0
  %2506 = vmatpush.bf16.msra.mxu0 %v1881
  %2507 = vmatpush.bf16.msra.mxu0 %v1880
  %2508 = vmatpush.bf16.msra.mxu0 %v1879
  %2509 = vmatpush.bf16.msra.mxu0 %v1878
  %2510 = vmatpush.bf16.msra.mxu0 %v1877
  %2511 = vmatpush.bf16.msra.mxu0 %v1876
  %2512 = vmatpush.bf16.msra.mxu0 %v1875
  %2513 = vmatpush.bf16.msra.mxu0 %v1874
  %2514 = vmatmul.bf16.gmra.mxu0 %v618
  %v2515 = vpop.f32.mrf.mxu0
  %v2516 = vadd.f32 %v2503, %v2515
  %v2517 = vpop.f32.mrf.mxu0
  %2518 = vdwg.mxu0
  %2519 = vmatpush.bf16.msra.mxu0 %v1889
  %2520 = vmatpush.bf16.msra.mxu0 %v1888
  %2521 = vmatpush.bf16.msra.mxu0 %v1887
  %2522 = vmatpush.bf16.msra.mxu0 %v1886
  %2523 = vmatpush.bf16.msra.mxu0 %v1885
  %2524 = vmatpush.bf16.msra.mxu0 %v1884
  %2525 = vmatpush.bf16.msra.mxu0 %v1883
  %2526 = vmatpush.bf16.msra.mxu0 %v1882
  %2527 = vmatmul.bf16.gmra.mxu0 %v619
  %v2528 = vpop.f32.mrf.mxu0
  %v2529 = vadd.f32 %v2516, %v2528
  %v2530 = vpop.f32.mrf.mxu0
  %2531 = vdwg.mxu0
  %2532 = vmatpush.bf16.msra.mxu0 %v1897
  %2533 = vmatpush.bf16.msra.mxu0 %v1896
  %2534 = vmatpush.bf16.msra.mxu0 %v1895
  %2535 = vmatpush.bf16.msra.mxu0 %v1894
  %2536 = vmatpush.bf16.msra.mxu0 %v1893
  %2537 = vmatpush.bf16.msra.mxu0 %v1892
  %2538 = vmatpush.bf16.msra.mxu0 %v1891
  %2539 = vmatpush.bf16.msra.mxu0 %v1890
  %2540 = vmatmul.bf16.gmra.mxu0 %v620
  %v2541 = vpop.f32.mrf.mxu0
  %v2542 = vadd.f32 %v2529, %v2541
  %v2543 = vpop.f32.mrf.mxu0
  %2544 = vdwg.mxu0
  %2545 = vmatpush.bf16.msra.mxu0 %v1905
  %2546 = vmatpush.bf16.msra.mxu0 %v1904
  %2547 = vmatpush.bf16.msra.mxu0 %v1903
  %2548 = vmatpush.bf16.msra.mxu0 %v1902
  %2549 = vmatpush.bf16.msra.mxu0 %v1901
  %2550 = vmatpush.bf16.msra.mxu0 %v1900
  %2551 = vmatpush.bf16.msra.mxu0 %v1899
  %2552 = vmatpush.bf16.msra.mxu0 %v1898
  %2553 = vmatmul.bf16.gmra.mxu0 %v621
  %v2554 = vpop.f32.mrf.mxu0
  %v2555 = vadd.f32 %v2542, %v2554
  %v2556 = vpop.f32.mrf.mxu0
  %2557 = vdwg.mxu0
  %2558 = vmatpush.bf16.msra.mxu0 %v1913
  %2559 = vmatpush.bf16.msra.mxu0 %v1912
  %2560 = vmatpush.bf16.msra.mxu0 %v1911
  %2561 = vmatpush.bf16.msra.mxu0 %v1910
  %2562 = vmatpush.bf16.msra.mxu0 %v1909
  %2563 = vmatpush.bf16.msra.mxu0 %v1908
  %2564 = vmatpush.bf16.msra.mxu0 %v1907
  %2565 = vmatpush.bf16.msra.mxu0 %v1906
  %2566 = vmatmul.bf16.gmra.mxu0 %v622
  %v2567 = vpop.f32.mrf.mxu0
  %v2568 = vadd.f32 %v2555, %v2567
  %v2569 = vpop.f32.mrf.mxu0
  %2570 = vdwg.mxu0
  %2571 = vmatpush.bf16.msra.mxu0 %v1921
  %2572 = vmatpush.bf16.msra.mxu0 %v1920
  %2573 = vmatpush.bf16.msra.mxu0 %v1919
  %2574 = vmatpush.bf16.msra.mxu0 %v1918
  %2575 = vmatpush.bf16.msra.mxu0 %v1917
  %2576 = vmatpush.bf16.msra.mxu0 %v1916
  %2577 = vmatpush.bf16.msra.mxu0 %v1915
  %2578 = vmatpush.bf16.msra.mxu0 %v1914
  %2579 = vmatmul.bf16.gmra.mxu0 %v623
  %v2580 = vpop.f32.mrf.mxu0
  %v2581 = vadd.f32 %v2568, %v2580
  %v2582 = vpop.f32.mrf.mxu0
  %2583 = vdwg.mxu0
  %2584 = vmatpush.bf16.msra.mxu0 %v1929
  %2585 = vmatpush.bf16.msra.mxu0 %v1928
  %2586 = vmatpush.bf16.msra.mxu0 %v1927
  %2587 = vmatpush.bf16.msra.mxu0 %v1926
  %2588 = vmatpush.bf16.msra.mxu0 %v1925
  %2589 = vmatpush.bf16.msra.mxu0 %v1924
  %2590 = vmatpush.bf16.msra.mxu0 %v1923
  %2591 = vmatpush.bf16.msra.mxu0 %v1922
  %2592 = vmatmul.bf16.gmra.mxu0 %v624
  %v2593 = vpop.f32.mrf.mxu0
  %v2594 = vadd.f32 %v2581, %v2593
  %v2595 = vpop.f32.mrf.mxu0
  %2596 = vdwg.mxu0
  %2597 = vmatpush.bf16.msra.mxu0 %v1937
  %2598 = vmatpush.bf16.msra.mxu0 %v1936
  %2599 = vmatpush.bf16.msra.mxu0 %v1935
  %2600 = vmatpush.bf16.msra.mxu0 %v1934
  %2601 = vmatpush.bf16.msra.mxu0 %v1933
  %2602 = vmatpush.bf16.msra.mxu0 %v1932
  %2603 = vmatpush.bf16.msra.mxu0 %v1931
  %2604 = vmatpush.bf16.msra.mxu0 %v1930
  %2605 = vmatmul.bf16.gmra.mxu0 %v625
  %v2606 = vpop.f32.mrf.mxu0
  %v2607 = vadd.f32 %v2594, %v2606
  %v2608 = vpop.f32.mrf.mxu0
  %2609 = vdwg.mxu0
  %2610 = vst [vmem:[%s3] sm:$0xff] %v2607
  // Predicated region
  $region14: #{discriminator_forward.7} parent=0 // pred_check
    _
  $region15: #{discriminator_forward.7} parent=0 // pred_check_branch
    %2612 = sbr.rel (0) target = $region17
  $region16: #{discriminator_forward.7} parent=0 // pred_region
    _
  $region17: #{discriminator_forward.7} parent=0 // pred_fallthru
    _
  // Predicated region
  $region18: #{discriminator_forward.7} parent=0 // pred_check
    _
  $region19: #{discriminator_forward.7} parent=0 // pred_check_branch
    %2614 = sbr.rel (0) target = $region21
  $region20: #{discriminator_forward.7} parent=0 // pred_region
    _
  $region21: #{discriminator_forward.7} parent=0 // pred_fallthru
    _

</llo_original>
